<compile_context>
chip_gen: v7x
topology: tpu7x:2x2x1
jax: 0.10.0
libtpu: 0.0.40
codegen_flags: <defaults>
</compile_context>

<pallas_src>
import jax
import jax.numpy as jnp
from jax.experimental import pallas as pl
from jax.experimental.pallas import tpu as pltpu


# --------------------------------------------------------------------------
# Fused kernel
# --------------------------------------------------------------------------
def _dvib_kernel(x_ref, lens_ref, fegs_ref, eps_ref,
                 conv_w_ref, conv_b_ref,
                 w0x_ref, b0x_ref, whh0_ref, bhh0_ref,
                 w1xf_ref, w1xb_ref, b1x_ref, whh1_ref, bhh1_ref,
                 w_mlp1_ref, b_mlp1_ref, w_mlp2_ref, b_mlp2_ref,
                 w_ms_ref, b_ms_ref, w_dec_ref, b_dec_ref,
                 out_ref, mean_ref, std_ref, lat_ref):
    T, B, _ = x_ref.shape
    H = whh0_ref.shape[1]
    H3 = 3 * H
    k = eps_ref.shape[1]
    f32 = jnp.float32

    def dot(a, b):
        return jnp.dot(a, b, preferred_element_type=f32)

    lens = lens_ref[...]                                   # (B, 1) int32

    # ---- hoisted weights / biases (broadcasts done once, not per step) ----
    conv_w = conv_w_ref[...]
    conv_b = jnp.broadcast_to(conv_b_ref[...], (B, conv_w.shape[1]))
    w0x = w0x_ref[...]
    b0x = jnp.broadcast_to(b0x_ref[...], (B, 2 * H3))
    whh0_f, whh0_b = whh0_ref[0], whh0_ref[1]
    bhh0_f = jnp.broadcast_to(bhh0_ref[0], (B, H3))
    bhh0_b = jnp.broadcast_to(bhh0_ref[1], (B, H3))
    w1xf = w1xf_ref[...]
    w1xb = w1xb_ref[...]
    b1x = jnp.broadcast_to(b1x_ref[...], (B, 2 * H3))
    whh1_f, whh1_b = whh1_ref[0], whh1_ref[1]
    bhh1_f = jnp.broadcast_to(bhh1_ref[0], (B, H3))
    bhh1_b = jnp.broadcast_to(bhh1_ref[1], (B, H3))

    # ---- conv(1x20)+ReLU and layer-0 input projection, hoisted off the
    #      recurrent path.  Loops are fully unrolled (T is static & small). ----
    gx0 = []
    for t in range(T):
        xt = jnp.maximum(dot(x_ref[t], conv_w) + conv_b, 0.0)      # (B, C)
        gx0.append(dot(xt, w0x) + b0x)                             # (B, 6H) [fwd|bwd]

    def gru_cell(gx, gh, h):
        # PyTorch gate order r, z, n ; gh already contains bhh.
        r = jax.nn.sigmoid(gx[:, :H] + gh[:, :H])
        z = jax.nn.sigmoid(gx[:, H:2 * H] + gh[:, H:2 * H])
        n = jnp.tanh(gx[:, 2 * H:] + r * gh[:, 2 * H:])
        return (1.0 - z) * n + z * h

    # ---- layer 0: fwd + bwd interleaved in one unrolled loop ----
    h0f = jnp.zeros((B, H), f32)
    h0b = jnp.zeros((B, H), f32)
    out_f = [None] * T          # fwd hidden at original time t
    out_b = [None] * T          # bwd hidden at original time t
    for s in range(T):
        # forward direction processes original position s, active for s < len
        ghf = dot(h0f, whh0_f) + bhh0_f
        hf_new = gru_cell(gx0[s][:, :H3], ghf, h0f)
        h0f = jnp.where(s < lens, hf_new, h0f)
        out_f[s] = h0f
        # backward direction processes original position T-1-s,
        # active for s >= T - len  (packed-sequence semantics)
        ghb = dot(h0b, whh0_b) + bhh0_b
        hb_new = gru_cell(gx0[T - 1 - s][:, H3:], ghb, h0b)
        h0b = jnp.where(s >= T - lens, hb_new, h0b)
        out_b[T - 1 - s] = h0b

    # ---- layer-1 input projection, hoisted (x1[t] = [out_f[t] | out_b[t]]) ----
    gx1 = [dot(out_f[t], w1xf) + dot(out_b[t], w1xb) + b1x for t in range(T)]

    # ---- layer 1: fwd + bwd, final hidden states only (no per-step stores) ----
    h1f = jnp.zeros((B, H), f32)
    h1b = jnp.zeros((B, H), f32)
    for s in range(T):
        ghf = dot(h1f, whh1_f) + bhh1_f
        hf_new = gru_cell(gx1[s][:, :H3], ghf, h1f)
        h1f = jnp.where(s < lens, hf_new, h1f)
        ghb = dot(h1b, whh1_b) + bhh1_b
        hb_new = gru_cell(gx1[T - 1 - s][:, H3:], ghb, h1b)
        h1b = jnp.where(s >= T - lens, hb_new, h1b)

    # ---- head ----
    # feat = [h1b, h1f, h0b, h0f, FEGS]; the concat is folded into the first
    # MLP matmul by row-splitting its weight (avoids lane-dim concatenation).
    h1 = (dot(h1b, w_mlp1_ref[0:H, :])
          + dot(h1f, w_mlp1_ref[H:2 * H, :])
          + dot(h0b, w_mlp1_ref[2 * H:3 * H, :])
          + dot(h0f, w_mlp1_ref[3 * H:4 * H, :])
          + dot(fegs_ref[...], w_mlp1_ref[4 * H:, :])
          + b_mlp1_ref[...])
    h1 = jnp.maximum(h1, 0.0)
    h2 = jnp.maximum(dot(h1, w_mlp2_ref[...]) + b_mlp2_ref[...], 0.0)

    ms = dot(h2, w_ms_ref[...]) + b_ms_ref[...]            # (B, 2k): [mean | std_pre]
    mean = ms[:, :k]
    pre = ms[:, k:] - 5.0
    # numerically-stable softplus
    std = jnp.maximum(pre, 0.0) + jnp.log(1.0 + jnp.exp(-jnp.abs(pre)))
    lat = mean + std * eps_ref[...]
    logits = dot(lat, w_dec_ref[...]) + b_dec_ref[...]

    out_ref[...] = jax.nn.sigmoid(logits)
    mean_ref[...] = mean
    std_ref[...] = std
    lat_ref[...] = lat


# --------------------------------------------------------------------------
# Wrapper
# --------------------------------------------------------------------------
_N_IN = 23


@jax.jit
def dvib_forward(params, pssm, lengths, FEGS, eps):
    B, L, _ = pssm.shape
    k = eps.shape[1]
    x_tm = jnp.transpose(pssm, (1, 0, 2))                  # (T, B, 20) time-major
    lens = lengths.astype(jnp.int32).reshape(B, 1)
    out_shapes = (jax.ShapeDtypeStruct((B, 2), jnp.float32),
                  jax.ShapeDtypeStruct((B, k), jnp.float32),
                  jax.ShapeDtypeStruct((B, k), jnp.float32),
                  jax.ShapeDtypeStruct((B, k), jnp.float32))
    vmem = pl.BlockSpec(memory_space=pltpu.MemorySpace.VMEM)
    return pl.pallas_call(
        _dvib_kernel,
        out_shape=out_shapes,
        in_specs=[vmem] * _N_IN,
        out_specs=(vmem, vmem, vmem, vmem),
    )(x_tm, lens, FEGS, eps,
      params["conv_w"], params["conv_b"],
      params["w0x"], params["b0x"], params["whh0"], params["bhh0"],
      params["w1xf"], params["w1xb"], params["b1x"], params["whh1"], params["bhh1"],
      params["w1"], params["b1"], params["w2"], params["b2"],
      params["w_ms"], params["b_ms"], params["w_dec"], params["b_dec"])


# --------------------------------------------------------------------------
# Parameter construction (deterministic); weights stored pre-packed/transposed
# for the fused kernel layout.
# --------------------------------------------------------------------------
def init_params(key, k, out_channels, hidden_size):
    C, H = out_channels, hidden_size
    H3 = 3 * H
    F = 4 * H + 578
    hidden_dim = (4 * H + 578 + k) // 2
    m1 = (4 * H + 578 + hidden_dim) // 2
    keys = iter(jax.random.split(key, 64))

    def xavier(shape, fi, fo):
        lim = (6.0 / (fi + fo)) ** 0.5
        return jax.random.uniform(next(keys), shape, jnp.float32, -lim, lim)

    def uni(shape, scale):
        return jax.random.uniform(next(keys), shape, jnp.float32, -scale, scale)

    p = {}
    # conv weight (C,1,1,20) stored transposed as (20, C)
    p["conv_w"] = xavier((20, C), 20, C)
    p["conv_b"] = jnp.zeros((1, C), jnp.float32)

    s0 = 1.0 / (H ** 0.5)
    # layer 0 (input C) — gate order [r | z | n] along the 3H axis
    wih0_f, wih0_b = uni((C, H3), s0), uni((C, H3), s0)
    bih0_f, bih0_b = uni((1, H3), s0), uni((1, H3), s0)
    p["w0x"] = jnp.concatenate([wih0_f, wih0_b], axis=1)              # (C, 6H)
    p["b0x"] = jnp.concatenate([bih0_f, bih0_b], axis=1)              # (1, 6H)
    p["whh0"] = jnp.stack([uni((H, H3), s0), uni((H, H3), s0)])       # (2, H, 3H)
    p["bhh0"] = jnp.stack([uni((1, H3), s0), uni((1, H3), s0)])       # (2, 1, 3H)

    # layer 1 (input 2H = [out_fwd | out_bwd]) — split by input half, stack dirs
    wih1_f, wih1_b = uni((2 * H, H3), s0), uni((2 * H, H3), s0)
    bih1_f, bih1_b = uni((1, H3), s0), uni((1, H3), s0)
    p["w1xf"] = jnp.concatenate([wih1_f[:H], wih1_b[:H]], axis=1)     # (H, 6H)
    p["w1xb"] = jnp.concatenate([wih1_f[H:], wih1_b[H:]], axis=1)     # (H, 6H)
    p["b1x"] = jnp.concatenate([bih1_f, bih1_b], axis=1)              # (1, 6H)
    p["whh1"] = jnp.stack([uni((H, H3), s0), uni((H, H3), s0)])
    p["bhh1"] = jnp.stack([uni((1, H3), s0), uni((1, H3), s0)])

    # MLP + heads (stored transposed for x @ W); w1 rows are ordered
    # [h1_bwd, h1_fwd, h0_bwd, h0_fwd, FEGS] matching torch.cat order.
    p["w1"] = xavier((F, m1), F, m1)
    p["b1"] = jnp.zeros((1, m1), jnp.float32)
    p["w2"] = xavier((m1, hidden_dim), m1, hidden_dim)
    p["b2"] = jnp.zeros((1, hidden_dim), jnp.float32)
    w_mean = xavier((hidden_dim, k), hidden_dim, k)
    w_std = xavier((hidden_dim, k), hidden_dim, k)
    p["w_ms"] = jnp.concatenate([w_mean, w_std], axis=1)              # (hidden, 2k)
    p["b_ms"] = jnp.zeros((1, 2 * k), jnp.float32)
    p["w_dec"] = xavier((k, 2), k, 2)
    p["b_dec"] = jnp.zeros((1, 2), jnp.float32)
    return p


if __name__ == "__main__":
    k, out_channels, hidden_size = 4, 8, 8
    B, L = 2, 8

    key = jax.random.PRNGKey(0)
    kp, kx, kf, ke = jax.random.split(key, 4)

    params = init_params(kp, k, out_channels, hidden_size)
    pssm = jax.random.normal(kx, (B, L, 20), jnp.float32)
    FEGS = jax.random.normal(kf, (B, 578), jnp.float32)
    lengths = jnp.array([8, 5], jnp.int32)            # sorted desc (pack_padded)
    eps = jax.random.normal(ke, (B, k), jnp.float32)  # reparameterization noise

    outputs, enc_mean, enc_std, latent = dvib_forward(params, pssm, lengths, FEGS, eps)
    jax.block_until_ready((outputs, enc_mean, enc_std, latent))

    assert outputs.shape == (B, 2)
    assert enc_mean.shape == (B, k)
    assert enc_std.shape == (B, k)
    assert latent.shape == (B, k)
    assert bool(jnp.all(jnp.isfinite(outputs)))
    assert bool(jnp.all(jnp.isfinite(enc_mean)))
    assert bool(jnp.all(jnp.isfinite(enc_std)))
    assert bool(jnp.all(jnp.isfinite(latent)))
    print("KERNEL_OK")
</pallas_src>

<mosaic_0001>
module attributes {stable_mosaic.version = 11 : i64} {
  func.func @_dvib_kernel(%arg0: memref<8x2x20xf32, #tpu.memory_space<vmem>>, %arg1: memref<2x1xi32, #tpu.memory_space<vmem>>, %arg2: memref<2x578xf32, #tpu.memory_space<vmem>>, %arg3: memref<2x4xf32, #tpu.memory_space<vmem>>, %arg4: memref<20x8xf32, #tpu.memory_space<vmem>>, %arg5: memref<1x8xf32, #tpu.memory_space<vmem>>, %arg6: memref<8x48xf32, #tpu.memory_space<vmem>>, %arg7: memref<1x48xf32, #tpu.memory_space<vmem>>, %arg8: memref<2x8x24xf32, #tpu.memory_space<vmem>>, %arg9: memref<2x1x24xf32, #tpu.memory_space<vmem>>, %arg10: memref<8x48xf32, #tpu.memory_space<vmem>>, %arg11: memref<8x48xf32, #tpu.memory_space<vmem>>, %arg12: memref<1x48xf32, #tpu.memory_space<vmem>>, %arg13: memref<2x8x24xf32, #tpu.memory_space<vmem>>, %arg14: memref<2x1x24xf32, #tpu.memory_space<vmem>>, %arg15: memref<610x458xf32, #tpu.memory_space<vmem>>, %arg16: memref<1x458xf32, #tpu.memory_space<vmem>>, %arg17: memref<458x307xf32, #tpu.memory_space<vmem>>, %arg18: memref<1x307xf32, #tpu.memory_space<vmem>>, %arg19: memref<307x8xf32, #tpu.memory_space<vmem>>, %arg20: memref<1x8xf32, #tpu.memory_space<vmem>>, %arg21: memref<4x2xf32, #tpu.memory_space<vmem>>, %arg22: memref<1x2xf32, #tpu.memory_space<vmem>>, %arg23: memref<2x2xf32, #tpu.memory_space<vmem>>, %arg24: memref<2x4xf32, #tpu.memory_space<vmem>>, %arg25: memref<2x4xf32, #tpu.memory_space<vmem>>, %arg26: memref<2x4xf32, #tpu.memory_space<vmem>>) attributes {dimension_semantics = [], scalar_prefetch = 0 : i64, scratch_operands = 0 : i64, tpu.core_type = #tpu.core_type<tc>} {
    %c0 = arith.constant 0 : index
    %c0_0 = arith.constant 0 : index
    %0 = vector.load %arg1[%c0, %c0_0] : memref<2x1xi32, #tpu.memory_space<vmem>>, vector<2x1xi32>
    %c0_1 = arith.constant 0 : index
    %c0_2 = arith.constant 0 : index
    %1 = vector.load %arg4[%c0_1, %c0_2] : memref<20x8xf32, #tpu.memory_space<vmem>>, vector<20x8xf32>
    %c0_3 = arith.constant 0 : index
    %c0_4 = arith.constant 0 : index
    %2 = vector.load %arg5[%c0_3, %c0_4] : memref<1x8xf32, #tpu.memory_space<vmem>>, vector<1x8xf32>
    %3 = vector.shape_cast %2 : vector<1x8xf32> to vector<1x8xf32>
    %4 = vector.broadcast %3 : vector<1x8xf32> to vector<2x8xf32>
    %c0_5 = arith.constant 0 : index
    %c0_6 = arith.constant 0 : index
    %5 = vector.load %arg6[%c0_5, %c0_6] : memref<8x48xf32, #tpu.memory_space<vmem>>, vector<8x48xf32>
    %c0_7 = arith.constant 0 : index
    %c0_8 = arith.constant 0 : index
    %6 = vector.load %arg7[%c0_7, %c0_8] : memref<1x48xf32, #tpu.memory_space<vmem>>, vector<1x48xf32>
    %7 = vector.shape_cast %6 : vector<1x48xf32> to vector<1x48xf32>
    %8 = vector.broadcast %7 : vector<1x48xf32> to vector<2x48xf32>
    %c0_9 = arith.constant 0 : index
    %c0_10 = arith.constant 0 : index
    %c0_11 = arith.constant 0 : index
    %9 = vector.load %arg8[%c0_9, %c0_10, %c0_11] : memref<2x8x24xf32, #tpu.memory_space<vmem>>, vector<1x8x24xf32>
    %10 = vector.shape_cast %9 : vector<1x8x24xf32> to vector<8x24xf32>
    %c1 = arith.constant 1 : index
    %c0_12 = arith.constant 0 : index
    %c0_13 = arith.constant 0 : index
    %11 = vector.load %arg8[%c1, %c0_12, %c0_13] : memref<2x8x24xf32, #tpu.memory_space<vmem>>, vector<1x8x24xf32>
    %12 = vector.shape_cast %11 : vector<1x8x24xf32> to vector<8x24xf32>
    %c0_14 = arith.constant 0 : index
    %c0_15 = arith.constant 0 : index
    %c0_16 = arith.constant 0 : index
    %13 = vector.load %arg9[%c0_14, %c0_15, %c0_16] : memref<2x1x24xf32, #tpu.memory_space<vmem>>, vector<1x1x24xf32>
    %14 = vector.shape_cast %13 : vector<1x1x24xf32> to vector<1x24xf32>
    %15 = vector.shape_cast %14 : vector<1x24xf32> to vector<1x24xf32>
    %16 = vector.broadcast %15 : vector<1x24xf32> to vector<2x24xf32>
    %c1_17 = arith.constant 1 : index
    %c0_18 = arith.constant 0 : index
    %c0_19 = arith.constant 0 : index
    %17 = vector.load %arg9[%c1_17, %c0_18, %c0_19] : memref<2x1x24xf32, #tpu.memory_space<vmem>>, vector<1x1x24xf32>
    %18 = vector.shape_cast %17 : vector<1x1x24xf32> to vector<1x24xf32>
    %19 = vector.shape_cast %18 : vector<1x24xf32> to vector<1x24xf32>
    %20 = vector.broadcast %19 : vector<1x24xf32> to vector<2x24xf32>
    %c0_20 = arith.constant 0 : index
    %c0_21 = arith.constant 0 : index
    %21 = vector.load %arg10[%c0_20, %c0_21] : memref<8x48xf32, #tpu.memory_space<vmem>>, vector<8x48xf32>
    %c0_22 = arith.constant 0 : index
    %c0_23 = arith.constant 0 : index
    %22 = vector.load %arg11[%c0_22, %c0_23] : memref<8x48xf32, #tpu.memory_space<vmem>>, vector<8x48xf32>
    %c0_24 = arith.constant 0 : index
    %c0_25 = arith.constant 0 : index
    %23 = vector.load %arg12[%c0_24, %c0_25] : memref<1x48xf32, #tpu.memory_space<vmem>>, vector<1x48xf32>
    %24 = vector.shape_cast %23 : vector<1x48xf32> to vector<1x48xf32>
    %25 = vector.broadcast %24 : vector<1x48xf32> to vector<2x48xf32>
    %c0_26 = arith.constant 0 : index
    %c0_27 = arith.constant 0 : index
    %c0_28 = arith.constant 0 : index
    %26 = vector.load %arg13[%c0_26, %c0_27, %c0_28] : memref<2x8x24xf32, #tpu.memory_space<vmem>>, vector<1x8x24xf32>
    %27 = vector.shape_cast %26 : vector<1x8x24xf32> to vector<8x24xf32>
    %c1_29 = arith.constant 1 : index
    %c0_30 = arith.constant 0 : index
    %c0_31 = arith.constant 0 : index
    %28 = vector.load %arg13[%c1_29, %c0_30, %c0_31] : memref<2x8x24xf32, #tpu.memory_space<vmem>>, vector<1x8x24xf32>
    %29 = vector.shape_cast %28 : vector<1x8x24xf32> to vector<8x24xf32>
    %c0_32 = arith.constant 0 : index
    %c0_33 = arith.constant 0 : index
    %c0_34 = arith.constant 0 : index
    %30 = vector.load %arg14[%c0_32, %c0_33, %c0_34] : memref<2x1x24xf32, #tpu.memory_space<vmem>>, vector<1x1x24xf32>
    %31 = vector.shape_cast %30 : vector<1x1x24xf32> to vector<1x24xf32>
    %32 = vector.shape_cast %31 : vector<1x24xf32> to vector<1x24xf32>
    %33 = vector.broadcast %32 : vector<1x24xf32> to vector<2x24xf32>
    %c1_35 = arith.constant 1 : index
    %c0_36 = arith.constant 0 : index
    %c0_37 = arith.constant 0 : index
    %34 = vector.load %arg14[%c1_35, %c0_36, %c0_37] : memref<2x1x24xf32, #tpu.memory_space<vmem>>, vector<1x1x24xf32>
    %35 = vector.shape_cast %34 : vector<1x1x24xf32> to vector<1x24xf32>
    %36 = vector.shape_cast %35 : vector<1x24xf32> to vector<1x24xf32>
    %37 = vector.broadcast %36 : vector<1x24xf32> to vector<2x24xf32>
    %c0_38 = arith.constant 0 : index
    %c0_39 = arith.constant 0 : index
    %c0_40 = arith.constant 0 : index
    %38 = vector.load %arg0[%c0_38, %c0_39, %c0_40] : memref<8x2x20xf32, #tpu.memory_space<vmem>>, vector<1x2x20xf32>
    %39 = vector.shape_cast %38 : vector<1x2x20xf32> to vector<2x20xf32>
    %cst = arith.constant dense<0.000000e+00> : vector<2x8xf32>
    %40 = tpu.matmul %39, %1, %cst {dimension_numbers = #tpu.dot_dimension_numbers<[1], [0], [0], [1], [0, 0, 1, 1], [], []>} : vector<2x20xf32>, vector<20x8xf32>, vector<2x8xf32> -> vector<2x8xf32>
    %41 = arith.addf %40, %4 : vector<2x8xf32>
    %cst_41 = arith.constant 0.000000e+00 : f32
    %42 = vector.broadcast %cst_41 : f32 to vector<2x8xf32>
    %43 = arith.maximumf %41, %42 : vector<2x8xf32>
    %cst_42 = arith.constant dense<0.000000e+00> : vector<2x48xf32>
    %44 = tpu.matmul %43, %5, %cst_42 {dimension_numbers = #tpu.dot_dimension_numbers<[1], [0], [0], [1], [0, 0, 1, 1], [], []>} : vector<2x8xf32>, vector<8x48xf32>, vector<2x48xf32> -> vector<2x48xf32>
    %45 = arith.addf %44, %8 : vector<2x48xf32>
    %c1_43 = arith.constant 1 : index
    %c0_44 = arith.constant 0 : index
    %c0_45 = arith.constant 0 : index
    %46 = vector.load %arg0[%c1_43, %c0_44, %c0_45] : memref<8x2x20xf32, #tpu.memory_space<vmem>>, vector<1x2x20xf32>
    %47 = vector.shape_cast %46 : vector<1x2x20xf32> to vector<2x20xf32>
    %cst_46 = arith.constant dense<0.000000e+00> : vector<2x8xf32>
    %48 = tpu.matmul %47, %1, %cst_46 {dimension_numbers = #tpu.dot_dimension_numbers<[1], [0], [0], [1], [0, 0, 1, 1], [], []>} : vector<2x20xf32>, vector<20x8xf32>, vector<2x8xf32> -> vector<2x8xf32>
    %49 = arith.addf %48, %4 : vector<2x8xf32>
    %cst_47 = arith.constant 0.000000e+00 : f32
    %50 = vector.broadcast %cst_47 : f32 to vector<2x8xf32>
    %51 = arith.maximumf %49, %50 : vector<2x8xf32>
    %cst_48 = arith.constant dense<0.000000e+00> : vector<2x48xf32>
    %52 = tpu.matmul %51, %5, %cst_48 {dimension_numbers = #tpu.dot_dimension_numbers<[1], [0], [0], [1], [0, 0, 1, 1], [], []>} : vector<2x8xf32>, vector<8x48xf32>, vector<2x48xf32> -> vector<2x48xf32>
    %53 = arith.addf %52, %8 : vector<2x48xf32>
    %c2 = arith.constant 2 : index
    %c0_49 = arith.constant 0 : index
    %c0_50 = arith.constant 0 : index
    %54 = vector.load %arg0[%c2, %c0_49, %c0_50] : memref<8x2x20xf32, #tpu.memory_space<vmem>>, vector<1x2x20xf32>
    %55 = vector.shape_cast %54 : vector<1x2x20xf32> to vector<2x20xf32>
    %cst_51 = arith.constant dense<0.000000e+00> : vector<2x8xf32>
    %56 = tpu.matmul %55, %1, %cst_51 {dimension_numbers = #tpu.dot_dimension_numbers<[1], [0], [0], [1], [0, 0, 1, 1], [], []>} : vector<2x20xf32>, vector<20x8xf32>, vector<2x8xf32> -> vector<2x8xf32>
    %57 = arith.addf %56, %4 : vector<2x8xf32>
    %cst_52 = arith.constant 0.000000e+00 : f32
    %58 = vector.broadcast %cst_52 : f32 to vector<2x8xf32>
    %59 = arith.maximumf %57, %58 : vector<2x8xf32>
    %cst_53 = arith.constant dense<0.000000e+00> : vector<2x48xf32>
    %60 = tpu.matmul %59, %5, %cst_53 {dimension_numbers = #tpu.dot_dimension_numbers<[1], [0], [0], [1], [0, 0, 1, 1], [], []>} : vector<2x8xf32>, vector<8x48xf32>, vector<2x48xf32> -> vector<2x48xf32>
    %61 = arith.addf %60, %8 : vector<2x48xf32>
    %c3 = arith.constant 3 : index
    %c0_54 = arith.constant 0 : index
    %c0_55 = arith.constant 0 : index
    %62 = vector.load %arg0[%c3, %c0_54, %c0_55] : memref<8x2x20xf32, #tpu.memory_space<vmem>>, vector<1x2x20xf32>
    %63 = vector.shape_cast %62 : vector<1x2x20xf32> to vector<2x20xf32>
    %cst_56 = arith.constant dense<0.000000e+00> : vector<2x8xf32>
    %64 = tpu.matmul %63, %1, %cst_56 {dimension_numbers = #tpu.dot_dimension_numbers<[1], [0], [0], [1], [0, 0, 1, 1], [], []>} : vector<2x20xf32>, vector<20x8xf32>, vector<2x8xf32> -> vector<2x8xf32>
    %65 = arith.addf %64, %4 : vector<2x8xf32>
    %cst_57 = arith.constant 0.000000e+00 : f32
    %66 = vector.broadcast %cst_57 : f32 to vector<2x8xf32>
    %67 = arith.maximumf %65, %66 : vector<2x8xf32>
    %cst_58 = arith.constant dense<0.000000e+00> : vector<2x48xf32>
    %68 = tpu.matmul %67, %5, %cst_58 {dimension_numbers = #tpu.dot_dimension_numbers<[1], [0], [0], [1], [0, 0, 1, 1], [], []>} : vector<2x8xf32>, vector<8x48xf32>, vector<2x48xf32> -> vector<2x48xf32>
    %69 = arith.addf %68, %8 : vector<2x48xf32>
    %c4 = arith.constant 4 : index
    %c0_59 = arith.constant 0 : index
    %c0_60 = arith.constant 0 : index
    %70 = vector.load %arg0[%c4, %c0_59, %c0_60] : memref<8x2x20xf32, #tpu.memory_space<vmem>>, vector<1x2x20xf32>
    %71 = vector.shape_cast %70 : vector<1x2x20xf32> to vector<2x20xf32>
    %cst_61 = arith.constant dense<0.000000e+00> : vector<2x8xf32>
    %72 = tpu.matmul %71, %1, %cst_61 {dimension_numbers = #tpu.dot_dimension_numbers<[1], [0], [0], [1], [0, 0, 1, 1], [], []>} : vector<2x20xf32>, vector<20x8xf32>, vector<2x8xf32> -> vector<2x8xf32>
    %73 = arith.addf %72, %4 : vector<2x8xf32>
    %cst_62 = arith.constant 0.000000e+00 : f32
    %74 = vector.broadcast %cst_62 : f32 to vector<2x8xf32>
    %75 = arith.maximumf %73, %74 : vector<2x8xf32>
    %cst_63 = arith.constant dense<0.000000e+00> : vector<2x48xf32>
    %76 = tpu.matmul %75, %5, %cst_63 {dimension_numbers = #tpu.dot_dimension_numbers<[1], [0], [0], [1], [0, 0, 1, 1], [], []>} : vector<2x8xf32>, vector<8x48xf32>, vector<2x48xf32> -> vector<2x48xf32>
    %77 = arith.addf %76, %8 : vector<2x48xf32>
    %c5 = arith.constant 5 : index
    %c0_64 = arith.constant 0 : index
    %c0_65 = arith.constant 0 : index
    %78 = vector.load %arg0[%c5, %c0_64, %c0_65] : memref<8x2x20xf32, #tpu.memory_space<vmem>>, vector<1x2x20xf32>
    %79 = vector.shape_cast %78 : vector<1x2x20xf32> to vector<2x20xf32>
    %cst_66 = arith.constant dense<0.000000e+00> : vector<2x8xf32>
    %80 = tpu.matmul %79, %1, %cst_66 {dimension_numbers = #tpu.dot_dimension_numbers<[1], [0], [0], [1], [0, 0, 1, 1], [], []>} : vector<2x20xf32>, vector<20x8xf32>, vector<2x8xf32> -> vector<2x8xf32>
    %81 = arith.addf %80, %4 : vector<2x8xf32>
    %cst_67 = arith.constant 0.000000e+00 : f32
    %82 = vector.broadcast %cst_67 : f32 to vector<2x8xf32>
    %83 = arith.maximumf %81, %82 : vector<2x8xf32>
    %cst_68 = arith.constant dense<0.000000e+00> : vector<2x48xf32>
    %84 = tpu.matmul %83, %5, %cst_68 {dimension_numbers = #tpu.dot_dimension_numbers<[1], [0], [0], [1], [0, 0, 1, 1], [], []>} : vector<2x8xf32>, vector<8x48xf32>, vector<2x48xf32> -> vector<2x48xf32>
    %85 = arith.addf %84, %8 : vector<2x48xf32>
    %c6 = arith.constant 6 : index
    %c0_69 = arith.constant 0 : index
    %c0_70 = arith.constant 0 : index
    %86 = vector.load %arg0[%c6, %c0_69, %c0_70] : memref<8x2x20xf32, #tpu.memory_space<vmem>>, vector<1x2x20xf32>
    %87 = vector.shape_cast %86 : vector<1x2x20xf32> to vector<2x20xf32>
    %cst_71 = arith.constant dense<0.000000e+00> : vector<2x8xf32>
    %88 = tpu.matmul %87, %1, %cst_71 {dimension_numbers = #tpu.dot_dimension_numbers<[1], [0], [0], [1], [0, 0, 1, 1], [], []>} : vector<2x20xf32>, vector<20x8xf32>, vector<2x8xf32> -> vector<2x8xf32>
    %89 = arith.addf %88, %4 : vector<2x8xf32>
    %cst_72 = arith.constant 0.000000e+00 : f32
    %90 = vector.broadcast %cst_72 : f32 to vector<2x8xf32>
    %91 = arith.maximumf %89, %90 : vector<2x8xf32>
    %cst_73 = arith.constant dense<0.000000e+00> : vector<2x48xf32>
    %92 = tpu.matmul %91, %5, %cst_73 {dimension_numbers = #tpu.dot_dimension_numbers<[1], [0], [0], [1], [0, 0, 1, 1], [], []>} : vector<2x8xf32>, vector<8x48xf32>, vector<2x48xf32> -> vector<2x48xf32>
    %93 = arith.addf %92, %8 : vector<2x48xf32>
    %c7 = arith.constant 7 : index
    %c0_74 = arith.constant 0 : index
    %c0_75 = arith.constant 0 : index
    %94 = vector.load %arg0[%c7, %c0_74, %c0_75] : memref<8x2x20xf32, #tpu.memory_space<vmem>>, vector<1x2x20xf32>
    %95 = vector.shape_cast %94 : vector<1x2x20xf32> to vector<2x20xf32>
    %cst_76 = arith.constant dense<0.000000e+00> : vector<2x8xf32>
    %96 = tpu.matmul %95, %1, %cst_76 {dimension_numbers = #tpu.dot_dimension_numbers<[1], [0], [0], [1], [0, 0, 1, 1], [], []>} : vector<2x20xf32>, vector<20x8xf32>, vector<2x8xf32> -> vector<2x8xf32>
    %97 = arith.addf %96, %4 : vector<2x8xf32>
    %cst_77 = arith.constant 0.000000e+00 : f32
    %98 = vector.broadcast %cst_77 : f32 to vector<2x8xf32>
    %99 = arith.maximumf %97, %98 : vector<2x8xf32>
    %cst_78 = arith.constant dense<0.000000e+00> : vector<2x48xf32>
    %100 = tpu.matmul %99, %5, %cst_78 {dimension_numbers = #tpu.dot_dimension_numbers<[1], [0], [0], [1], [0, 0, 1, 1], [], []>} : vector<2x8xf32>, vector<8x48xf32>, vector<2x48xf32> -> vector<2x48xf32>
    %101 = arith.addf %100, %8 : vector<2x48xf32>
    %cst_79 = arith.constant 0.000000e+00 : f32
    %102 = vector.broadcast %cst_79 : f32 to vector<2x8xf32>
    %cst_80 = arith.constant 0.000000e+00 : f32
    %103 = vector.broadcast %cst_80 : f32 to vector<2x8xf32>
    %cst_81 = arith.constant dense<0.000000e+00> : vector<2x24xf32>
    %104 = tpu.matmul %102, %10, %cst_81 {dimension_numbers = #tpu.dot_dimension_numbers<[1], [0], [0], [1], [0, 0, 1, 1], [], []>} : vector<2x8xf32>, vector<8x24xf32>, vector<2x24xf32> -> vector<2x24xf32>
    %105 = arith.addf %104, %16 : vector<2x24xf32>
    %106 = vector.extract_strided_slice %45 {offsets = [0, 0], sizes = [2, 24], strides = [1, 1]} : vector<2x48xf32> to vector<2x24xf32>
    %107 = vector.extract_strided_slice %106 {offsets = [0, 0], sizes = [2, 8], strides = [1, 1]} : vector<2x24xf32> to vector<2x8xf32>
    %108 = vector.extract_strided_slice %105 {offsets = [0, 0], sizes = [2, 8], strides = [1, 1]} : vector<2x24xf32> to vector<2x8xf32>
    %109 = arith.addf %107, %108 : vector<2x8xf32>
    %110 = arith.negf %109 : vector<2x8xf32>
    %111 = math.exp %110 : vector<2x8xf32>
    %cst_82 = arith.constant 1.000000e+00 : f32
    %112 = vector.broadcast %cst_82 : f32 to vector<2x8xf32>
    %113 = arith.addf %112, %111 : vector<2x8xf32>
    %114 = arith.divf %112, %113 : vector<2x8xf32>
    %115 = vector.extract_strided_slice %106 {offsets = [0, 8], sizes = [2, 8], strides = [1, 1]} : vector<2x24xf32> to vector<2x8xf32>
    %116 = vector.extract_strided_slice %105 {offsets = [0, 8], sizes = [2, 8], strides = [1, 1]} : vector<2x24xf32> to vector<2x8xf32>
    %117 = arith.addf %115, %116 : vector<2x8xf32>
    %118 = arith.negf %117 : vector<2x8xf32>
    %119 = math.exp %118 : vector<2x8xf32>
    %cst_83 = arith.constant 1.000000e+00 : f32
    %120 = vector.broadcast %cst_83 : f32 to vector<2x8xf32>
    %121 = arith.addf %120, %119 : vector<2x8xf32>
    %122 = arith.divf %120, %121 : vector<2x8xf32>
    %123 = vector.extract_strided_slice %106 {offsets = [0, 16], sizes = [2, 8], strides = [1, 1]} : vector<2x24xf32> to vector<2x8xf32>
    %124 = vector.extract_strided_slice %105 {offsets = [0, 16], sizes = [2, 8], strides = [1, 1]} : vector<2x24xf32> to vector<2x8xf32>
    %125 = arith.mulf %114, %124 : vector<2x8xf32>
    %126 = arith.addf %123, %125 : vector<2x8xf32>
    %127 = math.tanh %126 : vector<2x8xf32>
    %cst_84 = arith.constant 1.000000e+00 : f32
    %128 = vector.broadcast %cst_84 : f32 to vector<2x8xf32>
    %129 = arith.subf %128, %122 : vector<2x8xf32>
    %130 = arith.mulf %129, %127 : vector<2x8xf32>
    %131 = arith.mulf %122, %102 : vector<2x8xf32>
    %132 = arith.addf %130, %131 : vector<2x8xf32>
    %c0_i32 = arith.constant 0 : i32
    %133 = vector.broadcast %c0_i32 : i32 to vector<2x1xi32>
    %134 = arith.cmpi sgt, %0, %133 : vector<2x1xi32>
    %135 = vector.shape_cast %134 : vector<2x1xi1> to vector<2x1xi1>
    %136 = vector.broadcast %135 : vector<2x1xi1> to vector<2x8xi1>
    %137 = arith.select %136, %132, %102 : vector<2x8xi1>, vector<2x8xf32>
    %cst_85 = arith.constant dense<0.000000e+00> : vector<2x24xf32>
    %138 = tpu.matmul %103, %12, %cst_85 {dimension_numbers = #tpu.dot_dimension_numbers<[1], [0], [0], [1], [0, 0, 1, 1], [], []>} : vector<2x8xf32>, vector<8x24xf32>, vector<2x24xf32> -> vector<2x24xf32>
    %139 = arith.addf %138, %20 : vector<2x24xf32>
    %140 = vector.extract_strided_slice %101 {offsets = [0, 24], sizes = [2, 24], strides = [1, 1]} : vector<2x48xf32> to vector<2x24xf32>
    %141 = vector.extract_strided_slice %140 {offsets = [0, 0], sizes = [2, 8], strides = [1, 1]} : vector<2x24xf32> to vector<2x8xf32>
    %142 = vector.extract_strided_slice %139 {offsets = [0, 0], sizes = [2, 8], strides = [1, 1]} : vector<2x24xf32> to vector<2x8xf32>
    %143 = arith.addf %141, %142 : vector<2x8xf32>
    %144 = arith.negf %143 : vector<2x8xf32>
    %145 = math.exp %144 : vector<2x8xf32>
    %cst_86 = arith.constant 1.000000e+00 : f32
    %146 = vector.broadcast %cst_86 : f32 to vector<2x8xf32>
    %147 = arith.addf %146, %145 : vector<2x8xf32>
    %148 = arith.divf %146, %147 : vector<2x8xf32>
    %149 = vector.extract_strided_slice %140 {offsets = [0, 8], sizes = [2, 8], strides = [1, 1]} : vector<2x24xf32> to vector<2x8xf32>
    %150 = vector.extract_strided_slice %139 {offsets = [0, 8], sizes = [2, 8], strides = [1, 1]} : vector<2x24xf32> to vector<2x8xf32>
    %151 = arith.addf %149, %150 : vector<2x8xf32>
    %152 = arith.negf %151 : vector<2x8xf32>
    %153 = math.exp %152 : vector<2x8xf32>
    %cst_87 = arith.constant 1.000000e+00 : f32
    %154 = vector.broadcast %cst_87 : f32 to vector<2x8xf32>
    %155 = arith.addf %154, %153 : vector<2x8xf32>
    %156 = arith.divf %154, %155 : vector<2x8xf32>
    %157 = vector.extract_strided_slice %140 {offsets = [0, 16], sizes = [2, 8], strides = [1, 1]} : vector<2x24xf32> to vector<2x8xf32>
    %158 = vector.extract_strided_slice %139 {offsets = [0, 16], sizes = [2, 8], strides = [1, 1]} : vector<2x24xf32> to vector<2x8xf32>
    %159 = arith.mulf %148, %158 : vector<2x8xf32>
    %160 = arith.addf %157, %159 : vector<2x8xf32>
    %161 = math.tanh %160 : vector<2x8xf32>
    %cst_88 = arith.constant 1.000000e+00 : f32
    %162 = vector.broadcast %cst_88 : f32 to vector<2x8xf32>
    %163 = arith.subf %162, %156 : vector<2x8xf32>
    %164 = arith.mulf %163, %161 : vector<2x8xf32>
    %165 = arith.mulf %156, %103 : vector<2x8xf32>
    %166 = arith.addf %164, %165 : vector<2x8xf32>
    %c8_i32 = arith.constant 8 : i32
    %167 = vector.broadcast %c8_i32 : i32 to vector<2x1xi32>
    %168 = arith.subi %167, %0 : vector<2x1xi32>
    %c0_i32_89 = arith.constant 0 : i32
    %169 = vector.broadcast %c0_i32_89 : i32 to vector<2x1xi32>
    %170 = arith.cmpi sle, %168, %169 : vector<2x1xi32>
    %171 = vector.shape_cast %170 : vector<2x1xi1> to vector<2x1xi1>
    %172 = vector.broadcast %171 : vector<2x1xi1> to vector<2x8xi1>
    %173 = arith.select %172, %166, %103 : vector<2x8xi1>, vector<2x8xf32>
    %cst_90 = arith.constant dense<0.000000e+00> : vector<2x24xf32>
    %174 = tpu.matmul %137, %10, %cst_90 {dimension_numbers = #tpu.dot_dimension_numbers<[1], [0], [0], [1], [0, 0, 1, 1], [], []>} : vector<2x8xf32>, vector<8x24xf32>, vector<2x24xf32> -> vector<2x24xf32>
    %175 = arith.addf %174, %16 : vector<2x24xf32>
    %176 = vector.extract_strided_slice %53 {offsets = [0, 0], sizes = [2, 24], strides = [1, 1]} : vector<2x48xf32> to vector<2x24xf32>
    %177 = vector.extract_strided_slice %176 {offsets = [0, 0], sizes = [2, 8], strides = [1, 1]} : vector<2x24xf32> to vector<2x8xf32>
    %178 = vector.extract_strided_slice %175 {offsets = [0, 0], sizes = [2, 8], strides = [1, 1]} : vector<2x24xf32> to vector<2x8xf32>
    %179 = arith.addf %177, %178 : vector<2x8xf32>
    %180 = arith.negf %179 : vector<2x8xf32>
    %181 = math.exp %180 : vector<2x8xf32>
    %cst_91 = arith.constant 1.000000e+00 : f32
    %182 = vector.broadcast %cst_91 : f32 to vector<2x8xf32>
    %183 = arith.addf %182, %181 : vector<2x8xf32>
    %184 = arith.divf %182, %183 : vector<2x8xf32>
    %185 = vector.extract_strided_slice %176 {offsets = [0, 8], sizes = [2, 8], strides = [1, 1]} : vector<2x24xf32> to vector<2x8xf32>
    %186 = vector.extract_strided_slice %175 {offsets = [0, 8], sizes = [2, 8], strides = [1, 1]} : vector<2x24xf32> to vector<2x8xf32>
    %187 = arith.addf %185, %186 : vector<2x8xf32>
    %188 = arith.negf %187 : vector<2x8xf32>
    %189 = math.exp %188 : vector<2x8xf32>
    %cst_92 = arith.constant 1.000000e+00 : f32
    %190 = vector.broadcast %cst_92 : f32 to vector<2x8xf32>
    %191 = arith.addf %190, %189 : vector<2x8xf32>
    %192 = arith.divf %190, %191 : vector<2x8xf32>
    %193 = vector.extract_strided_slice %176 {offsets = [0, 16], sizes = [2, 8], strides = [1, 1]} : vector<2x24xf32> to vector<2x8xf32>
    %194 = vector.extract_strided_slice %175 {offsets = [0, 16], sizes = [2, 8], strides = [1, 1]} : vector<2x24xf32> to vector<2x8xf32>
    %195 = arith.mulf %184, %194 : vector<2x8xf32>
    %196 = arith.addf %193, %195 : vector<2x8xf32>
    %197 = math.tanh %196 : vector<2x8xf32>
    %cst_93 = arith.constant 1.000000e+00 : f32
    %198 = vector.broadcast %cst_93 : f32 to vector<2x8xf32>
    %199 = arith.subf %198, %192 : vector<2x8xf32>
    %200 = arith.mulf %199, %197 : vector<2x8xf32>
    %201 = arith.mulf %192, %137 : vector<2x8xf32>
    %202 = arith.addf %200, %201 : vector<2x8xf32>
    %c1_i32 = arith.constant 1 : i32
    %203 = vector.broadcast %c1_i32 : i32 to vector<2x1xi32>
    %204 = arith.cmpi sgt, %0, %203 : vector<2x1xi32>
    %205 = vector.shape_cast %204 : vector<2x1xi1> to vector<2x1xi1>
    %206 = vector.broadcast %205 : vector<2x1xi1> to vector<2x8xi1>
    %207 = arith.select %206, %202, %137 : vector<2x8xi1>, vector<2x8xf32>
    %cst_94 = arith.constant dense<0.000000e+00> : vector<2x24xf32>
    %208 = tpu.matmul %173, %12, %cst_94 {dimension_numbers = #tpu.dot_dimension_numbers<[1], [0], [0], [1], [0, 0, 1, 1], [], []>} : vector<2x8xf32>, vector<8x24xf32>, vector<2x24xf32> -> vector<2x24xf32>
    %209 = arith.addf %208, %20 : vector<2x24xf32>
    %210 = vector.extract_strided_slice %93 {offsets = [0, 24], sizes = [2, 24], strides = [1, 1]} : vector<2x48xf32> to vector<2x24xf32>
    %211 = vector.extract_strided_slice %210 {offsets = [0, 0], sizes = [2, 8], strides = [1, 1]} : vector<2x24xf32> to vector<2x8xf32>
    %212 = vector.extract_strided_slice %209 {offsets = [0, 0], sizes = [2, 8], strides = [1, 1]} : vector<2x24xf32> to vector<2x8xf32>
    %213 = arith.addf %211, %212 : vector<2x8xf32>
    %214 = arith.negf %213 : vector<2x8xf32>
    %215 = math.exp %214 : vector<2x8xf32>
    %cst_95 = arith.constant 1.000000e+00 : f32
    %216 = vector.broadcast %cst_95 : f32 to vector<2x8xf32>
    %217 = arith.addf %216, %215 : vector<2x8xf32>
    %218 = arith.divf %216, %217 : vector<2x8xf32>
    %219 = vector.extract_strided_slice %210 {offsets = [0, 8], sizes = [2, 8], strides = [1, 1]} : vector<2x24xf32> to vector<2x8xf32>
    %220 = vector.extract_strided_slice %209 {offsets = [0, 8], sizes = [2, 8], strides = [1, 1]} : vector<2x24xf32> to vector<2x8xf32>
    %221 = arith.addf %219, %220 : vector<2x8xf32>
    %222 = arith.negf %221 : vector<2x8xf32>
    %223 = math.exp %222 : vector<2x8xf32>
    %cst_96 = arith.constant 1.000000e+00 : f32
    %224 = vector.broadcast %cst_96 : f32 to vector<2x8xf32>
    %225 = arith.addf %224, %223 : vector<2x8xf32>
    %226 = arith.divf %224, %225 : vector<2x8xf32>
    %227 = vector.extract_strided_slice %210 {offsets = [0, 16], sizes = [2, 8], strides = [1, 1]} : vector<2x24xf32> to vector<2x8xf32>
    %228 = vector.extract_strided_slice %209 {offsets = [0, 16], sizes = [2, 8], strides = [1, 1]} : vector<2x24xf32> to vector<2x8xf32>
    %229 = arith.mulf %218, %228 : vector<2x8xf32>
    %230 = arith.addf %227, %229 : vector<2x8xf32>
    %231 = math.tanh %230 : vector<2x8xf32>
    %cst_97 = arith.constant 1.000000e+00 : f32
    %232 = vector.broadcast %cst_97 : f32 to vector<2x8xf32>
    %233 = arith.subf %232, %226 : vector<2x8xf32>
    %234 = arith.mulf %233, %231 : vector<2x8xf32>
    %235 = arith.mulf %226, %173 : vector<2x8xf32>
    %236 = arith.addf %234, %235 : vector<2x8xf32>
    %c8_i32_98 = arith.constant 8 : i32
    %237 = vector.broadcast %c8_i32_98 : i32 to vector<2x1xi32>
    %238 = arith.subi %237, %0 : vector<2x1xi32>
    %c1_i32_99 = arith.constant 1 : i32
    %239 = vector.broadcast %c1_i32_99 : i32 to vector<2x1xi32>
    %240 = arith.cmpi sle, %238, %239 : vector<2x1xi32>
    %241 = vector.shape_cast %240 : vector<2x1xi1> to vector<2x1xi1>
    %242 = vector.broadcast %241 : vector<2x1xi1> to vector<2x8xi1>
    %243 = arith.select %242, %236, %173 : vector<2x8xi1>, vector<2x8xf32>
    %cst_100 = arith.constant dense<0.000000e+00> : vector<2x24xf32>
    %244 = tpu.matmul %207, %10, %cst_100 {dimension_numbers = #tpu.dot_dimension_numbers<[1], [0], [0], [1], [0, 0, 1, 1], [], []>} : vector<2x8xf32>, vector<8x24xf32>, vector<2x24xf32> -> vector<2x24xf32>
    %245 = arith.addf %244, %16 : vector<2x24xf32>
    %246 = vector.extract_strided_slice %61 {offsets = [0, 0], sizes = [2, 24], strides = [1, 1]} : vector<2x48xf32> to vector<2x24xf32>
    %247 = vector.extract_strided_slice %246 {offsets = [0, 0], sizes = [2, 8], strides = [1, 1]} : vector<2x24xf32> to vector<2x8xf32>
    %248 = vector.extract_strided_slice %245 {offsets = [0, 0], sizes = [2, 8], strides = [1, 1]} : vector<2x24xf32> to vector<2x8xf32>
    %249 = arith.addf %247, %248 : vector<2x8xf32>
    %250 = arith.negf %249 : vector<2x8xf32>
    %251 = math.exp %250 : vector<2x8xf32>
    %cst_101 = arith.constant 1.000000e+00 : f32
    %252 = vector.broadcast %cst_101 : f32 to vector<2x8xf32>
    %253 = arith.addf %252, %251 : vector<2x8xf32>
    %254 = arith.divf %252, %253 : vector<2x8xf32>
    %255 = vector.extract_strided_slice %246 {offsets = [0, 8], sizes = [2, 8], strides = [1, 1]} : vector<2x24xf32> to vector<2x8xf32>
    %256 = vector.extract_strided_slice %245 {offsets = [0, 8], sizes = [2, 8], strides = [1, 1]} : vector<2x24xf32> to vector<2x8xf32>
    %257 = arith.addf %255, %256 : vector<2x8xf32>
    %258 = arith.negf %257 : vector<2x8xf32>
    %259 = math.exp %258 : vector<2x8xf32>
    %cst_102 = arith.constant 1.000000e+00 : f32
    %260 = vector.broadcast %cst_102 : f32 to vector<2x8xf32>
    %261 = arith.addf %260, %259 : vector<2x8xf32>
    %262 = arith.divf %260, %261 : vector<2x8xf32>
    %263 = vector.extract_strided_slice %246 {offsets = [0, 16], sizes = [2, 8], strides = [1, 1]} : vector<2x24xf32> to vector<2x8xf32>
    %264 = vector.extract_strided_slice %245 {offsets = [0, 16], sizes = [2, 8], strides = [1, 1]} : vector<2x24xf32> to vector<2x8xf32>
    %265 = arith.mulf %254, %264 : vector<2x8xf32>
    %266 = arith.addf %263, %265 : vector<2x8xf32>
    %267 = math.tanh %266 : vector<2x8xf32>
    %cst_103 = arith.constant 1.000000e+00 : f32
    %268 = vector.broadcast %cst_103 : f32 to vector<2x8xf32>
    %269 = arith.subf %268, %262 : vector<2x8xf32>
    %270 = arith.mulf %269, %267 : vector<2x8xf32>
    %271 = arith.mulf %262, %207 : vector<2x8xf32>
    %272 = arith.addf %270, %271 : vector<2x8xf32>
    %c2_i32 = arith.constant 2 : i32
    %273 = vector.broadcast %c2_i32 : i32 to vector<2x1xi32>
    %274 = arith.cmpi sgt, %0, %273 : vector<2x1xi32>
    %275 = vector.shape_cast %274 : vector<2x1xi1> to vector<2x1xi1>
    %276 = vector.broadcast %275 : vector<2x1xi1> to vector<2x8xi1>
    %277 = arith.select %276, %272, %207 : vector<2x8xi1>, vector<2x8xf32>
    %cst_104 = arith.constant dense<0.000000e+00> : vector<2x24xf32>
    %278 = tpu.matmul %243, %12, %cst_104 {dimension_numbers = #tpu.dot_dimension_numbers<[1], [0], [0], [1], [0, 0, 1, 1], [], []>} : vector<2x8xf32>, vector<8x24xf32>, vector<2x24xf32> -> vector<2x24xf32>
    %279 = arith.addf %278, %20 : vector<2x24xf32>
    %280 = vector.extract_strided_slice %85 {offsets = [0, 24], sizes = [2, 24], strides = [1, 1]} : vector<2x48xf32> to vector<2x24xf32>
    %281 = vector.extract_strided_slice %280 {offsets = [0, 0], sizes = [2, 8], strides = [1, 1]} : vector<2x24xf32> to vector<2x8xf32>
    %282 = vector.extract_strided_slice %279 {offsets = [0, 0], sizes = [2, 8], strides = [1, 1]} : vector<2x24xf32> to vector<2x8xf32>
    %283 = arith.addf %281, %282 : vector<2x8xf32>
    %284 = arith.negf %283 : vector<2x8xf32>
    %285 = math.exp %284 : vector<2x8xf32>
    %cst_105 = arith.constant 1.000000e+00 : f32
    %286 = vector.broadcast %cst_105 : f32 to vector<2x8xf32>
    %287 = arith.addf %286, %285 : vector<2x8xf32>
    %288 = arith.divf %286, %287 : vector<2x8xf32>
    %289 = vector.extract_strided_slice %280 {offsets = [0, 8], sizes = [2, 8], strides = [1, 1]} : vector<2x24xf32> to vector<2x8xf32>
    %290 = vector.extract_strided_slice %279 {offsets = [0, 8], sizes = [2, 8], strides = [1, 1]} : vector<2x24xf32> to vector<2x8xf32>
    %291 = arith.addf %289, %290 : vector<2x8xf32>
    %292 = arith.negf %291 : vector<2x8xf32>
    %293 = math.exp %292 : vector<2x8xf32>
    %cst_106 = arith.constant 1.000000e+00 : f32
    %294 = vector.broadcast %cst_106 : f32 to vector<2x8xf32>
    %295 = arith.addf %294, %293 : vector<2x8xf32>
    %296 = arith.divf %294, %295 : vector<2x8xf32>
    %297 = vector.extract_strided_slice %280 {offsets = [0, 16], sizes = [2, 8], strides = [1, 1]} : vector<2x24xf32> to vector<2x8xf32>
    %298 = vector.extract_strided_slice %279 {offsets = [0, 16], sizes = [2, 8], strides = [1, 1]} : vector<2x24xf32> to vector<2x8xf32>
    %299 = arith.mulf %288, %298 : vector<2x8xf32>
    %300 = arith.addf %297, %299 : vector<2x8xf32>
    %301 = math.tanh %300 : vector<2x8xf32>
    %cst_107 = arith.constant 1.000000e+00 : f32
    %302 = vector.broadcast %cst_107 : f32 to vector<2x8xf32>
    %303 = arith.subf %302, %296 : vector<2x8xf32>
    %304 = arith.mulf %303, %301 : vector<2x8xf32>
    %305 = arith.mulf %296, %243 : vector<2x8xf32>
    %306 = arith.addf %304, %305 : vector<2x8xf32>
    %c8_i32_108 = arith.constant 8 : i32
    %307 = vector.broadcast %c8_i32_108 : i32 to vector<2x1xi32>
    %308 = arith.subi %307, %0 : vector<2x1xi32>
    %c2_i32_109 = arith.constant 2 : i32
    %309 = vector.broadcast %c2_i32_109 : i32 to vector<2x1xi32>
    %310 = arith.cmpi sle, %308, %309 : vector<2x1xi32>
    %311 = vector.shape_cast %310 : vector<2x1xi1> to vector<2x1xi1>
    %312 = vector.broadcast %311 : vector<2x1xi1> to vector<2x8xi1>
    %313 = arith.select %312, %306, %243 : vector<2x8xi1>, vector<2x8xf32>
    %cst_110 = arith.constant dense<0.000000e+00> : vector<2x24xf32>
    %314 = tpu.matmul %277, %10, %cst_110 {dimension_numbers = #tpu.dot_dimension_numbers<[1], [0], [0], [1], [0, 0, 1, 1], [], []>} : vector<2x8xf32>, vector<8x24xf32>, vector<2x24xf32> -> vector<2x24xf32>
    %315 = arith.addf %314, %16 : vector<2x24xf32>
    %316 = vector.extract_strided_slice %69 {offsets = [0, 0], sizes = [2, 24], strides = [1, 1]} : vector<2x48xf32> to vector<2x24xf32>
    %317 = vector.extract_strided_slice %316 {offsets = [0, 0], sizes = [2, 8], strides = [1, 1]} : vector<2x24xf32> to vector<2x8xf32>
    %318 = vector.extract_strided_slice %315 {offsets = [0, 0], sizes = [2, 8], strides = [1, 1]} : vector<2x24xf32> to vector<2x8xf32>
    %319 = arith.addf %317, %318 : vector<2x8xf32>
    %320 = arith.negf %319 : vector<2x8xf32>
    %321 = math.exp %320 : vector<2x8xf32>
    %cst_111 = arith.constant 1.000000e+00 : f32
    %322 = vector.broadcast %cst_111 : f32 to vector<2x8xf32>
    %323 = arith.addf %322, %321 : vector<2x8xf32>
    %324 = arith.divf %322, %323 : vector<2x8xf32>
    %325 = vector.extract_strided_slice %316 {offsets = [0, 8], sizes = [2, 8], strides = [1, 1]} : vector<2x24xf32> to vector<2x8xf32>
    %326 = vector.extract_strided_slice %315 {offsets = [0, 8], sizes = [2, 8], strides = [1, 1]} : vector<2x24xf32> to vector<2x8xf32>
    %327 = arith.addf %325, %326 : vector<2x8xf32>
    %328 = arith.negf %327 : vector<2x8xf32>
    %329 = math.exp %328 : vector<2x8xf32>
    %cst_112 = arith.constant 1.000000e+00 : f32
    %330 = vector.broadcast %cst_112 : f32 to vector<2x8xf32>
    %331 = arith.addf %330, %329 : vector<2x8xf32>
    %332 = arith.divf %330, %331 : vector<2x8xf32>
    %333 = vector.extract_strided_slice %316 {offsets = [0, 16], sizes = [2, 8], strides = [1, 1]} : vector<2x24xf32> to vector<2x8xf32>
    %334 = vector.extract_strided_slice %315 {offsets = [0, 16], sizes = [2, 8], strides = [1, 1]} : vector<2x24xf32> to vector<2x8xf32>
    %335 = arith.mulf %324, %334 : vector<2x8xf32>
    %336 = arith.addf %333, %335 : vector<2x8xf32>
    %337 = math.tanh %336 : vector<2x8xf32>
    %cst_113 = arith.constant 1.000000e+00 : f32
    %338 = vector.broadcast %cst_113 : f32 to vector<2x8xf32>
    %339 = arith.subf %338, %332 : vector<2x8xf32>
    %340 = arith.mulf %339, %337 : vector<2x8xf32>
    %341 = arith.mulf %332, %277 : vector<2x8xf32>
    %342 = arith.addf %340, %341 : vector<2x8xf32>
    %c3_i32 = arith.constant 3 : i32
    %343 = vector.broadcast %c3_i32 : i32 to vector<2x1xi32>
    %344 = arith.cmpi sgt, %0, %343 : vector<2x1xi32>
    %345 = vector.shape_cast %344 : vector<2x1xi1> to vector<2x1xi1>
    %346 = vector.broadcast %345 : vector<2x1xi1> to vector<2x8xi1>
    %347 = arith.select %346, %342, %277 : vector<2x8xi1>, vector<2x8xf32>
    %cst_114 = arith.constant dense<0.000000e+00> : vector<2x24xf32>
    %348 = tpu.matmul %313, %12, %cst_114 {dimension_numbers = #tpu.dot_dimension_numbers<[1], [0], [0], [1], [0, 0, 1, 1], [], []>} : vector<2x8xf32>, vector<8x24xf32>, vector<2x24xf32> -> vector<2x24xf32>
    %349 = arith.addf %348, %20 : vector<2x24xf32>
    %350 = vector.extract_strided_slice %77 {offsets = [0, 24], sizes = [2, 24], strides = [1, 1]} : vector<2x48xf32> to vector<2x24xf32>
    %351 = vector.extract_strided_slice %350 {offsets = [0, 0], sizes = [2, 8], strides = [1, 1]} : vector<2x24xf32> to vector<2x8xf32>
    %352 = vector.extract_strided_slice %349 {offsets = [0, 0], sizes = [2, 8], strides = [1, 1]} : vector<2x24xf32> to vector<2x8xf32>
    %353 = arith.addf %351, %352 : vector<2x8xf32>
    %354 = arith.negf %353 : vector<2x8xf32>
    %355 = math.exp %354 : vector<2x8xf32>
    %cst_115 = arith.constant 1.000000e+00 : f32
    %356 = vector.broadcast %cst_115 : f32 to vector<2x8xf32>
    %357 = arith.addf %356, %355 : vector<2x8xf32>
    %358 = arith.divf %356, %357 : vector<2x8xf32>
    %359 = vector.extract_strided_slice %350 {offsets = [0, 8], sizes = [2, 8], strides = [1, 1]} : vector<2x24xf32> to vector<2x8xf32>
    %360 = vector.extract_strided_slice %349 {offsets = [0, 8], sizes = [2, 8], strides = [1, 1]} : vector<2x24xf32> to vector<2x8xf32>
    %361 = arith.addf %359, %360 : vector<2x8xf32>
    %362 = arith.negf %361 : vector<2x8xf32>
    %363 = math.exp %362 : vector<2x8xf32>
    %cst_116 = arith.constant 1.000000e+00 : f32
    %364 = vector.broadcast %cst_116 : f32 to vector<2x8xf32>
    %365 = arith.addf %364, %363 : vector<2x8xf32>
    %366 = arith.divf %364, %365 : vector<2x8xf32>
    %367 = vector.extract_strided_slice %350 {offsets = [0, 16], sizes = [2, 8], strides = [1, 1]} : vector<2x24xf32> to vector<2x8xf32>
    %368 = vector.extract_strided_slice %349 {offsets = [0, 16], sizes = [2, 8], strides = [1, 1]} : vector<2x24xf32> to vector<2x8xf32>
    %369 = arith.mulf %358, %368 : vector<2x8xf32>
    %370 = arith.addf %367, %369 : vector<2x8xf32>
    %371 = math.tanh %370 : vector<2x8xf32>
    %cst_117 = arith.constant 1.000000e+00 : f32
    %372 = vector.broadcast %cst_117 : f32 to vector<2x8xf32>
    %373 = arith.subf %372, %366 : vector<2x8xf32>
    %374 = arith.mulf %373, %371 : vector<2x8xf32>
    %375 = arith.mulf %366, %313 : vector<2x8xf32>
    %376 = arith.addf %374, %375 : vector<2x8xf32>
    %c8_i32_118 = arith.constant 8 : i32
    %377 = vector.broadcast %c8_i32_118 : i32 to vector<2x1xi32>
    %378 = arith.subi %377, %0 : vector<2x1xi32>
    %c3_i32_119 = arith.constant 3 : i32
    %379 = vector.broadcast %c3_i32_119 : i32 to vector<2x1xi32>
    %380 = arith.cmpi sle, %378, %379 : vector<2x1xi32>
    %381 = vector.shape_cast %380 : vector<2x1xi1> to vector<2x1xi1>
    %382 = vector.broadcast %381 : vector<2x1xi1> to vector<2x8xi1>
    %383 = arith.select %382, %376, %313 : vector<2x8xi1>, vector<2x8xf32>
    %cst_120 = arith.constant dense<0.000000e+00> : vector<2x24xf32>
    %384 = tpu.matmul %347, %10, %cst_120 {dimension_numbers = #tpu.dot_dimension_numbers<[1], [0], [0], [1], [0, 0, 1, 1], [], []>} : vector<2x8xf32>, vector<8x24xf32>, vector<2x24xf32> -> vector<2x24xf32>
    %385 = arith.addf %384, %16 : vector<2x24xf32>
    %386 = vector.extract_strided_slice %77 {offsets = [0, 0], sizes = [2, 24], strides = [1, 1]} : vector<2x48xf32> to vector<2x24xf32>
    %387 = vector.extract_strided_slice %386 {offsets = [0, 0], sizes = [2, 8], strides = [1, 1]} : vector<2x24xf32> to vector<2x8xf32>
    %388 = vector.extract_strided_slice %385 {offsets = [0, 0], sizes = [2, 8], strides = [1, 1]} : vector<2x24xf32> to vector<2x8xf32>
    %389 = arith.addf %387, %388 : vector<2x8xf32>
    %390 = arith.negf %389 : vector<2x8xf32>
    %391 = math.exp %390 : vector<2x8xf32>
    %cst_121 = arith.constant 1.000000e+00 : f32
    %392 = vector.broadcast %cst_121 : f32 to vector<2x8xf32>
    %393 = arith.addf %392, %391 : vector<2x8xf32>
    %394 = arith.divf %392, %393 : vector<2x8xf32>
    %395 = vector.extract_strided_slice %386 {offsets = [0, 8], sizes = [2, 8], strides = [1, 1]} : vector<2x24xf32> to vector<2x8xf32>
    %396 = vector.extract_strided_slice %385 {offsets = [0, 8], sizes = [2, 8], strides = [1, 1]} : vector<2x24xf32> to vector<2x8xf32>
    %397 = arith.addf %395, %396 : vector<2x8xf32>
    %398 = arith.negf %397 : vector<2x8xf32>
    %399 = math.exp %398 : vector<2x8xf32>
    %cst_122 = arith.constant 1.000000e+00 : f32
    %400 = vector.broadcast %cst_122 : f32 to vector<2x8xf32>
    %401 = arith.addf %400, %399 : vector<2x8xf32>
    %402 = arith.divf %400, %401 : vector<2x8xf32>
    %403 = vector.extract_strided_slice %386 {offsets = [0, 16], sizes = [2, 8], strides = [1, 1]} : vector<2x24xf32> to vector<2x8xf32>
    %404 = vector.extract_strided_slice %385 {offsets = [0, 16], sizes = [2, 8], strides = [1, 1]} : vector<2x24xf32> to vector<2x8xf32>
    %405 = arith.mulf %394, %404 : vector<2x8xf32>
    %406 = arith.addf %403, %405 : vector<2x8xf32>
    %407 = math.tanh %406 : vector<2x8xf32>
    %cst_123 = arith.constant 1.000000e+00 : f32
    %408 = vector.broadcast %cst_123 : f32 to vector<2x8xf32>
    %409 = arith.subf %408, %402 : vector<2x8xf32>
    %410 = arith.mulf %409, %407 : vector<2x8xf32>
    %411 = arith.mulf %402, %347 : vector<2x8xf32>
    %412 = arith.addf %410, %411 : vector<2x8xf32>
    %c4_i32 = arith.constant 4 : i32
    %413 = vector.broadcast %c4_i32 : i32 to vector<2x1xi32>
    %414 = arith.cmpi sgt, %0, %413 : vector<2x1xi32>
    %415 = vector.shape_cast %414 : vector<2x1xi1> to vector<2x1xi1>
    %416 = vector.broadcast %415 : vector<2x1xi1> to vector<2x8xi1>
    %417 = arith.select %416, %412, %347 : vector<2x8xi1>, vector<2x8xf32>
    %cst_124 = arith.constant dense<0.000000e+00> : vector<2x24xf32>
    %418 = tpu.matmul %383, %12, %cst_124 {dimension_numbers = #tpu.dot_dimension_numbers<[1], [0], [0], [1], [0, 0, 1, 1], [], []>} : vector<2x8xf32>, vector<8x24xf32>, vector<2x24xf32> -> vector<2x24xf32>
    %419 = arith.addf %418, %20 : vector<2x24xf32>
    %420 = vector.extract_strided_slice %69 {offsets = [0, 24], sizes = [2, 24], strides = [1, 1]} : vector<2x48xf32> to vector<2x24xf32>
    %421 = vector.extract_strided_slice %420 {offsets = [0, 0], sizes = [2, 8], strides = [1, 1]} : vector<2x24xf32> to vector<2x8xf32>
    %422 = vector.extract_strided_slice %419 {offsets = [0, 0], sizes = [2, 8], strides = [1, 1]} : vector<2x24xf32> to vector<2x8xf32>
    %423 = arith.addf %421, %422 : vector<2x8xf32>
    %424 = arith.negf %423 : vector<2x8xf32>
    %425 = math.exp %424 : vector<2x8xf32>
    %cst_125 = arith.constant 1.000000e+00 : f32
    %426 = vector.broadcast %cst_125 : f32 to vector<2x8xf32>
    %427 = arith.addf %426, %425 : vector<2x8xf32>
    %428 = arith.divf %426, %427 : vector<2x8xf32>
    %429 = vector.extract_strided_slice %420 {offsets = [0, 8], sizes = [2, 8], strides = [1, 1]} : vector<2x24xf32> to vector<2x8xf32>
    %430 = vector.extract_strided_slice %419 {offsets = [0, 8], sizes = [2, 8], strides = [1, 1]} : vector<2x24xf32> to vector<2x8xf32>
    %431 = arith.addf %429, %430 : vector<2x8xf32>
    %432 = arith.negf %431 : vector<2x8xf32>
    %433 = math.exp %432 : vector<2x8xf32>
    %cst_126 = arith.constant 1.000000e+00 : f32
    %434 = vector.broadcast %cst_126 : f32 to vector<2x8xf32>
    %435 = arith.addf %434, %433 : vector<2x8xf32>
    %436 = arith.divf %434, %435 : vector<2x8xf32>
    %437 = vector.extract_strided_slice %420 {offsets = [0, 16], sizes = [2, 8], strides = [1, 1]} : vector<2x24xf32> to vector<2x8xf32>
    %438 = vector.extract_strided_slice %419 {offsets = [0, 16], sizes = [2, 8], strides = [1, 1]} : vector<2x24xf32> to vector<2x8xf32>
    %439 = arith.mulf %428, %438 : vector<2x8xf32>
    %440 = arith.addf %437, %439 : vector<2x8xf32>
    %441 = math.tanh %440 : vector<2x8xf32>
    %cst_127 = arith.constant 1.000000e+00 : f32
    %442 = vector.broadcast %cst_127 : f32 to vector<2x8xf32>
    %443 = arith.subf %442, %436 : vector<2x8xf32>
    %444 = arith.mulf %443, %441 : vector<2x8xf32>
    %445 = arith.mulf %436, %383 : vector<2x8xf32>
    %446 = arith.addf %444, %445 : vector<2x8xf32>
    %c8_i32_128 = arith.constant 8 : i32
    %447 = vector.broadcast %c8_i32_128 : i32 to vector<2x1xi32>
    %448 = arith.subi %447, %0 : vector<2x1xi32>
    %c4_i32_129 = arith.constant 4 : i32
    %449 = vector.broadcast %c4_i32_129 : i32 to vector<2x1xi32>
    %450 = arith.cmpi sle, %448, %449 : vector<2x1xi32>
    %451 = vector.shape_cast %450 : vector<2x1xi1> to vector<2x1xi1>
    %452 = vector.broadcast %451 : vector<2x1xi1> to vector<2x8xi1>
    %453 = arith.select %452, %446, %383 : vector<2x8xi1>, vector<2x8xf32>
    %cst_130 = arith.constant dense<0.000000e+00> : vector<2x24xf32>
    %454 = tpu.matmul %417, %10, %cst_130 {dimension_numbers = #tpu.dot_dimension_numbers<[1], [0], [0], [1], [0, 0, 1, 1], [], []>} : vector<2x8xf32>, vector<8x24xf32>, vector<2x24xf32> -> vector<2x24xf32>
    %455 = arith.addf %454, %16 : vector<2x24xf32>
    %456 = vector.extract_strided_slice %85 {offsets = [0, 0], sizes = [2, 24], strides = [1, 1]} : vector<2x48xf32> to vector<2x24xf32>
    %457 = vector.extract_strided_slice %456 {offsets = [0, 0], sizes = [2, 8], strides = [1, 1]} : vector<2x24xf32> to vector<2x8xf32>
    %458 = vector.extract_strided_slice %455 {offsets = [0, 0], sizes = [2, 8], strides = [1, 1]} : vector<2x24xf32> to vector<2x8xf32>
    %459 = arith.addf %457, %458 : vector<2x8xf32>
    %460 = arith.negf %459 : vector<2x8xf32>
    %461 = math.exp %460 : vector<2x8xf32>
    %cst_131 = arith.constant 1.000000e+00 : f32
    %462 = vector.broadcast %cst_131 : f32 to vector<2x8xf32>
    %463 = arith.addf %462, %461 : vector<2x8xf32>
    %464 = arith.divf %462, %463 : vector<2x8xf32>
    %465 = vector.extract_strided_slice %456 {offsets = [0, 8], sizes = [2, 8], strides = [1, 1]} : vector<2x24xf32> to vector<2x8xf32>
    %466 = vector.extract_strided_slice %455 {offsets = [0, 8], sizes = [2, 8], strides = [1, 1]} : vector<2x24xf32> to vector<2x8xf32>
    %467 = arith.addf %465, %466 : vector<2x8xf32>
    %468 = arith.negf %467 : vector<2x8xf32>
    %469 = math.exp %468 : vector<2x8xf32>
    %cst_132 = arith.constant 1.000000e+00 : f32
    %470 = vector.broadcast %cst_132 : f32 to vector<2x8xf32>
    %471 = arith.addf %470, %469 : vector<2x8xf32>
    %472 = arith.divf %470, %471 : vector<2x8xf32>
    %473 = vector.extract_strided_slice %456 {offsets = [0, 16], sizes = [2, 8], strides = [1, 1]} : vector<2x24xf32> to vector<2x8xf32>
    %474 = vector.extract_strided_slice %455 {offsets = [0, 16], sizes = [2, 8], strides = [1, 1]} : vector<2x24xf32> to vector<2x8xf32>
    %475 = arith.mulf %464, %474 : vector<2x8xf32>
    %476 = arith.addf %473, %475 : vector<2x8xf32>
    %477 = math.tanh %476 : vector<2x8xf32>
    %cst_133 = arith.constant 1.000000e+00 : f32
    %478 = vector.broadcast %cst_133 : f32 to vector<2x8xf32>
    %479 = arith.subf %478, %472 : vector<2x8xf32>
    %480 = arith.mulf %479, %477 : vector<2x8xf32>
    %481 = arith.mulf %472, %417 : vector<2x8xf32>
    %482 = arith.addf %480, %481 : vector<2x8xf32>
    %c5_i32 = arith.constant 5 : i32
    %483 = vector.broadcast %c5_i32 : i32 to vector<2x1xi32>
    %484 = arith.cmpi sgt, %0, %483 : vector<2x1xi32>
    %485 = vector.shape_cast %484 : vector<2x1xi1> to vector<2x1xi1>
    %486 = vector.broadcast %485 : vector<2x1xi1> to vector<2x8xi1>
    %487 = arith.select %486, %482, %417 : vector<2x8xi1>, vector<2x8xf32>
    %cst_134 = arith.constant dense<0.000000e+00> : vector<2x24xf32>
    %488 = tpu.matmul %453, %12, %cst_134 {dimension_numbers = #tpu.dot_dimension_numbers<[1], [0], [0], [1], [0, 0, 1, 1], [], []>} : vector<2x8xf32>, vector<8x24xf32>, vector<2x24xf32> -> vector<2x24xf32>
    %489 = arith.addf %488, %20 : vector<2x24xf32>
    %490 = vector.extract_strided_slice %61 {offsets = [0, 24], sizes = [2, 24], strides = [1, 1]} : vector<2x48xf32> to vector<2x24xf32>
    %491 = vector.extract_strided_slice %490 {offsets = [0, 0], sizes = [2, 8], strides = [1, 1]} : vector<2x24xf32> to vector<2x8xf32>
    %492 = vector.extract_strided_slice %489 {offsets = [0, 0], sizes = [2, 8], strides = [1, 1]} : vector<2x24xf32> to vector<2x8xf32>
    %493 = arith.addf %491, %492 : vector<2x8xf32>
    %494 = arith.negf %493 : vector<2x8xf32>
    %495 = math.exp %494 : vector<2x8xf32>
    %cst_135 = arith.constant 1.000000e+00 : f32
    %496 = vector.broadcast %cst_135 : f32 to vector<2x8xf32>
    %497 = arith.addf %496, %495 : vector<2x8xf32>
    %498 = arith.divf %496, %497 : vector<2x8xf32>
    %499 = vector.extract_strided_slice %490 {offsets = [0, 8], sizes = [2, 8], strides = [1, 1]} : vector<2x24xf32> to vector<2x8xf32>
    %500 = vector.extract_strided_slice %489 {offsets = [0, 8], sizes = [2, 8], strides = [1, 1]} : vector<2x24xf32> to vector<2x8xf32>
    %501 = arith.addf %499, %500 : vector<2x8xf32>
    %502 = arith.negf %501 : vector<2x8xf32>
    %503 = math.exp %502 : vector<2x8xf32>
    %cst_136 = arith.constant 1.000000e+00 : f32
    %504 = vector.broadcast %cst_136 : f32 to vector<2x8xf32>
    %505 = arith.addf %504, %503 : vector<2x8xf32>
    %506 = arith.divf %504, %505 : vector<2x8xf32>
    %507 = vector.extract_strided_slice %490 {offsets = [0, 16], sizes = [2, 8], strides = [1, 1]} : vector<2x24xf32> to vector<2x8xf32>
    %508 = vector.extract_strided_slice %489 {offsets = [0, 16], sizes = [2, 8], strides = [1, 1]} : vector<2x24xf32> to vector<2x8xf32>
    %509 = arith.mulf %498, %508 : vector<2x8xf32>
    %510 = arith.addf %507, %509 : vector<2x8xf32>
    %511 = math.tanh %510 : vector<2x8xf32>
    %cst_137 = arith.constant 1.000000e+00 : f32
    %512 = vector.broadcast %cst_137 : f32 to vector<2x8xf32>
    %513 = arith.subf %512, %506 : vector<2x8xf32>
    %514 = arith.mulf %513, %511 : vector<2x8xf32>
    %515 = arith.mulf %506, %453 : vector<2x8xf32>
    %516 = arith.addf %514, %515 : vector<2x8xf32>
    %c8_i32_138 = arith.constant 8 : i32
    %517 = vector.broadcast %c8_i32_138 : i32 to vector<2x1xi32>
    %518 = arith.subi %517, %0 : vector<2x1xi32>
    %c5_i32_139 = arith.constant 5 : i32
    %519 = vector.broadcast %c5_i32_139 : i32 to vector<2x1xi32>
    %520 = arith.cmpi sle, %518, %519 : vector<2x1xi32>
    %521 = vector.shape_cast %520 : vector<2x1xi1> to vector<2x1xi1>
    %522 = vector.broadcast %521 : vector<2x1xi1> to vector<2x8xi1>
    %523 = arith.select %522, %516, %453 : vector<2x8xi1>, vector<2x8xf32>
    %cst_140 = arith.constant dense<0.000000e+00> : vector<2x24xf32>
    %524 = tpu.matmul %487, %10, %cst_140 {dimension_numbers = #tpu.dot_dimension_numbers<[1], [0], [0], [1], [0, 0, 1, 1], [], []>} : vector<2x8xf32>, vector<8x24xf32>, vector<2x24xf32> -> vector<2x24xf32>
    %525 = arith.addf %524, %16 : vector<2x24xf32>
    %526 = vector.extract_strided_slice %93 {offsets = [0, 0], sizes = [2, 24], strides = [1, 1]} : vector<2x48xf32> to vector<2x24xf32>
    %527 = vector.extract_strided_slice %526 {offsets = [0, 0], sizes = [2, 8], strides = [1, 1]} : vector<2x24xf32> to vector<2x8xf32>
    %528 = vector.extract_strided_slice %525 {offsets = [0, 0], sizes = [2, 8], strides = [1, 1]} : vector<2x24xf32> to vector<2x8xf32>
    %529 = arith.addf %527, %528 : vector<2x8xf32>
    %530 = arith.negf %529 : vector<2x8xf32>
    %531 = math.exp %530 : vector<2x8xf32>
    %cst_141 = arith.constant 1.000000e+00 : f32
    %532 = vector.broadcast %cst_141 : f32 to vector<2x8xf32>
    %533 = arith.addf %532, %531 : vector<2x8xf32>
    %534 = arith.divf %532, %533 : vector<2x8xf32>
    %535 = vector.extract_strided_slice %526 {offsets = [0, 8], sizes = [2, 8], strides = [1, 1]} : vector<2x24xf32> to vector<2x8xf32>
    %536 = vector.extract_strided_slice %525 {offsets = [0, 8], sizes = [2, 8], strides = [1, 1]} : vector<2x24xf32> to vector<2x8xf32>
    %537 = arith.addf %535, %536 : vector<2x8xf32>
    %538 = arith.negf %537 : vector<2x8xf32>
    %539 = math.exp %538 : vector<2x8xf32>
    %cst_142 = arith.constant 1.000000e+00 : f32
    %540 = vector.broadcast %cst_142 : f32 to vector<2x8xf32>
    %541 = arith.addf %540, %539 : vector<2x8xf32>
    %542 = arith.divf %540, %541 : vector<2x8xf32>
    %543 = vector.extract_strided_slice %526 {offsets = [0, 16], sizes = [2, 8], strides = [1, 1]} : vector<2x24xf32> to vector<2x8xf32>
    %544 = vector.extract_strided_slice %525 {offsets = [0, 16], sizes = [2, 8], strides = [1, 1]} : vector<2x24xf32> to vector<2x8xf32>
    %545 = arith.mulf %534, %544 : vector<2x8xf32>
    %546 = arith.addf %543, %545 : vector<2x8xf32>
    %547 = math.tanh %546 : vector<2x8xf32>
    %cst_143 = arith.constant 1.000000e+00 : f32
    %548 = vector.broadcast %cst_143 : f32 to vector<2x8xf32>
    %549 = arith.subf %548, %542 : vector<2x8xf32>
    %550 = arith.mulf %549, %547 : vector<2x8xf32>
    %551 = arith.mulf %542, %487 : vector<2x8xf32>
    %552 = arith.addf %550, %551 : vector<2x8xf32>
    %c6_i32 = arith.constant 6 : i32
    %553 = vector.broadcast %c6_i32 : i32 to vector<2x1xi32>
    %554 = arith.cmpi sgt, %0, %553 : vector<2x1xi32>
    %555 = vector.shape_cast %554 : vector<2x1xi1> to vector<2x1xi1>
    %556 = vector.broadcast %555 : vector<2x1xi1> to vector<2x8xi1>
    %557 = arith.select %556, %552, %487 : vector<2x8xi1>, vector<2x8xf32>
    %cst_144 = arith.constant dense<0.000000e+00> : vector<2x24xf32>
    %558 = tpu.matmul %523, %12, %cst_144 {dimension_numbers = #tpu.dot_dimension_numbers<[1], [0], [0], [1], [0, 0, 1, 1], [], []>} : vector<2x8xf32>, vector<8x24xf32>, vector<2x24xf32> -> vector<2x24xf32>
    %559 = arith.addf %558, %20 : vector<2x24xf32>
    %560 = vector.extract_strided_slice %53 {offsets = [0, 24], sizes = [2, 24], strides = [1, 1]} : vector<2x48xf32> to vector<2x24xf32>
    %561 = vector.extract_strided_slice %560 {offsets = [0, 0], sizes = [2, 8], strides = [1, 1]} : vector<2x24xf32> to vector<2x8xf32>
    %562 = vector.extract_strided_slice %559 {offsets = [0, 0], sizes = [2, 8], strides = [1, 1]} : vector<2x24xf32> to vector<2x8xf32>
    %563 = arith.addf %561, %562 : vector<2x8xf32>
    %564 = arith.negf %563 : vector<2x8xf32>
    %565 = math.exp %564 : vector<2x8xf32>
    %cst_145 = arith.constant 1.000000e+00 : f32
    %566 = vector.broadcast %cst_145 : f32 to vector<2x8xf32>
    %567 = arith.addf %566, %565 : vector<2x8xf32>
    %568 = arith.divf %566, %567 : vector<2x8xf32>
    %569 = vector.extract_strided_slice %560 {offsets = [0, 8], sizes = [2, 8], strides = [1, 1]} : vector<2x24xf32> to vector<2x8xf32>
    %570 = vector.extract_strided_slice %559 {offsets = [0, 8], sizes = [2, 8], strides = [1, 1]} : vector<2x24xf32> to vector<2x8xf32>
    %571 = arith.addf %569, %570 : vector<2x8xf32>
    %572 = arith.negf %571 : vector<2x8xf32>
    %573 = math.exp %572 : vector<2x8xf32>
    %cst_146 = arith.constant 1.000000e+00 : f32
    %574 = vector.broadcast %cst_146 : f32 to vector<2x8xf32>
    %575 = arith.addf %574, %573 : vector<2x8xf32>
    %576 = arith.divf %574, %575 : vector<2x8xf32>
    %577 = vector.extract_strided_slice %560 {offsets = [0, 16], sizes = [2, 8], strides = [1, 1]} : vector<2x24xf32> to vector<2x8xf32>
    %578 = vector.extract_strided_slice %559 {offsets = [0, 16], sizes = [2, 8], strides = [1, 1]} : vector<2x24xf32> to vector<2x8xf32>
    %579 = arith.mulf %568, %578 : vector<2x8xf32>
    %580 = arith.addf %577, %579 : vector<2x8xf32>
    %581 = math.tanh %580 : vector<2x8xf32>
    %cst_147 = arith.constant 1.000000e+00 : f32
    %582 = vector.broadcast %cst_147 : f32 to vector<2x8xf32>
    %583 = arith.subf %582, %576 : vector<2x8xf32>
    %584 = arith.mulf %583, %581 : vector<2x8xf32>
    %585 = arith.mulf %576, %523 : vector<2x8xf32>
    %586 = arith.addf %584, %585 : vector<2x8xf32>
    %c8_i32_148 = arith.constant 8 : i32
    %587 = vector.broadcast %c8_i32_148 : i32 to vector<2x1xi32>
    %588 = arith.subi %587, %0 : vector<2x1xi32>
    %c6_i32_149 = arith.constant 6 : i32
    %589 = vector.broadcast %c6_i32_149 : i32 to vector<2x1xi32>
    %590 = arith.cmpi sle, %588, %589 : vector<2x1xi32>
    %591 = vector.shape_cast %590 : vector<2x1xi1> to vector<2x1xi1>
    %592 = vector.broadcast %591 : vector<2x1xi1> to vector<2x8xi1>
    %593 = arith.select %592, %586, %523 : vector<2x8xi1>, vector<2x8xf32>
    %cst_150 = arith.constant dense<0.000000e+00> : vector<2x24xf32>
    %594 = tpu.matmul %557, %10, %cst_150 {dimension_numbers = #tpu.dot_dimension_numbers<[1], [0], [0], [1], [0, 0, 1, 1], [], []>} : vector<2x8xf32>, vector<8x24xf32>, vector<2x24xf32> -> vector<2x24xf32>
    %595 = arith.addf %594, %16 : vector<2x24xf32>
    %596 = vector.extract_strided_slice %101 {offsets = [0, 0], sizes = [2, 24], strides = [1, 1]} : vector<2x48xf32> to vector<2x24xf32>
    %597 = vector.extract_strided_slice %596 {offsets = [0, 0], sizes = [2, 8], strides = [1, 1]} : vector<2x24xf32> to vector<2x8xf32>
    %598 = vector.extract_strided_slice %595 {offsets = [0, 0], sizes = [2, 8], strides = [1, 1]} : vector<2x24xf32> to vector<2x8xf32>
    %599 = arith.addf %597, %598 : vector<2x8xf32>
    %600 = arith.negf %599 : vector<2x8xf32>
    %601 = math.exp %600 : vector<2x8xf32>
    %cst_151 = arith.constant 1.000000e+00 : f32
    %602 = vector.broadcast %cst_151 : f32 to vector<2x8xf32>
    %603 = arith.addf %602, %601 : vector<2x8xf32>
    %604 = arith.divf %602, %603 : vector<2x8xf32>
    %605 = vector.extract_strided_slice %596 {offsets = [0, 8], sizes = [2, 8], strides = [1, 1]} : vector<2x24xf32> to vector<2x8xf32>
    %606 = vector.extract_strided_slice %595 {offsets = [0, 8], sizes = [2, 8], strides = [1, 1]} : vector<2x24xf32> to vector<2x8xf32>
    %607 = arith.addf %605, %606 : vector<2x8xf32>
    %608 = arith.negf %607 : vector<2x8xf32>
    %609 = math.exp %608 : vector<2x8xf32>
    %cst_152 = arith.constant 1.000000e+00 : f32
    %610 = vector.broadcast %cst_152 : f32 to vector<2x8xf32>
    %611 = arith.addf %610, %609 : vector<2x8xf32>
    %612 = arith.divf %610, %611 : vector<2x8xf32>
    %613 = vector.extract_strided_slice %596 {offsets = [0, 16], sizes = [2, 8], strides = [1, 1]} : vector<2x24xf32> to vector<2x8xf32>
    %614 = vector.extract_strided_slice %595 {offsets = [0, 16], sizes = [2, 8], strides = [1, 1]} : vector<2x24xf32> to vector<2x8xf32>
    %615 = arith.mulf %604, %614 : vector<2x8xf32>
    %616 = arith.addf %613, %615 : vector<2x8xf32>
    %617 = math.tanh %616 : vector<2x8xf32>
    %cst_153 = arith.constant 1.000000e+00 : f32
    %618 = vector.broadcast %cst_153 : f32 to vector<2x8xf32>
    %619 = arith.subf %618, %612 : vector<2x8xf32>
    %620 = arith.mulf %619, %617 : vector<2x8xf32>
    %621 = arith.mulf %612, %557 : vector<2x8xf32>
    %622 = arith.addf %620, %621 : vector<2x8xf32>
    %c7_i32 = arith.constant 7 : i32
    %623 = vector.broadcast %c7_i32 : i32 to vector<2x1xi32>
    %624 = arith.cmpi sgt, %0, %623 : vector<2x1xi32>
    %625 = vector.shape_cast %624 : vector<2x1xi1> to vector<2x1xi1>
    %626 = vector.broadcast %625 : vector<2x1xi1> to vector<2x8xi1>
    %627 = arith.select %626, %622, %557 : vector<2x8xi1>, vector<2x8xf32>
    %cst_154 = arith.constant dense<0.000000e+00> : vector<2x24xf32>
    %628 = tpu.matmul %593, %12, %cst_154 {dimension_numbers = #tpu.dot_dimension_numbers<[1], [0], [0], [1], [0, 0, 1, 1], [], []>} : vector<2x8xf32>, vector<8x24xf32>, vector<2x24xf32> -> vector<2x24xf32>
    %629 = arith.addf %628, %20 : vector<2x24xf32>
    %630 = vector.extract_strided_slice %45 {offsets = [0, 24], sizes = [2, 24], strides = [1, 1]} : vector<2x48xf32> to vector<2x24xf32>
    %631 = vector.extract_strided_slice %630 {offsets = [0, 0], sizes = [2, 8], strides = [1, 1]} : vector<2x24xf32> to vector<2x8xf32>
    %632 = vector.extract_strided_slice %629 {offsets = [0, 0], sizes = [2, 8], strides = [1, 1]} : vector<2x24xf32> to vector<2x8xf32>
    %633 = arith.addf %631, %632 : vector<2x8xf32>
    %634 = arith.negf %633 : vector<2x8xf32>
    %635 = math.exp %634 : vector<2x8xf32>
    %cst_155 = arith.constant 1.000000e+00 : f32
    %636 = vector.broadcast %cst_155 : f32 to vector<2x8xf32>
    %637 = arith.addf %636, %635 : vector<2x8xf32>
    %638 = arith.divf %636, %637 : vector<2x8xf32>
    %639 = vector.extract_strided_slice %630 {offsets = [0, 8], sizes = [2, 8], strides = [1, 1]} : vector<2x24xf32> to vector<2x8xf32>
    %640 = vector.extract_strided_slice %629 {offsets = [0, 8], sizes = [2, 8], strides = [1, 1]} : vector<2x24xf32> to vector<2x8xf32>
    %641 = arith.addf %639, %640 : vector<2x8xf32>
    %642 = arith.negf %641 : vector<2x8xf32>
    %643 = math.exp %642 : vector<2x8xf32>
    %cst_156 = arith.constant 1.000000e+00 : f32
    %644 = vector.broadcast %cst_156 : f32 to vector<2x8xf32>
    %645 = arith.addf %644, %643 : vector<2x8xf32>
    %646 = arith.divf %644, %645 : vector<2x8xf32>
    %647 = vector.extract_strided_slice %630 {offsets = [0, 16], sizes = [2, 8], strides = [1, 1]} : vector<2x24xf32> to vector<2x8xf32>
    %648 = vector.extract_strided_slice %629 {offsets = [0, 16], sizes = [2, 8], strides = [1, 1]} : vector<2x24xf32> to vector<2x8xf32>
    %649 = arith.mulf %638, %648 : vector<2x8xf32>
    %650 = arith.addf %647, %649 : vector<2x8xf32>
    %651 = math.tanh %650 : vector<2x8xf32>
    %cst_157 = arith.constant 1.000000e+00 : f32
    %652 = vector.broadcast %cst_157 : f32 to vector<2x8xf32>
    %653 = arith.subf %652, %646 : vector<2x8xf32>
    %654 = arith.mulf %653, %651 : vector<2x8xf32>
    %655 = arith.mulf %646, %593 : vector<2x8xf32>
    %656 = arith.addf %654, %655 : vector<2x8xf32>
    %c8_i32_158 = arith.constant 8 : i32
    %657 = vector.broadcast %c8_i32_158 : i32 to vector<2x1xi32>
    %658 = arith.subi %657, %0 : vector<2x1xi32>
    %c7_i32_159 = arith.constant 7 : i32
    %659 = vector.broadcast %c7_i32_159 : i32 to vector<2x1xi32>
    %660 = arith.cmpi sle, %658, %659 : vector<2x1xi32>
    %661 = vector.shape_cast %660 : vector<2x1xi1> to vector<2x1xi1>
    %662 = vector.broadcast %661 : vector<2x1xi1> to vector<2x8xi1>
    %663 = arith.select %662, %656, %593 : vector<2x8xi1>, vector<2x8xf32>
    %cst_160 = arith.constant dense<0.000000e+00> : vector<2x48xf32>
    %664 = tpu.matmul %137, %21, %cst_160 {dimension_numbers = #tpu.dot_dimension_numbers<[1], [0], [0], [1], [0, 0, 1, 1], [], []>} : vector<2x8xf32>, vector<8x48xf32>, vector<2x48xf32> -> vector<2x48xf32>
    %cst_161 = arith.constant dense<0.000000e+00> : vector<2x48xf32>
    %665 = tpu.matmul %663, %22, %cst_161 {dimension_numbers = #tpu.dot_dimension_numbers<[1], [0], [0], [1], [0, 0, 1, 1], [], []>} : vector<2x8xf32>, vector<8x48xf32>, vector<2x48xf32> -> vector<2x48xf32>
    %666 = arith.addf %664, %665 : vector<2x48xf32>
    %667 = arith.addf %666, %25 : vector<2x48xf32>
    %cst_162 = arith.constant dense<0.000000e+00> : vector<2x48xf32>
    %668 = tpu.matmul %207, %21, %cst_162 {dimension_numbers = #tpu.dot_dimension_numbers<[1], [0], [0], [1], [0, 0, 1, 1], [], []>} : vector<2x8xf32>, vector<8x48xf32>, vector<2x48xf32> -> vector<2x48xf32>
    %cst_163 = arith.constant dense<0.000000e+00> : vector<2x48xf32>
    %669 = tpu.matmul %593, %22, %cst_163 {dimension_numbers = #tpu.dot_dimension_numbers<[1], [0], [0], [1], [0, 0, 1, 1], [], []>} : vector<2x8xf32>, vector<8x48xf32>, vector<2x48xf32> -> vector<2x48xf32>
    %670 = arith.addf %668, %669 : vector<2x48xf32>
    %671 = arith.addf %670, %25 : vector<2x48xf32>
    %cst_164 = arith.constant dense<0.000000e+00> : vector<2x48xf32>
    %672 = tpu.matmul %277, %21, %cst_164 {dimension_numbers = #tpu.dot_dimension_numbers<[1], [0], [0], [1], [0, 0, 1, 1], [], []>} : vector<2x8xf32>, vector<8x48xf32>, vector<2x48xf32> -> vector<2x48xf32>
    %cst_165 = arith.constant dense<0.000000e+00> : vector<2x48xf32>
    %673 = tpu.matmul %523, %22, %cst_165 {dimension_numbers = #tpu.dot_dimension_numbers<[1], [0], [0], [1], [0, 0, 1, 1], [], []>} : vector<2x8xf32>, vector<8x48xf32>, vector<2x48xf32> -> vector<2x48xf32>
    %674 = arith.addf %672, %673 : vector<2x48xf32>
    %675 = arith.addf %674, %25 : vector<2x48xf32>
    %cst_166 = arith.constant dense<0.000000e+00> : vector<2x48xf32>
    %676 = tpu.matmul %347, %21, %cst_166 {dimension_numbers = #tpu.dot_dimension_numbers<[1], [0], [0], [1], [0, 0, 1, 1], [], []>} : vector<2x8xf32>, vector<8x48xf32>, vector<2x48xf32> -> vector<2x48xf32>
    %cst_167 = arith.constant dense<0.000000e+00> : vector<2x48xf32>
    %677 = tpu.matmul %453, %22, %cst_167 {dimension_numbers = #tpu.dot_dimension_numbers<[1], [0], [0], [1], [0, 0, 1, 1], [], []>} : vector<2x8xf32>, vector<8x48xf32>, vector<2x48xf32> -> vector<2x48xf32>
    %678 = arith.addf %676, %677 : vector<2x48xf32>
    %679 = arith.addf %678, %25 : vector<2x48xf32>
    %cst_168 = arith.constant dense<0.000000e+00> : vector<2x48xf32>
    %680 = tpu.matmul %417, %21, %cst_168 {dimension_numbers = #tpu.dot_dimension_numbers<[1], [0], [0], [1], [0, 0, 1, 1], [], []>} : vector<2x8xf32>, vector<8x48xf32>, vector<2x48xf32> -> vector<2x48xf32>
    %cst_169 = arith.constant dense<0.000000e+00> : vector<2x48xf32>
    %681 = tpu.matmul %383, %22, %cst_169 {dimension_numbers = #tpu.dot_dimension_numbers<[1], [0], [0], [1], [0, 0, 1, 1], [], []>} : vector<2x8xf32>, vector<8x48xf32>, vector<2x48xf32> -> vector<2x48xf32>
    %682 = arith.addf %680, %681 : vector<2x48xf32>
    %683 = arith.addf %682, %25 : vector<2x48xf32>
    %cst_170 = arith.constant dense<0.000000e+00> : vector<2x48xf32>
    %684 = tpu.matmul %487, %21, %cst_170 {dimension_numbers = #tpu.dot_dimension_numbers<[1], [0], [0], [1], [0, 0, 1, 1], [], []>} : vector<2x8xf32>, vector<8x48xf32>, vector<2x48xf32> -> vector<2x48xf32>
    %cst_171 = arith.constant dense<0.000000e+00> : vector<2x48xf32>
    %685 = tpu.matmul %313, %22, %cst_171 {dimension_numbers = #tpu.dot_dimension_numbers<[1], [0], [0], [1], [0, 0, 1, 1], [], []>} : vector<2x8xf32>, vector<8x48xf32>, vector<2x48xf32> -> vector<2x48xf32>
    %686 = arith.addf %684, %685 : vector<2x48xf32>
    %687 = arith.addf %686, %25 : vector<2x48xf32>
    %cst_172 = arith.constant dense<0.000000e+00> : vector<2x48xf32>
    %688 = tpu.matmul %557, %21, %cst_172 {dimension_numbers = #tpu.dot_dimension_numbers<[1], [0], [0], [1], [0, 0, 1, 1], [], []>} : vector<2x8xf32>, vector<8x48xf32>, vector<2x48xf32> -> vector<2x48xf32>
    %cst_173 = arith.constant dense<0.000000e+00> : vector<2x48xf32>
    %689 = tpu.matmul %243, %22, %cst_173 {dimension_numbers = #tpu.dot_dimension_numbers<[1], [0], [0], [1], [0, 0, 1, 1], [], []>} : vector<2x8xf32>, vector<8x48xf32>, vector<2x48xf32> -> vector<2x48xf32>
    %690 = arith.addf %688, %689 : vector<2x48xf32>
    %691 = arith.addf %690, %25 : vector<2x48xf32>
    %cst_174 = arith.constant dense<0.000000e+00> : vector<2x48xf32>
    %692 = tpu.matmul %627, %21, %cst_174 {dimension_numbers = #tpu.dot_dimension_numbers<[1], [0], [0], [1], [0, 0, 1, 1], [], []>} : vector<2x8xf32>, vector<8x48xf32>, vector<2x48xf32> -> vector<2x48xf32>
    %cst_175 = arith.constant dense<0.000000e+00> : vector<2x48xf32>
    %693 = tpu.matmul %173, %22, %cst_175 {dimension_numbers = #tpu.dot_dimension_numbers<[1], [0], [0], [1], [0, 0, 1, 1], [], []>} : vector<2x8xf32>, vector<8x48xf32>, vector<2x48xf32> -> vector<2x48xf32>
    %694 = arith.addf %692, %693 : vector<2x48xf32>
    %695 = arith.addf %694, %25 : vector<2x48xf32>
    %cst_176 = arith.constant 0.000000e+00 : f32
    %696 = vector.broadcast %cst_176 : f32 to vector<2x8xf32>
    %cst_177 = arith.constant 0.000000e+00 : f32
    %697 = vector.broadcast %cst_177 : f32 to vector<2x8xf32>
    %cst_178 = arith.constant dense<0.000000e+00> : vector<2x24xf32>
    %698 = tpu.matmul %696, %27, %cst_178 {dimension_numbers = #tpu.dot_dimension_numbers<[1], [0], [0], [1], [0, 0, 1, 1], [], []>} : vector<2x8xf32>, vector<8x24xf32>, vector<2x24xf32> -> vector<2x24xf32>
    %699 = arith.addf %698, %33 : vector<2x24xf32>
    %700 = vector.extract_strided_slice %667 {offsets = [0, 0], sizes = [2, 24], strides = [1, 1]} : vector<2x48xf32> to vector<2x24xf32>
    %701 = vector.extract_strided_slice %700 {offsets = [0, 0], sizes = [2, 8], strides = [1, 1]} : vector<2x24xf32> to vector<2x8xf32>
    %702 = vector.extract_strided_slice %699 {offsets = [0, 0], sizes = [2, 8], strides = [1, 1]} : vector<2x24xf32> to vector<2x8xf32>
    %703 = arith.addf %701, %702 : vector<2x8xf32>
    %704 = arith.negf %703 : vector<2x8xf32>
    %705 = math.exp %704 : vector<2x8xf32>
    %cst_179 = arith.constant 1.000000e+00 : f32
    %706 = vector.broadcast %cst_179 : f32 to vector<2x8xf32>
    %707 = arith.addf %706, %705 : vector<2x8xf32>
    %708 = arith.divf %706, %707 : vector<2x8xf32>
    %709 = vector.extract_strided_slice %700 {offsets = [0, 8], sizes = [2, 8], strides = [1, 1]} : vector<2x24xf32> to vector<2x8xf32>
    %710 = vector.extract_strided_slice %699 {offsets = [0, 8], sizes = [2, 8], strides = [1, 1]} : vector<2x24xf32> to vector<2x8xf32>
    %711 = arith.addf %709, %710 : vector<2x8xf32>
    %712 = arith.negf %711 : vector<2x8xf32>
    %713 = math.exp %712 : vector<2x8xf32>
    %cst_180 = arith.constant 1.000000e+00 : f32
    %714 = vector.broadcast %cst_180 : f32 to vector<2x8xf32>
    %715 = arith.addf %714, %713 : vector<2x8xf32>
    %716 = arith.divf %714, %715 : vector<2x8xf32>
    %717 = vector.extract_strided_slice %700 {offsets = [0, 16], sizes = [2, 8], strides = [1, 1]} : vector<2x24xf32> to vector<2x8xf32>
    %718 = vector.extract_strided_slice %699 {offsets = [0, 16], sizes = [2, 8], strides = [1, 1]} : vector<2x24xf32> to vector<2x8xf32>
    %719 = arith.mulf %708, %718 : vector<2x8xf32>
    %720 = arith.addf %717, %719 : vector<2x8xf32>
    %721 = math.tanh %720 : vector<2x8xf32>
    %cst_181 = arith.constant 1.000000e+00 : f32
    %722 = vector.broadcast %cst_181 : f32 to vector<2x8xf32>
    %723 = arith.subf %722, %716 : vector<2x8xf32>
    %724 = arith.mulf %723, %721 : vector<2x8xf32>
    %725 = arith.mulf %716, %696 : vector<2x8xf32>
    %726 = arith.addf %724, %725 : vector<2x8xf32>
    %c0_i32_182 = arith.constant 0 : i32
    %727 = vector.broadcast %c0_i32_182 : i32 to vector<2x1xi32>
    %728 = arith.cmpi sgt, %0, %727 : vector<2x1xi32>
    %729 = vector.shape_cast %728 : vector<2x1xi1> to vector<2x1xi1>
    %730 = vector.broadcast %729 : vector<2x1xi1> to vector<2x8xi1>
    %731 = arith.select %730, %726, %696 : vector<2x8xi1>, vector<2x8xf32>
    %cst_183 = arith.constant dense<0.000000e+00> : vector<2x24xf32>
    %732 = tpu.matmul %697, %29, %cst_183 {dimension_numbers = #tpu.dot_dimension_numbers<[1], [0], [0], [1], [0, 0, 1, 1], [], []>} : vector<2x8xf32>, vector<8x24xf32>, vector<2x24xf32> -> vector<2x24xf32>
    %733 = arith.addf %732, %37 : vector<2x24xf32>
    %734 = vector.extract_strided_slice %695 {offsets = [0, 24], sizes = [2, 24], strides = [1, 1]} : vector<2x48xf32> to vector<2x24xf32>
    %735 = vector.extract_strided_slice %734 {offsets = [0, 0], sizes = [2, 8], strides = [1, 1]} : vector<2x24xf32> to vector<2x8xf32>
    %736 = vector.extract_strided_slice %733 {offsets = [0, 0], sizes = [2, 8], strides = [1, 1]} : vector<2x24xf32> to vector<2x8xf32>
    %737 = arith.addf %735, %736 : vector<2x8xf32>
    %738 = arith.negf %737 : vector<2x8xf32>
    %739 = math.exp %738 : vector<2x8xf32>
    %cst_184 = arith.constant 1.000000e+00 : f32
    %740 = vector.broadcast %cst_184 : f32 to vector<2x8xf32>
    %741 = arith.addf %740, %739 : vector<2x8xf32>
    %742 = arith.divf %740, %741 : vector<2x8xf32>
    %743 = vector.extract_strided_slice %734 {offsets = [0, 8], sizes = [2, 8], strides = [1, 1]} : vector<2x24xf32> to vector<2x8xf32>
    %744 = vector.extract_strided_slice %733 {offsets = [0, 8], sizes = [2, 8], strides = [1, 1]} : vector<2x24xf32> to vector<2x8xf32>
    %745 = arith.addf %743, %744 : vector<2x8xf32>
    %746 = arith.negf %745 : vector<2x8xf32>
    %747 = math.exp %746 : vector<2x8xf32>
    %cst_185 = arith.constant 1.000000e+00 : f32
    %748 = vector.broadcast %cst_185 : f32 to vector<2x8xf32>
    %749 = arith.addf %748, %747 : vector<2x8xf32>
    %750 = arith.divf %748, %749 : vector<2x8xf32>
    %751 = vector.extract_strided_slice %734 {offsets = [0, 16], sizes = [2, 8], strides = [1, 1]} : vector<2x24xf32> to vector<2x8xf32>
    %752 = vector.extract_strided_slice %733 {offsets = [0, 16], sizes = [2, 8], strides = [1, 1]} : vector<2x24xf32> to vector<2x8xf32>
    %753 = arith.mulf %742, %752 : vector<2x8xf32>
    %754 = arith.addf %751, %753 : vector<2x8xf32>
    %755 = math.tanh %754 : vector<2x8xf32>
    %cst_186 = arith.constant 1.000000e+00 : f32
    %756 = vector.broadcast %cst_186 : f32 to vector<2x8xf32>
    %757 = arith.subf %756, %750 : vector<2x8xf32>
    %758 = arith.mulf %757, %755 : vector<2x8xf32>
    %759 = arith.mulf %750, %697 : vector<2x8xf32>
    %760 = arith.addf %758, %759 : vector<2x8xf32>
    %c8_i32_187 = arith.constant 8 : i32
    %761 = vector.broadcast %c8_i32_187 : i32 to vector<2x1xi32>
    %762 = arith.subi %761, %0 : vector<2x1xi32>
    %c0_i32_188 = arith.constant 0 : i32
    %763 = vector.broadcast %c0_i32_188 : i32 to vector<2x1xi32>
    %764 = arith.cmpi sle, %762, %763 : vector<2x1xi32>
    %765 = vector.shape_cast %764 : vector<2x1xi1> to vector<2x1xi1>
    %766 = vector.broadcast %765 : vector<2x1xi1> to vector<2x8xi1>
    %767 = arith.select %766, %760, %697 : vector<2x8xi1>, vector<2x8xf32>
    %cst_189 = arith.constant dense<0.000000e+00> : vector<2x24xf32>
    %768 = tpu.matmul %731, %27, %cst_189 {dimension_numbers = #tpu.dot_dimension_numbers<[1], [0], [0], [1], [0, 0, 1, 1], [], []>} : vector<2x8xf32>, vector<8x24xf32>, vector<2x24xf32> -> vector<2x24xf32>
    %769 = arith.addf %768, %33 : vector<2x24xf32>
    %770 = vector.extract_strided_slice %671 {offsets = [0, 0], sizes = [2, 24], strides = [1, 1]} : vector<2x48xf32> to vector<2x24xf32>
    %771 = vector.extract_strided_slice %770 {offsets = [0, 0], sizes = [2, 8], strides = [1, 1]} : vector<2x24xf32> to vector<2x8xf32>
    %772 = vector.extract_strided_slice %769 {offsets = [0, 0], sizes = [2, 8], strides = [1, 1]} : vector<2x24xf32> to vector<2x8xf32>
    %773 = arith.addf %771, %772 : vector<2x8xf32>
    %774 = arith.negf %773 : vector<2x8xf32>
    %775 = math.exp %774 : vector<2x8xf32>
    %cst_190 = arith.constant 1.000000e+00 : f32
    %776 = vector.broadcast %cst_190 : f32 to vector<2x8xf32>
    %777 = arith.addf %776, %775 : vector<2x8xf32>
    %778 = arith.divf %776, %777 : vector<2x8xf32>
    %779 = vector.extract_strided_slice %770 {offsets = [0, 8], sizes = [2, 8], strides = [1, 1]} : vector<2x24xf32> to vector<2x8xf32>
    %780 = vector.extract_strided_slice %769 {offsets = [0, 8], sizes = [2, 8], strides = [1, 1]} : vector<2x24xf32> to vector<2x8xf32>
    %781 = arith.addf %779, %780 : vector<2x8xf32>
    %782 = arith.negf %781 : vector<2x8xf32>
    %783 = math.exp %782 : vector<2x8xf32>
    %cst_191 = arith.constant 1.000000e+00 : f32
    %784 = vector.broadcast %cst_191 : f32 to vector<2x8xf32>
    %785 = arith.addf %784, %783 : vector<2x8xf32>
    %786 = arith.divf %784, %785 : vector<2x8xf32>
    %787 = vector.extract_strided_slice %770 {offsets = [0, 16], sizes = [2, 8], strides = [1, 1]} : vector<2x24xf32> to vector<2x8xf32>
    %788 = vector.extract_strided_slice %769 {offsets = [0, 16], sizes = [2, 8], strides = [1, 1]} : vector<2x24xf32> to vector<2x8xf32>
    %789 = arith.mulf %778, %788 : vector<2x8xf32>
    %790 = arith.addf %787, %789 : vector<2x8xf32>
    %791 = math.tanh %790 : vector<2x8xf32>
    %cst_192 = arith.constant 1.000000e+00 : f32
    %792 = vector.broadcast %cst_192 : f32 to vector<2x8xf32>
    %793 = arith.subf %792, %786 : vector<2x8xf32>
    %794 = arith.mulf %793, %791 : vector<2x8xf32>
    %795 = arith.mulf %786, %731 : vector<2x8xf32>
    %796 = arith.addf %794, %795 : vector<2x8xf32>
    %c1_i32_193 = arith.constant 1 : i32
    %797 = vector.broadcast %c1_i32_193 : i32 to vector<2x1xi32>
    %798 = arith.cmpi sgt, %0, %797 : vector<2x1xi32>
    %799 = vector.shape_cast %798 : vector<2x1xi1> to vector<2x1xi1>
    %800 = vector.broadcast %799 : vector<2x1xi1> to vector<2x8xi1>
    %801 = arith.select %800, %796, %731 : vector<2x8xi1>, vector<2x8xf32>
    %cst_194 = arith.constant dense<0.000000e+00> : vector<2x24xf32>
    %802 = tpu.matmul %767, %29, %cst_194 {dimension_numbers = #tpu.dot_dimension_numbers<[1], [0], [0], [1], [0, 0, 1, 1], [], []>} : vector<2x8xf32>, vector<8x24xf32>, vector<2x24xf32> -> vector<2x24xf32>
    %803 = arith.addf %802, %37 : vector<2x24xf32>
    %804 = vector.extract_strided_slice %691 {offsets = [0, 24], sizes = [2, 24], strides = [1, 1]} : vector<2x48xf32> to vector<2x24xf32>
    %805 = vector.extract_strided_slice %804 {offsets = [0, 0], sizes = [2, 8], strides = [1, 1]} : vector<2x24xf32> to vector<2x8xf32>
    %806 = vector.extract_strided_slice %803 {offsets = [0, 0], sizes = [2, 8], strides = [1, 1]} : vector<2x24xf32> to vector<2x8xf32>
    %807 = arith.addf %805, %806 : vector<2x8xf32>
    %808 = arith.negf %807 : vector<2x8xf32>
    %809 = math.exp %808 : vector<2x8xf32>
    %cst_195 = arith.constant 1.000000e+00 : f32
    %810 = vector.broadcast %cst_195 : f32 to vector<2x8xf32>
    %811 = arith.addf %810, %809 : vector<2x8xf32>
    %812 = arith.divf %810, %811 : vector<2x8xf32>
    %813 = vector.extract_strided_slice %804 {offsets = [0, 8], sizes = [2, 8], strides = [1, 1]} : vector<2x24xf32> to vector<2x8xf32>
    %814 = vector.extract_strided_slice %803 {offsets = [0, 8], sizes = [2, 8], strides = [1, 1]} : vector<2x24xf32> to vector<2x8xf32>
    %815 = arith.addf %813, %814 : vector<2x8xf32>
    %816 = arith.negf %815 : vector<2x8xf32>
    %817 = math.exp %816 : vector<2x8xf32>
    %cst_196 = arith.constant 1.000000e+00 : f32
    %818 = vector.broadcast %cst_196 : f32 to vector<2x8xf32>
    %819 = arith.addf %818, %817 : vector<2x8xf32>
    %820 = arith.divf %818, %819 : vector<2x8xf32>
    %821 = vector.extract_strided_slice %804 {offsets = [0, 16], sizes = [2, 8], strides = [1, 1]} : vector<2x24xf32> to vector<2x8xf32>
    %822 = vector.extract_strided_slice %803 {offsets = [0, 16], sizes = [2, 8], strides = [1, 1]} : vector<2x24xf32> to vector<2x8xf32>
    %823 = arith.mulf %812, %822 : vector<2x8xf32>
    %824 = arith.addf %821, %823 : vector<2x8xf32>
    %825 = math.tanh %824 : vector<2x8xf32>
    %cst_197 = arith.constant 1.000000e+00 : f32
    %826 = vector.broadcast %cst_197 : f32 to vector<2x8xf32>
    %827 = arith.subf %826, %820 : vector<2x8xf32>
    %828 = arith.mulf %827, %825 : vector<2x8xf32>
    %829 = arith.mulf %820, %767 : vector<2x8xf32>
    %830 = arith.addf %828, %829 : vector<2x8xf32>
    %c8_i32_198 = arith.constant 8 : i32
    %831 = vector.broadcast %c8_i32_198 : i32 to vector<2x1xi32>
    %832 = arith.subi %831, %0 : vector<2x1xi32>
    %c1_i32_199 = arith.constant 1 : i32
    %833 = vector.broadcast %c1_i32_199 : i32 to vector<2x1xi32>
    %834 = arith.cmpi sle, %832, %833 : vector<2x1xi32>
    %835 = vector.shape_cast %834 : vector<2x1xi1> to vector<2x1xi1>
    %836 = vector.broadcast %835 : vector<2x1xi1> to vector<2x8xi1>
    %837 = arith.select %836, %830, %767 : vector<2x8xi1>, vector<2x8xf32>
    %cst_200 = arith.constant dense<0.000000e+00> : vector<2x24xf32>
    %838 = tpu.matmul %801, %27, %cst_200 {dimension_numbers = #tpu.dot_dimension_numbers<[1], [0], [0], [1], [0, 0, 1, 1], [], []>} : vector<2x8xf32>, vector<8x24xf32>, vector<2x24xf32> -> vector<2x24xf32>
    %839 = arith.addf %838, %33 : vector<2x24xf32>
    %840 = vector.extract_strided_slice %675 {offsets = [0, 0], sizes = [2, 24], strides = [1, 1]} : vector<2x48xf32> to vector<2x24xf32>
    %841 = vector.extract_strided_slice %840 {offsets = [0, 0], sizes = [2, 8], strides = [1, 1]} : vector<2x24xf32> to vector<2x8xf32>
    %842 = vector.extract_strided_slice %839 {offsets = [0, 0], sizes = [2, 8], strides = [1, 1]} : vector<2x24xf32> to vector<2x8xf32>
    %843 = arith.addf %841, %842 : vector<2x8xf32>
    %844 = arith.negf %843 : vector<2x8xf32>
    %845 = math.exp %844 : vector<2x8xf32>
    %cst_201 = arith.constant 1.000000e+00 : f32
    %846 = vector.broadcast %cst_201 : f32 to vector<2x8xf32>
    %847 = arith.addf %846, %845 : vector<2x8xf32>
    %848 = arith.divf %846, %847 : vector<2x8xf32>
    %849 = vector.extract_strided_slice %840 {offsets = [0, 8], sizes = [2, 8], strides = [1, 1]} : vector<2x24xf32> to vector<2x8xf32>
    %850 = vector.extract_strided_slice %839 {offsets = [0, 8], sizes = [2, 8], strides = [1, 1]} : vector<2x24xf32> to vector<2x8xf32>
    %851 = arith.addf %849, %850 : vector<2x8xf32>
    %852 = arith.negf %851 : vector<2x8xf32>
    %853 = math.exp %852 : vector<2x8xf32>
    %cst_202 = arith.constant 1.000000e+00 : f32
    %854 = vector.broadcast %cst_202 : f32 to vector<2x8xf32>
    %855 = arith.addf %854, %853 : vector<2x8xf32>
    %856 = arith.divf %854, %855 : vector<2x8xf32>
    %857 = vector.extract_strided_slice %840 {offsets = [0, 16], sizes = [2, 8], strides = [1, 1]} : vector<2x24xf32> to vector<2x8xf32>
    %858 = vector.extract_strided_slice %839 {offsets = [0, 16], sizes = [2, 8], strides = [1, 1]} : vector<2x24xf32> to vector<2x8xf32>
    %859 = arith.mulf %848, %858 : vector<2x8xf32>
    %860 = arith.addf %857, %859 : vector<2x8xf32>
    %861 = math.tanh %860 : vector<2x8xf32>
    %cst_203 = arith.constant 1.000000e+00 : f32
    %862 = vector.broadcast %cst_203 : f32 to vector<2x8xf32>
    %863 = arith.subf %862, %856 : vector<2x8xf32>
    %864 = arith.mulf %863, %861 : vector<2x8xf32>
    %865 = arith.mulf %856, %801 : vector<2x8xf32>
    %866 = arith.addf %864, %865 : vector<2x8xf32>
    %c2_i32_204 = arith.constant 2 : i32
    %867 = vector.broadcast %c2_i32_204 : i32 to vector<2x1xi32>
    %868 = arith.cmpi sgt, %0, %867 : vector<2x1xi32>
    %869 = vector.shape_cast %868 : vector<2x1xi1> to vector<2x1xi1>
    %870 = vector.broadcast %869 : vector<2x1xi1> to vector<2x8xi1>
    %871 = arith.select %870, %866, %801 : vector<2x8xi1>, vector<2x8xf32>
    %cst_205 = arith.constant dense<0.000000e+00> : vector<2x24xf32>
    %872 = tpu.matmul %837, %29, %cst_205 {dimension_numbers = #tpu.dot_dimension_numbers<[1], [0], [0], [1], [0, 0, 1, 1], [], []>} : vector<2x8xf32>, vector<8x24xf32>, vector<2x24xf32> -> vector<2x24xf32>
    %873 = arith.addf %872, %37 : vector<2x24xf32>
    %874 = vector.extract_strided_slice %687 {offsets = [0, 24], sizes = [2, 24], strides = [1, 1]} : vector<2x48xf32> to vector<2x24xf32>
    %875 = vector.extract_strided_slice %874 {offsets = [0, 0], sizes = [2, 8], strides = [1, 1]} : vector<2x24xf32> to vector<2x8xf32>
    %876 = vector.extract_strided_slice %873 {offsets = [0, 0], sizes = [2, 8], strides = [1, 1]} : vector<2x24xf32> to vector<2x8xf32>
    %877 = arith.addf %875, %876 : vector<2x8xf32>
    %878 = arith.negf %877 : vector<2x8xf32>
    %879 = math.exp %878 : vector<2x8xf32>
    %cst_206 = arith.constant 1.000000e+00 : f32
    %880 = vector.broadcast %cst_206 : f32 to vector<2x8xf32>
    %881 = arith.addf %880, %879 : vector<2x8xf32>
    %882 = arith.divf %880, %881 : vector<2x8xf32>
    %883 = vector.extract_strided_slice %874 {offsets = [0, 8], sizes = [2, 8], strides = [1, 1]} : vector<2x24xf32> to vector<2x8xf32>
    %884 = vector.extract_strided_slice %873 {offsets = [0, 8], sizes = [2, 8], strides = [1, 1]} : vector<2x24xf32> to vector<2x8xf32>
    %885 = arith.addf %883, %884 : vector<2x8xf32>
    %886 = arith.negf %885 : vector<2x8xf32>
    %887 = math.exp %886 : vector<2x8xf32>
    %cst_207 = arith.constant 1.000000e+00 : f32
    %888 = vector.broadcast %cst_207 : f32 to vector<2x8xf32>
    %889 = arith.addf %888, %887 : vector<2x8xf32>
    %890 = arith.divf %888, %889 : vector<2x8xf32>
    %891 = vector.extract_strided_slice %874 {offsets = [0, 16], sizes = [2, 8], strides = [1, 1]} : vector<2x24xf32> to vector<2x8xf32>
    %892 = vector.extract_strided_slice %873 {offsets = [0, 16], sizes = [2, 8], strides = [1, 1]} : vector<2x24xf32> to vector<2x8xf32>
    %893 = arith.mulf %882, %892 : vector<2x8xf32>
    %894 = arith.addf %891, %893 : vector<2x8xf32>
    %895 = math.tanh %894 : vector<2x8xf32>
    %cst_208 = arith.constant 1.000000e+00 : f32
    %896 = vector.broadcast %cst_208 : f32 to vector<2x8xf32>
    %897 = arith.subf %896, %890 : vector<2x8xf32>
    %898 = arith.mulf %897, %895 : vector<2x8xf32>
    %899 = arith.mulf %890, %837 : vector<2x8xf32>
    %900 = arith.addf %898, %899 : vector<2x8xf32>
    %c8_i32_209 = arith.constant 8 : i32
    %901 = vector.broadcast %c8_i32_209 : i32 to vector<2x1xi32>
    %902 = arith.subi %901, %0 : vector<2x1xi32>
    %c2_i32_210 = arith.constant 2 : i32
    %903 = vector.broadcast %c2_i32_210 : i32 to vector<2x1xi32>
    %904 = arith.cmpi sle, %902, %903 : vector<2x1xi32>
    %905 = vector.shape_cast %904 : vector<2x1xi1> to vector<2x1xi1>
    %906 = vector.broadcast %905 : vector<2x1xi1> to vector<2x8xi1>
    %907 = arith.select %906, %900, %837 : vector<2x8xi1>, vector<2x8xf32>
    %cst_211 = arith.constant dense<0.000000e+00> : vector<2x24xf32>
    %908 = tpu.matmul %871, %27, %cst_211 {dimension_numbers = #tpu.dot_dimension_numbers<[1], [0], [0], [1], [0, 0, 1, 1], [], []>} : vector<2x8xf32>, vector<8x24xf32>, vector<2x24xf32> -> vector<2x24xf32>
    %909 = arith.addf %908, %33 : vector<2x24xf32>
    %910 = vector.extract_strided_slice %679 {offsets = [0, 0], sizes = [2, 24], strides = [1, 1]} : vector<2x48xf32> to vector<2x24xf32>
    %911 = vector.extract_strided_slice %910 {offsets = [0, 0], sizes = [2, 8], strides = [1, 1]} : vector<2x24xf32> to vector<2x8xf32>
    %912 = vector.extract_strided_slice %909 {offsets = [0, 0], sizes = [2, 8], strides = [1, 1]} : vector<2x24xf32> to vector<2x8xf32>
    %913 = arith.addf %911, %912 : vector<2x8xf32>
    %914 = arith.negf %913 : vector<2x8xf32>
    %915 = math.exp %914 : vector<2x8xf32>
    %cst_212 = arith.constant 1.000000e+00 : f32
    %916 = vector.broadcast %cst_212 : f32 to vector<2x8xf32>
    %917 = arith.addf %916, %915 : vector<2x8xf32>
    %918 = arith.divf %916, %917 : vector<2x8xf32>
    %919 = vector.extract_strided_slice %910 {offsets = [0, 8], sizes = [2, 8], strides = [1, 1]} : vector<2x24xf32> to vector<2x8xf32>
    %920 = vector.extract_strided_slice %909 {offsets = [0, 8], sizes = [2, 8], strides = [1, 1]} : vector<2x24xf32> to vector<2x8xf32>
    %921 = arith.addf %919, %920 : vector<2x8xf32>
    %922 = arith.negf %921 : vector<2x8xf32>
    %923 = math.exp %922 : vector<2x8xf32>
    %cst_213 = arith.constant 1.000000e+00 : f32
    %924 = vector.broadcast %cst_213 : f32 to vector<2x8xf32>
    %925 = arith.addf %924, %923 : vector<2x8xf32>
    %926 = arith.divf %924, %925 : vector<2x8xf32>
    %927 = vector.extract_strided_slice %910 {offsets = [0, 16], sizes = [2, 8], strides = [1, 1]} : vector<2x24xf32> to vector<2x8xf32>
    %928 = vector.extract_strided_slice %909 {offsets = [0, 16], sizes = [2, 8], strides = [1, 1]} : vector<2x24xf32> to vector<2x8xf32>
    %929 = arith.mulf %918, %928 : vector<2x8xf32>
    %930 = arith.addf %927, %929 : vector<2x8xf32>
    %931 = math.tanh %930 : vector<2x8xf32>
    %cst_214 = arith.constant 1.000000e+00 : f32
    %932 = vector.broadcast %cst_214 : f32 to vector<2x8xf32>
    %933 = arith.subf %932, %926 : vector<2x8xf32>
    %934 = arith.mulf %933, %931 : vector<2x8xf32>
    %935 = arith.mulf %926, %871 : vector<2x8xf32>
    %936 = arith.addf %934, %935 : vector<2x8xf32>
    %c3_i32_215 = arith.constant 3 : i32
    %937 = vector.broadcast %c3_i32_215 : i32 to vector<2x1xi32>
    %938 = arith.cmpi sgt, %0, %937 : vector<2x1xi32>
    %939 = vector.shape_cast %938 : vector<2x1xi1> to vector<2x1xi1>
    %940 = vector.broadcast %939 : vector<2x1xi1> to vector<2x8xi1>
    %941 = arith.select %940, %936, %871 : vector<2x8xi1>, vector<2x8xf32>
    %cst_216 = arith.constant dense<0.000000e+00> : vector<2x24xf32>
    %942 = tpu.matmul %907, %29, %cst_216 {dimension_numbers = #tpu.dot_dimension_numbers<[1], [0], [0], [1], [0, 0, 1, 1], [], []>} : vector<2x8xf32>, vector<8x24xf32>, vector<2x24xf32> -> vector<2x24xf32>
    %943 = arith.addf %942, %37 : vector<2x24xf32>
    %944 = vector.extract_strided_slice %683 {offsets = [0, 24], sizes = [2, 24], strides = [1, 1]} : vector<2x48xf32> to vector<2x24xf32>
    %945 = vector.extract_strided_slice %944 {offsets = [0, 0], sizes = [2, 8], strides = [1, 1]} : vector<2x24xf32> to vector<2x8xf32>
    %946 = vector.extract_strided_slice %943 {offsets = [0, 0], sizes = [2, 8], strides = [1, 1]} : vector<2x24xf32> to vector<2x8xf32>
    %947 = arith.addf %945, %946 : vector<2x8xf32>
    %948 = arith.negf %947 : vector<2x8xf32>
    %949 = math.exp %948 : vector<2x8xf32>
    %cst_217 = arith.constant 1.000000e+00 : f32
    %950 = vector.broadcast %cst_217 : f32 to vector<2x8xf32>
    %951 = arith.addf %950, %949 : vector<2x8xf32>
    %952 = arith.divf %950, %951 : vector<2x8xf32>
    %953 = vector.extract_strided_slice %944 {offsets = [0, 8], sizes = [2, 8], strides = [1, 1]} : vector<2x24xf32> to vector<2x8xf32>
    %954 = vector.extract_strided_slice %943 {offsets = [0, 8], sizes = [2, 8], strides = [1, 1]} : vector<2x24xf32> to vector<2x8xf32>
    %955 = arith.addf %953, %954 : vector<2x8xf32>
    %956 = arith.negf %955 : vector<2x8xf32>
    %957 = math.exp %956 : vector<2x8xf32>
    %cst_218 = arith.constant 1.000000e+00 : f32
    %958 = vector.broadcast %cst_218 : f32 to vector<2x8xf32>
    %959 = arith.addf %958, %957 : vector<2x8xf32>
    %960 = arith.divf %958, %959 : vector<2x8xf32>
    %961 = vector.extract_strided_slice %944 {offsets = [0, 16], sizes = [2, 8], strides = [1, 1]} : vector<2x24xf32> to vector<2x8xf32>
    %962 = vector.extract_strided_slice %943 {offsets = [0, 16], sizes = [2, 8], strides = [1, 1]} : vector<2x24xf32> to vector<2x8xf32>
    %963 = arith.mulf %952, %962 : vector<2x8xf32>
    %964 = arith.addf %961, %963 : vector<2x8xf32>
    %965 = math.tanh %964 : vector<2x8xf32>
    %cst_219 = arith.constant 1.000000e+00 : f32
    %966 = vector.broadcast %cst_219 : f32 to vector<2x8xf32>
    %967 = arith.subf %966, %960 : vector<2x8xf32>
    %968 = arith.mulf %967, %965 : vector<2x8xf32>
    %969 = arith.mulf %960, %907 : vector<2x8xf32>
    %970 = arith.addf %968, %969 : vector<2x8xf32>
    %c8_i32_220 = arith.constant 8 : i32
    %971 = vector.broadcast %c8_i32_220 : i32 to vector<2x1xi32>
    %972 = arith.subi %971, %0 : vector<2x1xi32>
    %c3_i32_221 = arith.constant 3 : i32
    %973 = vector.broadcast %c3_i32_221 : i32 to vector<2x1xi32>
    %974 = arith.cmpi sle, %972, %973 : vector<2x1xi32>
    %975 = vector.shape_cast %974 : vector<2x1xi1> to vector<2x1xi1>
    %976 = vector.broadcast %975 : vector<2x1xi1> to vector<2x8xi1>
    %977 = arith.select %976, %970, %907 : vector<2x8xi1>, vector<2x8xf32>
    %cst_222 = arith.constant dense<0.000000e+00> : vector<2x24xf32>
    %978 = tpu.matmul %941, %27, %cst_222 {dimension_numbers = #tpu.dot_dimension_numbers<[1], [0], [0], [1], [0, 0, 1, 1], [], []>} : vector<2x8xf32>, vector<8x24xf32>, vector<2x24xf32> -> vector<2x24xf32>
    %979 = arith.addf %978, %33 : vector<2x24xf32>
    %980 = vector.extract_strided_slice %683 {offsets = [0, 0], sizes = [2, 24], strides = [1, 1]} : vector<2x48xf32> to vector<2x24xf32>
    %981 = vector.extract_strided_slice %980 {offsets = [0, 0], sizes = [2, 8], strides = [1, 1]} : vector<2x24xf32> to vector<2x8xf32>
    %982 = vector.extract_strided_slice %979 {offsets = [0, 0], sizes = [2, 8], strides = [1, 1]} : vector<2x24xf32> to vector<2x8xf32>
    %983 = arith.addf %981, %982 : vector<2x8xf32>
    %984 = arith.negf %983 : vector<2x8xf32>
    %985 = math.exp %984 : vector<2x8xf32>
    %cst_223 = arith.constant 1.000000e+00 : f32
    %986 = vector.broadcast %cst_223 : f32 to vector<2x8xf32>
    %987 = arith.addf %986, %985 : vector<2x8xf32>
    %988 = arith.divf %986, %987 : vector<2x8xf32>
    %989 = vector.extract_strided_slice %980 {offsets = [0, 8], sizes = [2, 8], strides = [1, 1]} : vector<2x24xf32> to vector<2x8xf32>
    %990 = vector.extract_strided_slice %979 {offsets = [0, 8], sizes = [2, 8], strides = [1, 1]} : vector<2x24xf32> to vector<2x8xf32>
    %991 = arith.addf %989, %990 : vector<2x8xf32>
    %992 = arith.negf %991 : vector<2x8xf32>
    %993 = math.exp %992 : vector<2x8xf32>
    %cst_224 = arith.constant 1.000000e+00 : f32
    %994 = vector.broadcast %cst_224 : f32 to vector<2x8xf32>
    %995 = arith.addf %994, %993 : vector<2x8xf32>
    %996 = arith.divf %994, %995 : vector<2x8xf32>
    %997 = vector.extract_strided_slice %980 {offsets = [0, 16], sizes = [2, 8], strides = [1, 1]} : vector<2x24xf32> to vector<2x8xf32>
    %998 = vector.extract_strided_slice %979 {offsets = [0, 16], sizes = [2, 8], strides = [1, 1]} : vector<2x24xf32> to vector<2x8xf32>
    %999 = arith.mulf %988, %998 : vector<2x8xf32>
    %1000 = arith.addf %997, %999 : vector<2x8xf32>
    %1001 = math.tanh %1000 : vector<2x8xf32>
    %cst_225 = arith.constant 1.000000e+00 : f32
    %1002 = vector.broadcast %cst_225 : f32 to vector<2x8xf32>
    %1003 = arith.subf %1002, %996 : vector<2x8xf32>
    %1004 = arith.mulf %1003, %1001 : vector<2x8xf32>
    %1005 = arith.mulf %996, %941 : vector<2x8xf32>
    %1006 = arith.addf %1004, %1005 : vector<2x8xf32>
    %c4_i32_226 = arith.constant 4 : i32
    %1007 = vector.broadcast %c4_i32_226 : i32 to vector<2x1xi32>
    %1008 = arith.cmpi sgt, %0, %1007 : vector<2x1xi32>
    %1009 = vector.shape_cast %1008 : vector<2x1xi1> to vector<2x1xi1>
    %1010 = vector.broadcast %1009 : vector<2x1xi1> to vector<2x8xi1>
    %1011 = arith.select %1010, %1006, %941 : vector<2x8xi1>, vector<2x8xf32>
    %cst_227 = arith.constant dense<0.000000e+00> : vector<2x24xf32>
    %1012 = tpu.matmul %977, %29, %cst_227 {dimension_numbers = #tpu.dot_dimension_numbers<[1], [0], [0], [1], [0, 0, 1, 1], [], []>} : vector<2x8xf32>, vector<8x24xf32>, vector<2x24xf32> -> vector<2x24xf32>
    %1013 = arith.addf %1012, %37 : vector<2x24xf32>
    %1014 = vector.extract_strided_slice %679 {offsets = [0, 24], sizes = [2, 24], strides = [1, 1]} : vector<2x48xf32> to vector<2x24xf32>
    %1015 = vector.extract_strided_slice %1014 {offsets = [0, 0], sizes = [2, 8], strides = [1, 1]} : vector<2x24xf32> to vector<2x8xf32>
    %1016 = vector.extract_strided_slice %1013 {offsets = [0, 0], sizes = [2, 8], strides = [1, 1]} : vector<2x24xf32> to vector<2x8xf32>
    %1017 = arith.addf %1015, %1016 : vector<2x8xf32>
    %1018 = arith.negf %1017 : vector<2x8xf32>
    %1019 = math.exp %1018 : vector<2x8xf32>
    %cst_228 = arith.constant 1.000000e+00 : f32
    %1020 = vector.broadcast %cst_228 : f32 to vector<2x8xf32>
    %1021 = arith.addf %1020, %1019 : vector<2x8xf32>
    %1022 = arith.divf %1020, %1021 : vector<2x8xf32>
    %1023 = vector.extract_strided_slice %1014 {offsets = [0, 8], sizes = [2, 8], strides = [1, 1]} : vector<2x24xf32> to vector<2x8xf32>
    %1024 = vector.extract_strided_slice %1013 {offsets = [0, 8], sizes = [2, 8], strides = [1, 1]} : vector<2x24xf32> to vector<2x8xf32>
    %1025 = arith.addf %1023, %1024 : vector<2x8xf32>
    %1026 = arith.negf %1025 : vector<2x8xf32>
    %1027 = math.exp %1026 : vector<2x8xf32>
    %cst_229 = arith.constant 1.000000e+00 : f32
    %1028 = vector.broadcast %cst_229 : f32 to vector<2x8xf32>
    %1029 = arith.addf %1028, %1027 : vector<2x8xf32>
    %1030 = arith.divf %1028, %1029 : vector<2x8xf32>
    %1031 = vector.extract_strided_slice %1014 {offsets = [0, 16], sizes = [2, 8], strides = [1, 1]} : vector<2x24xf32> to vector<2x8xf32>
    %1032 = vector.extract_strided_slice %1013 {offsets = [0, 16], sizes = [2, 8], strides = [1, 1]} : vector<2x24xf32> to vector<2x8xf32>
    %1033 = arith.mulf %1022, %1032 : vector<2x8xf32>
    %1034 = arith.addf %1031, %1033 : vector<2x8xf32>
    %1035 = math.tanh %1034 : vector<2x8xf32>
    %cst_230 = arith.constant 1.000000e+00 : f32
    %1036 = vector.broadcast %cst_230 : f32 to vector<2x8xf32>
    %1037 = arith.subf %1036, %1030 : vector<2x8xf32>
    %1038 = arith.mulf %1037, %1035 : vector<2x8xf32>
    %1039 = arith.mulf %1030, %977 : vector<2x8xf32>
    %1040 = arith.addf %1038, %1039 : vector<2x8xf32>
    %c8_i32_231 = arith.constant 8 : i32
    %1041 = vector.broadcast %c8_i32_231 : i32 to vector<2x1xi32>
    %1042 = arith.subi %1041, %0 : vector<2x1xi32>
    %c4_i32_232 = arith.constant 4 : i32
    %1043 = vector.broadcast %c4_i32_232 : i32 to vector<2x1xi32>
    %1044 = arith.cmpi sle, %1042, %1043 : vector<2x1xi32>
    %1045 = vector.shape_cast %1044 : vector<2x1xi1> to vector<2x1xi1>
    %1046 = vector.broadcast %1045 : vector<2x1xi1> to vector<2x8xi1>
    %1047 = arith.select %1046, %1040, %977 : vector<2x8xi1>, vector<2x8xf32>
    %cst_233 = arith.constant dense<0.000000e+00> : vector<2x24xf32>
    %1048 = tpu.matmul %1011, %27, %cst_233 {dimension_numbers = #tpu.dot_dimension_numbers<[1], [0], [0], [1], [0, 0, 1, 1], [], []>} : vector<2x8xf32>, vector<8x24xf32>, vector<2x24xf32> -> vector<2x24xf32>
    %1049 = arith.addf %1048, %33 : vector<2x24xf32>
    %1050 = vector.extract_strided_slice %687 {offsets = [0, 0], sizes = [2, 24], strides = [1, 1]} : vector<2x48xf32> to vector<2x24xf32>
    %1051 = vector.extract_strided_slice %1050 {offsets = [0, 0], sizes = [2, 8], strides = [1, 1]} : vector<2x24xf32> to vector<2x8xf32>
    %1052 = vector.extract_strided_slice %1049 {offsets = [0, 0], sizes = [2, 8], strides = [1, 1]} : vector<2x24xf32> to vector<2x8xf32>
    %1053 = arith.addf %1051, %1052 : vector<2x8xf32>
    %1054 = arith.negf %1053 : vector<2x8xf32>
    %1055 = math.exp %1054 : vector<2x8xf32>
    %cst_234 = arith.constant 1.000000e+00 : f32
    %1056 = vector.broadcast %cst_234 : f32 to vector<2x8xf32>
    %1057 = arith.addf %1056, %1055 : vector<2x8xf32>
    %1058 = arith.divf %1056, %1057 : vector<2x8xf32>
    %1059 = vector.extract_strided_slice %1050 {offsets = [0, 8], sizes = [2, 8], strides = [1, 1]} : vector<2x24xf32> to vector<2x8xf32>
    %1060 = vector.extract_strided_slice %1049 {offsets = [0, 8], sizes = [2, 8], strides = [1, 1]} : vector<2x24xf32> to vector<2x8xf32>
    %1061 = arith.addf %1059, %1060 : vector<2x8xf32>
    %1062 = arith.negf %1061 : vector<2x8xf32>
    %1063 = math.exp %1062 : vector<2x8xf32>
    %cst_235 = arith.constant 1.000000e+00 : f32
    %1064 = vector.broadcast %cst_235 : f32 to vector<2x8xf32>
    %1065 = arith.addf %1064, %1063 : vector<2x8xf32>
    %1066 = arith.divf %1064, %1065 : vector<2x8xf32>
    %1067 = vector.extract_strided_slice %1050 {offsets = [0, 16], sizes = [2, 8], strides = [1, 1]} : vector<2x24xf32> to vector<2x8xf32>
    %1068 = vector.extract_strided_slice %1049 {offsets = [0, 16], sizes = [2, 8], strides = [1, 1]} : vector<2x24xf32> to vector<2x8xf32>
    %1069 = arith.mulf %1058, %1068 : vector<2x8xf32>
    %1070 = arith.addf %1067, %1069 : vector<2x8xf32>
    %1071 = math.tanh %1070 : vector<2x8xf32>
    %cst_236 = arith.constant 1.000000e+00 : f32
    %1072 = vector.broadcast %cst_236 : f32 to vector<2x8xf32>
    %1073 = arith.subf %1072, %1066 : vector<2x8xf32>
    %1074 = arith.mulf %1073, %1071 : vector<2x8xf32>
    %1075 = arith.mulf %1066, %1011 : vector<2x8xf32>
    %1076 = arith.addf %1074, %1075 : vector<2x8xf32>
    %c5_i32_237 = arith.constant 5 : i32
    %1077 = vector.broadcast %c5_i32_237 : i32 to vector<2x1xi32>
    %1078 = arith.cmpi sgt, %0, %1077 : vector<2x1xi32>
    %1079 = vector.shape_cast %1078 : vector<2x1xi1> to vector<2x1xi1>
    %1080 = vector.broadcast %1079 : vector<2x1xi1> to vector<2x8xi1>
    %1081 = arith.select %1080, %1076, %1011 : vector<2x8xi1>, vector<2x8xf32>
    %cst_238 = arith.constant dense<0.000000e+00> : vector<2x24xf32>
    %1082 = tpu.matmul %1047, %29, %cst_238 {dimension_numbers = #tpu.dot_dimension_numbers<[1], [0], [0], [1], [0, 0, 1, 1], [], []>} : vector<2x8xf32>, vector<8x24xf32>, vector<2x24xf32> -> vector<2x24xf32>
    %1083 = arith.addf %1082, %37 : vector<2x24xf32>
    %1084 = vector.extract_strided_slice %675 {offsets = [0, 24], sizes = [2, 24], strides = [1, 1]} : vector<2x48xf32> to vector<2x24xf32>
    %1085 = vector.extract_strided_slice %1084 {offsets = [0, 0], sizes = [2, 8], strides = [1, 1]} : vector<2x24xf32> to vector<2x8xf32>
    %1086 = vector.extract_strided_slice %1083 {offsets = [0, 0], sizes = [2, 8], strides = [1, 1]} : vector<2x24xf32> to vector<2x8xf32>
    %1087 = arith.addf %1085, %1086 : vector<2x8xf32>
    %1088 = arith.negf %1087 : vector<2x8xf32>
    %1089 = math.exp %1088 : vector<2x8xf32>
    %cst_239 = arith.constant 1.000000e+00 : f32
    %1090 = vector.broadcast %cst_239 : f32 to vector<2x8xf32>
    %1091 = arith.addf %1090, %1089 : vector<2x8xf32>
    %1092 = arith.divf %1090, %1091 : vector<2x8xf32>
    %1093 = vector.extract_strided_slice %1084 {offsets = [0, 8], sizes = [2, 8], strides = [1, 1]} : vector<2x24xf32> to vector<2x8xf32>
    %1094 = vector.extract_strided_slice %1083 {offsets = [0, 8], sizes = [2, 8], strides = [1, 1]} : vector<2x24xf32> to vector<2x8xf32>
    %1095 = arith.addf %1093, %1094 : vector<2x8xf32>
    %1096 = arith.negf %1095 : vector<2x8xf32>
    %1097 = math.exp %1096 : vector<2x8xf32>
    %cst_240 = arith.constant 1.000000e+00 : f32
    %1098 = vector.broadcast %cst_240 : f32 to vector<2x8xf32>
    %1099 = arith.addf %1098, %1097 : vector<2x8xf32>
    %1100 = arith.divf %1098, %1099 : vector<2x8xf32>
    %1101 = vector.extract_strided_slice %1084 {offsets = [0, 16], sizes = [2, 8], strides = [1, 1]} : vector<2x24xf32> to vector<2x8xf32>
    %1102 = vector.extract_strided_slice %1083 {offsets = [0, 16], sizes = [2, 8], strides = [1, 1]} : vector<2x24xf32> to vector<2x8xf32>
    %1103 = arith.mulf %1092, %1102 : vector<2x8xf32>
    %1104 = arith.addf %1101, %1103 : vector<2x8xf32>
    %1105 = math.tanh %1104 : vector<2x8xf32>
    %cst_241 = arith.constant 1.000000e+00 : f32
    %1106 = vector.broadcast %cst_241 : f32 to vector<2x8xf32>
    %1107 = arith.subf %1106, %1100 : vector<2x8xf32>
    %1108 = arith.mulf %1107, %1105 : vector<2x8xf32>
    %1109 = arith.mulf %1100, %1047 : vector<2x8xf32>
    %1110 = arith.addf %1108, %1109 : vector<2x8xf32>
    %c8_i32_242 = arith.constant 8 : i32
    %1111 = vector.broadcast %c8_i32_242 : i32 to vector<2x1xi32>
    %1112 = arith.subi %1111, %0 : vector<2x1xi32>
    %c5_i32_243 = arith.constant 5 : i32
    %1113 = vector.broadcast %c5_i32_243 : i32 to vector<2x1xi32>
    %1114 = arith.cmpi sle, %1112, %1113 : vector<2x1xi32>
    %1115 = vector.shape_cast %1114 : vector<2x1xi1> to vector<2x1xi1>
    %1116 = vector.broadcast %1115 : vector<2x1xi1> to vector<2x8xi1>
    %1117 = arith.select %1116, %1110, %1047 : vector<2x8xi1>, vector<2x8xf32>
    %cst_244 = arith.constant dense<0.000000e+00> : vector<2x24xf32>
    %1118 = tpu.matmul %1081, %27, %cst_244 {dimension_numbers = #tpu.dot_dimension_numbers<[1], [0], [0], [1], [0, 0, 1, 1], [], []>} : vector<2x8xf32>, vector<8x24xf32>, vector<2x24xf32> -> vector<2x24xf32>
    %1119 = arith.addf %1118, %33 : vector<2x24xf32>
    %1120 = vector.extract_strided_slice %691 {offsets = [0, 0], sizes = [2, 24], strides = [1, 1]} : vector<2x48xf32> to vector<2x24xf32>
    %1121 = vector.extract_strided_slice %1120 {offsets = [0, 0], sizes = [2, 8], strides = [1, 1]} : vector<2x24xf32> to vector<2x8xf32>
    %1122 = vector.extract_strided_slice %1119 {offsets = [0, 0], sizes = [2, 8], strides = [1, 1]} : vector<2x24xf32> to vector<2x8xf32>
    %1123 = arith.addf %1121, %1122 : vector<2x8xf32>
    %1124 = arith.negf %1123 : vector<2x8xf32>
    %1125 = math.exp %1124 : vector<2x8xf32>
    %cst_245 = arith.constant 1.000000e+00 : f32
    %1126 = vector.broadcast %cst_245 : f32 to vector<2x8xf32>
    %1127 = arith.addf %1126, %1125 : vector<2x8xf32>
    %1128 = arith.divf %1126, %1127 : vector<2x8xf32>
    %1129 = vector.extract_strided_slice %1120 {offsets = [0, 8], sizes = [2, 8], strides = [1, 1]} : vector<2x24xf32> to vector<2x8xf32>
    %1130 = vector.extract_strided_slice %1119 {offsets = [0, 8], sizes = [2, 8], strides = [1, 1]} : vector<2x24xf32> to vector<2x8xf32>
    %1131 = arith.addf %1129, %1130 : vector<2x8xf32>
    %1132 = arith.negf %1131 : vector<2x8xf32>
    %1133 = math.exp %1132 : vector<2x8xf32>
    %cst_246 = arith.constant 1.000000e+00 : f32
    %1134 = vector.broadcast %cst_246 : f32 to vector<2x8xf32>
    %1135 = arith.addf %1134, %1133 : vector<2x8xf32>
    %1136 = arith.divf %1134, %1135 : vector<2x8xf32>
    %1137 = vector.extract_strided_slice %1120 {offsets = [0, 16], sizes = [2, 8], strides = [1, 1]} : vector<2x24xf32> to vector<2x8xf32>
    %1138 = vector.extract_strided_slice %1119 {offsets = [0, 16], sizes = [2, 8], strides = [1, 1]} : vector<2x24xf32> to vector<2x8xf32>
    %1139 = arith.mulf %1128, %1138 : vector<2x8xf32>
    %1140 = arith.addf %1137, %1139 : vector<2x8xf32>
    %1141 = math.tanh %1140 : vector<2x8xf32>
    %cst_247 = arith.constant 1.000000e+00 : f32
    %1142 = vector.broadcast %cst_247 : f32 to vector<2x8xf32>
    %1143 = arith.subf %1142, %1136 : vector<2x8xf32>
    %1144 = arith.mulf %1143, %1141 : vector<2x8xf32>
    %1145 = arith.mulf %1136, %1081 : vector<2x8xf32>
    %1146 = arith.addf %1144, %1145 : vector<2x8xf32>
    %c6_i32_248 = arith.constant 6 : i32
    %1147 = vector.broadcast %c6_i32_248 : i32 to vector<2x1xi32>
    %1148 = arith.cmpi sgt, %0, %1147 : vector<2x1xi32>
    %1149 = vector.shape_cast %1148 : vector<2x1xi1> to vector<2x1xi1>
    %1150 = vector.broadcast %1149 : vector<2x1xi1> to vector<2x8xi1>
    %1151 = arith.select %1150, %1146, %1081 : vector<2x8xi1>, vector<2x8xf32>
    %cst_249 = arith.constant dense<0.000000e+00> : vector<2x24xf32>
    %1152 = tpu.matmul %1117, %29, %cst_249 {dimension_numbers = #tpu.dot_dimension_numbers<[1], [0], [0], [1], [0, 0, 1, 1], [], []>} : vector<2x8xf32>, vector<8x24xf32>, vector<2x24xf32> -> vector<2x24xf32>
    %1153 = arith.addf %1152, %37 : vector<2x24xf32>
    %1154 = vector.extract_strided_slice %671 {offsets = [0, 24], sizes = [2, 24], strides = [1, 1]} : vector<2x48xf32> to vector<2x24xf32>
    %1155 = vector.extract_strided_slice %1154 {offsets = [0, 0], sizes = [2, 8], strides = [1, 1]} : vector<2x24xf32> to vector<2x8xf32>
    %1156 = vector.extract_strided_slice %1153 {offsets = [0, 0], sizes = [2, 8], strides = [1, 1]} : vector<2x24xf32> to vector<2x8xf32>
    %1157 = arith.addf %1155, %1156 : vector<2x8xf32>
    %1158 = arith.negf %1157 : vector<2x8xf32>
    %1159 = math.exp %1158 : vector<2x8xf32>
    %cst_250 = arith.constant 1.000000e+00 : f32
    %1160 = vector.broadcast %cst_250 : f32 to vector<2x8xf32>
    %1161 = arith.addf %1160, %1159 : vector<2x8xf32>
    %1162 = arith.divf %1160, %1161 : vector<2x8xf32>
    %1163 = vector.extract_strided_slice %1154 {offsets = [0, 8], sizes = [2, 8], strides = [1, 1]} : vector<2x24xf32> to vector<2x8xf32>
    %1164 = vector.extract_strided_slice %1153 {offsets = [0, 8], sizes = [2, 8], strides = [1, 1]} : vector<2x24xf32> to vector<2x8xf32>
    %1165 = arith.addf %1163, %1164 : vector<2x8xf32>
    %1166 = arith.negf %1165 : vector<2x8xf32>
    %1167 = math.exp %1166 : vector<2x8xf32>
    %cst_251 = arith.constant 1.000000e+00 : f32
    %1168 = vector.broadcast %cst_251 : f32 to vector<2x8xf32>
    %1169 = arith.addf %1168, %1167 : vector<2x8xf32>
    %1170 = arith.divf %1168, %1169 : vector<2x8xf32>
    %1171 = vector.extract_strided_slice %1154 {offsets = [0, 16], sizes = [2, 8], strides = [1, 1]} : vector<2x24xf32> to vector<2x8xf32>
    %1172 = vector.extract_strided_slice %1153 {offsets = [0, 16], sizes = [2, 8], strides = [1, 1]} : vector<2x24xf32> to vector<2x8xf32>
    %1173 = arith.mulf %1162, %1172 : vector<2x8xf32>
    %1174 = arith.addf %1171, %1173 : vector<2x8xf32>
    %1175 = math.tanh %1174 : vector<2x8xf32>
    %cst_252 = arith.constant 1.000000e+00 : f32
    %1176 = vector.broadcast %cst_252 : f32 to vector<2x8xf32>
    %1177 = arith.subf %1176, %1170 : vector<2x8xf32>
    %1178 = arith.mulf %1177, %1175 : vector<2x8xf32>
    %1179 = arith.mulf %1170, %1117 : vector<2x8xf32>
    %1180 = arith.addf %1178, %1179 : vector<2x8xf32>
    %c8_i32_253 = arith.constant 8 : i32
    %1181 = vector.broadcast %c8_i32_253 : i32 to vector<2x1xi32>
    %1182 = arith.subi %1181, %0 : vector<2x1xi32>
    %c6_i32_254 = arith.constant 6 : i32
    %1183 = vector.broadcast %c6_i32_254 : i32 to vector<2x1xi32>
    %1184 = arith.cmpi sle, %1182, %1183 : vector<2x1xi32>
    %1185 = vector.shape_cast %1184 : vector<2x1xi1> to vector<2x1xi1>
    %1186 = vector.broadcast %1185 : vector<2x1xi1> to vector<2x8xi1>
    %1187 = arith.select %1186, %1180, %1117 : vector<2x8xi1>, vector<2x8xf32>
    %cst_255 = arith.constant dense<0.000000e+00> : vector<2x24xf32>
    %1188 = tpu.matmul %1151, %27, %cst_255 {dimension_numbers = #tpu.dot_dimension_numbers<[1], [0], [0], [1], [0, 0, 1, 1], [], []>} : vector<2x8xf32>, vector<8x24xf32>, vector<2x24xf32> -> vector<2x24xf32>
    %1189 = arith.addf %1188, %33 : vector<2x24xf32>
    %1190 = vector.extract_strided_slice %695 {offsets = [0, 0], sizes = [2, 24], strides = [1, 1]} : vector<2x48xf32> to vector<2x24xf32>
    %1191 = vector.extract_strided_slice %1190 {offsets = [0, 0], sizes = [2, 8], strides = [1, 1]} : vector<2x24xf32> to vector<2x8xf32>
    %1192 = vector.extract_strided_slice %1189 {offsets = [0, 0], sizes = [2, 8], strides = [1, 1]} : vector<2x24xf32> to vector<2x8xf32>
    %1193 = arith.addf %1191, %1192 : vector<2x8xf32>
    %1194 = arith.negf %1193 : vector<2x8xf32>
    %1195 = math.exp %1194 : vector<2x8xf32>
    %cst_256 = arith.constant 1.000000e+00 : f32
    %1196 = vector.broadcast %cst_256 : f32 to vector<2x8xf32>
    %1197 = arith.addf %1196, %1195 : vector<2x8xf32>
    %1198 = arith.divf %1196, %1197 : vector<2x8xf32>
    %1199 = vector.extract_strided_slice %1190 {offsets = [0, 8], sizes = [2, 8], strides = [1, 1]} : vector<2x24xf32> to vector<2x8xf32>
    %1200 = vector.extract_strided_slice %1189 {offsets = [0, 8], sizes = [2, 8], strides = [1, 1]} : vector<2x24xf32> to vector<2x8xf32>
    %1201 = arith.addf %1199, %1200 : vector<2x8xf32>
    %1202 = arith.negf %1201 : vector<2x8xf32>
    %1203 = math.exp %1202 : vector<2x8xf32>
    %cst_257 = arith.constant 1.000000e+00 : f32
    %1204 = vector.broadcast %cst_257 : f32 to vector<2x8xf32>
    %1205 = arith.addf %1204, %1203 : vector<2x8xf32>
    %1206 = arith.divf %1204, %1205 : vector<2x8xf32>
    %1207 = vector.extract_strided_slice %1190 {offsets = [0, 16], sizes = [2, 8], strides = [1, 1]} : vector<2x24xf32> to vector<2x8xf32>
    %1208 = vector.extract_strided_slice %1189 {offsets = [0, 16], sizes = [2, 8], strides = [1, 1]} : vector<2x24xf32> to vector<2x8xf32>
    %1209 = arith.mulf %1198, %1208 : vector<2x8xf32>
    %1210 = arith.addf %1207, %1209 : vector<2x8xf32>
    %1211 = math.tanh %1210 : vector<2x8xf32>
    %cst_258 = arith.constant 1.000000e+00 : f32
    %1212 = vector.broadcast %cst_258 : f32 to vector<2x8xf32>
    %1213 = arith.subf %1212, %1206 : vector<2x8xf32>
    %1214 = arith.mulf %1213, %1211 : vector<2x8xf32>
    %1215 = arith.mulf %1206, %1151 : vector<2x8xf32>
    %1216 = arith.addf %1214, %1215 : vector<2x8xf32>
    %c7_i32_259 = arith.constant 7 : i32
    %1217 = vector.broadcast %c7_i32_259 : i32 to vector<2x1xi32>
    %1218 = arith.cmpi sgt, %0, %1217 : vector<2x1xi32>
    %1219 = vector.shape_cast %1218 : vector<2x1xi1> to vector<2x1xi1>
    %1220 = vector.broadcast %1219 : vector<2x1xi1> to vector<2x8xi1>
    %1221 = arith.select %1220, %1216, %1151 : vector<2x8xi1>, vector<2x8xf32>
    %cst_260 = arith.constant dense<0.000000e+00> : vector<2x24xf32>
    %1222 = tpu.matmul %1187, %29, %cst_260 {dimension_numbers = #tpu.dot_dimension_numbers<[1], [0], [0], [1], [0, 0, 1, 1], [], []>} : vector<2x8xf32>, vector<8x24xf32>, vector<2x24xf32> -> vector<2x24xf32>
    %1223 = arith.addf %1222, %37 : vector<2x24xf32>
    %1224 = vector.extract_strided_slice %667 {offsets = [0, 24], sizes = [2, 24], strides = [1, 1]} : vector<2x48xf32> to vector<2x24xf32>
    %1225 = vector.extract_strided_slice %1224 {offsets = [0, 0], sizes = [2, 8], strides = [1, 1]} : vector<2x24xf32> to vector<2x8xf32>
    %1226 = vector.extract_strided_slice %1223 {offsets = [0, 0], sizes = [2, 8], strides = [1, 1]} : vector<2x24xf32> to vector<2x8xf32>
    %1227 = arith.addf %1225, %1226 : vector<2x8xf32>
    %1228 = arith.negf %1227 : vector<2x8xf32>
    %1229 = math.exp %1228 : vector<2x8xf32>
    %cst_261 = arith.constant 1.000000e+00 : f32
    %1230 = vector.broadcast %cst_261 : f32 to vector<2x8xf32>
    %1231 = arith.addf %1230, %1229 : vector<2x8xf32>
    %1232 = arith.divf %1230, %1231 : vector<2x8xf32>
    %1233 = vector.extract_strided_slice %1224 {offsets = [0, 8], sizes = [2, 8], strides = [1, 1]} : vector<2x24xf32> to vector<2x8xf32>
    %1234 = vector.extract_strided_slice %1223 {offsets = [0, 8], sizes = [2, 8], strides = [1, 1]} : vector<2x24xf32> to vector<2x8xf32>
    %1235 = arith.addf %1233, %1234 : vector<2x8xf32>
    %1236 = arith.negf %1235 : vector<2x8xf32>
    %1237 = math.exp %1236 : vector<2x8xf32>
    %cst_262 = arith.constant 1.000000e+00 : f32
    %1238 = vector.broadcast %cst_262 : f32 to vector<2x8xf32>
    %1239 = arith.addf %1238, %1237 : vector<2x8xf32>
    %1240 = arith.divf %1238, %1239 : vector<2x8xf32>
    %1241 = vector.extract_strided_slice %1224 {offsets = [0, 16], sizes = [2, 8], strides = [1, 1]} : vector<2x24xf32> to vector<2x8xf32>
    %1242 = vector.extract_strided_slice %1223 {offsets = [0, 16], sizes = [2, 8], strides = [1, 1]} : vector<2x24xf32> to vector<2x8xf32>
    %1243 = arith.mulf %1232, %1242 : vector<2x8xf32>
    %1244 = arith.addf %1241, %1243 : vector<2x8xf32>
    %1245 = math.tanh %1244 : vector<2x8xf32>
    %cst_263 = arith.constant 1.000000e+00 : f32
    %1246 = vector.broadcast %cst_263 : f32 to vector<2x8xf32>
    %1247 = arith.subf %1246, %1240 : vector<2x8xf32>
    %1248 = arith.mulf %1247, %1245 : vector<2x8xf32>
    %1249 = arith.mulf %1240, %1187 : vector<2x8xf32>
    %1250 = arith.addf %1248, %1249 : vector<2x8xf32>
    %c8_i32_264 = arith.constant 8 : i32
    %1251 = vector.broadcast %c8_i32_264 : i32 to vector<2x1xi32>
    %1252 = arith.subi %1251, %0 : vector<2x1xi32>
    %c7_i32_265 = arith.constant 7 : i32
    %1253 = vector.broadcast %c7_i32_265 : i32 to vector<2x1xi32>
    %1254 = arith.cmpi sle, %1252, %1253 : vector<2x1xi32>
    %1255 = vector.shape_cast %1254 : vector<2x1xi1> to vector<2x1xi1>
    %1256 = vector.broadcast %1255 : vector<2x1xi1> to vector<2x8xi1>
    %1257 = arith.select %1256, %1250, %1187 : vector<2x8xi1>, vector<2x8xf32>
    %c0_266 = arith.constant 0 : index
    %c0_267 = arith.constant 0 : index
    %1258 = vector.load %arg15[%c0_266, %c0_267] : memref<610x458xf32, #tpu.memory_space<vmem>>, vector<8x458xf32>
    %cst_268 = arith.constant dense<0.000000e+00> : vector<2x458xf32>
    %1259 = tpu.matmul %1257, %1258, %cst_268 {dimension_numbers = #tpu.dot_dimension_numbers<[1], [0], [0], [1], [0, 0, 1, 1], [], []>} : vector<2x8xf32>, vector<8x458xf32>, vector<2x458xf32> -> vector<2x458xf32>
    %c8 = arith.constant 8 : index
    %c0_269 = arith.constant 0 : index
    %1260 = vector.load %arg15[%c8, %c0_269] : memref<610x458xf32, #tpu.memory_space<vmem>>, vector<8x458xf32>
    %cst_270 = arith.constant dense<0.000000e+00> : vector<2x458xf32>
    %1261 = tpu.matmul %1221, %1260, %cst_270 {dimension_numbers = #tpu.dot_dimension_numbers<[1], [0], [0], [1], [0, 0, 1, 1], [], []>} : vector<2x8xf32>, vector<8x458xf32>, vector<2x458xf32> -> vector<2x458xf32>
    %1262 = arith.addf %1259, %1261 : vector<2x458xf32>
    %c16 = arith.constant 16 : index
    %c0_271 = arith.constant 0 : index
    %1263 = vector.load %arg15[%c16, %c0_271] : memref<610x458xf32, #tpu.memory_space<vmem>>, vector<8x458xf32>
    %cst_272 = arith.constant dense<0.000000e+00> : vector<2x458xf32>
    %1264 = tpu.matmul %663, %1263, %cst_272 {dimension_numbers = #tpu.dot_dimension_numbers<[1], [0], [0], [1], [0, 0, 1, 1], [], []>} : vector<2x8xf32>, vector<8x458xf32>, vector<2x458xf32> -> vector<2x458xf32>
    %1265 = arith.addf %1262, %1264 : vector<2x458xf32>
    %c24 = arith.constant 24 : index
    %c0_273 = arith.constant 0 : index
    %1266 = vector.load %arg15[%c24, %c0_273] : memref<610x458xf32, #tpu.memory_space<vmem>>, vector<8x458xf32>
    %cst_274 = arith.constant dense<0.000000e+00> : vector<2x458xf32>
    %1267 = tpu.matmul %627, %1266, %cst_274 {dimension_numbers = #tpu.dot_dimension_numbers<[1], [0], [0], [1], [0, 0, 1, 1], [], []>} : vector<2x8xf32>, vector<8x458xf32>, vector<2x458xf32> -> vector<2x458xf32>
    %1268 = arith.addf %1265, %1267 : vector<2x458xf32>
    %c0_275 = arith.constant 0 : index
    %c0_276 = arith.constant 0 : index
    %1269 = vector.load %arg2[%c0_275, %c0_276] : memref<2x578xf32, #tpu.memory_space<vmem>>, vector<2x578xf32>
    %c32 = arith.constant 32 : index
    %c0_277 = arith.constant 0 : index
    %1270 = vector.load %arg15[%c32, %c0_277] : memref<610x458xf32, #tpu.memory_space<vmem>>, vector<578x458xf32>
    %cst_278 = arith.constant dense<0.000000e+00> : vector<2x458xf32>
    %1271 = tpu.matmul %1269, %1270, %cst_278 {dimension_numbers = #tpu.dot_dimension_numbers<[1], [0], [0], [1], [0, 0, 1, 1], [], []>} : vector<2x578xf32>, vector<578x458xf32>, vector<2x458xf32> -> vector<2x458xf32>
    %1272 = arith.addf %1268, %1271 : vector<2x458xf32>
    %c0_279 = arith.constant 0 : index
    %c0_280 = arith.constant 0 : index
    %1273 = vector.load %arg16[%c0_279, %c0_280] : memref<1x458xf32, #tpu.memory_space<vmem>>, vector<1x458xf32>
    %1274 = vector.broadcast %1273 : vector<1x458xf32> to vector<2x458xf32>
    %1275 = arith.addf %1272, %1274 : vector<2x458xf32>
    %cst_281 = arith.constant 0.000000e+00 : f32
    %1276 = vector.broadcast %cst_281 : f32 to vector<2x458xf32>
    %1277 = arith.maximumf %1275, %1276 : vector<2x458xf32>
    %c0_282 = arith.constant 0 : index
    %c0_283 = arith.constant 0 : index
    %1278 = vector.load %arg17[%c0_282, %c0_283] : memref<458x307xf32, #tpu.memory_space<vmem>>, vector<458x307xf32>
    %cst_284 = arith.constant dense<0.000000e+00> : vector<2x307xf32>
    %1279 = tpu.matmul %1277, %1278, %cst_284 {dimension_numbers = #tpu.dot_dimension_numbers<[1], [0], [0], [1], [0, 0, 1, 1], [], []>} : vector<2x458xf32>, vector<458x307xf32>, vector<2x307xf32> -> vector<2x307xf32>
    %c0_285 = arith.constant 0 : index
    %c0_286 = arith.constant 0 : index
    %1280 = vector.load %arg18[%c0_285, %c0_286] : memref<1x307xf32, #tpu.memory_space<vmem>>, vector<1x307xf32>
    %1281 = vector.broadcast %1280 : vector<1x307xf32> to vector<2x307xf32>
    %1282 = arith.addf %1279, %1281 : vector<2x307xf32>
    %cst_287 = arith.constant 0.000000e+00 : f32
    %1283 = vector.broadcast %cst_287 : f32 to vector<2x307xf32>
    %1284 = arith.maximumf %1282, %1283 : vector<2x307xf32>
    %c0_288 = arith.constant 0 : index
    %c0_289 = arith.constant 0 : index
    %1285 = vector.load %arg19[%c0_288, %c0_289] : memref<307x8xf32, #tpu.memory_space<vmem>>, vector<307x8xf32>
    %cst_290 = arith.constant dense<0.000000e+00> : vector<2x8xf32>
    %1286 = tpu.matmul %1284, %1285, %cst_290 {dimension_numbers = #tpu.dot_dimension_numbers<[1], [0], [0], [1], [0, 0, 1, 1], [], []>} : vector<2x307xf32>, vector<307x8xf32>, vector<2x8xf32> -> vector<2x8xf32>
    %c0_291 = arith.constant 0 : index
    %c0_292 = arith.constant 0 : index
    %1287 = vector.load %arg20[%c0_291, %c0_292] : memref<1x8xf32, #tpu.memory_space<vmem>>, vector<1x8xf32>
    %1288 = vector.broadcast %1287 : vector<1x8xf32> to vector<2x8xf32>
    %1289 = arith.addf %1286, %1288 : vector<2x8xf32>
    %1290 = vector.extract_strided_slice %1289 {offsets = [0, 0], sizes = [2, 4], strides = [1, 1]} : vector<2x8xf32> to vector<2x4xf32>
    %1291 = vector.extract_strided_slice %1289 {offsets = [0, 4], sizes = [2, 4], strides = [1, 1]} : vector<2x8xf32> to vector<2x4xf32>
    %cst_293 = arith.constant 5.000000e+00 : f32
    %1292 = vector.broadcast %cst_293 : f32 to vector<2x4xf32>
    %1293 = arith.subf %1291, %1292 : vector<2x4xf32>
    %cst_294 = arith.constant 0.000000e+00 : f32
    %1294 = vector.broadcast %cst_294 : f32 to vector<2x4xf32>
    %1295 = arith.maximumf %1293, %1294 : vector<2x4xf32>
    %1296 = math.absf %1293 : vector<2x4xf32>
    %cst_295 = arith.constant 0.000000e+00 : f32
    %1297 = vector.broadcast %cst_295 : f32 to vector<2x4xf32>
    %1298 = arith.subf %1297, %1296 : vector<2x4xf32>
    %1299 = math.exp %1298 : vector<2x4xf32>
    %cst_296 = arith.constant 1.000000e+00 : f32
    %1300 = vector.broadcast %cst_296 : f32 to vector<2x4xf32>
    %1301 = arith.addf %1300, %1299 : vector<2x4xf32>
    %1302 = math.log %1301 : vector<2x4xf32>
    %1303 = arith.addf %1295, %1302 : vector<2x4xf32>
    %c0_297 = arith.constant 0 : index
    %c0_298 = arith.constant 0 : index
    %1304 = vector.load %arg3[%c0_297, %c0_298] : memref<2x4xf32, #tpu.memory_space<vmem>>, vector<2x4xf32>
    %1305 = arith.mulf %1303, %1304 : vector<2x4xf32>
    %1306 = arith.addf %1290, %1305 : vector<2x4xf32>
    %c0_299 = arith.constant 0 : index
    %c0_300 = arith.constant 0 : index
    %1307 = vector.load %arg21[%c0_299, %c0_300] : memref<4x2xf32, #tpu.memory_space<vmem>>, vector<4x2xf32>
    %cst_301 = arith.constant dense<0.000000e+00> : vector<2x2xf32>
    %1308 = tpu.matmul %1306, %1307, %cst_301 {dimension_numbers = #tpu.dot_dimension_numbers<[1], [0], [0], [1], [0, 0, 1, 1], [], []>} : vector<2x4xf32>, vector<4x2xf32>, vector<2x2xf32> -> vector<2x2xf32>
    %c0_302 = arith.constant 0 : index
    %c0_303 = arith.constant 0 : index
    %1309 = vector.load %arg22[%c0_302, %c0_303] : memref<1x2xf32, #tpu.memory_space<vmem>>, vector<1x2xf32>
    %1310 = vector.broadcast %1309 : vector<1x2xf32> to vector<2x2xf32>
    %1311 = arith.addf %1308, %1310 : vector<2x2xf32>
    %1312 = arith.negf %1311 : vector<2x2xf32>
    %1313 = math.exp %1312 : vector<2x2xf32>
    %cst_304 = arith.constant 1.000000e+00 : f32
    %1314 = vector.broadcast %cst_304 : f32 to vector<2x2xf32>
    %1315 = arith.addf %1314, %1313 : vector<2x2xf32>
    %1316 = arith.divf %1314, %1315 : vector<2x2xf32>
    %c0_305 = arith.constant 0 : index
    %c0_306 = arith.constant 0 : index
    %1317 = vector.load %arg23[%c0_305, %c0_306] : memref<2x2xf32, #tpu.memory_space<vmem>>, vector<2x2xf32>
    tpu.vector_store %arg23[%c0_305, %c0_306], %1316 {strides = array<i32>} : memref<2x2xf32, #tpu.memory_space<vmem>>, vector<2x2xf32>,
    %c0_307 = arith.constant 0 : index
    %c0_308 = arith.constant 0 : index
    %1318 = vector.load %arg24[%c0_307, %c0_308] : memref<2x4xf32, #tpu.memory_space<vmem>>, vector<2x4xf32>
    tpu.vector_store %arg24[%c0_307, %c0_308], %1290 {strides = array<i32>} : memref<2x4xf32, #tpu.memory_space<vmem>>, vector<2x4xf32>,
    %c0_309 = arith.constant 0 : index
    %c0_310 = arith.constant 0 : index
    %1319 = vector.load %arg25[%c0_309, %c0_310] : memref<2x4xf32, #tpu.memory_space<vmem>>, vector<2x4xf32>
    tpu.vector_store %arg25[%c0_309, %c0_310], %1303 {strides = array<i32>} : memref<2x4xf32, #tpu.memory_space<vmem>>, vector<2x4xf32>,
    %c0_311 = arith.constant 0 : index
    %c0_312 = arith.constant 0 : index
    %1320 = vector.load %arg26[%c0_311, %c0_312] : memref<2x4xf32, #tpu.memory_space<vmem>>, vector<2x4xf32>
    tpu.vector_store %arg26[%c0_311, %c0_312], %1306 {strides = array<i32>} : memref<2x4xf32, #tpu.memory_space<vmem>>, vector<2x4xf32>,
    return
  }
}

</mosaic_0001>

<llo_original>
// kernel: dvib_forward.1
$region0: #{dvib_forward.1}
  #allocation0 [shape = 'u32[]', space=smem, size = 0x4, offset = 0x4, fixed_abs, tag = 'smem constant byte address 0x4 - core index']
  #allocation1 [shape = 'u32[144,128]{1,0:T(1,128)}', space=vmem, size = 0x12000, scoped, tag = 'internal scratch']
  %s0 = inlined_call_operand.vmem [shape: f32[8,2,20], index: 0, kind: input, shape index: {}]
  %s1 = inlined_call_operand.vmem [shape: s32[2,1], index: 1, kind: input, shape index: {}]
  %s2 = inlined_call_operand.vmem [shape: f32[2,578], index: 2, kind: input, shape index: {}]
  %s3 = inlined_call_operand.vmem [shape: f32[2,4], index: 3, kind: input, shape index: {}]
  %s4 = inlined_call_operand.vmem [shape: f32[20,8], index: 4, kind: input, shape index: {}]
  %s5 = inlined_call_operand.vmem [shape: f32[1,8], index: 5, kind: input, shape index: {}]
  %s6 = inlined_call_operand.vmem [shape: f32[8,48], index: 6, kind: input, shape index: {}]
  %s7 = inlined_call_operand.vmem [shape: f32[1,48], index: 7, kind: input, shape index: {}]
  %s8 = inlined_call_operand.vmem [shape: f32[2,8,24], index: 8, kind: input, shape index: {}]
  %s9 = inlined_call_operand.vmem [shape: f32[2,1,24], index: 9, kind: input, shape index: {}]
  %s10 = inlined_call_operand.vmem [shape: f32[8,48], index: 10, kind: input, shape index: {}]
  %s11 = inlined_call_operand.vmem [shape: f32[8,48], index: 11, kind: input, shape index: {}]
  %s12 = inlined_call_operand.vmem [shape: f32[1,48], index: 12, kind: input, shape index: {}]
  %s13 = inlined_call_operand.vmem [shape: f32[2,8,24], index: 13, kind: input, shape index: {}]
  %s14 = inlined_call_operand.vmem [shape: f32[2,1,24], index: 14, kind: input, shape index: {}]
  %s15 = inlined_call_operand.vmem [shape: f32[610,458], index: 15, kind: input, shape index: {}]
  %s16 = inlined_call_operand.vmem [shape: f32[1,458], index: 16, kind: input, shape index: {}]
  %s17 = inlined_call_operand.vmem [shape: f32[458,307], index: 17, kind: input, shape index: {}]
  %s18 = inlined_call_operand.vmem [shape: f32[1,307], index: 18, kind: input, shape index: {}]
  %s19 = inlined_call_operand.vmem [shape: f32[307,8], index: 19, kind: input, shape index: {}]
  %s20 = inlined_call_operand.vmem [shape: f32[1,8], index: 20, kind: input, shape index: {}]
  %s21 = inlined_call_operand.vmem [shape: f32[4,2], index: 21, kind: input, shape index: {}]
  %s22 = inlined_call_operand.vmem [shape: f32[1,2], index: 22, kind: input, shape index: {}]
  %s23 = inlined_call_operand.hbm [shape: f32[2,2], index: 23, kind: output, shape index: {0}]
  %s24 = inlined_call_operand.hbm [shape: f32[2,4], index: 24, kind: output, shape index: {1}]
  %s25 = inlined_call_operand.hbm [shape: f32[2,4], index: 25, kind: output, shape index: {2}]
  %s26 = inlined_call_operand.hbm [shape: f32[2,4], index: 26, kind: output, shape index: {3}]
  %27 = xla_tuple %s23, %s24, %s25, %s26
  %s28 = sld [smem:[#allocation0]]
  $region126: #{dvib_forward.1} parent=0
    _
  %s30 = ssub.s32 1, %s28
  %s31 = scalar_select 0, %s30, %s28
  $region1: #{dvib_forward.1} parent=0
    #allocation2 [shape = 'u8[1024]{0}', space=vmem, size = 0x400, scoped, tag = 'output window, operand 0, single buffered']
    #allocation3 [shape = 's32[1]{0}', space=sflag, size = 0x4, scoped, tag = 'scoped memory for dvib_forward.1']
    #allocation4 [shape = 'u8[1024]{0}', space=vmem, size = 0x400, scoped, tag = 'output window, operand 1, single buffered']
    #allocation5 [shape = 's32[1]{0}', space=sflag, size = 0x4, scoped, tag = 'scoped memory for dvib_forward.1']
    #allocation6 [shape = 'u8[1024]{0}', space=vmem, size = 0x400, scoped, tag = 'output window, operand 2, single buffered']
    #allocation7 [shape = 'u8[1024]{0}', space=vmem, size = 0x400, scoped, tag = 'output window, operand 3, single buffered']
    #allocation8 [shape = 's32[1]{0}', space=sflag, size = 0x4, scoped, tag = 'scoped memory for dvib_forward.1']
    %32 = vsyncpa [#allocation3], 0
    %33 = vsyncpa [#allocation5], 0
    %34 = vsyncpa [#allocation8], 0
    // Predicated region
    $region2: #{dvib_forward.1} parent=1 // pred_check
      _
    $region3: #{dvib_forward.1} parent=1 // pred_check_branch
      %36 = sbr.rel (0) target = $region5
    $region4: #{dvib_forward.1} parent=1 // pred_region
      _
    $region5: #{dvib_forward.1} parent=1 // pred_fallthru
      _
    // Predicated region
    $region6: #{dvib_forward.1} parent=1 // pred_check
      _
    $region7: #{dvib_forward.1} parent=1 // pred_check_branch
      %38 = sbr.rel (0) target = $region9
    $region8: #{dvib_forward.1} parent=1 // pred_region
      _
    $region9: #{dvib_forward.1} parent=1 // pred_fallthru
      _
    // Predicated region
    $region10: #{dvib_forward.1} parent=1 // pred_check
      _
    $region11: #{dvib_forward.1} parent=1 // pred_check_branch
      %40 = sbr.rel (0) target = $region13
    $region12: #{dvib_forward.1} parent=1 // pred_region
      _
    $region13: #{dvib_forward.1} parent=1 // pred_fallthru
      _
    // Predicated region
    $region14: #{dvib_forward.1} parent=1 // pred_check
      _
    $region15: #{dvib_forward.1} parent=1 // pred_check_branch
      %42 = sbr.rel (0) target = $region17
    $region16: #{dvib_forward.1} parent=1 // pred_region
      _
    $region17: #{dvib_forward.1} parent=1 // pred_fallthru
      _
    // Predicated region
    $region18: #{dvib_forward.1} parent=1 // pred_check
      _
    $region19: #{dvib_forward.1} parent=1 // pred_check_branch
      %44 = sbr.rel (0) target = $region21
    $region20: #{dvib_forward.1} parent=1 // pred_region
      _
    $region21: #{dvib_forward.1} parent=1 // pred_fallthru
      _
    // Predicated region
    $region22: #{dvib_forward.1} parent=1 // pred_check
      _
    $region23: #{dvib_forward.1} parent=1 // pred_check_branch
      %46 = sbr.rel (0) target = $region25
    $region24: #{dvib_forward.1} parent=1 // pred_region
      _
    $region25: #{dvib_forward.1} parent=1 // pred_fallthru
      _
    // Predicated region
    $region26: #{dvib_forward.1} parent=1 // pred_check
      _
    $region27: #{dvib_forward.1} parent=1 // pred_check_branch
      %48 = sbr.rel (0) target = $region29
    $region28: #{dvib_forward.1} parent=1 // pred_region
      _
    $region29: #{dvib_forward.1} parent=1 // pred_fallthru
      _
    // Predicated region
    $region30: #{dvib_forward.1} parent=1 // pred_check
      _
    $region31: #{dvib_forward.1} parent=1 // pred_check_branch
      %50 = sbr.rel (0) target = $region33
    $region32: #{dvib_forward.1} parent=1 // pred_region
      _
    $region33: #{dvib_forward.1} parent=1 // pred_fallthru
      _
    // Predicated region
    $region34: #{dvib_forward.1} parent=1 // pred_check
      _
    $region35: #{dvib_forward.1} parent=1 // pred_check_branch
      %52 = sbr.rel (0) target = $region37
    $region36: #{dvib_forward.1} parent=1 // pred_region
      _
    $region37: #{dvib_forward.1} parent=1 // pred_fallthru
      _
    // Predicated region
    $region38: #{dvib_forward.1} parent=1 // pred_check
      _
    $region39: #{dvib_forward.1} parent=1 // pred_check_branch
      %54 = sbr.rel (0) target = $region41
    $region40: #{dvib_forward.1} parent=1 // pred_region
      _
    $region41: #{dvib_forward.1} parent=1 // pred_fallthru
      _
    // Predicated region
    $region42: #{dvib_forward.1} parent=1 // pred_check
      _
    $region43: #{dvib_forward.1} parent=1 // pred_check_branch
      %56 = sbr.rel (0) target = $region45
    $region44: #{dvib_forward.1} parent=1 // pred_region
      _
    $region45: #{dvib_forward.1} parent=1 // pred_fallthru
      _
    // Predicated region
    $region46: #{dvib_forward.1} parent=1 // pred_check
      _
    $region47: #{dvib_forward.1} parent=1 // pred_check_branch
      %58 = sbr.rel (0) target = $region49
    $region48: #{dvib_forward.1} parent=1 // pred_region
      _
    $region49: #{dvib_forward.1} parent=1 // pred_fallthru
      _
    // Predicated region
    $region50: #{dvib_forward.1} parent=1 // pred_check
      _
    $region51: #{dvib_forward.1} parent=1 // pred_check_branch
      %60 = sbr.rel (0) target = $region53
    $region52: #{dvib_forward.1} parent=1 // pred_region
      _
    $region53: #{dvib_forward.1} parent=1 // pred_fallthru
      _
    // Predicated region
    $region54: #{dvib_forward.1} parent=1 // pred_check
      _
    $region55: #{dvib_forward.1} parent=1 // pred_check_branch
      %62 = sbr.rel (0) target = $region57
    $region56: #{dvib_forward.1} parent=1 // pred_region
      _
    $region57: #{dvib_forward.1} parent=1 // pred_fallthru
      _
    // Predicated region
    $region58: #{dvib_forward.1} parent=1 // pred_check
      _
    $region59: #{dvib_forward.1} parent=1 // pred_check_branch
      %64 = sbr.rel (0) target = $region61
    $region60: #{dvib_forward.1} parent=1 // pred_region
      _
    $region61: #{dvib_forward.1} parent=1 // pred_fallthru
      _
    // Predicated region
    $region62: #{dvib_forward.1} parent=1 // pred_check
      _
    $region63: #{dvib_forward.1} parent=1 // pred_check_branch
      %66 = sbr.rel (0) target = $region65
    $region64: #{dvib_forward.1} parent=1 // pred_region
      _
    $region65: #{dvib_forward.1} parent=1 // pred_fallthru
      _
    // Predicated region
    $region66: #{dvib_forward.1} parent=1 // pred_check
      _
    $region67: #{dvib_forward.1} parent=1 // pred_check_branch
      %68 = sbr.rel (0) target = $region69
    $region68: #{dvib_forward.1} parent=1 // pred_region
      _
    $region69: #{dvib_forward.1} parent=1 // pred_fallthru
      _
    // Predicated region
    $region70: #{dvib_forward.1} parent=1 // pred_check
      _
    $region71: #{dvib_forward.1} parent=1 // pred_check_branch
      %70 = sbr.rel (0) target = $region73
    $region72: #{dvib_forward.1} parent=1 // pred_region
      _
    $region73: #{dvib_forward.1} parent=1 // pred_fallthru
      _
    // Predicated region
    $region74: #{dvib_forward.1} parent=1 // pred_check
      _
    $region75: #{dvib_forward.1} parent=1 // pred_check_branch
      %72 = sbr.rel (0) target = $region77
    $region76: #{dvib_forward.1} parent=1 // pred_region
      _
    $region77: #{dvib_forward.1} parent=1 // pred_fallthru
      _
    // Predicated region
    $region78: #{dvib_forward.1} parent=1 // pred_check
      _
    $region79: #{dvib_forward.1} parent=1 // pred_check_branch
      %74 = sbr.rel (0) target = $region81
    $region80: #{dvib_forward.1} parent=1 // pred_region
      _
    $region81: #{dvib_forward.1} parent=1 // pred_fallthru
      _
    // Predicated region
    $region82: #{dvib_forward.1} parent=1 // pred_check
      _
    $region83: #{dvib_forward.1} parent=1 // pred_check_branch
      %76 = sbr.rel (0) target = $region85
    $region84: #{dvib_forward.1} parent=1 // pred_region
      _
    $region85: #{dvib_forward.1} parent=1 // pred_fallthru
      _
    // Predicated region
    $region86: #{dvib_forward.1} parent=1 // pred_check
      _
    $region87: #{dvib_forward.1} parent=1 // pred_check_branch
      %78 = sbr.rel (0) target = $region89
    $region88: #{dvib_forward.1} parent=1 // pred_region
      _
    $region89: #{dvib_forward.1} parent=1 // pred_fallthru
      _
    // Predicated region
    $region90: #{dvib_forward.1} parent=1 // pred_check
      _
    $region91: #{dvib_forward.1} parent=1 // pred_check_branch
      %80 = sbr.rel (0) target = $region93
    $region92: #{dvib_forward.1} parent=1 // pred_region
      _
    $region93: #{dvib_forward.1} parent=1 // pred_fallthru
      _
    %v81 = vld [vmem:[%s1] sm:$0x3]
    %v82 = vld [vmem:[%s4] sm:$0xff]
    %v83 = vld [vmem:[%s4 + $0x8] sm:$0xff]
    %v84 = vld [vmem:[%s4 + $0x10] sm:$0xf]
    %v85 = vld [vmem:[%s5] sm:$0x1]
    %v87 = vlaneseq
    %v88 = vshrl.u32 %v87, 7
    %v89 = vsub.s32 0, %v88
    %v90 = vrot.slane %v85, %v89
    %v92 = vld [vmem:[%s6] sm:$0xff]
    %v93 = vld [vmem:[%s7] sm:$0x1]
    %v95 = vlaneseq
    %v96 = vshrl.u32 %v95, 7
    %v97 = vsub.s32 0, %v96
    %v98 = vrot.slane %v93, %v97
    %v100 = vld [vmem:[%s8] sm:$0xff]
    %s101 = scalar_lea.vmem %s8, 8
    %v102 = vld [vmem:[%s101] sm:$0xff]
    %v103 = vld [vmem:[%s9] sm:$0x1]
    %v105 = vlaneseq
    %v106 = vshrl.u32 %v105, 7
    %v107 = vsub.s32 0, %v106
    %v108 = vrot.slane %v103, %v107
    %s110 = scalar_lea.vmem %s9, 1
    %v111 = vld [vmem:[%s110] sm:$0x1]
    %v113 = vlaneseq
    %v114 = vshrl.u32 %v113, 7
    %v115 = vsub.s32 0, %v114
    %v116 = vrot.slane %v111, %v115
    %v118 = vld [vmem:[%s10] sm:$0xff]
    %v119 = vld [vmem:[%s11] sm:$0xff]
    %v120 = vld [vmem:[%s12] sm:$0x1]
    %v122 = vlaneseq
    %v123 = vshrl.u32 %v122, 7
    %v124 = vsub.s32 0, %v123
    %v125 = vrot.slane %v120, %v124
    %v127 = vld [vmem:[%s13] sm:$0xff]
    %s128 = scalar_lea.vmem %s13, 8
    %v129 = vld [vmem:[%s128] sm:$0xff]
    %v130 = vld [vmem:[%s14] sm:$0x1]
    %v132 = vlaneseq
    %v133 = vshrl.u32 %v132, 7
    %v134 = vsub.s32 0, %v133
    %v135 = vrot.slane %v130, %v134
    %s137 = scalar_lea.vmem %s14, 1
    %v138 = vld [vmem:[%s137] sm:$0x1]
    %v140 = vlaneseq
    %v141 = vshrl.u32 %v140, 7
    %v142 = vsub.s32 0, %v141
    %v143 = vrot.slane %v138, %v142
    %v145 = vld [vmem:[%s0] sm:$0x3]
    %vm146 = vcmask 162816
    %v148 = vsel %vm146, %v145, 0
    %vm150 = vcmask 1043456
    %v152 = vsel %vm150, %v84, 0
    %154 = vmatprep.subr.mxu0 0.0
    %155 = vmatpush1.msra.mxu0 %v82
    %156 = vmatprep.subr.mxu0 0.0
    %157 = vmatpush1.msra.mxu0 %v83
    %158 = vmatprep.subr.mxu0 0.0
    %159 = vmatpush1.msra.mxu0 %v152
    %160 = vmatprep.subr.mxu0 0.0
    %161 = vmatpush1.msra.mxu0 0.0
    %162 = vmatprep.subr.mxu0 0.0
    %163 = vmatpush1.msra.mxu0 0.0
    %164 = vmatprep.subr.mxu0 0.0
    %165 = vmatpush1.msra.mxu0 0.0
    %166 = vmatprep.subr.mxu0 0.0
    %167 = vmatpush1.msra.mxu0 0.0
    %168 = vmatprep.subr.mxu0 0.0
    %169 = vmatpush1.msra.mxu0 0.0
    %170 = vmatprep.subr.mxu0 0.0
    %171 = vmatpush1.msra.mxu0 0.0
    %172 = vmatprep.subr.mxu0 0.0
    %173 = vmatpush1.msra.mxu0 0.0
    %174 = vmatprep.subr.mxu0 0.0
    %175 = vmatpush1.msra.mxu0 0.0
    %176 = vmatprep.subr.mxu0 0.0
    %177 = vmatpush1.msra.mxu0 0.0
    %178 = vmatprep.subr.mxu0 0.0
    %179 = vmatpush1.msra.mxu0 0.0
    %180 = vmatprep.subr.mxu0 0.0
    %181 = vmatpush1.msra.mxu0 0.0
    %182 = vmatprep.subr.mxu0 0.0
    %183 = vmatpush1.msra.mxu0 0.0
    %184 = vmatprep.subr.mxu0 0.0
    %185 = vmatpush1.msra.mxu0 0.0
    %186 = vmatprep.subr.mxu0 0.0
    %187 = vmatpush1.msra.mxu0 0.0
    %188 = vmatprep.subr.mxu0 0.0
    %189 = vmatpush1.msra.mxu0 0.0
    %190 = vmatprep.subr.mxu0 0.0
    %191 = vmatpush1.msra.mxu0 0.0
    %192 = vmatprep.subr.mxu0 0.0
    %193 = vmatpush1.msra.mxu0 0.0
    %194 = vmatprep.subr.mxu0 0.0
    %195 = vmatpush1.msra.mxu0 0.0
    %196 = vmatprep.subr.mxu0 0.0
    %197 = vmatpush1.msra.mxu0 0.0
    %198 = vmatprep.subr.mxu0 0.0
    %199 = vmatpush1.msra.mxu0 0.0
    %200 = vmatprep.subr.mxu0 0.0
    %201 = vmatpush1.msra.mxu0 0.0
    %202 = vmatprep.subr.mxu0 0.0
    %203 = vmatpush1.msra.mxu0 0.0
    %204 = vmatprep.subr.mxu0 0.0
    %205 = vmatpush1.msra.mxu0 0.0
    %206 = vmatprep.subr.mxu0 0.0
    %207 = vmatpush1.msra.mxu0 0.0
    %208 = vmatprep.subr.mxu0 0.0
    %209 = vmatpush1.msra.mxu0 0.0
    %210 = vmatprep.subr.mxu0 0.0
    %211 = vmatpush1.msra.mxu0 0.0
    %212 = vmatprep.subr.mxu0 0.0
    %213 = vmatpush1.msra.mxu0 0.0
    %214 = vmatprep.subr.mxu0 0.0
    %215 = vmatpush1.msra.mxu0 0.0
    %216 = vmatprep.subr.mxu0 0.0
    %217 = vmatpush1.msra.mxu0 0.0
    %218 = vmatprep.mubr.f32.mxu0 0.0
    %219 = vmatmul.mubr.f32.gmra.mrb[0].mxu0 %v148
    %v220 = vpop.f32.mrb[0].mxu0
    %v221 = vadd.f32 %v90, %v220
    %v222 = vpop.f32.mrb[0].mxu0
    %223 = vdwg.mxu0
    %v224 = vmax.f32 %v221, 0.0
    %vm225 = vcmask 64512
    %v227 = vsel %vm225, %v224, 0
    %229 = vmatprep.subr.mxu0 0.0
    %230 = vmatpush1.msra.mxu0 %v92
    %231 = vmatprep.subr.mxu0 0.0
    %232 = vmatpush1.msra.mxu0 0.0
    %233 = vmatprep.subr.mxu0 0.0
    %234 = vmatpush1.msra.mxu0 0.0
    %235 = vmatprep.subr.mxu0 0.0
    %236 = vmatpush1.msra.mxu0 0.0
    %237 = vmatprep.subr.mxu0 0.0
    %238 = vmatpush1.msra.mxu0 0.0
    %239 = vmatprep.subr.mxu0 0.0
    %240 = vmatpush1.msra.mxu0 0.0
    %241 = vmatprep.subr.mxu0 0.0
    %242 = vmatpush1.msra.mxu0 0.0
    %243 = vmatprep.subr.mxu0 0.0
    %244 = vmatpush1.msra.mxu0 0.0
    %245 = vmatprep.subr.mxu0 0.0
    %246 = vmatpush1.msra.mxu0 0.0
    %247 = vmatprep.subr.mxu0 0.0
    %248 = vmatpush1.msra.mxu0 0.0
    %249 = vmatprep.subr.mxu0 0.0
    %250 = vmatpush1.msra.mxu0 0.0
    %251 = vmatprep.subr.mxu0 0.0
    %252 = vmatpush1.msra.mxu0 0.0
    %253 = vmatprep.subr.mxu0 0.0
    %254 = vmatpush1.msra.mxu0 0.0
    %255 = vmatprep.subr.mxu0 0.0
    %256 = vmatpush1.msra.mxu0 0.0
    %257 = vmatprep.subr.mxu0 0.0
    %258 = vmatpush1.msra.mxu0 0.0
    %259 = vmatprep.subr.mxu0 0.0
    %260 = vmatpush1.msra.mxu0 0.0
    %261 = vmatprep.subr.mxu0 0.0
    %262 = vmatpush1.msra.mxu0 0.0
    %263 = vmatprep.subr.mxu0 0.0
    %264 = vmatpush1.msra.mxu0 0.0
    %265 = vmatprep.subr.mxu0 0.0
    %266 = vmatpush1.msra.mxu0 0.0
    %267 = vmatprep.subr.mxu0 0.0
    %268 = vmatpush1.msra.mxu0 0.0
    %269 = vmatprep.subr.mxu0 0.0
    %270 = vmatpush1.msra.mxu0 0.0
    %271 = vmatprep.subr.mxu0 0.0
    %272 = vmatpush1.msra.mxu0 0.0
    %273 = vmatprep.subr.mxu0 0.0
    %274 = vmatpush1.msra.mxu0 0.0
    %275 = vmatprep.subr.mxu0 0.0
    %276 = vmatpush1.msra.mxu0 0.0
    %277 = vmatprep.subr.mxu0 0.0
    %278 = vmatpush1.msra.mxu0 0.0
    %279 = vmatprep.subr.mxu0 0.0
    %280 = vmatpush1.msra.mxu0 0.0
    %281 = vmatprep.subr.mxu0 0.0
    %282 = vmatpush1.msra.mxu0 0.0
    %283 = vmatprep.subr.mxu0 0.0
    %284 = vmatpush1.msra.mxu0 0.0
    %285 = vmatprep.subr.mxu0 0.0
    %286 = vmatpush1.msra.mxu0 0.0
    %287 = vmatprep.subr.mxu0 0.0
    %288 = vmatpush1.msra.mxu0 0.0
    %289 = vmatprep.subr.mxu0 0.0
    %290 = vmatpush1.msra.mxu0 0.0
    %291 = vmatprep.subr.mxu0 0.0
    %292 = vmatpush1.msra.mxu0 0.0
    %293 = vmatprep.mubr.f32.mxu0 0.0
    %294 = vmatmul.mubr.f32.gmra.mrb[0].mxu0 %v227
    %v295 = vpop.f32.mrb[0].mxu0
    %v296 = vadd.f32 %v98, %v295
    %v297 = vpop.f32.mrb[0].mxu0
    %298 = vdwg.mxu0
    %s299 = scalar_lea.vmem %s0, 2
    %v300 = vld [vmem:[%s299] sm:$0x3]
    %v302 = vsel %vm146, %v300, 0
    %304 = vmatprep.subr.mxu0 0.0
    %305 = vmatpush1.msra.mxu0 %v82
    %306 = vmatprep.subr.mxu0 0.0
    %307 = vmatpush1.msra.mxu0 %v83
    %308 = vmatprep.subr.mxu0 0.0
    %309 = vmatpush1.msra.mxu0 %v152
    %310 = vmatprep.subr.mxu0 0.0
    %311 = vmatpush1.msra.mxu0 0.0
    %312 = vmatprep.subr.mxu0 0.0
    %313 = vmatpush1.msra.mxu0 0.0
    %314 = vmatprep.subr.mxu0 0.0
    %315 = vmatpush1.msra.mxu0 0.0
    %316 = vmatprep.subr.mxu0 0.0
    %317 = vmatpush1.msra.mxu0 0.0
    %318 = vmatprep.subr.mxu0 0.0
    %319 = vmatpush1.msra.mxu0 0.0
    %320 = vmatprep.subr.mxu0 0.0
    %321 = vmatpush1.msra.mxu0 0.0
    %322 = vmatprep.subr.mxu0 0.0
    %323 = vmatpush1.msra.mxu0 0.0
    %324 = vmatprep.subr.mxu0 0.0
    %325 = vmatpush1.msra.mxu0 0.0
    %326 = vmatprep.subr.mxu0 0.0
    %327 = vmatpush1.msra.mxu0 0.0
    %328 = vmatprep.subr.mxu0 0.0
    %329 = vmatpush1.msra.mxu0 0.0
    %330 = vmatprep.subr.mxu0 0.0
    %331 = vmatpush1.msra.mxu0 0.0
    %332 = vmatprep.subr.mxu0 0.0
    %333 = vmatpush1.msra.mxu0 0.0
    %334 = vmatprep.subr.mxu0 0.0
    %335 = vmatpush1.msra.mxu0 0.0
    %336 = vmatprep.subr.mxu0 0.0
    %337 = vmatpush1.msra.mxu0 0.0
    %338 = vmatprep.subr.mxu0 0.0
    %339 = vmatpush1.msra.mxu0 0.0
    %340 = vmatprep.subr.mxu0 0.0
    %341 = vmatpush1.msra.mxu0 0.0
    %342 = vmatprep.subr.mxu0 0.0
    %343 = vmatpush1.msra.mxu0 0.0
    %344 = vmatprep.subr.mxu0 0.0
    %345 = vmatpush1.msra.mxu0 0.0
    %346 = vmatprep.subr.mxu0 0.0
    %347 = vmatpush1.msra.mxu0 0.0
    %348 = vmatprep.subr.mxu0 0.0
    %349 = vmatpush1.msra.mxu0 0.0
    %350 = vmatprep.subr.mxu0 0.0
    %351 = vmatpush1.msra.mxu0 0.0
    %352 = vmatprep.subr.mxu0 0.0
    %353 = vmatpush1.msra.mxu0 0.0
    %354 = vmatprep.subr.mxu0 0.0
    %355 = vmatpush1.msra.mxu0 0.0
    %356 = vmatprep.subr.mxu0 0.0
    %357 = vmatpush1.msra.mxu0 0.0
    %358 = vmatprep.subr.mxu0 0.0
    %359 = vmatpush1.msra.mxu0 0.0
    %360 = vmatprep.subr.mxu0 0.0
    %361 = vmatpush1.msra.mxu0 0.0
    %362 = vmatprep.subr.mxu0 0.0
    %363 = vmatpush1.msra.mxu0 0.0
    %364 = vmatprep.subr.mxu0 0.0
    %365 = vmatpush1.msra.mxu0 0.0
    %366 = vmatprep.subr.mxu0 0.0
    %367 = vmatpush1.msra.mxu0 0.0
    %368 = vmatprep.mubr.f32.mxu0 0.0
    %369 = vmatmul.mubr.f32.gmra.mrb[0].mxu0 %v302
    %v370 = vpop.f32.mrb[0].mxu0
    %v371 = vadd.f32 %v90, %v370
    %v372 = vpop.f32.mrb[0].mxu0
    %373 = vdwg.mxu0
    %v374 = vmax.f32 %v371, 0.0
    %v376 = vsel %vm225, %v374, 0
    %378 = vmatprep.subr.mxu0 0.0
    %379 = vmatpush1.msra.mxu0 %v92
    %380 = vmatprep.subr.mxu0 0.0
    %381 = vmatpush1.msra.mxu0 0.0
    %382 = vmatprep.subr.mxu0 0.0
    %383 = vmatpush1.msra.mxu0 0.0
    %384 = vmatprep.subr.mxu0 0.0
    %385 = vmatpush1.msra.mxu0 0.0
    %386 = vmatprep.subr.mxu0 0.0
    %387 = vmatpush1.msra.mxu0 0.0
    %388 = vmatprep.subr.mxu0 0.0
    %389 = vmatpush1.msra.mxu0 0.0
    %390 = vmatprep.subr.mxu0 0.0
    %391 = vmatpush1.msra.mxu0 0.0
    %392 = vmatprep.subr.mxu0 0.0
    %393 = vmatpush1.msra.mxu0 0.0
    %394 = vmatprep.subr.mxu0 0.0
    %395 = vmatpush1.msra.mxu0 0.0
    %396 = vmatprep.subr.mxu0 0.0
    %397 = vmatpush1.msra.mxu0 0.0
    %398 = vmatprep.subr.mxu0 0.0
    %399 = vmatpush1.msra.mxu0 0.0
    %400 = vmatprep.subr.mxu0 0.0
    %401 = vmatpush1.msra.mxu0 0.0
    %402 = vmatprep.subr.mxu0 0.0
    %403 = vmatpush1.msra.mxu0 0.0
    %404 = vmatprep.subr.mxu0 0.0
    %405 = vmatpush1.msra.mxu0 0.0
    %406 = vmatprep.subr.mxu0 0.0
    %407 = vmatpush1.msra.mxu0 0.0
    %408 = vmatprep.subr.mxu0 0.0
    %409 = vmatpush1.msra.mxu0 0.0
    %410 = vmatprep.subr.mxu0 0.0
    %411 = vmatpush1.msra.mxu0 0.0
    %412 = vmatprep.subr.mxu0 0.0
    %413 = vmatpush1.msra.mxu0 0.0
    %414 = vmatprep.subr.mxu0 0.0
    %415 = vmatpush1.msra.mxu0 0.0
    %416 = vmatprep.subr.mxu0 0.0
    %417 = vmatpush1.msra.mxu0 0.0
    %418 = vmatprep.subr.mxu0 0.0
    %419 = vmatpush1.msra.mxu0 0.0
    %420 = vmatprep.subr.mxu0 0.0
    %421 = vmatpush1.msra.mxu0 0.0
    %422 = vmatprep.subr.mxu0 0.0
    %423 = vmatpush1.msra.mxu0 0.0
    %424 = vmatprep.subr.mxu0 0.0
    %425 = vmatpush1.msra.mxu0 0.0
    %426 = vmatprep.subr.mxu0 0.0
    %427 = vmatpush1.msra.mxu0 0.0
    %428 = vmatprep.subr.mxu0 0.0
    %429 = vmatpush1.msra.mxu0 0.0
    %430 = vmatprep.subr.mxu0 0.0
    %431 = vmatpush1.msra.mxu0 0.0
    %432 = vmatprep.subr.mxu0 0.0
    %433 = vmatpush1.msra.mxu0 0.0
    %434 = vmatprep.subr.mxu0 0.0
    %435 = vmatpush1.msra.mxu0 0.0
    %436 = vmatprep.subr.mxu0 0.0
    %437 = vmatpush1.msra.mxu0 0.0
    %438 = vmatprep.subr.mxu0 0.0
    %439 = vmatpush1.msra.mxu0 0.0
    %440 = vmatprep.subr.mxu0 0.0
    %441 = vmatpush1.msra.mxu0 0.0
    %442 = vmatprep.mubr.f32.mxu0 0.0
    %443 = vmatmul.mubr.f32.gmra.mrb[0].mxu0 %v376
    %v444 = vpop.f32.mrb[0].mxu0
    %v445 = vadd.f32 %v98, %v444
    %v446 = vpop.f32.mrb[0].mxu0
    %447 = vdwg.mxu0
    %s448 = scalar_lea.vmem %s0, 4
    %v449 = vld [vmem:[%s448] sm:$0x3]
    %v451 = vsel %vm146, %v449, 0
    %453 = vmatprep.subr.mxu0 0.0
    %454 = vmatpush1.msra.mxu0 %v82
    %455 = vmatprep.subr.mxu0 0.0
    %456 = vmatpush1.msra.mxu0 %v83
    %457 = vmatprep.subr.mxu0 0.0
    %458 = vmatpush1.msra.mxu0 %v152
    %459 = vmatprep.subr.mxu0 0.0
    %460 = vmatpush1.msra.mxu0 0.0
    %461 = vmatprep.subr.mxu0 0.0
    %462 = vmatpush1.msra.mxu0 0.0
    %463 = vmatprep.subr.mxu0 0.0
    %464 = vmatpush1.msra.mxu0 0.0
    %465 = vmatprep.subr.mxu0 0.0
    %466 = vmatpush1.msra.mxu0 0.0
    %467 = vmatprep.subr.mxu0 0.0
    %468 = vmatpush1.msra.mxu0 0.0
    %469 = vmatprep.subr.mxu0 0.0
    %470 = vmatpush1.msra.mxu0 0.0
    %471 = vmatprep.subr.mxu0 0.0
    %472 = vmatpush1.msra.mxu0 0.0
    %473 = vmatprep.subr.mxu0 0.0
    %474 = vmatpush1.msra.mxu0 0.0
    %475 = vmatprep.subr.mxu0 0.0
    %476 = vmatpush1.msra.mxu0 0.0
    %477 = vmatprep.subr.mxu0 0.0
    %478 = vmatpush1.msra.mxu0 0.0
    %479 = vmatprep.subr.mxu0 0.0
    %480 = vmatpush1.msra.mxu0 0.0
    %481 = vmatprep.subr.mxu0 0.0
    %482 = vmatpush1.msra.mxu0 0.0
    %483 = vmatprep.subr.mxu0 0.0
    %484 = vmatpush1.msra.mxu0 0.0
    %485 = vmatprep.subr.mxu0 0.0
    %486 = vmatpush1.msra.mxu0 0.0
    %487 = vmatprep.subr.mxu0 0.0
    %488 = vmatpush1.msra.mxu0 0.0
    %489 = vmatprep.subr.mxu0 0.0
    %490 = vmatpush1.msra.mxu0 0.0
    %491 = vmatprep.subr.mxu0 0.0
    %492 = vmatpush1.msra.mxu0 0.0
    %493 = vmatprep.subr.mxu0 0.0
    %494 = vmatpush1.msra.mxu0 0.0
    %495 = vmatprep.subr.mxu0 0.0
    %496 = vmatpush1.msra.mxu0 0.0
    %497 = vmatprep.subr.mxu0 0.0
    %498 = vmatpush1.msra.mxu0 0.0
    %499 = vmatprep.subr.mxu0 0.0
    %500 = vmatpush1.msra.mxu0 0.0
    %501 = vmatprep.subr.mxu0 0.0
    %502 = vmatpush1.msra.mxu0 0.0
    %503 = vmatprep.subr.mxu0 0.0
    %504 = vmatpush1.msra.mxu0 0.0
    %505 = vmatprep.subr.mxu0 0.0
    %506 = vmatpush1.msra.mxu0 0.0
    %507 = vmatprep.subr.mxu0 0.0
    %508 = vmatpush1.msra.mxu0 0.0
    %509 = vmatprep.subr.mxu0 0.0
    %510 = vmatpush1.msra.mxu0 0.0
    %511 = vmatprep.subr.mxu0 0.0
    %512 = vmatpush1.msra.mxu0 0.0
    %513 = vmatprep.subr.mxu0 0.0
    %514 = vmatpush1.msra.mxu0 0.0
    %515 = vmatprep.subr.mxu0 0.0
    %516 = vmatpush1.msra.mxu0 0.0
    %517 = vmatprep.mubr.f32.mxu0 0.0
    %518 = vmatmul.mubr.f32.gmra.mrb[0].mxu0 %v451
    %v519 = vpop.f32.mrb[0].mxu0
    %v520 = vadd.f32 %v90, %v519
    %v521 = vpop.f32.mrb[0].mxu0
    %522 = vdwg.mxu0
    %v523 = vmax.f32 %v520, 0.0
    %v525 = vsel %vm225, %v523, 0
    %527 = vmatprep.subr.mxu0 0.0
    %528 = vmatpush1.msra.mxu0 %v92
    %529 = vmatprep.subr.mxu0 0.0
    %530 = vmatpush1.msra.mxu0 0.0
    %531 = vmatprep.subr.mxu0 0.0
    %532 = vmatpush1.msra.mxu0 0.0
    %533 = vmatprep.subr.mxu0 0.0
    %534 = vmatpush1.msra.mxu0 0.0
    %535 = vmatprep.subr.mxu0 0.0
    %536 = vmatpush1.msra.mxu0 0.0
    %537 = vmatprep.subr.mxu0 0.0
    %538 = vmatpush1.msra.mxu0 0.0
    %539 = vmatprep.subr.mxu0 0.0
    %540 = vmatpush1.msra.mxu0 0.0
    %541 = vmatprep.subr.mxu0 0.0
    %542 = vmatpush1.msra.mxu0 0.0
    %543 = vmatprep.subr.mxu0 0.0
    %544 = vmatpush1.msra.mxu0 0.0
    %545 = vmatprep.subr.mxu0 0.0
    %546 = vmatpush1.msra.mxu0 0.0
    %547 = vmatprep.subr.mxu0 0.0
    %548 = vmatpush1.msra.mxu0 0.0
    %549 = vmatprep.subr.mxu0 0.0
    %550 = vmatpush1.msra.mxu0 0.0
    %551 = vmatprep.subr.mxu0 0.0
    %552 = vmatpush1.msra.mxu0 0.0
    %553 = vmatprep.subr.mxu0 0.0
    %554 = vmatpush1.msra.mxu0 0.0
    %555 = vmatprep.subr.mxu0 0.0
    %556 = vmatpush1.msra.mxu0 0.0
    %557 = vmatprep.subr.mxu0 0.0
    %558 = vmatpush1.msra.mxu0 0.0
    %559 = vmatprep.subr.mxu0 0.0
    %560 = vmatpush1.msra.mxu0 0.0
    %561 = vmatprep.subr.mxu0 0.0
    %562 = vmatpush1.msra.mxu0 0.0
    %563 = vmatprep.subr.mxu0 0.0
    %564 = vmatpush1.msra.mxu0 0.0
    %565 = vmatprep.subr.mxu0 0.0
    %566 = vmatpush1.msra.mxu0 0.0
    %567 = vmatprep.subr.mxu0 0.0
    %568 = vmatpush1.msra.mxu0 0.0
    %569 = vmatprep.subr.mxu0 0.0
    %570 = vmatpush1.msra.mxu0 0.0
    %571 = vmatprep.subr.mxu0 0.0
    %572 = vmatpush1.msra.mxu0 0.0
    %573 = vmatprep.subr.mxu0 0.0
    %574 = vmatpush1.msra.mxu0 0.0
    %575 = vmatprep.subr.mxu0 0.0
    %576 = vmatpush1.msra.mxu0 0.0
    %577 = vmatprep.subr.mxu0 0.0
    %578 = vmatpush1.msra.mxu0 0.0
    %579 = vmatprep.subr.mxu0 0.0
    %580 = vmatpush1.msra.mxu0 0.0
    %581 = vmatprep.subr.mxu0 0.0
    %582 = vmatpush1.msra.mxu0 0.0
    %583 = vmatprep.subr.mxu0 0.0
    %584 = vmatpush1.msra.mxu0 0.0
    %585 = vmatprep.subr.mxu0 0.0
    %586 = vmatpush1.msra.mxu0 0.0
    %587 = vmatprep.subr.mxu0 0.0
    %588 = vmatpush1.msra.mxu0 0.0
    %589 = vmatprep.subr.mxu0 0.0
    %590 = vmatpush1.msra.mxu0 0.0
    %591 = vmatprep.mubr.f32.mxu0 0.0
    %592 = vmatmul.mubr.f32.gmra.mrb[0].mxu0 %v525
    %v593 = vpop.f32.mrb[0].mxu0
    %v594 = vadd.f32 %v98, %v593
    %v595 = vpop.f32.mrb[0].mxu0
    %596 = vdwg.mxu0
    %s597 = scalar_lea.vmem %s0, 6
    %v598 = vld [vmem:[%s597] sm:$0x3]
    %v600 = vsel %vm146, %v598, 0
    %602 = vmatprep.subr.mxu0 0.0
    %603 = vmatpush1.msra.mxu0 %v82
    %604 = vmatprep.subr.mxu0 0.0
    %605 = vmatpush1.msra.mxu0 %v83
    %606 = vmatprep.subr.mxu0 0.0
    %607 = vmatpush1.msra.mxu0 %v152
    %608 = vmatprep.subr.mxu0 0.0
    %609 = vmatpush1.msra.mxu0 0.0
    %610 = vmatprep.subr.mxu0 0.0
    %611 = vmatpush1.msra.mxu0 0.0
    %612 = vmatprep.subr.mxu0 0.0
    %613 = vmatpush1.msra.mxu0 0.0
    %614 = vmatprep.subr.mxu0 0.0
    %615 = vmatpush1.msra.mxu0 0.0
    %616 = vmatprep.subr.mxu0 0.0
    %617 = vmatpush1.msra.mxu0 0.0
    %618 = vmatprep.subr.mxu0 0.0
    %619 = vmatpush1.msra.mxu0 0.0
    %620 = vmatprep.subr.mxu0 0.0
    %621 = vmatpush1.msra.mxu0 0.0
    %622 = vmatprep.subr.mxu0 0.0
    %623 = vmatpush1.msra.mxu0 0.0
    %624 = vmatprep.subr.mxu0 0.0
    %625 = vmatpush1.msra.mxu0 0.0
    %626 = vmatprep.subr.mxu0 0.0
    %627 = vmatpush1.msra.mxu0 0.0
    %628 = vmatprep.subr.mxu0 0.0
    %629 = vmatpush1.msra.mxu0 0.0
    %630 = vmatprep.subr.mxu0 0.0
    %631 = vmatpush1.msra.mxu0 0.0
    %632 = vmatprep.subr.mxu0 0.0
    %633 = vmatpush1.msra.mxu0 0.0
    %634 = vmatprep.subr.mxu0 0.0
    %635 = vmatpush1.msra.mxu0 0.0
    %636 = vmatprep.subr.mxu0 0.0
    %637 = vmatpush1.msra.mxu0 0.0
    %638 = vmatprep.subr.mxu0 0.0
    %639 = vmatpush1.msra.mxu0 0.0
    %640 = vmatprep.subr.mxu0 0.0
    %641 = vmatpush1.msra.mxu0 0.0
    %642 = vmatprep.subr.mxu0 0.0
    %643 = vmatpush1.msra.mxu0 0.0
    %644 = vmatprep.subr.mxu0 0.0
    %645 = vmatpush1.msra.mxu0 0.0
    %646 = vmatprep.subr.mxu0 0.0
    %647 = vmatpush1.msra.mxu0 0.0
    %648 = vmatprep.subr.mxu0 0.0
    %649 = vmatpush1.msra.mxu0 0.0
    %650 = vmatprep.subr.mxu0 0.0
    %651 = vmatpush1.msra.mxu0 0.0
    %652 = vmatprep.subr.mxu0 0.0
    %653 = vmatpush1.msra.mxu0 0.0
    %654 = vmatprep.subr.mxu0 0.0
    %655 = vmatpush1.msra.mxu0 0.0
    %656 = vmatprep.subr.mxu0 0.0
    %657 = vmatpush1.msra.mxu0 0.0
    %658 = vmatprep.subr.mxu0 0.0
    %659 = vmatpush1.msra.mxu0 0.0
    %660 = vmatprep.subr.mxu0 0.0
    %661 = vmatpush1.msra.mxu0 0.0
    %662 = vmatprep.subr.mxu0 0.0
    %663 = vmatpush1.msra.mxu0 0.0
    %664 = vmatprep.subr.mxu0 0.0
    %665 = vmatpush1.msra.mxu0 0.0
    %666 = vmatprep.mubr.f32.mxu0 0.0
    %667 = vmatmul.mubr.f32.gmra.mrb[0].mxu0 %v600
    %v668 = vpop.f32.mrb[0].mxu0
    %v669 = vadd.f32 %v90, %v668
    %v670 = vpop.f32.mrb[0].mxu0
    %671 = vdwg.mxu0
    %v672 = vmax.f32 %v669, 0.0
    %v674 = vsel %vm225, %v672, 0
    %676 = vmatprep.subr.mxu0 0.0
    %677 = vmatpush1.msra.mxu0 %v92
    %678 = vmatprep.subr.mxu0 0.0
    %679 = vmatpush1.msra.mxu0 0.0
    %680 = vmatprep.subr.mxu0 0.0
    %681 = vmatpush1.msra.mxu0 0.0
    %682 = vmatprep.subr.mxu0 0.0
    %683 = vmatpush1.msra.mxu0 0.0
    %684 = vmatprep.subr.mxu0 0.0
    %685 = vmatpush1.msra.mxu0 0.0
    %686 = vmatprep.subr.mxu0 0.0
    %687 = vmatpush1.msra.mxu0 0.0
    %688 = vmatprep.subr.mxu0 0.0
    %689 = vmatpush1.msra.mxu0 0.0
    %690 = vmatprep.subr.mxu0 0.0
    %691 = vmatpush1.msra.mxu0 0.0
    %692 = vmatprep.subr.mxu0 0.0
    %693 = vmatpush1.msra.mxu0 0.0
    %694 = vmatprep.subr.mxu0 0.0
    %695 = vmatpush1.msra.mxu0 0.0
    %696 = vmatprep.subr.mxu0 0.0
    %697 = vmatpush1.msra.mxu0 0.0
    %698 = vmatprep.subr.mxu0 0.0
    %699 = vmatpush1.msra.mxu0 0.0
    %700 = vmatprep.subr.mxu0 0.0
    %701 = vmatpush1.msra.mxu0 0.0
    %702 = vmatprep.subr.mxu0 0.0
    %703 = vmatpush1.msra.mxu0 0.0
    %704 = vmatprep.subr.mxu0 0.0
    %705 = vmatpush1.msra.mxu0 0.0
    %706 = vmatprep.subr.mxu0 0.0
    %707 = vmatpush1.msra.mxu0 0.0
    %708 = vmatprep.subr.mxu0 0.0
    %709 = vmatpush1.msra.mxu0 0.0
    %710 = vmatprep.subr.mxu0 0.0
    %711 = vmatpush1.msra.mxu0 0.0
    %712 = vmatprep.subr.mxu0 0.0
    %713 = vmatpush1.msra.mxu0 0.0
    %714 = vmatprep.subr.mxu0 0.0
    %715 = vmatpush1.msra.mxu0 0.0
    %716 = vmatprep.subr.mxu0 0.0
    %717 = vmatpush1.msra.mxu0 0.0
    %718 = vmatprep.subr.mxu0 0.0
    %719 = vmatpush1.msra.mxu0 0.0
    %720 = vmatprep.subr.mxu0 0.0
    %721 = vmatpush1.msra.mxu0 0.0
    %722 = vmatprep.subr.mxu0 0.0
    %723 = vmatpush1.msra.mxu0 0.0
    %724 = vmatprep.subr.mxu0 0.0
    %725 = vmatpush1.msra.mxu0 0.0
    %726 = vmatprep.subr.mxu0 0.0
    %727 = vmatpush1.msra.mxu0 0.0
    %728 = vmatprep.subr.mxu0 0.0
    %729 = vmatpush1.msra.mxu0 0.0
    %730 = vmatprep.subr.mxu0 0.0
    %731 = vmatpush1.msra.mxu0 0.0
    %732 = vmatprep.subr.mxu0 0.0
    %733 = vmatpush1.msra.mxu0 0.0
    %734 = vmatprep.subr.mxu0 0.0
    %735 = vmatpush1.msra.mxu0 0.0
    %736 = vmatprep.subr.mxu0 0.0
    %737 = vmatpush1.msra.mxu0 0.0
    %738 = vmatprep.subr.mxu0 0.0
    %739 = vmatpush1.msra.mxu0 0.0
    %740 = vmatprep.mubr.f32.mxu0 0.0
    %741 = vmatmul.mubr.f32.gmra.mrb[0].mxu0 %v674
    %v742 = vpop.f32.mrb[0].mxu0
    %v743 = vadd.f32 %v98, %v742
    %v744 = vpop.f32.mrb[0].mxu0
    %745 = vdwg.mxu0
    %s746 = scalar_lea.vmem %s0, 8
    %v747 = vld [vmem:[%s746] sm:$0x3]
    %v749 = vsel %vm146, %v747, 0
    %751 = vmatprep.subr.mxu0 0.0
    %752 = vmatpush1.msra.mxu0 %v82
    %753 = vmatprep.subr.mxu0 0.0
    %754 = vmatpush1.msra.mxu0 %v83
    %755 = vmatprep.subr.mxu0 0.0
    %756 = vmatpush1.msra.mxu0 %v152
    %757 = vmatprep.subr.mxu0 0.0
    %758 = vmatpush1.msra.mxu0 0.0
    %759 = vmatprep.subr.mxu0 0.0
    %760 = vmatpush1.msra.mxu0 0.0
    %761 = vmatprep.subr.mxu0 0.0
    %762 = vmatpush1.msra.mxu0 0.0
    %763 = vmatprep.subr.mxu0 0.0
    %764 = vmatpush1.msra.mxu0 0.0
    %765 = vmatprep.subr.mxu0 0.0
    %766 = vmatpush1.msra.mxu0 0.0
    %767 = vmatprep.subr.mxu0 0.0
    %768 = vmatpush1.msra.mxu0 0.0
    %769 = vmatprep.subr.mxu0 0.0
    %770 = vmatpush1.msra.mxu0 0.0
    %771 = vmatprep.subr.mxu0 0.0
    %772 = vmatpush1.msra.mxu0 0.0
    %773 = vmatprep.subr.mxu0 0.0
    %774 = vmatpush1.msra.mxu0 0.0
    %775 = vmatprep.subr.mxu0 0.0
    %776 = vmatpush1.msra.mxu0 0.0
    %777 = vmatprep.subr.mxu0 0.0
    %778 = vmatpush1.msra.mxu0 0.0
    %779 = vmatprep.subr.mxu0 0.0
    %780 = vmatpush1.msra.mxu0 0.0
    %781 = vmatprep.subr.mxu0 0.0
    %782 = vmatpush1.msra.mxu0 0.0
    %783 = vmatprep.subr.mxu0 0.0
    %784 = vmatpush1.msra.mxu0 0.0
    %785 = vmatprep.subr.mxu0 0.0
    %786 = vmatpush1.msra.mxu0 0.0
    %787 = vmatprep.subr.mxu0 0.0
    %788 = vmatpush1.msra.mxu0 0.0
    %789 = vmatprep.subr.mxu0 0.0
    %790 = vmatpush1.msra.mxu0 0.0
    %791 = vmatprep.subr.mxu0 0.0
    %792 = vmatpush1.msra.mxu0 0.0
    %793 = vmatprep.subr.mxu0 0.0
    %794 = vmatpush1.msra.mxu0 0.0
    %795 = vmatprep.subr.mxu0 0.0
    %796 = vmatpush1.msra.mxu0 0.0
    %797 = vmatprep.subr.mxu0 0.0
    %798 = vmatpush1.msra.mxu0 0.0
    %799 = vmatprep.subr.mxu0 0.0
    %800 = vmatpush1.msra.mxu0 0.0
    %801 = vmatprep.subr.mxu0 0.0
    %802 = vmatpush1.msra.mxu0 0.0
    %803 = vmatprep.subr.mxu0 0.0
    %804 = vmatpush1.msra.mxu0 0.0
    %805 = vmatprep.subr.mxu0 0.0
    %806 = vmatpush1.msra.mxu0 0.0
    %807 = vmatprep.subr.mxu0 0.0
    %808 = vmatpush1.msra.mxu0 0.0
    %809 = vmatprep.subr.mxu0 0.0
    %810 = vmatpush1.msra.mxu0 0.0
    %811 = vmatprep.subr.mxu0 0.0
    %812 = vmatpush1.msra.mxu0 0.0
    %813 = vmatprep.subr.mxu0 0.0
    %814 = vmatpush1.msra.mxu0 0.0
    %815 = vmatprep.mubr.f32.mxu0 0.0
    %816 = vmatmul.mubr.f32.gmra.mrb[0].mxu0 %v749
    %v817 = vpop.f32.mrb[0].mxu0
    %v818 = vadd.f32 %v90, %v817
    %v819 = vpop.f32.mrb[0].mxu0
    %820 = vdwg.mxu0
    %v821 = vmax.f32 %v818, 0.0
    %v823 = vsel %vm225, %v821, 0
    %825 = vmatprep.subr.mxu0 0.0
    %826 = vmatpush1.msra.mxu0 %v92
    %827 = vmatprep.subr.mxu0 0.0
    %828 = vmatpush1.msra.mxu0 0.0
    %829 = vmatprep.subr.mxu0 0.0
    %830 = vmatpush1.msra.mxu0 0.0
    %831 = vmatprep.subr.mxu0 0.0
    %832 = vmatpush1.msra.mxu0 0.0
    %833 = vmatprep.subr.mxu0 0.0
    %834 = vmatpush1.msra.mxu0 0.0
    %835 = vmatprep.subr.mxu0 0.0
    %836 = vmatpush1.msra.mxu0 0.0
    %837 = vmatprep.subr.mxu0 0.0
    %838 = vmatpush1.msra.mxu0 0.0
    %839 = vmatprep.subr.mxu0 0.0
    %840 = vmatpush1.msra.mxu0 0.0
    %841 = vmatprep.subr.mxu0 0.0
    %842 = vmatpush1.msra.mxu0 0.0
    %843 = vmatprep.subr.mxu0 0.0
    %844 = vmatpush1.msra.mxu0 0.0
    %845 = vmatprep.subr.mxu0 0.0
    %846 = vmatpush1.msra.mxu0 0.0
    %847 = vmatprep.subr.mxu0 0.0
    %848 = vmatpush1.msra.mxu0 0.0
    %849 = vmatprep.subr.mxu0 0.0
    %850 = vmatpush1.msra.mxu0 0.0
    %851 = vmatprep.subr.mxu0 0.0
    %852 = vmatpush1.msra.mxu0 0.0
    %853 = vmatprep.subr.mxu0 0.0
    %854 = vmatpush1.msra.mxu0 0.0
    %855 = vmatprep.subr.mxu0 0.0
    %856 = vmatpush1.msra.mxu0 0.0
    %857 = vmatprep.subr.mxu0 0.0
    %858 = vmatpush1.msra.mxu0 0.0
    %859 = vmatprep.subr.mxu0 0.0
    %860 = vmatpush1.msra.mxu0 0.0
    %861 = vmatprep.subr.mxu0 0.0
    %862 = vmatpush1.msra.mxu0 0.0
    %863 = vmatprep.subr.mxu0 0.0
    %864 = vmatpush1.msra.mxu0 0.0
    %865 = vmatprep.subr.mxu0 0.0
    %866 = vmatpush1.msra.mxu0 0.0
    %867 = vmatprep.subr.mxu0 0.0
    %868 = vmatpush1.msra.mxu0 0.0
    %869 = vmatprep.subr.mxu0 0.0
    %870 = vmatpush1.msra.mxu0 0.0
    %871 = vmatprep.subr.mxu0 0.0
    %872 = vmatpush1.msra.mxu0 0.0
    %873 = vmatprep.subr.mxu0 0.0
    %874 = vmatpush1.msra.mxu0 0.0
    %875 = vmatprep.subr.mxu0 0.0
    %876 = vmatpush1.msra.mxu0 0.0
    %877 = vmatprep.subr.mxu0 0.0
    %878 = vmatpush1.msra.mxu0 0.0
    %879 = vmatprep.subr.mxu0 0.0
    %880 = vmatpush1.msra.mxu0 0.0
    %881 = vmatprep.subr.mxu0 0.0
    %882 = vmatpush1.msra.mxu0 0.0
    %883 = vmatprep.subr.mxu0 0.0
    %884 = vmatpush1.msra.mxu0 0.0
    %885 = vmatprep.subr.mxu0 0.0
    %886 = vmatpush1.msra.mxu0 0.0
    %887 = vmatprep.subr.mxu0 0.0
    %888 = vmatpush1.msra.mxu0 0.0
    %889 = vmatprep.mubr.f32.mxu0 0.0
    %890 = vmatmul.mubr.f32.gmra.mrb[0].mxu0 %v823
    %v891 = vpop.f32.mrb[0].mxu0
    %v892 = vadd.f32 %v98, %v891
    %v893 = vpop.f32.mrb[0].mxu0
    %894 = vdwg.mxu0
    %s895 = scalar_lea.vmem %s0, 10
    %v896 = vld [vmem:[%s895] sm:$0x3]
    %v898 = vsel %vm146, %v896, 0
    %900 = vmatprep.subr.mxu0 0.0
    %901 = vmatpush1.msra.mxu0 %v82
    %902 = vmatprep.subr.mxu0 0.0
    %903 = vmatpush1.msra.mxu0 %v83
    %904 = vmatprep.subr.mxu0 0.0
    %905 = vmatpush1.msra.mxu0 %v152
    %906 = vmatprep.subr.mxu0 0.0
    %907 = vmatpush1.msra.mxu0 0.0
    %908 = vmatprep.subr.mxu0 0.0
    %909 = vmatpush1.msra.mxu0 0.0
    %910 = vmatprep.subr.mxu0 0.0
    %911 = vmatpush1.msra.mxu0 0.0
    %912 = vmatprep.subr.mxu0 0.0
    %913 = vmatpush1.msra.mxu0 0.0
    %914 = vmatprep.subr.mxu0 0.0
    %915 = vmatpush1.msra.mxu0 0.0
    %916 = vmatprep.subr.mxu0 0.0
    %917 = vmatpush1.msra.mxu0 0.0
    %918 = vmatprep.subr.mxu0 0.0
    %919 = vmatpush1.msra.mxu0 0.0
    %920 = vmatprep.subr.mxu0 0.0
    %921 = vmatpush1.msra.mxu0 0.0
    %922 = vmatprep.subr.mxu0 0.0
    %923 = vmatpush1.msra.mxu0 0.0
    %924 = vmatprep.subr.mxu0 0.0
    %925 = vmatpush1.msra.mxu0 0.0
    %926 = vmatprep.subr.mxu0 0.0
    %927 = vmatpush1.msra.mxu0 0.0
    %928 = vmatprep.subr.mxu0 0.0
    %929 = vmatpush1.msra.mxu0 0.0
    %930 = vmatprep.subr.mxu0 0.0
    %931 = vmatpush1.msra.mxu0 0.0
    %932 = vmatprep.subr.mxu0 0.0
    %933 = vmatpush1.msra.mxu0 0.0
    %934 = vmatprep.subr.mxu0 0.0
    %935 = vmatpush1.msra.mxu0 0.0
    %936 = vmatprep.subr.mxu0 0.0
    %937 = vmatpush1.msra.mxu0 0.0
    %938 = vmatprep.subr.mxu0 0.0
    %939 = vmatpush1.msra.mxu0 0.0
    %940 = vmatprep.subr.mxu0 0.0
    %941 = vmatpush1.msra.mxu0 0.0
    %942 = vmatprep.subr.mxu0 0.0
    %943 = vmatpush1.msra.mxu0 0.0
    %944 = vmatprep.subr.mxu0 0.0
    %945 = vmatpush1.msra.mxu0 0.0
    %946 = vmatprep.subr.mxu0 0.0
    %947 = vmatpush1.msra.mxu0 0.0
    %948 = vmatprep.subr.mxu0 0.0
    %949 = vmatpush1.msra.mxu0 0.0
    %950 = vmatprep.subr.mxu0 0.0
    %951 = vmatpush1.msra.mxu0 0.0
    %952 = vmatprep.subr.mxu0 0.0
    %953 = vmatpush1.msra.mxu0 0.0
    %954 = vmatprep.subr.mxu0 0.0
    %955 = vmatpush1.msra.mxu0 0.0
    %956 = vmatprep.subr.mxu0 0.0
    %957 = vmatpush1.msra.mxu0 0.0
    %958 = vmatprep.subr.mxu0 0.0
    %959 = vmatpush1.msra.mxu0 0.0
    %960 = vmatprep.subr.mxu0 0.0
    %961 = vmatpush1.msra.mxu0 0.0
    %962 = vmatprep.subr.mxu0 0.0
    %963 = vmatpush1.msra.mxu0 0.0
    %964 = vmatprep.mubr.f32.mxu0 0.0
    %965 = vmatmul.mubr.f32.gmra.mrb[0].mxu0 %v898
    %v966 = vpop.f32.mrb[0].mxu0
    %v967 = vadd.f32 %v90, %v966
    %v968 = vpop.f32.mrb[0].mxu0
    %969 = vdwg.mxu0
    %v970 = vmax.f32 %v967, 0.0
    %v972 = vsel %vm225, %v970, 0
    %974 = vmatprep.subr.mxu0 0.0
    %975 = vmatpush1.msra.mxu0 %v92
    %976 = vmatprep.subr.mxu0 0.0
    %977 = vmatpush1.msra.mxu0 0.0
    %978 = vmatprep.subr.mxu0 0.0
    %979 = vmatpush1.msra.mxu0 0.0
    %980 = vmatprep.subr.mxu0 0.0
    %981 = vmatpush1.msra.mxu0 0.0
    %982 = vmatprep.subr.mxu0 0.0
    %983 = vmatpush1.msra.mxu0 0.0
    %984 = vmatprep.subr.mxu0 0.0
    %985 = vmatpush1.msra.mxu0 0.0
    %986 = vmatprep.subr.mxu0 0.0
    %987 = vmatpush1.msra.mxu0 0.0
    %988 = vmatprep.subr.mxu0 0.0
    %989 = vmatpush1.msra.mxu0 0.0
    %990 = vmatprep.subr.mxu0 0.0
    %991 = vmatpush1.msra.mxu0 0.0
    %992 = vmatprep.subr.mxu0 0.0
    %993 = vmatpush1.msra.mxu0 0.0
    %994 = vmatprep.subr.mxu0 0.0
    %995 = vmatpush1.msra.mxu0 0.0
    %996 = vmatprep.subr.mxu0 0.0
    %997 = vmatpush1.msra.mxu0 0.0
    %998 = vmatprep.subr.mxu0 0.0
    %999 = vmatpush1.msra.mxu0 0.0
    %1000 = vmatprep.subr.mxu0 0.0
    %1001 = vmatpush1.msra.mxu0 0.0
    %1002 = vmatprep.subr.mxu0 0.0
    %1003 = vmatpush1.msra.mxu0 0.0
    %1004 = vmatprep.subr.mxu0 0.0
    %1005 = vmatpush1.msra.mxu0 0.0
    %1006 = vmatprep.subr.mxu0 0.0
    %1007 = vmatpush1.msra.mxu0 0.0
    %1008 = vmatprep.subr.mxu0 0.0
    %1009 = vmatpush1.msra.mxu0 0.0
    %1010 = vmatprep.subr.mxu0 0.0
    %1011 = vmatpush1.msra.mxu0 0.0
    %1012 = vmatprep.subr.mxu0 0.0
    %1013 = vmatpush1.msra.mxu0 0.0
    %1014 = vmatprep.subr.mxu0 0.0
    %1015 = vmatpush1.msra.mxu0 0.0
    %1016 = vmatprep.subr.mxu0 0.0
    %1017 = vmatpush1.msra.mxu0 0.0
    %1018 = vmatprep.subr.mxu0 0.0
    %1019 = vmatpush1.msra.mxu0 0.0
    %1020 = vmatprep.subr.mxu0 0.0
    %1021 = vmatpush1.msra.mxu0 0.0
    %1022 = vmatprep.subr.mxu0 0.0
    %1023 = vmatpush1.msra.mxu0 0.0
    %1024 = vmatprep.subr.mxu0 0.0
    %1025 = vmatpush1.msra.mxu0 0.0
    %1026 = vmatprep.subr.mxu0 0.0
    %1027 = vmatpush1.msra.mxu0 0.0
    %1028 = vmatprep.subr.mxu0 0.0
    %1029 = vmatpush1.msra.mxu0 0.0
    %1030 = vmatprep.subr.mxu0 0.0
    %1031 = vmatpush1.msra.mxu0 0.0
    %1032 = vmatprep.subr.mxu0 0.0
    %1033 = vmatpush1.msra.mxu0 0.0
    %1034 = vmatprep.subr.mxu0 0.0
    %1035 = vmatpush1.msra.mxu0 0.0
    %1036 = vmatprep.subr.mxu0 0.0
    %1037 = vmatpush1.msra.mxu0 0.0
    %1038 = vmatprep.mubr.f32.mxu0 0.0
    %1039 = vmatmul.mubr.f32.gmra.mrb[0].mxu0 %v972
    %v1040 = vpop.f32.mrb[0].mxu0
    %v1041 = vadd.f32 %v98, %v1040
    %v1042 = vpop.f32.mrb[0].mxu0
    %1043 = vdwg.mxu0
    %s1044 = scalar_lea.vmem %s0, 12
    %v1045 = vld [vmem:[%s1044] sm:$0x3]
    %v1047 = vsel %vm146, %v1045, 0
    %1049 = vmatprep.subr.mxu0 0.0
    %1050 = vmatpush1.msra.mxu0 %v82
    %1051 = vmatprep.subr.mxu0 0.0
    %1052 = vmatpush1.msra.mxu0 %v83
    %1053 = vmatprep.subr.mxu0 0.0
    %1054 = vmatpush1.msra.mxu0 %v152
    %1055 = vmatprep.subr.mxu0 0.0
    %1056 = vmatpush1.msra.mxu0 0.0
    %1057 = vmatprep.subr.mxu0 0.0
    %1058 = vmatpush1.msra.mxu0 0.0
    %1059 = vmatprep.subr.mxu0 0.0
    %1060 = vmatpush1.msra.mxu0 0.0
    %1061 = vmatprep.subr.mxu0 0.0
    %1062 = vmatpush1.msra.mxu0 0.0
    %1063 = vmatprep.subr.mxu0 0.0
    %1064 = vmatpush1.msra.mxu0 0.0
    %1065 = vmatprep.subr.mxu0 0.0
    %1066 = vmatpush1.msra.mxu0 0.0
    %1067 = vmatprep.subr.mxu0 0.0
    %1068 = vmatpush1.msra.mxu0 0.0
    %1069 = vmatprep.subr.mxu0 0.0
    %1070 = vmatpush1.msra.mxu0 0.0
    %1071 = vmatprep.subr.mxu0 0.0
    %1072 = vmatpush1.msra.mxu0 0.0
    %1073 = vmatprep.subr.mxu0 0.0
    %1074 = vmatpush1.msra.mxu0 0.0
    %1075 = vmatprep.subr.mxu0 0.0
    %1076 = vmatpush1.msra.mxu0 0.0
    %1077 = vmatprep.subr.mxu0 0.0
    %1078 = vmatpush1.msra.mxu0 0.0
    %1079 = vmatprep.subr.mxu0 0.0
    %1080 = vmatpush1.msra.mxu0 0.0
    %1081 = vmatprep.subr.mxu0 0.0
    %1082 = vmatpush1.msra.mxu0 0.0
    %1083 = vmatprep.subr.mxu0 0.0
    %1084 = vmatpush1.msra.mxu0 0.0
    %1085 = vmatprep.subr.mxu0 0.0
    %1086 = vmatpush1.msra.mxu0 0.0
    %1087 = vmatprep.subr.mxu0 0.0
    %1088 = vmatpush1.msra.mxu0 0.0
    %1089 = vmatprep.subr.mxu0 0.0
    %1090 = vmatpush1.msra.mxu0 0.0
    %1091 = vmatprep.subr.mxu0 0.0
    %1092 = vmatpush1.msra.mxu0 0.0
    %1093 = vmatprep.subr.mxu0 0.0
    %1094 = vmatpush1.msra.mxu0 0.0
    %1095 = vmatprep.subr.mxu0 0.0
    %1096 = vmatpush1.msra.mxu0 0.0
    %1097 = vmatprep.subr.mxu0 0.0
    %1098 = vmatpush1.msra.mxu0 0.0
    %1099 = vmatprep.subr.mxu0 0.0
    %1100 = vmatpush1.msra.mxu0 0.0
    %1101 = vmatprep.subr.mxu0 0.0
    %1102 = vmatpush1.msra.mxu0 0.0
    %1103 = vmatprep.subr.mxu0 0.0
    %1104 = vmatpush1.msra.mxu0 0.0
    %1105 = vmatprep.subr.mxu0 0.0
    %1106 = vmatpush1.msra.mxu0 0.0
    %1107 = vmatprep.subr.mxu0 0.0
    %1108 = vmatpush1.msra.mxu0 0.0
    %1109 = vmatprep.subr.mxu0 0.0
    %1110 = vmatpush1.msra.mxu0 0.0
    %1111 = vmatprep.subr.mxu0 0.0
    %1112 = vmatpush1.msra.mxu0 0.0
    %1113 = vmatprep.mubr.f32.mxu0 0.0
    %1114 = vmatmul.mubr.f32.gmra.mrb[0].mxu0 %v1047
    %v1115 = vpop.f32.mrb[0].mxu0
    %v1116 = vadd.f32 %v90, %v1115
    %v1117 = vpop.f32.mrb[0].mxu0
    %1118 = vdwg.mxu0
    %v1119 = vmax.f32 %v1116, 0.0
    %v1121 = vsel %vm225, %v1119, 0
    %1123 = vmatprep.subr.mxu0 0.0
    %1124 = vmatpush1.msra.mxu0 %v92
    %1125 = vmatprep.subr.mxu0 0.0
    %1126 = vmatpush1.msra.mxu0 0.0
    %1127 = vmatprep.subr.mxu0 0.0
    %1128 = vmatpush1.msra.mxu0 0.0
    %1129 = vmatprep.subr.mxu0 0.0
    %1130 = vmatpush1.msra.mxu0 0.0
    %1131 = vmatprep.subr.mxu0 0.0
    %1132 = vmatpush1.msra.mxu0 0.0
    %1133 = vmatprep.subr.mxu0 0.0
    %1134 = vmatpush1.msra.mxu0 0.0
    %1135 = vmatprep.subr.mxu0 0.0
    %1136 = vmatpush1.msra.mxu0 0.0
    %1137 = vmatprep.subr.mxu0 0.0
    %1138 = vmatpush1.msra.mxu0 0.0
    %1139 = vmatprep.subr.mxu0 0.0
    %1140 = vmatpush1.msra.mxu0 0.0
    %1141 = vmatprep.subr.mxu0 0.0
    %1142 = vmatpush1.msra.mxu0 0.0
    %1143 = vmatprep.subr.mxu0 0.0
    %1144 = vmatpush1.msra.mxu0 0.0
    %1145 = vmatprep.subr.mxu0 0.0
    %1146 = vmatpush1.msra.mxu0 0.0
    %1147 = vmatprep.subr.mxu0 0.0
    %1148 = vmatpush1.msra.mxu0 0.0
    %1149 = vmatprep.subr.mxu0 0.0
    %1150 = vmatpush1.msra.mxu0 0.0
    %1151 = vmatprep.subr.mxu0 0.0
    %1152 = vmatpush1.msra.mxu0 0.0
    %1153 = vmatprep.subr.mxu0 0.0
    %1154 = vmatpush1.msra.mxu0 0.0
    %1155 = vmatprep.subr.mxu0 0.0
    %1156 = vmatpush1.msra.mxu0 0.0
    %1157 = vmatprep.subr.mxu0 0.0
    %1158 = vmatpush1.msra.mxu0 0.0
    %1159 = vmatprep.subr.mxu0 0.0
    %1160 = vmatpush1.msra.mxu0 0.0
    %1161 = vmatprep.subr.mxu0 0.0
    %1162 = vmatpush1.msra.mxu0 0.0
    %1163 = vmatprep.subr.mxu0 0.0
    %1164 = vmatpush1.msra.mxu0 0.0
    %1165 = vmatprep.subr.mxu0 0.0
    %1166 = vmatpush1.msra.mxu0 0.0
    %1167 = vmatprep.subr.mxu0 0.0
    %1168 = vmatpush1.msra.mxu0 0.0
    %1169 = vmatprep.subr.mxu0 0.0
    %1170 = vmatpush1.msra.mxu0 0.0
    %1171 = vmatprep.subr.mxu0 0.0
    %1172 = vmatpush1.msra.mxu0 0.0
    %1173 = vmatprep.subr.mxu0 0.0
    %1174 = vmatpush1.msra.mxu0 0.0
    %1175 = vmatprep.subr.mxu0 0.0
    %1176 = vmatpush1.msra.mxu0 0.0
    %1177 = vmatprep.subr.mxu0 0.0
    %1178 = vmatpush1.msra.mxu0 0.0
    %1179 = vmatprep.subr.mxu0 0.0
    %1180 = vmatpush1.msra.mxu0 0.0
    %1181 = vmatprep.subr.mxu0 0.0
    %1182 = vmatpush1.msra.mxu0 0.0
    %1183 = vmatprep.subr.mxu0 0.0
    %1184 = vmatpush1.msra.mxu0 0.0
    %1185 = vmatprep.subr.mxu0 0.0
    %1186 = vmatpush1.msra.mxu0 0.0
    %1187 = vmatprep.mubr.f32.mxu0 0.0
    %1188 = vmatmul.mubr.f32.gmra.mrb[0].mxu0 %v1121
    %v1189 = vpop.f32.mrb[0].mxu0
    %v1190 = vadd.f32 %v98, %v1189
    %v1191 = vpop.f32.mrb[0].mxu0
    %1192 = vdwg.mxu0
    %s1193 = scalar_lea.vmem %s0, 14
    %v1194 = vld [vmem:[%s1193] sm:$0x3]
    %v1196 = vsel %vm146, %v1194, 0
    %1198 = vmatprep.subr.mxu0 0.0
    %1199 = vmatpush1.msra.mxu0 %v82
    %1200 = vmatprep.subr.mxu0 0.0
    %1201 = vmatpush1.msra.mxu0 %v83
    %1202 = vmatprep.subr.mxu0 0.0
    %1203 = vmatpush1.msra.mxu0 %v152
    %1204 = vmatprep.subr.mxu0 0.0
    %1205 = vmatpush1.msra.mxu0 0.0
    %1206 = vmatprep.subr.mxu0 0.0
    %1207 = vmatpush1.msra.mxu0 0.0
    %1208 = vmatprep.subr.mxu0 0.0
    %1209 = vmatpush1.msra.mxu0 0.0
    %1210 = vmatprep.subr.mxu0 0.0
    %1211 = vmatpush1.msra.mxu0 0.0
    %1212 = vmatprep.subr.mxu0 0.0
    %1213 = vmatpush1.msra.mxu0 0.0
    %1214 = vmatprep.subr.mxu0 0.0
    %1215 = vmatpush1.msra.mxu0 0.0
    %1216 = vmatprep.subr.mxu0 0.0
    %1217 = vmatpush1.msra.mxu0 0.0
    %1218 = vmatprep.subr.mxu0 0.0
    %1219 = vmatpush1.msra.mxu0 0.0
    %1220 = vmatprep.subr.mxu0 0.0
    %1221 = vmatpush1.msra.mxu0 0.0
    %1222 = vmatprep.subr.mxu0 0.0
    %1223 = vmatpush1.msra.mxu0 0.0
    %1224 = vmatprep.subr.mxu0 0.0
    %1225 = vmatpush1.msra.mxu0 0.0
    %1226 = vmatprep.subr.mxu0 0.0
    %1227 = vmatpush1.msra.mxu0 0.0
    %1228 = vmatprep.subr.mxu0 0.0
    %1229 = vmatpush1.msra.mxu0 0.0
    %1230 = vmatprep.subr.mxu0 0.0
    %1231 = vmatpush1.msra.mxu0 0.0
    %1232 = vmatprep.subr.mxu0 0.0
    %1233 = vmatpush1.msra.mxu0 0.0
    %1234 = vmatprep.subr.mxu0 0.0
    %1235 = vmatpush1.msra.mxu0 0.0
    %1236 = vmatprep.subr.mxu0 0.0
    %1237 = vmatpush1.msra.mxu0 0.0
    %1238 = vmatprep.subr.mxu0 0.0
    %1239 = vmatpush1.msra.mxu0 0.0
    %1240 = vmatprep.subr.mxu0 0.0
    %1241 = vmatpush1.msra.mxu0 0.0
    %1242 = vmatprep.subr.mxu0 0.0
    %1243 = vmatpush1.msra.mxu0 0.0
    %1244 = vmatprep.subr.mxu0 0.0
    %1245 = vmatpush1.msra.mxu0 0.0
    %1246 = vmatprep.subr.mxu0 0.0
    %1247 = vmatpush1.msra.mxu0 0.0
    %1248 = vmatprep.subr.mxu0 0.0
    %1249 = vmatpush1.msra.mxu0 0.0
    %1250 = vmatprep.subr.mxu0 0.0
    %1251 = vmatpush1.msra.mxu0 0.0
    %1252 = vmatprep.subr.mxu0 0.0
    %1253 = vmatpush1.msra.mxu0 0.0
    %1254 = vmatprep.subr.mxu0 0.0
    %1255 = vmatpush1.msra.mxu0 0.0
    %1256 = vmatprep.subr.mxu0 0.0
    %1257 = vmatpush1.msra.mxu0 0.0
    %1258 = vmatprep.subr.mxu0 0.0
    %1259 = vmatpush1.msra.mxu0 0.0
    %1260 = vmatprep.subr.mxu0 0.0
    %1261 = vmatpush1.msra.mxu0 0.0
    %1262 = vmatprep.mubr.f32.mxu0 0.0
    %1263 = vmatmul.mubr.f32.gmra.mrb[0].mxu0 %v1196
    %v1264 = vpop.f32.mrb[0].mxu0
    %v1265 = vadd.f32 %v90, %v1264
    %v1266 = vpop.f32.mrb[0].mxu0
    %1267 = vdwg.mxu0
    %v1268 = vmax.f32 %v1265, 0.0
    %v1270 = vsel %vm225, %v1268, 0
    %1272 = vmatprep.subr.mxu0 0.0
    %1273 = vmatpush1.msra.mxu0 %v92
    %1274 = vmatprep.subr.mxu0 0.0
    %1275 = vmatpush1.msra.mxu0 0.0
    %1276 = vmatprep.subr.mxu0 0.0
    %1277 = vmatpush1.msra.mxu0 0.0
    %1278 = vmatprep.subr.mxu0 0.0
    %1279 = vmatpush1.msra.mxu0 0.0
    %1280 = vmatprep.subr.mxu0 0.0
    %1281 = vmatpush1.msra.mxu0 0.0
    %1282 = vmatprep.subr.mxu0 0.0
    %1283 = vmatpush1.msra.mxu0 0.0
    %1284 = vmatprep.subr.mxu0 0.0
    %1285 = vmatpush1.msra.mxu0 0.0
    %1286 = vmatprep.subr.mxu0 0.0
    %1287 = vmatpush1.msra.mxu0 0.0
    %1288 = vmatprep.subr.mxu0 0.0
    %1289 = vmatpush1.msra.mxu0 0.0
    %1290 = vmatprep.subr.mxu0 0.0
    %1291 = vmatpush1.msra.mxu0 0.0
    %1292 = vmatprep.subr.mxu0 0.0
    %1293 = vmatpush1.msra.mxu0 0.0
    %1294 = vmatprep.subr.mxu0 0.0
    %1295 = vmatpush1.msra.mxu0 0.0
    %1296 = vmatprep.subr.mxu0 0.0
    %1297 = vmatpush1.msra.mxu0 0.0
    %1298 = vmatprep.subr.mxu0 0.0
    %1299 = vmatpush1.msra.mxu0 0.0
    %1300 = vmatprep.subr.mxu0 0.0
    %1301 = vmatpush1.msra.mxu0 0.0
    %1302 = vmatprep.subr.mxu0 0.0
    %1303 = vmatpush1.msra.mxu0 0.0
    %1304 = vmatprep.subr.mxu0 0.0
    %1305 = vmatpush1.msra.mxu0 0.0
    %1306 = vmatprep.subr.mxu0 0.0
    %1307 = vmatpush1.msra.mxu0 0.0
    %1308 = vmatprep.subr.mxu0 0.0
    %1309 = vmatpush1.msra.mxu0 0.0
    %1310 = vmatprep.subr.mxu0 0.0
    %1311 = vmatpush1.msra.mxu0 0.0
    %1312 = vmatprep.subr.mxu0 0.0
    %1313 = vmatpush1.msra.mxu0 0.0
    %1314 = vmatprep.subr.mxu0 0.0
    %1315 = vmatpush1.msra.mxu0 0.0
    %1316 = vmatprep.subr.mxu0 0.0
    %1317 = vmatpush1.msra.mxu0 0.0
    %1318 = vmatprep.subr.mxu0 0.0
    %1319 = vmatpush1.msra.mxu0 0.0
    %1320 = vmatprep.subr.mxu0 0.0
    %1321 = vmatpush1.msra.mxu0 0.0
    %1322 = vmatprep.subr.mxu0 0.0
    %1323 = vmatpush1.msra.mxu0 0.0
    %1324 = vmatprep.subr.mxu0 0.0
    %1325 = vmatpush1.msra.mxu0 0.0
    %1326 = vmatprep.subr.mxu0 0.0
    %1327 = vmatpush1.msra.mxu0 0.0
    %1328 = vmatprep.subr.mxu0 0.0
    %1329 = vmatpush1.msra.mxu0 0.0
    %1330 = vmatprep.subr.mxu0 0.0
    %1331 = vmatpush1.msra.mxu0 0.0
    %1332 = vmatprep.subr.mxu0 0.0
    %1333 = vmatpush1.msra.mxu0 0.0
    %1334 = vmatprep.subr.mxu0 0.0
    %1335 = vmatpush1.msra.mxu0 0.0
    %1336 = vmatprep.mubr.f32.mxu0 0.0
    %1337 = vmatmul.mubr.f32.gmra.mrb[0].mxu0 %v1270
    %v1338 = vpop.f32.mrb[0].mxu0
    %v1339 = vadd.f32 %v98, %v1338
    %v1340 = vpop.f32.mrb[0].mxu0
    %1341 = vdwg.mxu0
    %v1343 = vsel %vm225, 0.0, 0
    %1345 = vmatprep.subr.mxu0 0.0
    %1346 = vmatpush1.msra.mxu0 %v100
    %1347 = vmatprep.subr.mxu0 0.0
    %1348 = vmatpush1.msra.mxu0 0.0
    %1349 = vmatprep.subr.mxu0 0.0
    %1350 = vmatpush1.msra.mxu0 0.0
    %1351 = vmatprep.subr.mxu0 0.0
    %1352 = vmatpush1.msra.mxu0 0.0
    %1353 = vmatprep.subr.mxu0 0.0
    %1354 = vmatpush1.msra.mxu0 0.0
    %1355 = vmatprep.subr.mxu0 0.0
    %1356 = vmatpush1.msra.mxu0 0.0
    %1357 = vmatprep.subr.mxu0 0.0
    %1358 = vmatpush1.msra.mxu0 0.0
    %1359 = vmatprep.subr.mxu0 0.0
    %1360 = vmatpush1.msra.mxu0 0.0
    %1361 = vmatprep.subr.mxu0 0.0
    %1362 = vmatpush1.msra.mxu0 0.0
    %1363 = vmatprep.subr.mxu0 0.0
    %1364 = vmatpush1.msra.mxu0 0.0
    %1365 = vmatprep.subr.mxu0 0.0
    %1366 = vmatpush1.msra.mxu0 0.0
    %1367 = vmatprep.subr.mxu0 0.0
    %1368 = vmatpush1.msra.mxu0 0.0
    %1369 = vmatprep.subr.mxu0 0.0
    %1370 = vmatpush1.msra.mxu0 0.0
    %1371 = vmatprep.subr.mxu0 0.0
    %1372 = vmatpush1.msra.mxu0 0.0
    %1373 = vmatprep.subr.mxu0 0.0
    %1374 = vmatpush1.msra.mxu0 0.0
    %1375 = vmatprep.subr.mxu0 0.0
    %1376 = vmatpush1.msra.mxu0 0.0
    %1377 = vmatprep.subr.mxu0 0.0
    %1378 = vmatpush1.msra.mxu0 0.0
    %1379 = vmatprep.subr.mxu0 0.0
    %1380 = vmatpush1.msra.mxu0 0.0
    %1381 = vmatprep.subr.mxu0 0.0
    %1382 = vmatpush1.msra.mxu0 0.0
    %1383 = vmatprep.subr.mxu0 0.0
    %1384 = vmatpush1.msra.mxu0 0.0
    %1385 = vmatprep.subr.mxu0 0.0
    %1386 = vmatpush1.msra.mxu0 0.0
    %1387 = vmatprep.subr.mxu0 0.0
    %1388 = vmatpush1.msra.mxu0 0.0
    %1389 = vmatprep.subr.mxu0 0.0
    %1390 = vmatpush1.msra.mxu0 0.0
    %1391 = vmatprep.subr.mxu0 0.0
    %1392 = vmatpush1.msra.mxu0 0.0
    %1393 = vmatprep.subr.mxu0 0.0
    %1394 = vmatpush1.msra.mxu0 0.0
    %1395 = vmatprep.subr.mxu0 0.0
    %1396 = vmatpush1.msra.mxu0 0.0
    %1397 = vmatprep.subr.mxu0 0.0
    %1398 = vmatpush1.msra.mxu0 0.0
    %1399 = vmatprep.subr.mxu0 0.0
    %1400 = vmatpush1.msra.mxu0 0.0
    %1401 = vmatprep.subr.mxu0 0.0
    %1402 = vmatpush1.msra.mxu0 0.0
    %1403 = vmatprep.subr.mxu0 0.0
    %1404 = vmatpush1.msra.mxu0 0.0
    %1405 = vmatprep.subr.mxu0 0.0
    %1406 = vmatpush1.msra.mxu0 0.0
    %1407 = vmatprep.subr.mxu0 0.0
    %1408 = vmatpush1.msra.mxu0 0.0
    %1409 = vmatprep.mubr.f32.mxu0 0.0
    %1410 = vmatmul.mubr.f32.gmra.mrb[0].mxu0 %v1343
    %v1411 = vpop.f32.mrb[0].mxu0
    %v1412 = vadd.f32 %v108, %v1411
    %v1413 = vpop.f32.mrb[0].mxu0
    %1414 = vdwg.mxu0
    %v1415 = vadd.f32 %v296, %v1412
    %v1416 = vxor.u32 %v1415, 2147483648
    %v1417 = vmul.f32 %v1416, 1.442695
    %v1418 = vpow.pop %v1417
    %v1419 = vadd.f32 %v1418, 1.0
    %v1420 = vrcp.pop %v1419
    %v1421 = vmul.f32 1.0, %v1420
    %1423 = vrot.lane.b32.xlu0 %v1412, 112
    %v1424 = vpop.permute.xlu0 %1423
    %v1426 = vmul.f32 %v1421, %v1424
    %1428 = vrot.lane.b32.xlu0 %v1426, 16
    %v1429 = vpop.permute.xlu0 %1428
    %v1431 = vadd.f32 %v296, %v1429
    %v1432 = vtanh.pop %v1431
    %v1433 = vsub.f32 1.0, %v1421
    %1435 = vrot.lane.b32.xlu0 %v1432, 120
    %v1436 = vpop.permute.xlu0 %1435
    %v1438 = vmul.f32 %v1433, %v1436
    %v1439 = vmul.f32 %v1421, 0.0
    %v1440 = vadd.f32 %v1438, %v1439
    %vm1441 = vcmp.gt.s32.totalorder %v81, 0
    %v1442 = vsel %vm1441, 1, 0
    %1443 = vset.pattern.permute.xlu0 0
    %1444 = vperm.xlu0 %1443, %v1442
    %v1445 = vpop.permute.xlu0 %1444
    %vm1446 = vcmp.eq.s32.totalorder %v1445, 1
    %v1447 = vsel %vm1446, %v1440, 0.0
    %1448 = vmatprep.subr.mxu0 0.0
    %1449 = vmatpush1.msra.mxu0 %v102
    %1450 = vmatprep.subr.mxu0 0.0
    %1451 = vmatpush1.msra.mxu0 0.0
    %1452 = vmatprep.subr.mxu0 0.0
    %1453 = vmatpush1.msra.mxu0 0.0
    %1454 = vmatprep.subr.mxu0 0.0
    %1455 = vmatpush1.msra.mxu0 0.0
    %1456 = vmatprep.subr.mxu0 0.0
    %1457 = vmatpush1.msra.mxu0 0.0
    %1458 = vmatprep.subr.mxu0 0.0
    %1459 = vmatpush1.msra.mxu0 0.0
    %1460 = vmatprep.subr.mxu0 0.0
    %1461 = vmatpush1.msra.mxu0 0.0
    %1462 = vmatprep.subr.mxu0 0.0
    %1463 = vmatpush1.msra.mxu0 0.0
    %1464 = vmatprep.subr.mxu0 0.0
    %1465 = vmatpush1.msra.mxu0 0.0
    %1466 = vmatprep.subr.mxu0 0.0
    %1467 = vmatpush1.msra.mxu0 0.0
    %1468 = vmatprep.subr.mxu0 0.0
    %1469 = vmatpush1.msra.mxu0 0.0
    %1470 = vmatprep.subr.mxu0 0.0
    %1471 = vmatpush1.msra.mxu0 0.0
    %1472 = vmatprep.subr.mxu0 0.0
    %1473 = vmatpush1.msra.mxu0 0.0
    %1474 = vmatprep.subr.mxu0 0.0
    %1475 = vmatpush1.msra.mxu0 0.0
    %1476 = vmatprep.subr.mxu0 0.0
    %1477 = vmatpush1.msra.mxu0 0.0
    %1478 = vmatprep.subr.mxu0 0.0
    %1479 = vmatpush1.msra.mxu0 0.0
    %1480 = vmatprep.subr.mxu0 0.0
    %1481 = vmatpush1.msra.mxu0 0.0
    %1482 = vmatprep.subr.mxu0 0.0
    %1483 = vmatpush1.msra.mxu0 0.0
    %1484 = vmatprep.subr.mxu0 0.0
    %1485 = vmatpush1.msra.mxu0 0.0
    %1486 = vmatprep.subr.mxu0 0.0
    %1487 = vmatpush1.msra.mxu0 0.0
    %1488 = vmatprep.subr.mxu0 0.0
    %1489 = vmatpush1.msra.mxu0 0.0
    %1490 = vmatprep.subr.mxu0 0.0
    %1491 = vmatpush1.msra.mxu0 0.0
    %1492 = vmatprep.subr.mxu0 0.0
    %1493 = vmatpush1.msra.mxu0 0.0
    %1494 = vmatprep.subr.mxu0 0.0
    %1495 = vmatpush1.msra.mxu0 0.0
    %1496 = vmatprep.subr.mxu0 0.0
    %1497 = vmatpush1.msra.mxu0 0.0
    %1498 = vmatprep.subr.mxu0 0.0
    %1499 = vmatpush1.msra.mxu0 0.0
    %1500 = vmatprep.subr.mxu0 0.0
    %1501 = vmatpush1.msra.mxu0 0.0
    %1502 = vmatprep.subr.mxu0 0.0
    %1503 = vmatpush1.msra.mxu0 0.0
    %1504 = vmatprep.subr.mxu0 0.0
    %1505 = vmatpush1.msra.mxu0 0.0
    %1506 = vmatprep.subr.mxu0 0.0
    %1507 = vmatpush1.msra.mxu0 0.0
    %1508 = vmatprep.subr.mxu0 0.0
    %1509 = vmatpush1.msra.mxu0 0.0
    %1510 = vmatprep.subr.mxu0 0.0
    %1511 = vmatpush1.msra.mxu0 0.0
    %1512 = vmatprep.mubr.f32.mxu0 0.0
    %1513 = vmatmul.mubr.f32.gmra.mrb[0].mxu0 %v1343
    %v1514 = vpop.f32.mrb[0].mxu0
    %v1515 = vadd.f32 %v116, %v1514
    %v1516 = vpop.f32.mrb[0].mxu0
    %1517 = vdwg.mxu0
    %1519 = vrot.lane.b32.xlu0 %v1515, 24
    %v1520 = vpop.permute.xlu0 %1519
    %v1522 = vadd.f32 %v1339, %v1520
    %v1523 = vxor.u32 %v1522, 2147483648
    %v1524 = vmul.f32 %v1523, 1.442695
    %v1525 = vpow.pop %v1524
    %v1526 = vadd.f32 %v1525, 1.0
    %v1527 = vrcp.pop %v1526
    %v1528 = vmul.f32 1.0, %v1527
    %1529 = vrot.lane.b32.xlu0 %v1515, 8
    %v1530 = vpop.permute.xlu0 %1529
    %v1532 = vmul.f32 %v1528, %v1530
    %1534 = vrot.lane.b32.xlu0 %v1532, 16
    %v1535 = vpop.permute.xlu0 %1534
    %v1537 = vadd.f32 %v1339, %v1535
    %v1538 = vtanh.pop %v1537
    %v1539 = vsub.f32 1.0, %v1528
    %1541 = vrot.lane.b32.xlu0 %v1538, 120
    %v1542 = vpop.permute.xlu0 %1541
    %v1544 = vmul.f32 %v1539, %v1542
    %v1545 = vmul.f32 %v1528, 0.0
    %v1546 = vadd.f32 %v1544, %v1545
    %v1547 = vsub.s32 8, %v81
    %vm1548 = vcmp.le.s32.totalorder %v1547, 0
    %v1549 = vsel %vm1548, 1, 0
    %1550 = vset.pattern.permute.xlu0 0
    %1551 = vperm.xlu0 %1550, %v1549
    %v1552 = vpop.permute.xlu0 %1551
    %vm1553 = vcmp.eq.s32.totalorder %v1552, 1
    %v1554 = vsel %vm1553, %v1546, 0.0
    %1556 = vrot.lane.b32.xlu0 %v1447, 120
    %v1557 = vpop.permute.xlu0 %1556
    %v1558 = vsel %vm225, %v1557, 0
    %1560 = vmatprep.subr.mxu0 0.0
    %1561 = vmatpush1.msra.mxu0 %v100
    %1562 = vmatprep.subr.mxu0 0.0
    %1563 = vmatpush1.msra.mxu0 0.0
    %1564 = vmatprep.subr.mxu0 0.0
    %1565 = vmatpush1.msra.mxu0 0.0
    %1566 = vmatprep.subr.mxu0 0.0
    %1567 = vmatpush1.msra.mxu0 0.0
    %1568 = vmatprep.subr.mxu0 0.0
    %1569 = vmatpush1.msra.mxu0 0.0
    %1570 = vmatprep.subr.mxu0 0.0
    %1571 = vmatpush1.msra.mxu0 0.0
    %1572 = vmatprep.subr.mxu0 0.0
    %1573 = vmatpush1.msra.mxu0 0.0
    %1574 = vmatprep.subr.mxu0 0.0
    %1575 = vmatpush1.msra.mxu0 0.0
    %1576 = vmatprep.subr.mxu0 0.0
    %1577 = vmatpush1.msra.mxu0 0.0
    %1578 = vmatprep.subr.mxu0 0.0
    %1579 = vmatpush1.msra.mxu0 0.0
    %1580 = vmatprep.subr.mxu0 0.0
    %1581 = vmatpush1.msra.mxu0 0.0
    %1582 = vmatprep.subr.mxu0 0.0
    %1583 = vmatpush1.msra.mxu0 0.0
    %1584 = vmatprep.subr.mxu0 0.0
    %1585 = vmatpush1.msra.mxu0 0.0
    %1586 = vmatprep.subr.mxu0 0.0
    %1587 = vmatpush1.msra.mxu0 0.0
    %1588 = vmatprep.subr.mxu0 0.0
    %1589 = vmatpush1.msra.mxu0 0.0
    %1590 = vmatprep.subr.mxu0 0.0
    %1591 = vmatpush1.msra.mxu0 0.0
    %1592 = vmatprep.subr.mxu0 0.0
    %1593 = vmatpush1.msra.mxu0 0.0
    %1594 = vmatprep.subr.mxu0 0.0
    %1595 = vmatpush1.msra.mxu0 0.0
    %1596 = vmatprep.subr.mxu0 0.0
    %1597 = vmatpush1.msra.mxu0 0.0
    %1598 = vmatprep.subr.mxu0 0.0
    %1599 = vmatpush1.msra.mxu0 0.0
    %1600 = vmatprep.subr.mxu0 0.0
    %1601 = vmatpush1.msra.mxu0 0.0
    %1602 = vmatprep.subr.mxu0 0.0
    %1603 = vmatpush1.msra.mxu0 0.0
    %1604 = vmatprep.subr.mxu0 0.0
    %1605 = vmatpush1.msra.mxu0 0.0
    %1606 = vmatprep.subr.mxu0 0.0
    %1607 = vmatpush1.msra.mxu0 0.0
    %1608 = vmatprep.subr.mxu0 0.0
    %1609 = vmatpush1.msra.mxu0 0.0
    %1610 = vmatprep.subr.mxu0 0.0
    %1611 = vmatpush1.msra.mxu0 0.0
    %1612 = vmatprep.subr.mxu0 0.0
    %1613 = vmatpush1.msra.mxu0 0.0
    %1614 = vmatprep.subr.mxu0 0.0
    %1615 = vmatpush1.msra.mxu0 0.0
    %1616 = vmatprep.subr.mxu0 0.0
    %1617 = vmatpush1.msra.mxu0 0.0
    %1618 = vmatprep.subr.mxu0 0.0
    %1619 = vmatpush1.msra.mxu0 0.0
    %1620 = vmatprep.subr.mxu0 0.0
    %1621 = vmatpush1.msra.mxu0 0.0
    %1622 = vmatprep.subr.mxu0 0.0
    %1623 = vmatpush1.msra.mxu0 0.0
    %1624 = vmatprep.mubr.f32.mxu0 0.0
    %1625 = vmatmul.mubr.f32.gmra.mrb[0].mxu0 %v1558
    %v1626 = vpop.f32.mrb[0].mxu0
    %v1627 = vadd.f32 %v108, %v1626
    %v1628 = vpop.f32.mrb[0].mxu0
    %1629 = vdwg.mxu0
    %v1630 = vadd.f32 %v445, %v1627
    %v1631 = vxor.u32 %v1630, 2147483648
    %v1632 = vmul.f32 %v1631, 1.442695
    %v1633 = vpow.pop %v1632
    %v1634 = vadd.f32 %v1633, 1.0
    %v1635 = vrcp.pop %v1634
    %v1636 = vmul.f32 1.0, %v1635
    %1638 = vrot.lane.b32.xlu0 %v1627, 112
    %v1639 = vpop.permute.xlu0 %1638
    %v1641 = vmul.f32 %v1636, %v1639
    %1643 = vrot.lane.b32.xlu0 %v1641, 16
    %v1644 = vpop.permute.xlu0 %1643
    %v1646 = vadd.f32 %v445, %v1644
    %v1647 = vtanh.pop %v1646
    %v1648 = vsub.f32 1.0, %v1636
    %1650 = vrot.lane.b32.xlu0 %v1647, 120
    %v1651 = vpop.permute.xlu0 %1650
    %v1653 = vmul.f32 %v1648, %v1651
    %v1654 = vmul.f32 %v1636, %v1447
    %v1655 = vadd.f32 %v1653, %v1654
    %vm1656 = vcmp.gt.s32.totalorder %v81, 1
    %v1657 = vsel %vm1656, 1, 0
    %1658 = vset.pattern.permute.xlu0 0
    %1659 = vperm.xlu0 %1658, %v1657
    %v1660 = vpop.permute.xlu0 %1659
    %vm1661 = vcmp.eq.s32.totalorder %v1660, 1
    %v1662 = vsel %vm1661, %v1655, %v1447
    %1664 = vrot.lane.b32.xlu0 %v1554, 96
    %v1665 = vpop.permute.xlu0 %1664
    %v1666 = vsel %vm225, %v1665, 0
    %1668 = vmatprep.subr.mxu0 0.0
    %1669 = vmatpush1.msra.mxu0 %v102
    %1670 = vmatprep.subr.mxu0 0.0
    %1671 = vmatpush1.msra.mxu0 0.0
    %1672 = vmatprep.subr.mxu0 0.0
    %1673 = vmatpush1.msra.mxu0 0.0
    %1674 = vmatprep.subr.mxu0 0.0
    %1675 = vmatpush1.msra.mxu0 0.0
    %1676 = vmatprep.subr.mxu0 0.0
    %1677 = vmatpush1.msra.mxu0 0.0
    %1678 = vmatprep.subr.mxu0 0.0
    %1679 = vmatpush1.msra.mxu0 0.0
    %1680 = vmatprep.subr.mxu0 0.0
    %1681 = vmatpush1.msra.mxu0 0.0
    %1682 = vmatprep.subr.mxu0 0.0
    %1683 = vmatpush1.msra.mxu0 0.0
    %1684 = vmatprep.subr.mxu0 0.0
    %1685 = vmatpush1.msra.mxu0 0.0
    %1686 = vmatprep.subr.mxu0 0.0
    %1687 = vmatpush1.msra.mxu0 0.0
    %1688 = vmatprep.subr.mxu0 0.0
    %1689 = vmatpush1.msra.mxu0 0.0
    %1690 = vmatprep.subr.mxu0 0.0
    %1691 = vmatpush1.msra.mxu0 0.0
    %1692 = vmatprep.subr.mxu0 0.0
    %1693 = vmatpush1.msra.mxu0 0.0
    %1694 = vmatprep.subr.mxu0 0.0
    %1695 = vmatpush1.msra.mxu0 0.0
    %1696 = vmatprep.subr.mxu0 0.0
    %1697 = vmatpush1.msra.mxu0 0.0
    %1698 = vmatprep.subr.mxu0 0.0
    %1699 = vmatpush1.msra.mxu0 0.0
    %1700 = vmatprep.subr.mxu0 0.0
    %1701 = vmatpush1.msra.mxu0 0.0
    %1702 = vmatprep.subr.mxu0 0.0
    %1703 = vmatpush1.msra.mxu0 0.0
    %1704 = vmatprep.subr.mxu0 0.0
    %1705 = vmatpush1.msra.mxu0 0.0
    %1706 = vmatprep.subr.mxu0 0.0
    %1707 = vmatpush1.msra.mxu0 0.0
    %1708 = vmatprep.subr.mxu0 0.0
    %1709 = vmatpush1.msra.mxu0 0.0
    %1710 = vmatprep.subr.mxu0 0.0
    %1711 = vmatpush1.msra.mxu0 0.0
    %1712 = vmatprep.subr.mxu0 0.0
    %1713 = vmatpush1.msra.mxu0 0.0
    %1714 = vmatprep.subr.mxu0 0.0
    %1715 = vmatpush1.msra.mxu0 0.0
    %1716 = vmatprep.subr.mxu0 0.0
    %1717 = vmatpush1.msra.mxu0 0.0
    %1718 = vmatprep.subr.mxu0 0.0
    %1719 = vmatpush1.msra.mxu0 0.0
    %1720 = vmatprep.subr.mxu0 0.0
    %1721 = vmatpush1.msra.mxu0 0.0
    %1722 = vmatprep.subr.mxu0 0.0
    %1723 = vmatpush1.msra.mxu0 0.0
    %1724 = vmatprep.subr.mxu0 0.0
    %1725 = vmatpush1.msra.mxu0 0.0
    %1726 = vmatprep.subr.mxu0 0.0
    %1727 = vmatpush1.msra.mxu0 0.0
    %1728 = vmatprep.subr.mxu0 0.0
    %1729 = vmatpush1.msra.mxu0 0.0
    %1730 = vmatprep.subr.mxu0 0.0
    %1731 = vmatpush1.msra.mxu0 0.0
    %1732 = vmatprep.mubr.f32.mxu0 0.0
    %1733 = vmatmul.mubr.f32.gmra.mrb[0].mxu0 %v1666
    %v1734 = vpop.f32.mrb[0].mxu0
    %v1735 = vadd.f32 %v116, %v1734
    %v1736 = vpop.f32.mrb[0].mxu0
    %1737 = vdwg.mxu0
    %1739 = vrot.lane.b32.xlu0 %v1735, 24
    %v1740 = vpop.permute.xlu0 %1739
    %v1742 = vadd.f32 %v1190, %v1740
    %v1743 = vxor.u32 %v1742, 2147483648
    %v1744 = vmul.f32 %v1743, 1.442695
    %v1745 = vpow.pop %v1744
    %v1746 = vadd.f32 %v1745, 1.0
    %v1747 = vrcp.pop %v1746
    %v1748 = vmul.f32 1.0, %v1747
    %1749 = vrot.lane.b32.xlu0 %v1735, 8
    %v1750 = vpop.permute.xlu0 %1749
    %v1752 = vmul.f32 %v1748, %v1750
    %1754 = vrot.lane.b32.xlu0 %v1752, 16
    %v1755 = vpop.permute.xlu0 %1754
    %v1757 = vadd.f32 %v1190, %v1755
    %v1758 = vtanh.pop %v1757
    %v1759 = vsub.f32 1.0, %v1748
    %1761 = vrot.lane.b32.xlu0 %v1758, 120
    %v1762 = vpop.permute.xlu0 %1761
    %v1764 = vmul.f32 %v1759, %v1762
    %v1765 = vmul.f32 %v1748, %v1554
    %v1766 = vadd.f32 %v1764, %v1765
    %vm1767 = vcmp.le.s32.totalorder %v1547, 1
    %v1768 = vsel %vm1767, 1, 0
    %1769 = vset.pattern.permute.xlu0 0
    %1770 = vperm.xlu0 %1769, %v1768
    %v1771 = vpop.permute.xlu0 %1770
    %vm1772 = vcmp.eq.s32.totalorder %v1771, 1
    %v1773 = vsel %vm1772, %v1766, %v1554
    %1775 = vrot.lane.b32.xlu0 %v1662, 120
    %v1776 = vpop.permute.xlu0 %1775
    %v1777 = vsel %vm225, %v1776, 0
    %1779 = vmatprep.subr.mxu0 0.0
    %1780 = vmatpush1.msra.mxu0 %v100
    %1781 = vmatprep.subr.mxu0 0.0
    %1782 = vmatpush1.msra.mxu0 0.0
    %1783 = vmatprep.subr.mxu0 0.0
    %1784 = vmatpush1.msra.mxu0 0.0
    %1785 = vmatprep.subr.mxu0 0.0
    %1786 = vmatpush1.msra.mxu0 0.0
    %1787 = vmatprep.subr.mxu0 0.0
    %1788 = vmatpush1.msra.mxu0 0.0
    %1789 = vmatprep.subr.mxu0 0.0
    %1790 = vmatpush1.msra.mxu0 0.0
    %1791 = vmatprep.subr.mxu0 0.0
    %1792 = vmatpush1.msra.mxu0 0.0
    %1793 = vmatprep.subr.mxu0 0.0
    %1794 = vmatpush1.msra.mxu0 0.0
    %1795 = vmatprep.subr.mxu0 0.0
    %1796 = vmatpush1.msra.mxu0 0.0
    %1797 = vmatprep.subr.mxu0 0.0
    %1798 = vmatpush1.msra.mxu0 0.0
    %1799 = vmatprep.subr.mxu0 0.0
    %1800 = vmatpush1.msra.mxu0 0.0
    %1801 = vmatprep.subr.mxu0 0.0
    %1802 = vmatpush1.msra.mxu0 0.0
    %1803 = vmatprep.subr.mxu0 0.0
    %1804 = vmatpush1.msra.mxu0 0.0
    %1805 = vmatprep.subr.mxu0 0.0
    %1806 = vmatpush1.msra.mxu0 0.0
    %1807 = vmatprep.subr.mxu0 0.0
    %1808 = vmatpush1.msra.mxu0 0.0
    %1809 = vmatprep.subr.mxu0 0.0
    %1810 = vmatpush1.msra.mxu0 0.0
    %1811 = vmatprep.subr.mxu0 0.0
    %1812 = vmatpush1.msra.mxu0 0.0
    %1813 = vmatprep.subr.mxu0 0.0
    %1814 = vmatpush1.msra.mxu0 0.0
    %1815 = vmatprep.subr.mxu0 0.0
    %1816 = vmatpush1.msra.mxu0 0.0
    %1817 = vmatprep.subr.mxu0 0.0
    %1818 = vmatpush1.msra.mxu0 0.0
    %1819 = vmatprep.subr.mxu0 0.0
    %1820 = vmatpush1.msra.mxu0 0.0
    %1821 = vmatprep.subr.mxu0 0.0
    %1822 = vmatpush1.msra.mxu0 0.0
    %1823 = vmatprep.subr.mxu0 0.0
    %1824 = vmatpush1.msra.mxu0 0.0
    %1825 = vmatprep.subr.mxu0 0.0
    %1826 = vmatpush1.msra.mxu0 0.0
    %1827 = vmatprep.subr.mxu0 0.0
    %1828 = vmatpush1.msra.mxu0 0.0
    %1829 = vmatprep.subr.mxu0 0.0
    %1830 = vmatpush1.msra.mxu0 0.0
    %1831 = vmatprep.subr.mxu0 0.0
    %1832 = vmatpush1.msra.mxu0 0.0
    %1833 = vmatprep.subr.mxu0 0.0
    %1834 = vmatpush1.msra.mxu0 0.0
    %1835 = vmatprep.subr.mxu0 0.0
    %1836 = vmatpush1.msra.mxu0 0.0
    %1837 = vmatprep.subr.mxu0 0.0
    %1838 = vmatpush1.msra.mxu0 0.0
    %1839 = vmatprep.subr.mxu0 0.0
    %1840 = vmatpush1.msra.mxu0 0.0
    %1841 = vmatprep.subr.mxu0 0.0
    %1842 = vmatpush1.msra.mxu0 0.0
    %1843 = vmatprep.mubr.f32.mxu0 0.0
    %1844 = vmatmul.mubr.f32.gmra.mrb[0].mxu0 %v1777
    %v1845 = vpop.f32.mrb[0].mxu0
    %v1846 = vadd.f32 %v108, %v1845
    %v1847 = vpop.f32.mrb[0].mxu0
    %1848 = vdwg.mxu0
    %v1849 = vadd.f32 %v594, %v1846
    %v1850 = vxor.u32 %v1849, 2147483648
    %v1851 = vmul.f32 %v1850, 1.442695
    %v1852 = vpow.pop %v1851
    %v1853 = vadd.f32 %v1852, 1.0
    %v1854 = vrcp.pop %v1853
    %v1855 = vmul.f32 1.0, %v1854
    %1857 = vrot.lane.b32.xlu0 %v1846, 112
    %v1858 = vpop.permute.xlu0 %1857
    %v1860 = vmul.f32 %v1855, %v1858
    %1862 = vrot.lane.b32.xlu0 %v1860, 16
    %v1863 = vpop.permute.xlu0 %1862
    %v1865 = vadd.f32 %v594, %v1863
    %v1866 = vtanh.pop %v1865
    %v1867 = vsub.f32 1.0, %v1855
    %1869 = vrot.lane.b32.xlu0 %v1866, 120
    %v1870 = vpop.permute.xlu0 %1869
    %v1872 = vmul.f32 %v1867, %v1870
    %v1873 = vmul.f32 %v1855, %v1662
    %v1874 = vadd.f32 %v1872, %v1873
    %vm1875 = vcmp.gt.s32.totalorder %v81, 2
    %v1876 = vsel %vm1875, 1, 0
    %1877 = vset.pattern.permute.xlu0 0
    %1878 = vperm.xlu0 %1877, %v1876
    %v1879 = vpop.permute.xlu0 %1878
    %vm1880 = vcmp.eq.s32.totalorder %v1879, 1
    %v1881 = vsel %vm1880, %v1874, %v1662
    %1883 = vrot.lane.b32.xlu0 %v1773, 96
    %v1884 = vpop.permute.xlu0 %1883
    %v1885 = vsel %vm225, %v1884, 0
    %1887 = vmatprep.subr.mxu0 0.0
    %1888 = vmatpush1.msra.mxu0 %v102
    %1889 = vmatprep.subr.mxu0 0.0
    %1890 = vmatpush1.msra.mxu0 0.0
    %1891 = vmatprep.subr.mxu0 0.0
    %1892 = vmatpush1.msra.mxu0 0.0
    %1893 = vmatprep.subr.mxu0 0.0
    %1894 = vmatpush1.msra.mxu0 0.0
    %1895 = vmatprep.subr.mxu0 0.0
    %1896 = vmatpush1.msra.mxu0 0.0
    %1897 = vmatprep.subr.mxu0 0.0
    %1898 = vmatpush1.msra.mxu0 0.0
    %1899 = vmatprep.subr.mxu0 0.0
    %1900 = vmatpush1.msra.mxu0 0.0
    %1901 = vmatprep.subr.mxu0 0.0
    %1902 = vmatpush1.msra.mxu0 0.0
    %1903 = vmatprep.subr.mxu0 0.0
    %1904 = vmatpush1.msra.mxu0 0.0
    %1905 = vmatprep.subr.mxu0 0.0
    %1906 = vmatpush1.msra.mxu0 0.0
    %1907 = vmatprep.subr.mxu0 0.0
    %1908 = vmatpush1.msra.mxu0 0.0
    %1909 = vmatprep.subr.mxu0 0.0
    %1910 = vmatpush1.msra.mxu0 0.0
    %1911 = vmatprep.subr.mxu0 0.0
    %1912 = vmatpush1.msra.mxu0 0.0
    %1913 = vmatprep.subr.mxu0 0.0
    %1914 = vmatpush1.msra.mxu0 0.0
    %1915 = vmatprep.subr.mxu0 0.0
    %1916 = vmatpush1.msra.mxu0 0.0
    %1917 = vmatprep.subr.mxu0 0.0
    %1918 = vmatpush1.msra.mxu0 0.0
    %1919 = vmatprep.subr.mxu0 0.0
    %1920 = vmatpush1.msra.mxu0 0.0
    %1921 = vmatprep.subr.mxu0 0.0
    %1922 = vmatpush1.msra.mxu0 0.0
    %1923 = vmatprep.subr.mxu0 0.0
    %1924 = vmatpush1.msra.mxu0 0.0
    %1925 = vmatprep.subr.mxu0 0.0
    %1926 = vmatpush1.msra.mxu0 0.0
    %1927 = vmatprep.subr.mxu0 0.0
    %1928 = vmatpush1.msra.mxu0 0.0
    %1929 = vmatprep.subr.mxu0 0.0
    %1930 = vmatpush1.msra.mxu0 0.0
    %1931 = vmatprep.subr.mxu0 0.0
    %1932 = vmatpush1.msra.mxu0 0.0
    %1933 = vmatprep.subr.mxu0 0.0
    %1934 = vmatpush1.msra.mxu0 0.0
    %1935 = vmatprep.subr.mxu0 0.0
    %1936 = vmatpush1.msra.mxu0 0.0
    %1937 = vmatprep.subr.mxu0 0.0
    %1938 = vmatpush1.msra.mxu0 0.0
    %1939 = vmatprep.subr.mxu0 0.0
    %1940 = vmatpush1.msra.mxu0 0.0
    %1941 = vmatprep.subr.mxu0 0.0
    %1942 = vmatpush1.msra.mxu0 0.0
    %1943 = vmatprep.subr.mxu0 0.0
    %1944 = vmatpush1.msra.mxu0 0.0
    %1945 = vmatprep.subr.mxu0 0.0
    %1946 = vmatpush1.msra.mxu0 0.0
    %1947 = vmatprep.subr.mxu0 0.0
    %1948 = vmatpush1.msra.mxu0 0.0
    %1949 = vmatprep.subr.mxu0 0.0
    %1950 = vmatpush1.msra.mxu0 0.0
    %1951 = vmatprep.mubr.f32.mxu0 0.0
    %1952 = vmatmul.mubr.f32.gmra.mrb[0].mxu0 %v1885
    %v1953 = vpop.f32.mrb[0].mxu0
    %v1954 = vadd.f32 %v116, %v1953
    %v1955 = vpop.f32.mrb[0].mxu0
    %1956 = vdwg.mxu0
    %1958 = vrot.lane.b32.xlu0 %v1954, 24
    %v1959 = vpop.permute.xlu0 %1958
    %v1961 = vadd.f32 %v1041, %v1959
    %v1962 = vxor.u32 %v1961, 2147483648
    %v1963 = vmul.f32 %v1962, 1.442695
    %v1964 = vpow.pop %v1963
    %v1965 = vadd.f32 %v1964, 1.0
    %v1966 = vrcp.pop %v1965
    %v1967 = vmul.f32 1.0, %v1966
    %1968 = vrot.lane.b32.xlu0 %v1954, 8
    %v1969 = vpop.permute.xlu0 %1968
    %v1971 = vmul.f32 %v1967, %v1969
    %1973 = vrot.lane.b32.xlu0 %v1971, 16
    %v1974 = vpop.permute.xlu0 %1973
    %v1976 = vadd.f32 %v1041, %v1974
    %v1977 = vtanh.pop %v1976
    %v1978 = vsub.f32 1.0, %v1967
    %1980 = vrot.lane.b32.xlu0 %v1977, 120
    %v1981 = vpop.permute.xlu0 %1980
    %v1983 = vmul.f32 %v1978, %v1981
    %v1984 = vmul.f32 %v1967, %v1773
    %v1985 = vadd.f32 %v1983, %v1984
    %vm1986 = vcmp.le.s32.totalorder %v1547, 2
    %v1987 = vsel %vm1986, 1, 0
    %1988 = vset.pattern.permute.xlu0 0
    %1989 = vperm.xlu0 %1988, %v1987
    %v1990 = vpop.permute.xlu0 %1989
    %vm1991 = vcmp.eq.s32.totalorder %v1990, 1
    %v1992 = vsel %vm1991, %v1985, %v1773
    %1994 = vrot.lane.b32.xlu0 %v1881, 120
    %v1995 = vpop.permute.xlu0 %1994
    %v1996 = vsel %vm225, %v1995, 0
    %1998 = vmatprep.subr.mxu0 0.0
    %1999 = vmatpush1.msra.mxu0 %v100
    %2000 = vmatprep.subr.mxu0 0.0
    %2001 = vmatpush1.msra.mxu0 0.0
    %2002 = vmatprep.subr.mxu0 0.0
    %2003 = vmatpush1.msra.mxu0 0.0
    %2004 = vmatprep.subr.mxu0 0.0
    %2005 = vmatpush1.msra.mxu0 0.0
    %2006 = vmatprep.subr.mxu0 0.0
    %2007 = vmatpush1.msra.mxu0 0.0
    %2008 = vmatprep.subr.mxu0 0.0
    %2009 = vmatpush1.msra.mxu0 0.0
    %2010 = vmatprep.subr.mxu0 0.0
    %2011 = vmatpush1.msra.mxu0 0.0
    %2012 = vmatprep.subr.mxu0 0.0
    %2013 = vmatpush1.msra.mxu0 0.0
    %2014 = vmatprep.subr.mxu0 0.0
    %2015 = vmatpush1.msra.mxu0 0.0
    %2016 = vmatprep.subr.mxu0 0.0
    %2017 = vmatpush1.msra.mxu0 0.0
    %2018 = vmatprep.subr.mxu0 0.0
    %2019 = vmatpush1.msra.mxu0 0.0
    %2020 = vmatprep.subr.mxu0 0.0
    %2021 = vmatpush1.msra.mxu0 0.0
    %2022 = vmatprep.subr.mxu0 0.0
    %2023 = vmatpush1.msra.mxu0 0.0
    %2024 = vmatprep.subr.mxu0 0.0
    %2025 = vmatpush1.msra.mxu0 0.0
    %2026 = vmatprep.subr.mxu0 0.0
    %2027 = vmatpush1.msra.mxu0 0.0
    %2028 = vmatprep.subr.mxu0 0.0
    %2029 = vmatpush1.msra.mxu0 0.0
    %2030 = vmatprep.subr.mxu0 0.0
    %2031 = vmatpush1.msra.mxu0 0.0
    %2032 = vmatprep.subr.mxu0 0.0
    %2033 = vmatpush1.msra.mxu0 0.0
    %2034 = vmatprep.subr.mxu0 0.0
    %2035 = vmatpush1.msra.mxu0 0.0
    %2036 = vmatprep.subr.mxu0 0.0
    %2037 = vmatpush1.msra.mxu0 0.0
    %2038 = vmatprep.subr.mxu0 0.0
    %2039 = vmatpush1.msra.mxu0 0.0
    %2040 = vmatprep.subr.mxu0 0.0
    %2041 = vmatpush1.msra.mxu0 0.0
    %2042 = vmatprep.subr.mxu0 0.0
    %2043 = vmatpush1.msra.mxu0 0.0
    %2044 = vmatprep.subr.mxu0 0.0
    %2045 = vmatpush1.msra.mxu0 0.0
    %2046 = vmatprep.subr.mxu0 0.0
    %2047 = vmatpush1.msra.mxu0 0.0
    %2048 = vmatprep.subr.mxu0 0.0
    %2049 = vmatpush1.msra.mxu0 0.0
    %2050 = vmatprep.subr.mxu0 0.0
    %2051 = vmatpush1.msra.mxu0 0.0
    %2052 = vmatprep.subr.mxu0 0.0
    %2053 = vmatpush1.msra.mxu0 0.0
    %2054 = vmatprep.subr.mxu0 0.0
    %2055 = vmatpush1.msra.mxu0 0.0
    %2056 = vmatprep.subr.mxu0 0.0
    %2057 = vmatpush1.msra.mxu0 0.0
    %2058 = vmatprep.subr.mxu0 0.0
    %2059 = vmatpush1.msra.mxu0 0.0
    %2060 = vmatprep.subr.mxu0 0.0
    %2061 = vmatpush1.msra.mxu0 0.0
    %2062 = vmatprep.mubr.f32.mxu0 0.0
    %2063 = vmatmul.mubr.f32.gmra.mrb[0].mxu0 %v1996
    %v2064 = vpop.f32.mrb[0].mxu0
    %v2065 = vadd.f32 %v108, %v2064
    %v2066 = vpop.f32.mrb[0].mxu0
    %2067 = vdwg.mxu0
    %v2068 = vadd.f32 %v743, %v2065
    %v2069 = vxor.u32 %v2068, 2147483648
    %v2070 = vmul.f32 %v2069, 1.442695
    %v2071 = vpow.pop %v2070
    %v2072 = vadd.f32 %v2071, 1.0
    %v2073 = vrcp.pop %v2072
    %v2074 = vmul.f32 1.0, %v2073
    %2076 = vrot.lane.b32.xlu0 %v2065, 112
    %v2077 = vpop.permute.xlu0 %2076
    %v2079 = vmul.f32 %v2074, %v2077
    %2081 = vrot.lane.b32.xlu0 %v2079, 16
    %v2082 = vpop.permute.xlu0 %2081
    %v2084 = vadd.f32 %v743, %v2082
    %v2085 = vtanh.pop %v2084
    %v2086 = vsub.f32 1.0, %v2074
    %2088 = vrot.lane.b32.xlu0 %v2085, 120
    %v2089 = vpop.permute.xlu0 %2088
    %v2091 = vmul.f32 %v2086, %v2089
    %v2092 = vmul.f32 %v2074, %v1881
    %v2093 = vadd.f32 %v2091, %v2092
    %vm2094 = vcmp.gt.s32.totalorder %v81, 3
    %v2095 = vsel %vm2094, 1, 0
    %2096 = vset.pattern.permute.xlu0 0
    %2097 = vperm.xlu0 %2096, %v2095
    %v2098 = vpop.permute.xlu0 %2097
    %vm2099 = vcmp.eq.s32.totalorder %v2098, 1
    %v2100 = vsel %vm2099, %v2093, %v1881
    %2102 = vrot.lane.b32.xlu0 %v1992, 96
    %v2103 = vpop.permute.xlu0 %2102
    %v2104 = vsel %vm225, %v2103, 0
    %2106 = vmatprep.subr.mxu0 0.0
    %2107 = vmatpush1.msra.mxu0 %v102
    %2108 = vmatprep.subr.mxu0 0.0
    %2109 = vmatpush1.msra.mxu0 0.0
    %2110 = vmatprep.subr.mxu0 0.0
    %2111 = vmatpush1.msra.mxu0 0.0
    %2112 = vmatprep.subr.mxu0 0.0
    %2113 = vmatpush1.msra.mxu0 0.0
    %2114 = vmatprep.subr.mxu0 0.0
    %2115 = vmatpush1.msra.mxu0 0.0
    %2116 = vmatprep.subr.mxu0 0.0
    %2117 = vmatpush1.msra.mxu0 0.0
    %2118 = vmatprep.subr.mxu0 0.0
    %2119 = vmatpush1.msra.mxu0 0.0
    %2120 = vmatprep.subr.mxu0 0.0
    %2121 = vmatpush1.msra.mxu0 0.0
    %2122 = vmatprep.subr.mxu0 0.0
    %2123 = vmatpush1.msra.mxu0 0.0
    %2124 = vmatprep.subr.mxu0 0.0
    %2125 = vmatpush1.msra.mxu0 0.0
    %2126 = vmatprep.subr.mxu0 0.0
    %2127 = vmatpush1.msra.mxu0 0.0
    %2128 = vmatprep.subr.mxu0 0.0
    %2129 = vmatpush1.msra.mxu0 0.0
    %2130 = vmatprep.subr.mxu0 0.0
    %2131 = vmatpush1.msra.mxu0 0.0
    %2132 = vmatprep.subr.mxu0 0.0
    %2133 = vmatpush1.msra.mxu0 0.0
    %2134 = vmatprep.subr.mxu0 0.0
    %2135 = vmatpush1.msra.mxu0 0.0
    %2136 = vmatprep.subr.mxu0 0.0
    %2137 = vmatpush1.msra.mxu0 0.0
    %2138 = vmatprep.subr.mxu0 0.0
    %2139 = vmatpush1.msra.mxu0 0.0
    %2140 = vmatprep.subr.mxu0 0.0
    %2141 = vmatpush1.msra.mxu0 0.0
    %2142 = vmatprep.subr.mxu0 0.0
    %2143 = vmatpush1.msra.mxu0 0.0
    %2144 = vmatprep.subr.mxu0 0.0
    %2145 = vmatpush1.msra.mxu0 0.0
    %2146 = vmatprep.subr.mxu0 0.0
    %2147 = vmatpush1.msra.mxu0 0.0
    %2148 = vmatprep.subr.mxu0 0.0
    %2149 = vmatpush1.msra.mxu0 0.0
    %2150 = vmatprep.subr.mxu0 0.0
    %2151 = vmatpush1.msra.mxu0 0.0
    %2152 = vmatprep.subr.mxu0 0.0
    %2153 = vmatpush1.msra.mxu0 0.0
    %2154 = vmatprep.subr.mxu0 0.0
    %2155 = vmatpush1.msra.mxu0 0.0
    %2156 = vmatprep.subr.mxu0 0.0
    %2157 = vmatpush1.msra.mxu0 0.0
    %2158 = vmatprep.subr.mxu0 0.0
    %2159 = vmatpush1.msra.mxu0 0.0
    %2160 = vmatprep.subr.mxu0 0.0
    %2161 = vmatpush1.msra.mxu0 0.0
    %2162 = vmatprep.subr.mxu0 0.0
    %2163 = vmatpush1.msra.mxu0 0.0
    %2164 = vmatprep.subr.mxu0 0.0
    %2165 = vmatpush1.msra.mxu0 0.0
    %2166 = vmatprep.subr.mxu0 0.0
    %2167 = vmatpush1.msra.mxu0 0.0
    %2168 = vmatprep.subr.mxu0 0.0
    %2169 = vmatpush1.msra.mxu0 0.0
    %2170 = vmatprep.mubr.f32.mxu0 0.0
    %2171 = vmatmul.mubr.f32.gmra.mrb[0].mxu0 %v2104
    %v2172 = vpop.f32.mrb[0].mxu0
    %v2173 = vadd.f32 %v116, %v2172
    %v2174 = vpop.f32.mrb[0].mxu0
    %2175 = vdwg.mxu0
    %2177 = vrot.lane.b32.xlu0 %v2173, 24
    %v2178 = vpop.permute.xlu0 %2177
    %v2180 = vadd.f32 %v892, %v2178
    %v2181 = vxor.u32 %v2180, 2147483648
    %v2182 = vmul.f32 %v2181, 1.442695
    %v2183 = vpow.pop %v2182
    %v2184 = vadd.f32 %v2183, 1.0
    %v2185 = vrcp.pop %v2184
    %v2186 = vmul.f32 1.0, %v2185
    %2187 = vrot.lane.b32.xlu0 %v2173, 8
    %v2188 = vpop.permute.xlu0 %2187
    %v2190 = vmul.f32 %v2186, %v2188
    %2192 = vrot.lane.b32.xlu0 %v2190, 16
    %v2193 = vpop.permute.xlu0 %2192
    %v2195 = vadd.f32 %v892, %v2193
    %v2196 = vtanh.pop %v2195
    %v2197 = vsub.f32 1.0, %v2186
    %2199 = vrot.lane.b32.xlu0 %v2196, 120
    %v2200 = vpop.permute.xlu0 %2199
    %v2202 = vmul.f32 %v2197, %v2200
    %v2203 = vmul.f32 %v2186, %v1992
    %v2204 = vadd.f32 %v2202, %v2203
    %vm2205 = vcmp.le.s32.totalorder %v1547, 3
    %v2206 = vsel %vm2205, 1, 0
    %2207 = vset.pattern.permute.xlu0 0
    %2208 = vperm.xlu0 %2207, %v2206
    %v2209 = vpop.permute.xlu0 %2208
    %vm2210 = vcmp.eq.s32.totalorder %v2209, 1
    %v2211 = vsel %vm2210, %v2204, %v1992
    %2213 = vrot.lane.b32.xlu0 %v2100, 120
    %v2214 = vpop.permute.xlu0 %2213
    %v2215 = vsel %vm225, %v2214, 0
    %2217 = vmatprep.subr.mxu0 0.0
    %2218 = vmatpush1.msra.mxu0 %v100
    %2219 = vmatprep.subr.mxu0 0.0
    %2220 = vmatpush1.msra.mxu0 0.0
    %2221 = vmatprep.subr.mxu0 0.0
    %2222 = vmatpush1.msra.mxu0 0.0
    %2223 = vmatprep.subr.mxu0 0.0
    %2224 = vmatpush1.msra.mxu0 0.0
    %2225 = vmatprep.subr.mxu0 0.0
    %2226 = vmatpush1.msra.mxu0 0.0
    %2227 = vmatprep.subr.mxu0 0.0
    %2228 = vmatpush1.msra.mxu0 0.0
    %2229 = vmatprep.subr.mxu0 0.0
    %2230 = vmatpush1.msra.mxu0 0.0
    %2231 = vmatprep.subr.mxu0 0.0
    %2232 = vmatpush1.msra.mxu0 0.0
    %2233 = vmatprep.subr.mxu0 0.0
    %2234 = vmatpush1.msra.mxu0 0.0
    %2235 = vmatprep.subr.mxu0 0.0
    %2236 = vmatpush1.msra.mxu0 0.0
    %2237 = vmatprep.subr.mxu0 0.0
    %2238 = vmatpush1.msra.mxu0 0.0
    %2239 = vmatprep.subr.mxu0 0.0
    %2240 = vmatpush1.msra.mxu0 0.0
    %2241 = vmatprep.subr.mxu0 0.0
    %2242 = vmatpush1.msra.mxu0 0.0
    %2243 = vmatprep.subr.mxu0 0.0
    %2244 = vmatpush1.msra.mxu0 0.0
    %2245 = vmatprep.subr.mxu0 0.0
    %2246 = vmatpush1.msra.mxu0 0.0
    %2247 = vmatprep.subr.mxu0 0.0
    %2248 = vmatpush1.msra.mxu0 0.0
    %2249 = vmatprep.subr.mxu0 0.0
    %2250 = vmatpush1.msra.mxu0 0.0
    %2251 = vmatprep.subr.mxu0 0.0
    %2252 = vmatpush1.msra.mxu0 0.0
    %2253 = vmatprep.subr.mxu0 0.0
    %2254 = vmatpush1.msra.mxu0 0.0
    %2255 = vmatprep.subr.mxu0 0.0
    %2256 = vmatpush1.msra.mxu0 0.0
    %2257 = vmatprep.subr.mxu0 0.0
    %2258 = vmatpush1.msra.mxu0 0.0
    %2259 = vmatprep.subr.mxu0 0.0
    %2260 = vmatpush1.msra.mxu0 0.0
    %2261 = vmatprep.subr.mxu0 0.0
    %2262 = vmatpush1.msra.mxu0 0.0
    %2263 = vmatprep.subr.mxu0 0.0
    %2264 = vmatpush1.msra.mxu0 0.0
    %2265 = vmatprep.subr.mxu0 0.0
    %2266 = vmatpush1.msra.mxu0 0.0
    %2267 = vmatprep.subr.mxu0 0.0
    %2268 = vmatpush1.msra.mxu0 0.0
    %2269 = vmatprep.subr.mxu0 0.0
    %2270 = vmatpush1.msra.mxu0 0.0
    %2271 = vmatprep.subr.mxu0 0.0
    %2272 = vmatpush1.msra.mxu0 0.0
    %2273 = vmatprep.subr.mxu0 0.0
    %2274 = vmatpush1.msra.mxu0 0.0
    %2275 = vmatprep.subr.mxu0 0.0
    %2276 = vmatpush1.msra.mxu0 0.0
    %2277 = vmatprep.subr.mxu0 0.0
    %2278 = vmatpush1.msra.mxu0 0.0
    %2279 = vmatprep.subr.mxu0 0.0
    %2280 = vmatpush1.msra.mxu0 0.0
    %2281 = vmatprep.mubr.f32.mxu0 0.0
    %2282 = vmatmul.mubr.f32.gmra.mrb[0].mxu0 %v2215
    %v2283 = vpop.f32.mrb[0].mxu0
    %v2284 = vadd.f32 %v108, %v2283
    %v2285 = vpop.f32.mrb[0].mxu0
    %2286 = vdwg.mxu0
    %v2287 = vadd.f32 %v892, %v2284
    %v2288 = vxor.u32 %v2287, 2147483648
    %v2289 = vmul.f32 %v2288, 1.442695
    %v2290 = vpow.pop %v2289
    %v2291 = vadd.f32 %v2290, 1.0
    %v2292 = vrcp.pop %v2291
    %v2293 = vmul.f32 1.0, %v2292
    %2295 = vrot.lane.b32.xlu0 %v2284, 112
    %v2296 = vpop.permute.xlu0 %2295
    %v2298 = vmul.f32 %v2293, %v2296
    %2300 = vrot.lane.b32.xlu0 %v2298, 16
    %v2301 = vpop.permute.xlu0 %2300
    %v2303 = vadd.f32 %v892, %v2301
    %v2304 = vtanh.pop %v2303
    %v2305 = vsub.f32 1.0, %v2293
    %2307 = vrot.lane.b32.xlu0 %v2304, 120
    %v2308 = vpop.permute.xlu0 %2307
    %v2310 = vmul.f32 %v2305, %v2308
    %v2311 = vmul.f32 %v2293, %v2100
    %v2312 = vadd.f32 %v2310, %v2311
    %vm2313 = vcmp.gt.s32.totalorder %v81, 4
    %v2314 = vsel %vm2313, 1, 0
    %2315 = vset.pattern.permute.xlu0 0
    %2316 = vperm.xlu0 %2315, %v2314
    %v2317 = vpop.permute.xlu0 %2316
    %vm2318 = vcmp.eq.s32.totalorder %v2317, 1
    %v2319 = vsel %vm2318, %v2312, %v2100
    %2321 = vrot.lane.b32.xlu0 %v2211, 96
    %v2322 = vpop.permute.xlu0 %2321
    %v2323 = vsel %vm225, %v2322, 0
    %2325 = vmatprep.subr.mxu0 0.0
    %2326 = vmatpush1.msra.mxu0 %v102
    %2327 = vmatprep.subr.mxu0 0.0
    %2328 = vmatpush1.msra.mxu0 0.0
    %2329 = vmatprep.subr.mxu0 0.0
    %2330 = vmatpush1.msra.mxu0 0.0
    %2331 = vmatprep.subr.mxu0 0.0
    %2332 = vmatpush1.msra.mxu0 0.0
    %2333 = vmatprep.subr.mxu0 0.0
    %2334 = vmatpush1.msra.mxu0 0.0
    %2335 = vmatprep.subr.mxu0 0.0
    %2336 = vmatpush1.msra.mxu0 0.0
    %2337 = vmatprep.subr.mxu0 0.0
    %2338 = vmatpush1.msra.mxu0 0.0
    %2339 = vmatprep.subr.mxu0 0.0
    %2340 = vmatpush1.msra.mxu0 0.0
    %2341 = vmatprep.subr.mxu0 0.0
    %2342 = vmatpush1.msra.mxu0 0.0
    %2343 = vmatprep.subr.mxu0 0.0
    %2344 = vmatpush1.msra.mxu0 0.0
    %2345 = vmatprep.subr.mxu0 0.0
    %2346 = vmatpush1.msra.mxu0 0.0
    %2347 = vmatprep.subr.mxu0 0.0
    %2348 = vmatpush1.msra.mxu0 0.0
    %2349 = vmatprep.subr.mxu0 0.0
    %2350 = vmatpush1.msra.mxu0 0.0
    %2351 = vmatprep.subr.mxu0 0.0
    %2352 = vmatpush1.msra.mxu0 0.0
    %2353 = vmatprep.subr.mxu0 0.0
    %2354 = vmatpush1.msra.mxu0 0.0
    %2355 = vmatprep.subr.mxu0 0.0
    %2356 = vmatpush1.msra.mxu0 0.0
    %2357 = vmatprep.subr.mxu0 0.0
    %2358 = vmatpush1.msra.mxu0 0.0
    %2359 = vmatprep.subr.mxu0 0.0
    %2360 = vmatpush1.msra.mxu0 0.0
    %2361 = vmatprep.subr.mxu0 0.0
    %2362 = vmatpush1.msra.mxu0 0.0
    %2363 = vmatprep.subr.mxu0 0.0
    %2364 = vmatpush1.msra.mxu0 0.0
    %2365 = vmatprep.subr.mxu0 0.0
    %2366 = vmatpush1.msra.mxu0 0.0
    %2367 = vmatprep.subr.mxu0 0.0
    %2368 = vmatpush1.msra.mxu0 0.0
    %2369 = vmatprep.subr.mxu0 0.0
    %2370 = vmatpush1.msra.mxu0 0.0
    %2371 = vmatprep.subr.mxu0 0.0
    %2372 = vmatpush1.msra.mxu0 0.0
    %2373 = vmatprep.subr.mxu0 0.0
    %2374 = vmatpush1.msra.mxu0 0.0
    %2375 = vmatprep.subr.mxu0 0.0
    %2376 = vmatpush1.msra.mxu0 0.0
    %2377 = vmatprep.subr.mxu0 0.0
    %2378 = vmatpush1.msra.mxu0 0.0
    %2379 = vmatprep.subr.mxu0 0.0
    %2380 = vmatpush1.msra.mxu0 0.0
    %2381 = vmatprep.subr.mxu0 0.0
    %2382 = vmatpush1.msra.mxu0 0.0
    %2383 = vmatprep.subr.mxu0 0.0
    %2384 = vmatpush1.msra.mxu0 0.0
    %2385 = vmatprep.subr.mxu0 0.0
    %2386 = vmatpush1.msra.mxu0 0.0
    %2387 = vmatprep.subr.mxu0 0.0
    %2388 = vmatpush1.msra.mxu0 0.0
    %2389 = vmatprep.mubr.f32.mxu0 0.0
    %2390 = vmatmul.mubr.f32.gmra.mrb[0].mxu0 %v2323
    %v2391 = vpop.f32.mrb[0].mxu0
    %v2392 = vadd.f32 %v116, %v2391
    %v2393 = vpop.f32.mrb[0].mxu0
    %2394 = vdwg.mxu0
    %2396 = vrot.lane.b32.xlu0 %v2392, 24
    %v2397 = vpop.permute.xlu0 %2396
    %v2399 = vadd.f32 %v743, %v2397
    %v2400 = vxor.u32 %v2399, 2147483648
    %v2401 = vmul.f32 %v2400, 1.442695
    %v2402 = vpow.pop %v2401
    %v2403 = vadd.f32 %v2402, 1.0
    %v2404 = vrcp.pop %v2403
    %v2405 = vmul.f32 1.0, %v2404
    %2406 = vrot.lane.b32.xlu0 %v2392, 8
    %v2407 = vpop.permute.xlu0 %2406
    %v2409 = vmul.f32 %v2405, %v2407
    %2411 = vrot.lane.b32.xlu0 %v2409, 16
    %v2412 = vpop.permute.xlu0 %2411
    %v2414 = vadd.f32 %v743, %v2412
    %v2415 = vtanh.pop %v2414
    %v2416 = vsub.f32 1.0, %v2405
    %2418 = vrot.lane.b32.xlu0 %v2415, 120
    %v2419 = vpop.permute.xlu0 %2418
    %v2421 = vmul.f32 %v2416, %v2419
    %v2422 = vmul.f32 %v2405, %v2211
    %v2423 = vadd.f32 %v2421, %v2422
    %vm2424 = vcmp.le.s32.totalorder %v1547, 4
    %v2425 = vsel %vm2424, 1, 0
    %2426 = vset.pattern.permute.xlu0 0
    %2427 = vperm.xlu0 %2426, %v2425
    %v2428 = vpop.permute.xlu0 %2427
    %vm2429 = vcmp.eq.s32.totalorder %v2428, 1
    %v2430 = vsel %vm2429, %v2423, %v2211
    %2432 = vrot.lane.b32.xlu0 %v2319, 120
    %v2433 = vpop.permute.xlu0 %2432
    %v2434 = vsel %vm225, %v2433, 0
    %2436 = vmatprep.subr.mxu0 0.0
    %2437 = vmatpush1.msra.mxu0 %v100
    %2438 = vmatprep.subr.mxu0 0.0
    %2439 = vmatpush1.msra.mxu0 0.0
    %2440 = vmatprep.subr.mxu0 0.0
    %2441 = vmatpush1.msra.mxu0 0.0
    %2442 = vmatprep.subr.mxu0 0.0
    %2443 = vmatpush1.msra.mxu0 0.0
    %2444 = vmatprep.subr.mxu0 0.0
    %2445 = vmatpush1.msra.mxu0 0.0
    %2446 = vmatprep.subr.mxu0 0.0
    %2447 = vmatpush1.msra.mxu0 0.0
    %2448 = vmatprep.subr.mxu0 0.0
    %2449 = vmatpush1.msra.mxu0 0.0
    %2450 = vmatprep.subr.mxu0 0.0
    %2451 = vmatpush1.msra.mxu0 0.0
    %2452 = vmatprep.subr.mxu0 0.0
    %2453 = vmatpush1.msra.mxu0 0.0
    %2454 = vmatprep.subr.mxu0 0.0
    %2455 = vmatpush1.msra.mxu0 0.0
    %2456 = vmatprep.subr.mxu0 0.0
    %2457 = vmatpush1.msra.mxu0 0.0
    %2458 = vmatprep.subr.mxu0 0.0
    %2459 = vmatpush1.msra.mxu0 0.0
    %2460 = vmatprep.subr.mxu0 0.0
    %2461 = vmatpush1.msra.mxu0 0.0
    %2462 = vmatprep.subr.mxu0 0.0
    %2463 = vmatpush1.msra.mxu0 0.0
    %2464 = vmatprep.subr.mxu0 0.0
    %2465 = vmatpush1.msra.mxu0 0.0
    %2466 = vmatprep.subr.mxu0 0.0
    %2467 = vmatpush1.msra.mxu0 0.0
    %2468 = vmatprep.subr.mxu0 0.0
    %2469 = vmatpush1.msra.mxu0 0.0
    %2470 = vmatprep.subr.mxu0 0.0
    %2471 = vmatpush1.msra.mxu0 0.0
    %2472 = vmatprep.subr.mxu0 0.0
    %2473 = vmatpush1.msra.mxu0 0.0
    %2474 = vmatprep.subr.mxu0 0.0
    %2475 = vmatpush1.msra.mxu0 0.0
    %2476 = vmatprep.subr.mxu0 0.0
    %2477 = vmatpush1.msra.mxu0 0.0
    %2478 = vmatprep.subr.mxu0 0.0
    %2479 = vmatpush1.msra.mxu0 0.0
    %2480 = vmatprep.subr.mxu0 0.0
    %2481 = vmatpush1.msra.mxu0 0.0
    %2482 = vmatprep.subr.mxu0 0.0
    %2483 = vmatpush1.msra.mxu0 0.0
    %2484 = vmatprep.subr.mxu0 0.0
    %2485 = vmatpush1.msra.mxu0 0.0
    %2486 = vmatprep.subr.mxu0 0.0
    %2487 = vmatpush1.msra.mxu0 0.0
    %2488 = vmatprep.subr.mxu0 0.0
    %2489 = vmatpush1.msra.mxu0 0.0
    %2490 = vmatprep.subr.mxu0 0.0
    %2491 = vmatpush1.msra.mxu0 0.0
    %2492 = vmatprep.subr.mxu0 0.0
    %2493 = vmatpush1.msra.mxu0 0.0
    %2494 = vmatprep.subr.mxu0 0.0
    %2495 = vmatpush1.msra.mxu0 0.0
    %2496 = vmatprep.subr.mxu0 0.0
    %2497 = vmatpush1.msra.mxu0 0.0
    %2498 = vmatprep.subr.mxu0 0.0
    %2499 = vmatpush1.msra.mxu0 0.0
    %2500 = vmatprep.mubr.f32.mxu0 0.0
    %2501 = vmatmul.mubr.f32.gmra.mrb[0].mxu0 %v2434
    %v2502 = vpop.f32.mrb[0].mxu0
    %v2503 = vadd.f32 %v108, %v2502
    %v2504 = vpop.f32.mrb[0].mxu0
    %2505 = vdwg.mxu0
    %v2506 = vadd.f32 %v1041, %v2503
    %v2507 = vxor.u32 %v2506, 2147483648
    %v2508 = vmul.f32 %v2507, 1.442695
    %v2509 = vpow.pop %v2508
    %v2510 = vadd.f32 %v2509, 1.0
    %v2511 = vrcp.pop %v2510
    %v2512 = vmul.f32 1.0, %v2511
    %2514 = vrot.lane.b32.xlu0 %v2503, 112
    %v2515 = vpop.permute.xlu0 %2514
    %v2517 = vmul.f32 %v2512, %v2515
    %2519 = vrot.lane.b32.xlu0 %v2517, 16
    %v2520 = vpop.permute.xlu0 %2519
    %v2522 = vadd.f32 %v1041, %v2520
    %v2523 = vtanh.pop %v2522
    %v2524 = vsub.f32 1.0, %v2512
    %2526 = vrot.lane.b32.xlu0 %v2523, 120
    %v2527 = vpop.permute.xlu0 %2526
    %v2529 = vmul.f32 %v2524, %v2527
    %v2530 = vmul.f32 %v2512, %v2319
    %v2531 = vadd.f32 %v2529, %v2530
    %vm2532 = vcmp.gt.s32.totalorder %v81, 5
    %v2533 = vsel %vm2532, 1, 0
    %2534 = vset.pattern.permute.xlu0 0
    %2535 = vperm.xlu0 %2534, %v2533
    %v2536 = vpop.permute.xlu0 %2535
    %vm2537 = vcmp.eq.s32.totalorder %v2536, 1
    %v2538 = vsel %vm2537, %v2531, %v2319
    %2540 = vrot.lane.b32.xlu0 %v2430, 96
    %v2541 = vpop.permute.xlu0 %2540
    %v2542 = vsel %vm225, %v2541, 0
    %2544 = vmatprep.subr.mxu0 0.0
    %2545 = vmatpush1.msra.mxu0 %v102
    %2546 = vmatprep.subr.mxu0 0.0
    %2547 = vmatpush1.msra.mxu0 0.0
    %2548 = vmatprep.subr.mxu0 0.0
    %2549 = vmatpush1.msra.mxu0 0.0
    %2550 = vmatprep.subr.mxu0 0.0
    %2551 = vmatpush1.msra.mxu0 0.0
    %2552 = vmatprep.subr.mxu0 0.0
    %2553 = vmatpush1.msra.mxu0 0.0
    %2554 = vmatprep.subr.mxu0 0.0
    %2555 = vmatpush1.msra.mxu0 0.0
    %2556 = vmatprep.subr.mxu0 0.0
    %2557 = vmatpush1.msra.mxu0 0.0
    %2558 = vmatprep.subr.mxu0 0.0
    %2559 = vmatpush1.msra.mxu0 0.0
    %2560 = vmatprep.subr.mxu0 0.0
    %2561 = vmatpush1.msra.mxu0 0.0
    %2562 = vmatprep.subr.mxu0 0.0
    %2563 = vmatpush1.msra.mxu0 0.0
    %2564 = vmatprep.subr.mxu0 0.0
    %2565 = vmatpush1.msra.mxu0 0.0
    %2566 = vmatprep.subr.mxu0 0.0
    %2567 = vmatpush1.msra.mxu0 0.0
    %2568 = vmatprep.subr.mxu0 0.0
    %2569 = vmatpush1.msra.mxu0 0.0
    %2570 = vmatprep.subr.mxu0 0.0
    %2571 = vmatpush1.msra.mxu0 0.0
    %2572 = vmatprep.subr.mxu0 0.0
    %2573 = vmatpush1.msra.mxu0 0.0
    %2574 = vmatprep.subr.mxu0 0.0
    %2575 = vmatpush1.msra.mxu0 0.0
    %2576 = vmatprep.subr.mxu0 0.0
    %2577 = vmatpush1.msra.mxu0 0.0
    %2578 = vmatprep.subr.mxu0 0.0
    %2579 = vmatpush1.msra.mxu0 0.0
    %2580 = vmatprep.subr.mxu0 0.0
    %2581 = vmatpush1.msra.mxu0 0.0
    %2582 = vmatprep.subr.mxu0 0.0
    %2583 = vmatpush1.msra.mxu0 0.0
    %2584 = vmatprep.subr.mxu0 0.0
    %2585 = vmatpush1.msra.mxu0 0.0
    %2586 = vmatprep.subr.mxu0 0.0
    %2587 = vmatpush1.msra.mxu0 0.0
    %2588 = vmatprep.subr.mxu0 0.0
    %2589 = vmatpush1.msra.mxu0 0.0
    %2590 = vmatprep.subr.mxu0 0.0
    %2591 = vmatpush1.msra.mxu0 0.0
    %2592 = vmatprep.subr.mxu0 0.0
    %2593 = vmatpush1.msra.mxu0 0.0
    %2594 = vmatprep.subr.mxu0 0.0
    %2595 = vmatpush1.msra.mxu0 0.0
    %2596 = vmatprep.subr.mxu0 0.0
    %2597 = vmatpush1.msra.mxu0 0.0
    %2598 = vmatprep.subr.mxu0 0.0
    %2599 = vmatpush1.msra.mxu0 0.0
    %2600 = vmatprep.subr.mxu0 0.0
    %2601 = vmatpush1.msra.mxu0 0.0
    %2602 = vmatprep.subr.mxu0 0.0
    %2603 = vmatpush1.msra.mxu0 0.0
    %2604 = vmatprep.subr.mxu0 0.0
    %2605 = vmatpush1.msra.mxu0 0.0
    %2606 = vmatprep.subr.mxu0 0.0
    %2607 = vmatpush1.msra.mxu0 0.0
    %2608 = vmatprep.mubr.f32.mxu0 0.0
    %2609 = vmatmul.mubr.f32.gmra.mrb[0].mxu0 %v2542
    %v2610 = vpop.f32.mrb[0].mxu0
    %v2611 = vadd.f32 %v116, %v2610
    %v2612 = vpop.f32.mrb[0].mxu0
    %2613 = vdwg.mxu0
    %2615 = vrot.lane.b32.xlu0 %v2611, 24
    %v2616 = vpop.permute.xlu0 %2615
    %v2618 = vadd.f32 %v594, %v2616
    %v2619 = vxor.u32 %v2618, 2147483648
    %v2620 = vmul.f32 %v2619, 1.442695
    %v2621 = vpow.pop %v2620
    %v2622 = vadd.f32 %v2621, 1.0
    %v2623 = vrcp.pop %v2622
    %v2624 = vmul.f32 1.0, %v2623
    %2625 = vrot.lane.b32.xlu0 %v2611, 8
    %v2626 = vpop.permute.xlu0 %2625
    %v2628 = vmul.f32 %v2624, %v2626
    %2630 = vrot.lane.b32.xlu0 %v2628, 16
    %v2631 = vpop.permute.xlu0 %2630
    %v2633 = vadd.f32 %v594, %v2631
    %v2634 = vtanh.pop %v2633
    %v2635 = vsub.f32 1.0, %v2624
    %2637 = vrot.lane.b32.xlu0 %v2634, 120
    %v2638 = vpop.permute.xlu0 %2637
    %v2640 = vmul.f32 %v2635, %v2638
    %v2641 = vmul.f32 %v2624, %v2430
    %v2642 = vadd.f32 %v2640, %v2641
    %vm2643 = vcmp.le.s32.totalorder %v1547, 5
    %v2644 = vsel %vm2643, 1, 0
    %2645 = vset.pattern.permute.xlu0 0
    %2646 = vperm.xlu0 %2645, %v2644
    %v2647 = vpop.permute.xlu0 %2646
    %vm2648 = vcmp.eq.s32.totalorder %v2647, 1
    %v2649 = vsel %vm2648, %v2642, %v2430
    %2651 = vrot.lane.b32.xlu0 %v2538, 120
    %v2652 = vpop.permute.xlu0 %2651
    %v2653 = vsel %vm225, %v2652, 0
    %2655 = vmatprep.subr.mxu0 0.0
    %2656 = vmatpush1.msra.mxu0 %v100
    %2657 = vmatprep.subr.mxu0 0.0
    %2658 = vmatpush1.msra.mxu0 0.0
    %2659 = vmatprep.subr.mxu0 0.0
    %2660 = vmatpush1.msra.mxu0 0.0
    %2661 = vmatprep.subr.mxu0 0.0
    %2662 = vmatpush1.msra.mxu0 0.0
    %2663 = vmatprep.subr.mxu0 0.0
    %2664 = vmatpush1.msra.mxu0 0.0
    %2665 = vmatprep.subr.mxu0 0.0
    %2666 = vmatpush1.msra.mxu0 0.0
    %2667 = vmatprep.subr.mxu0 0.0
    %2668 = vmatpush1.msra.mxu0 0.0
    %2669 = vmatprep.subr.mxu0 0.0
    %2670 = vmatpush1.msra.mxu0 0.0
    %2671 = vmatprep.subr.mxu0 0.0
    %2672 = vmatpush1.msra.mxu0 0.0
    %2673 = vmatprep.subr.mxu0 0.0
    %2674 = vmatpush1.msra.mxu0 0.0
    %2675 = vmatprep.subr.mxu0 0.0
    %2676 = vmatpush1.msra.mxu0 0.0
    %2677 = vmatprep.subr.mxu0 0.0
    %2678 = vmatpush1.msra.mxu0 0.0
    %2679 = vmatprep.subr.mxu0 0.0
    %2680 = vmatpush1.msra.mxu0 0.0
    %2681 = vmatprep.subr.mxu0 0.0
    %2682 = vmatpush1.msra.mxu0 0.0
    %2683 = vmatprep.subr.mxu0 0.0
    %2684 = vmatpush1.msra.mxu0 0.0
    %2685 = vmatprep.subr.mxu0 0.0
    %2686 = vmatpush1.msra.mxu0 0.0
    %2687 = vmatprep.subr.mxu0 0.0
    %2688 = vmatpush1.msra.mxu0 0.0
    %2689 = vmatprep.subr.mxu0 0.0
    %2690 = vmatpush1.msra.mxu0 0.0
    %2691 = vmatprep.subr.mxu0 0.0
    %2692 = vmatpush1.msra.mxu0 0.0
    %2693 = vmatprep.subr.mxu0 0.0
    %2694 = vmatpush1.msra.mxu0 0.0
    %2695 = vmatprep.subr.mxu0 0.0
    %2696 = vmatpush1.msra.mxu0 0.0
    %2697 = vmatprep.subr.mxu0 0.0
    %2698 = vmatpush1.msra.mxu0 0.0
    %2699 = vmatprep.subr.mxu0 0.0
    %2700 = vmatpush1.msra.mxu0 0.0
    %2701 = vmatprep.subr.mxu0 0.0
    %2702 = vmatpush1.msra.mxu0 0.0
    %2703 = vmatprep.subr.mxu0 0.0
    %2704 = vmatpush1.msra.mxu0 0.0
    %2705 = vmatprep.subr.mxu0 0.0
    %2706 = vmatpush1.msra.mxu0 0.0
    %2707 = vmatprep.subr.mxu0 0.0
    %2708 = vmatpush1.msra.mxu0 0.0
    %2709 = vmatprep.subr.mxu0 0.0
    %2710 = vmatpush1.msra.mxu0 0.0
    %2711 = vmatprep.subr.mxu0 0.0
    %2712 = vmatpush1.msra.mxu0 0.0
    %2713 = vmatprep.subr.mxu0 0.0
    %2714 = vmatpush1.msra.mxu0 0.0
    %2715 = vmatprep.subr.mxu0 0.0
    %2716 = vmatpush1.msra.mxu0 0.0
    %2717 = vmatprep.subr.mxu0 0.0
    %2718 = vmatpush1.msra.mxu0 0.0
    %2719 = vmatprep.mubr.f32.mxu0 0.0
    %2720 = vmatmul.mubr.f32.gmra.mrb[0].mxu0 %v2653
    %v2721 = vpop.f32.mrb[0].mxu0
    %v2722 = vadd.f32 %v108, %v2721
    %v2723 = vpop.f32.mrb[0].mxu0
    %2724 = vdwg.mxu0
    %v2725 = vadd.f32 %v1190, %v2722
    %v2726 = vxor.u32 %v2725, 2147483648
    %v2727 = vmul.f32 %v2726, 1.442695
    %v2728 = vpow.pop %v2727
    %v2729 = vadd.f32 %v2728, 1.0
    %v2730 = vrcp.pop %v2729
    %v2731 = vmul.f32 1.0, %v2730
    %2733 = vrot.lane.b32.xlu0 %v2722, 112
    %v2734 = vpop.permute.xlu0 %2733
    %v2736 = vmul.f32 %v2731, %v2734
    %2738 = vrot.lane.b32.xlu0 %v2736, 16
    %v2739 = vpop.permute.xlu0 %2738
    %v2741 = vadd.f32 %v1190, %v2739
    %v2742 = vtanh.pop %v2741
    %v2743 = vsub.f32 1.0, %v2731
    %2745 = vrot.lane.b32.xlu0 %v2742, 120
    %v2746 = vpop.permute.xlu0 %2745
    %v2748 = vmul.f32 %v2743, %v2746
    %v2749 = vmul.f32 %v2731, %v2538
    %v2750 = vadd.f32 %v2748, %v2749
    %vm2751 = vcmp.gt.s32.totalorder %v81, 6
    %v2752 = vsel %vm2751, 1, 0
    %2753 = vset.pattern.permute.xlu0 0
    %2754 = vperm.xlu0 %2753, %v2752
    %v2755 = vpop.permute.xlu0 %2754
    %vm2756 = vcmp.eq.s32.totalorder %v2755, 1
    %v2757 = vsel %vm2756, %v2750, %v2538
    %2759 = vrot.lane.b32.xlu0 %v2649, 96
    %v2760 = vpop.permute.xlu0 %2759
    %v2761 = vsel %vm225, %v2760, 0
    %2763 = vmatprep.subr.mxu0 0.0
    %2764 = vmatpush1.msra.mxu0 %v102
    %2765 = vmatprep.subr.mxu0 0.0
    %2766 = vmatpush1.msra.mxu0 0.0
    %2767 = vmatprep.subr.mxu0 0.0
    %2768 = vmatpush1.msra.mxu0 0.0
    %2769 = vmatprep.subr.mxu0 0.0
    %2770 = vmatpush1.msra.mxu0 0.0
    %2771 = vmatprep.subr.mxu0 0.0
    %2772 = vmatpush1.msra.mxu0 0.0
    %2773 = vmatprep.subr.mxu0 0.0
    %2774 = vmatpush1.msra.mxu0 0.0
    %2775 = vmatprep.subr.mxu0 0.0
    %2776 = vmatpush1.msra.mxu0 0.0
    %2777 = vmatprep.subr.mxu0 0.0
    %2778 = vmatpush1.msra.mxu0 0.0
    %2779 = vmatprep.subr.mxu0 0.0
    %2780 = vmatpush1.msra.mxu0 0.0
    %2781 = vmatprep.subr.mxu0 0.0
    %2782 = vmatpush1.msra.mxu0 0.0
    %2783 = vmatprep.subr.mxu0 0.0
    %2784 = vmatpush1.msra.mxu0 0.0
    %2785 = vmatprep.subr.mxu0 0.0
    %2786 = vmatpush1.msra.mxu0 0.0
    %2787 = vmatprep.subr.mxu0 0.0
    %2788 = vmatpush1.msra.mxu0 0.0
    %2789 = vmatprep.subr.mxu0 0.0
    %2790 = vmatpush1.msra.mxu0 0.0
    %2791 = vmatprep.subr.mxu0 0.0
    %2792 = vmatpush1.msra.mxu0 0.0
    %2793 = vmatprep.subr.mxu0 0.0
    %2794 = vmatpush1.msra.mxu0 0.0
    %2795 = vmatprep.subr.mxu0 0.0
    %2796 = vmatpush1.msra.mxu0 0.0
    %2797 = vmatprep.subr.mxu0 0.0
    %2798 = vmatpush1.msra.mxu0 0.0
    %2799 = vmatprep.subr.mxu0 0.0
    %2800 = vmatpush1.msra.mxu0 0.0
    %2801 = vmatprep.subr.mxu0 0.0
    %2802 = vmatpush1.msra.mxu0 0.0
    %2803 = vmatprep.subr.mxu0 0.0
    %2804 = vmatpush1.msra.mxu0 0.0
    %2805 = vmatprep.subr.mxu0 0.0
    %2806 = vmatpush1.msra.mxu0 0.0
    %2807 = vmatprep.subr.mxu0 0.0
    %2808 = vmatpush1.msra.mxu0 0.0
    %2809 = vmatprep.subr.mxu0 0.0
    %2810 = vmatpush1.msra.mxu0 0.0
    %2811 = vmatprep.subr.mxu0 0.0
    %2812 = vmatpush1.msra.mxu0 0.0
    %2813 = vmatprep.subr.mxu0 0.0
    %2814 = vmatpush1.msra.mxu0 0.0
    %2815 = vmatprep.subr.mxu0 0.0
    %2816 = vmatpush1.msra.mxu0 0.0
    %2817 = vmatprep.subr.mxu0 0.0
    %2818 = vmatpush1.msra.mxu0 0.0
    %2819 = vmatprep.subr.mxu0 0.0
    %2820 = vmatpush1.msra.mxu0 0.0
    %2821 = vmatprep.subr.mxu0 0.0
    %2822 = vmatpush1.msra.mxu0 0.0
    %2823 = vmatprep.subr.mxu0 0.0
    %2824 = vmatpush1.msra.mxu0 0.0
    %2825 = vmatprep.subr.mxu0 0.0
    %2826 = vmatpush1.msra.mxu0 0.0
    %2827 = vmatprep.mubr.f32.mxu0 0.0
    %2828 = vmatmul.mubr.f32.gmra.mrb[0].mxu0 %v2761
    %v2829 = vpop.f32.mrb[0].mxu0
    %v2830 = vadd.f32 %v116, %v2829
    %v2831 = vpop.f32.mrb[0].mxu0
    %2832 = vdwg.mxu0
    %2834 = vrot.lane.b32.xlu0 %v2830, 24
    %v2835 = vpop.permute.xlu0 %2834
    %v2837 = vadd.f32 %v445, %v2835
    %v2838 = vxor.u32 %v2837, 2147483648
    %v2839 = vmul.f32 %v2838, 1.442695
    %v2840 = vpow.pop %v2839
    %v2841 = vadd.f32 %v2840, 1.0
    %v2842 = vrcp.pop %v2841
    %v2843 = vmul.f32 1.0, %v2842
    %2844 = vrot.lane.b32.xlu0 %v2830, 8
    %v2845 = vpop.permute.xlu0 %2844
    %v2847 = vmul.f32 %v2843, %v2845
    %2849 = vrot.lane.b32.xlu0 %v2847, 16
    %v2850 = vpop.permute.xlu0 %2849
    %v2852 = vadd.f32 %v445, %v2850
    %v2853 = vtanh.pop %v2852
    %v2854 = vsub.f32 1.0, %v2843
    %2856 = vrot.lane.b32.xlu0 %v2853, 120
    %v2857 = vpop.permute.xlu0 %2856
    %v2859 = vmul.f32 %v2854, %v2857
    %v2860 = vmul.f32 %v2843, %v2649
    %v2861 = vadd.f32 %v2859, %v2860
    %vm2862 = vcmp.le.s32.totalorder %v1547, 6
    %v2863 = vsel %vm2862, 1, 0
    %2864 = vset.pattern.permute.xlu0 0
    %2865 = vperm.xlu0 %2864, %v2863
    %v2866 = vpop.permute.xlu0 %2865
    %vm2867 = vcmp.eq.s32.totalorder %v2866, 1
    %v2868 = vsel %vm2867, %v2861, %v2649
    %2870 = vrot.lane.b32.xlu0 %v2757, 120
    %v2871 = vpop.permute.xlu0 %2870
    %v2872 = vsel %vm225, %v2871, 0
    %2874 = vmatprep.subr.mxu0 0.0
    %2875 = vmatpush1.msra.mxu0 %v100
    %2876 = vmatprep.subr.mxu0 0.0
    %2877 = vmatpush1.msra.mxu0 0.0
    %2878 = vmatprep.subr.mxu0 0.0
    %2879 = vmatpush1.msra.mxu0 0.0
    %2880 = vmatprep.subr.mxu0 0.0
    %2881 = vmatpush1.msra.mxu0 0.0
    %2882 = vmatprep.subr.mxu0 0.0
    %2883 = vmatpush1.msra.mxu0 0.0
    %2884 = vmatprep.subr.mxu0 0.0
    %2885 = vmatpush1.msra.mxu0 0.0
    %2886 = vmatprep.subr.mxu0 0.0
    %2887 = vmatpush1.msra.mxu0 0.0
    %2888 = vmatprep.subr.mxu0 0.0
    %2889 = vmatpush1.msra.mxu0 0.0
    %2890 = vmatprep.subr.mxu0 0.0
    %2891 = vmatpush1.msra.mxu0 0.0
    %2892 = vmatprep.subr.mxu0 0.0
    %2893 = vmatpush1.msra.mxu0 0.0
    %2894 = vmatprep.subr.mxu0 0.0
    %2895 = vmatpush1.msra.mxu0 0.0
    %2896 = vmatprep.subr.mxu0 0.0
    %2897 = vmatpush1.msra.mxu0 0.0
    %2898 = vmatprep.subr.mxu0 0.0
    %2899 = vmatpush1.msra.mxu0 0.0
    %2900 = vmatprep.subr.mxu0 0.0
    %2901 = vmatpush1.msra.mxu0 0.0
    %2902 = vmatprep.subr.mxu0 0.0
    %2903 = vmatpush1.msra.mxu0 0.0
    %2904 = vmatprep.subr.mxu0 0.0
    %2905 = vmatpush1.msra.mxu0 0.0
    %2906 = vmatprep.subr.mxu0 0.0
    %2907 = vmatpush1.msra.mxu0 0.0
    %2908 = vmatprep.subr.mxu0 0.0
    %2909 = vmatpush1.msra.mxu0 0.0
    %2910 = vmatprep.subr.mxu0 0.0
    %2911 = vmatpush1.msra.mxu0 0.0
    %2912 = vmatprep.subr.mxu0 0.0
    %2913 = vmatpush1.msra.mxu0 0.0
    %2914 = vmatprep.subr.mxu0 0.0
    %2915 = vmatpush1.msra.mxu0 0.0
    %2916 = vmatprep.subr.mxu0 0.0
    %2917 = vmatpush1.msra.mxu0 0.0
    %2918 = vmatprep.subr.mxu0 0.0
    %2919 = vmatpush1.msra.mxu0 0.0
    %2920 = vmatprep.subr.mxu0 0.0
    %2921 = vmatpush1.msra.mxu0 0.0
    %2922 = vmatprep.subr.mxu0 0.0
    %2923 = vmatpush1.msra.mxu0 0.0
    %2924 = vmatprep.subr.mxu0 0.0
    %2925 = vmatpush1.msra.mxu0 0.0
    %2926 = vmatprep.subr.mxu0 0.0
    %2927 = vmatpush1.msra.mxu0 0.0
    %2928 = vmatprep.subr.mxu0 0.0
    %2929 = vmatpush1.msra.mxu0 0.0
    %2930 = vmatprep.subr.mxu0 0.0
    %2931 = vmatpush1.msra.mxu0 0.0
    %2932 = vmatprep.subr.mxu0 0.0
    %2933 = vmatpush1.msra.mxu0 0.0
    %2934 = vmatprep.subr.mxu0 0.0
    %2935 = vmatpush1.msra.mxu0 0.0
    %2936 = vmatprep.subr.mxu0 0.0
    %2937 = vmatpush1.msra.mxu0 0.0
    %2938 = vmatprep.mubr.f32.mxu0 0.0
    %2939 = vmatmul.mubr.f32.gmra.mrb[0].mxu0 %v2872
    %v2940 = vpop.f32.mrb[0].mxu0
    %v2941 = vadd.f32 %v108, %v2940
    %v2942 = vpop.f32.mrb[0].mxu0
    %2943 = vdwg.mxu0
    %v2944 = vadd.f32 %v1339, %v2941
    %v2945 = vxor.u32 %v2944, 2147483648
    %v2946 = vmul.f32 %v2945, 1.442695
    %v2947 = vpow.pop %v2946
    %v2948 = vadd.f32 %v2947, 1.0
    %v2949 = vrcp.pop %v2948
    %v2950 = vmul.f32 1.0, %v2949
    %2952 = vrot.lane.b32.xlu0 %v2941, 112
    %v2953 = vpop.permute.xlu0 %2952
    %v2955 = vmul.f32 %v2950, %v2953
    %2957 = vrot.lane.b32.xlu0 %v2955, 16
    %v2958 = vpop.permute.xlu0 %2957
    %v2960 = vadd.f32 %v1339, %v2958
    %v2961 = vtanh.pop %v2960
    %v2962 = vsub.f32 1.0, %v2950
    %2964 = vrot.lane.b32.xlu0 %v2961, 120
    %v2965 = vpop.permute.xlu0 %2964
    %v2967 = vmul.f32 %v2962, %v2965
    %v2968 = vmul.f32 %v2950, %v2757
    %v2969 = vadd.f32 %v2967, %v2968
    %vm2970 = vcmp.gt.s32.totalorder %v81, 7
    %v2971 = vsel %vm2970, 1, 0
    %2972 = vset.pattern.permute.xlu0 0
    %2973 = vperm.xlu0 %2972, %v2971
    %v2974 = vpop.permute.xlu0 %2973
    %vm2975 = vcmp.eq.s32.totalorder %v2974, 1
    %v2976 = vsel %vm2975, %v2969, %v2757
    %2978 = vrot.lane.b32.xlu0 %v2868, 96
    %v2979 = vpop.permute.xlu0 %2978
    %v2980 = vsel %vm225, %v2979, 0
    %2982 = vmatprep.subr.mxu0 0.0
    %2983 = vmatpush1.msra.mxu0 %v102
    %2984 = vmatprep.subr.mxu0 0.0
    %2985 = vmatpush1.msra.mxu0 0.0
    %2986 = vmatprep.subr.mxu0 0.0
    %2987 = vmatpush1.msra.mxu0 0.0
    %2988 = vmatprep.subr.mxu0 0.0
    %2989 = vmatpush1.msra.mxu0 0.0
    %2990 = vmatprep.subr.mxu0 0.0
    %2991 = vmatpush1.msra.mxu0 0.0
    %2992 = vmatprep.subr.mxu0 0.0
    %2993 = vmatpush1.msra.mxu0 0.0
    %2994 = vmatprep.subr.mxu0 0.0
    %2995 = vmatpush1.msra.mxu0 0.0
    %2996 = vmatprep.subr.mxu0 0.0
    %2997 = vmatpush1.msra.mxu0 0.0
    %2998 = vmatprep.subr.mxu0 0.0
    %2999 = vmatpush1.msra.mxu0 0.0
    %3000 = vmatprep.subr.mxu0 0.0
    %3001 = vmatpush1.msra.mxu0 0.0
    %3002 = vmatprep.subr.mxu0 0.0
    %3003 = vmatpush1.msra.mxu0 0.0
    %3004 = vmatprep.subr.mxu0 0.0
    %3005 = vmatpush1.msra.mxu0 0.0
    %3006 = vmatprep.subr.mxu0 0.0
    %3007 = vmatpush1.msra.mxu0 0.0
    %3008 = vmatprep.subr.mxu0 0.0
    %3009 = vmatpush1.msra.mxu0 0.0
    %3010 = vmatprep.subr.mxu0 0.0
    %3011 = vmatpush1.msra.mxu0 0.0
    %3012 = vmatprep.subr.mxu0 0.0
    %3013 = vmatpush1.msra.mxu0 0.0
    %3014 = vmatprep.subr.mxu0 0.0
    %3015 = vmatpush1.msra.mxu0 0.0
    %3016 = vmatprep.subr.mxu0 0.0
    %3017 = vmatpush1.msra.mxu0 0.0
    %3018 = vmatprep.subr.mxu0 0.0
    %3019 = vmatpush1.msra.mxu0 0.0
    %3020 = vmatprep.subr.mxu0 0.0
    %3021 = vmatpush1.msra.mxu0 0.0
    %3022 = vmatprep.subr.mxu0 0.0
    %3023 = vmatpush1.msra.mxu0 0.0
    %3024 = vmatprep.subr.mxu0 0.0
    %3025 = vmatpush1.msra.mxu0 0.0
    %3026 = vmatprep.subr.mxu0 0.0
    %3027 = vmatpush1.msra.mxu0 0.0
    %3028 = vmatprep.subr.mxu0 0.0
    %3029 = vmatpush1.msra.mxu0 0.0
    %3030 = vmatprep.subr.mxu0 0.0
    %3031 = vmatpush1.msra.mxu0 0.0
    %3032 = vmatprep.subr.mxu0 0.0
    %3033 = vmatpush1.msra.mxu0 0.0
    %3034 = vmatprep.subr.mxu0 0.0
    %3035 = vmatpush1.msra.mxu0 0.0
    %3036 = vmatprep.subr.mxu0 0.0
    %3037 = vmatpush1.msra.mxu0 0.0
    %3038 = vmatprep.subr.mxu0 0.0
    %3039 = vmatpush1.msra.mxu0 0.0
    %3040 = vmatprep.subr.mxu0 0.0
    %3041 = vmatpush1.msra.mxu0 0.0
    %3042 = vmatprep.subr.mxu0 0.0
    %3043 = vmatpush1.msra.mxu0 0.0
    %3044 = vmatprep.subr.mxu0 0.0
    %3045 = vmatpush1.msra.mxu0 0.0
    %3046 = vmatprep.mubr.f32.mxu0 0.0
    %3047 = vmatmul.mubr.f32.gmra.mrb[0].mxu0 %v2980
    %v3048 = vpop.f32.mrb[0].mxu0
    %v3049 = vadd.f32 %v116, %v3048
    %v3050 = vpop.f32.mrb[0].mxu0
    %3051 = vdwg.mxu0
    %3053 = vrot.lane.b32.xlu0 %v3049, 24
    %v3054 = vpop.permute.xlu0 %3053
    %v3056 = vadd.f32 %v296, %v3054
    %v3057 = vxor.u32 %v3056, 2147483648
    %v3058 = vmul.f32 %v3057, 1.442695
    %v3059 = vpow.pop %v3058
    %v3060 = vadd.f32 %v3059, 1.0
    %v3061 = vrcp.pop %v3060
    %v3062 = vmul.f32 1.0, %v3061
    %3063 = vrot.lane.b32.xlu0 %v3049, 8
    %v3064 = vpop.permute.xlu0 %3063
    %v3066 = vmul.f32 %v3062, %v3064
    %3068 = vrot.lane.b32.xlu0 %v3066, 16
    %v3069 = vpop.permute.xlu0 %3068
    %v3071 = vadd.f32 %v296, %v3069
    %v3072 = vtanh.pop %v3071
    %v3073 = vsub.f32 1.0, %v3062
    %3075 = vrot.lane.b32.xlu0 %v3072, 120
    %v3076 = vpop.permute.xlu0 %3075
    %v3078 = vmul.f32 %v3073, %v3076
    %v3079 = vmul.f32 %v3062, %v2868
    %v3080 = vadd.f32 %v3078, %v3079
    %vm3081 = vcmp.le.s32.totalorder %v1547, 7
    %v3082 = vsel %vm3081, 1, 0
    %3083 = vset.pattern.permute.xlu0 0
    %3084 = vperm.xlu0 %3083, %v3082
    %v3085 = vpop.permute.xlu0 %3084
    %vm3086 = vcmp.eq.s32.totalorder %v3085, 1
    %v3087 = vsel %vm3086, %v3080, %v2868
    %3089 = vrot.lane.b32.xlu0 %v3087, 96
    %v3090 = vpop.permute.xlu0 %3089
    %v3091 = vsel %vm225, %v3090, 0
    %3093 = vmatprep.subr.mxu0 0.0
    %3094 = vmatpush1.msra.mxu0 %v119
    %3095 = vmatprep.subr.mxu0 0.0
    %3096 = vmatpush1.msra.mxu0 0.0
    %3097 = vmatprep.subr.mxu0 0.0
    %3098 = vmatpush1.msra.mxu0 0.0
    %3099 = vmatprep.subr.mxu0 0.0
    %3100 = vmatpush1.msra.mxu0 0.0
    %3101 = vmatprep.subr.mxu0 0.0
    %3102 = vmatpush1.msra.mxu0 0.0
    %3103 = vmatprep.subr.mxu0 0.0
    %3104 = vmatpush1.msra.mxu0 0.0
    %3105 = vmatprep.subr.mxu0 0.0
    %3106 = vmatpush1.msra.mxu0 0.0
    %3107 = vmatprep.subr.mxu0 0.0
    %3108 = vmatpush1.msra.mxu0 0.0
    %3109 = vmatprep.subr.mxu0 0.0
    %3110 = vmatpush1.msra.mxu0 0.0
    %3111 = vmatprep.subr.mxu0 0.0
    %3112 = vmatpush1.msra.mxu0 0.0
    %3113 = vmatprep.subr.mxu0 0.0
    %3114 = vmatpush1.msra.mxu0 0.0
    %3115 = vmatprep.subr.mxu0 0.0
    %3116 = vmatpush1.msra.mxu0 0.0
    %3117 = vmatprep.subr.mxu0 0.0
    %3118 = vmatpush1.msra.mxu0 0.0
    %3119 = vmatprep.subr.mxu0 0.0
    %3120 = vmatpush1.msra.mxu0 0.0
    %3121 = vmatprep.subr.mxu0 0.0
    %3122 = vmatpush1.msra.mxu0 0.0
    %3123 = vmatprep.subr.mxu0 0.0
    %3124 = vmatpush1.msra.mxu0 0.0
    %3125 = vmatprep.subr.mxu0 0.0
    %3126 = vmatpush1.msra.mxu0 0.0
    %3127 = vmatprep.subr.mxu0 0.0
    %3128 = vmatpush1.msra.mxu0 0.0
    %3129 = vmatprep.subr.mxu0 0.0
    %3130 = vmatpush1.msra.mxu0 0.0
    %3131 = vmatprep.subr.mxu0 0.0
    %3132 = vmatpush1.msra.mxu0 0.0
    %3133 = vmatprep.subr.mxu0 0.0
    %3134 = vmatpush1.msra.mxu0 0.0
    %3135 = vmatprep.subr.mxu0 0.0
    %3136 = vmatpush1.msra.mxu0 0.0
    %3137 = vmatprep.subr.mxu0 0.0
    %3138 = vmatpush1.msra.mxu0 0.0
    %3139 = vmatprep.subr.mxu0 0.0
    %3140 = vmatpush1.msra.mxu0 0.0
    %3141 = vmatprep.subr.mxu0 0.0
    %3142 = vmatpush1.msra.mxu0 0.0
    %3143 = vmatprep.subr.mxu0 0.0
    %3144 = vmatpush1.msra.mxu0 0.0
    %3145 = vmatprep.subr.mxu0 0.0
    %3146 = vmatpush1.msra.mxu0 0.0
    %3147 = vmatprep.subr.mxu0 0.0
    %3148 = vmatpush1.msra.mxu0 0.0
    %3149 = vmatprep.subr.mxu0 0.0
    %3150 = vmatpush1.msra.mxu0 0.0
    %3151 = vmatprep.subr.mxu0 0.0
    %3152 = vmatpush1.msra.mxu0 0.0
    %3153 = vmatprep.subr.mxu0 0.0
    %3154 = vmatpush1.msra.mxu0 0.0
    %3155 = vmatprep.subr.mxu0 0.0
    %3156 = vmatpush1.msra.mxu0 0.0
    %3157 = vmatprep.mubr.f32.mxu0 0.0
    %3158 = vmatmul.mubr.f32.gmra.mrb[0].mxu0 %v3091
    %v3159 = vpop.f32.mrb[0].mxu0
    %v3160 = vadd.f32 0.0, %v3159
    %v3161 = vpop.f32.mrb[0].mxu0
    %3162 = vdwg.mxu0
    %3163 = vmatprep.subr.mxu0 0.0
    %3164 = vmatpush1.msra.mxu0 %v118
    %3165 = vmatprep.subr.mxu0 0.0
    %3166 = vmatpush1.msra.mxu0 0.0
    %3167 = vmatprep.subr.mxu0 0.0
    %3168 = vmatpush1.msra.mxu0 0.0
    %3169 = vmatprep.subr.mxu0 0.0
    %3170 = vmatpush1.msra.mxu0 0.0
    %3171 = vmatprep.subr.mxu0 0.0
    %3172 = vmatpush1.msra.mxu0 0.0
    %3173 = vmatprep.subr.mxu0 0.0
    %3174 = vmatpush1.msra.mxu0 0.0
    %3175 = vmatprep.subr.mxu0 0.0
    %3176 = vmatpush1.msra.mxu0 0.0
    %3177 = vmatprep.subr.mxu0 0.0
    %3178 = vmatpush1.msra.mxu0 0.0
    %3179 = vmatprep.subr.mxu0 0.0
    %3180 = vmatpush1.msra.mxu0 0.0
    %3181 = vmatprep.subr.mxu0 0.0
    %3182 = vmatpush1.msra.mxu0 0.0
    %3183 = vmatprep.subr.mxu0 0.0
    %3184 = vmatpush1.msra.mxu0 0.0
    %3185 = vmatprep.subr.mxu0 0.0
    %3186 = vmatpush1.msra.mxu0 0.0
    %3187 = vmatprep.subr.mxu0 0.0
    %3188 = vmatpush1.msra.mxu0 0.0
    %3189 = vmatprep.subr.mxu0 0.0
    %3190 = vmatpush1.msra.mxu0 0.0
    %3191 = vmatprep.subr.mxu0 0.0
    %3192 = vmatpush1.msra.mxu0 0.0
    %3193 = vmatprep.subr.mxu0 0.0
    %3194 = vmatpush1.msra.mxu0 0.0
    %3195 = vmatprep.subr.mxu0 0.0
    %3196 = vmatpush1.msra.mxu0 0.0
    %3197 = vmatprep.subr.mxu0 0.0
    %3198 = vmatpush1.msra.mxu0 0.0
    %3199 = vmatprep.subr.mxu0 0.0
    %3200 = vmatpush1.msra.mxu0 0.0
    %3201 = vmatprep.subr.mxu0 0.0
    %3202 = vmatpush1.msra.mxu0 0.0
    %3203 = vmatprep.subr.mxu0 0.0
    %3204 = vmatpush1.msra.mxu0 0.0
    %3205 = vmatprep.subr.mxu0 0.0
    %3206 = vmatpush1.msra.mxu0 0.0
    %3207 = vmatprep.subr.mxu0 0.0
    %3208 = vmatpush1.msra.mxu0 0.0
    %3209 = vmatprep.subr.mxu0 0.0
    %3210 = vmatpush1.msra.mxu0 0.0
    %3211 = vmatprep.subr.mxu0 0.0
    %3212 = vmatpush1.msra.mxu0 0.0
    %3213 = vmatprep.subr.mxu0 0.0
    %3214 = vmatpush1.msra.mxu0 0.0
    %3215 = vmatprep.subr.mxu0 0.0
    %3216 = vmatpush1.msra.mxu0 0.0
    %3217 = vmatprep.subr.mxu0 0.0
    %3218 = vmatpush1.msra.mxu0 0.0
    %3219 = vmatprep.subr.mxu0 0.0
    %3220 = vmatpush1.msra.mxu0 0.0
    %3221 = vmatprep.subr.mxu0 0.0
    %3222 = vmatpush1.msra.mxu0 0.0
    %3223 = vmatprep.subr.mxu0 0.0
    %3224 = vmatpush1.msra.mxu0 0.0
    %3225 = vmatprep.subr.mxu0 0.0
    %3226 = vmatpush1.msra.mxu0 0.0
    %3227 = vmatprep.mubr.f32.mxu0 0.0
    %3228 = vmatmul.mubr.f32.gmra.mrb[0].mxu0 %v1558
    %v3229 = vpop.f32.mrb[0].mxu0
    %v3230 = vadd.f32 %v3160, %v3229
    %v3231 = vpop.f32.mrb[0].mxu0
    %3232 = vdwg.mxu0
    %v3233 = vadd.f32 %v3230, %v125
    %3234 = vmatprep.subr.mxu0 0.0
    %3235 = vmatpush1.msra.mxu0 %v119
    %3236 = vmatprep.subr.mxu0 0.0
    %3237 = vmatpush1.msra.mxu0 0.0
    %3238 = vmatprep.subr.mxu0 0.0
    %3239 = vmatpush1.msra.mxu0 0.0
    %3240 = vmatprep.subr.mxu0 0.0
    %3241 = vmatpush1.msra.mxu0 0.0
    %3242 = vmatprep.subr.mxu0 0.0
    %3243 = vmatpush1.msra.mxu0 0.0
    %3244 = vmatprep.subr.mxu0 0.0
    %3245 = vmatpush1.msra.mxu0 0.0
    %3246 = vmatprep.subr.mxu0 0.0
    %3247 = vmatpush1.msra.mxu0 0.0
    %3248 = vmatprep.subr.mxu0 0.0
    %3249 = vmatpush1.msra.mxu0 0.0
    %3250 = vmatprep.subr.mxu0 0.0
    %3251 = vmatpush1.msra.mxu0 0.0
    %3252 = vmatprep.subr.mxu0 0.0
    %3253 = vmatpush1.msra.mxu0 0.0
    %3254 = vmatprep.subr.mxu0 0.0
    %3255 = vmatpush1.msra.mxu0 0.0
    %3256 = vmatprep.subr.mxu0 0.0
    %3257 = vmatpush1.msra.mxu0 0.0
    %3258 = vmatprep.subr.mxu0 0.0
    %3259 = vmatpush1.msra.mxu0 0.0
    %3260 = vmatprep.subr.mxu0 0.0
    %3261 = vmatpush1.msra.mxu0 0.0
    %3262 = vmatprep.subr.mxu0 0.0
    %3263 = vmatpush1.msra.mxu0 0.0
    %3264 = vmatprep.subr.mxu0 0.0
    %3265 = vmatpush1.msra.mxu0 0.0
    %3266 = vmatprep.subr.mxu0 0.0
    %3267 = vmatpush1.msra.mxu0 0.0
    %3268 = vmatprep.subr.mxu0 0.0
    %3269 = vmatpush1.msra.mxu0 0.0
    %3270 = vmatprep.subr.mxu0 0.0
    %3271 = vmatpush1.msra.mxu0 0.0
    %3272 = vmatprep.subr.mxu0 0.0
    %3273 = vmatpush1.msra.mxu0 0.0
    %3274 = vmatprep.subr.mxu0 0.0
    %3275 = vmatpush1.msra.mxu0 0.0
    %3276 = vmatprep.subr.mxu0 0.0
    %3277 = vmatpush1.msra.mxu0 0.0
    %3278 = vmatprep.subr.mxu0 0.0
    %3279 = vmatpush1.msra.mxu0 0.0
    %3280 = vmatprep.subr.mxu0 0.0
    %3281 = vmatpush1.msra.mxu0 0.0
    %3282 = vmatprep.subr.mxu0 0.0
    %3283 = vmatpush1.msra.mxu0 0.0
    %3284 = vmatprep.subr.mxu0 0.0
    %3285 = vmatpush1.msra.mxu0 0.0
    %3286 = vmatprep.subr.mxu0 0.0
    %3287 = vmatpush1.msra.mxu0 0.0
    %3288 = vmatprep.subr.mxu0 0.0
    %3289 = vmatpush1.msra.mxu0 0.0
    %3290 = vmatprep.subr.mxu0 0.0
    %3291 = vmatpush1.msra.mxu0 0.0
    %3292 = vmatprep.subr.mxu0 0.0
    %3293 = vmatpush1.msra.mxu0 0.0
    %3294 = vmatprep.subr.mxu0 0.0
    %3295 = vmatpush1.msra.mxu0 0.0
    %3296 = vmatprep.subr.mxu0 0.0
    %3297 = vmatpush1.msra.mxu0 0.0
    %3298 = vmatprep.mubr.f32.mxu0 0.0
    %3299 = vmatmul.mubr.f32.gmra.mrb[0].mxu0 %v2980
    %v3300 = vpop.f32.mrb[0].mxu0
    %v3301 = vadd.f32 0.0, %v3300
    %v3302 = vpop.f32.mrb[0].mxu0
    %3303 = vdwg.mxu0
    %3304 = vmatprep.subr.mxu0 0.0
    %3305 = vmatpush1.msra.mxu0 %v118
    %3306 = vmatprep.subr.mxu0 0.0
    %3307 = vmatpush1.msra.mxu0 0.0
    %3308 = vmatprep.subr.mxu0 0.0
    %3309 = vmatpush1.msra.mxu0 0.0
    %3310 = vmatprep.subr.mxu0 0.0
    %3311 = vmatpush1.msra.mxu0 0.0
    %3312 = vmatprep.subr.mxu0 0.0
    %3313 = vmatpush1.msra.mxu0 0.0
    %3314 = vmatprep.subr.mxu0 0.0
    %3315 = vmatpush1.msra.mxu0 0.0
    %3316 = vmatprep.subr.mxu0 0.0
    %3317 = vmatpush1.msra.mxu0 0.0
    %3318 = vmatprep.subr.mxu0 0.0
    %3319 = vmatpush1.msra.mxu0 0.0
    %3320 = vmatprep.subr.mxu0 0.0
    %3321 = vmatpush1.msra.mxu0 0.0
    %3322 = vmatprep.subr.mxu0 0.0
    %3323 = vmatpush1.msra.mxu0 0.0
    %3324 = vmatprep.subr.mxu0 0.0
    %3325 = vmatpush1.msra.mxu0 0.0
    %3326 = vmatprep.subr.mxu0 0.0
    %3327 = vmatpush1.msra.mxu0 0.0
    %3328 = vmatprep.subr.mxu0 0.0
    %3329 = vmatpush1.msra.mxu0 0.0
    %3330 = vmatprep.subr.mxu0 0.0
    %3331 = vmatpush1.msra.mxu0 0.0
    %3332 = vmatprep.subr.mxu0 0.0
    %3333 = vmatpush1.msra.mxu0 0.0
    %3334 = vmatprep.subr.mxu0 0.0
    %3335 = vmatpush1.msra.mxu0 0.0
    %3336 = vmatprep.subr.mxu0 0.0
    %3337 = vmatpush1.msra.mxu0 0.0
    %3338 = vmatprep.subr.mxu0 0.0
    %3339 = vmatpush1.msra.mxu0 0.0
    %3340 = vmatprep.subr.mxu0 0.0
    %3341 = vmatpush1.msra.mxu0 0.0
    %3342 = vmatprep.subr.mxu0 0.0
    %3343 = vmatpush1.msra.mxu0 0.0
    %3344 = vmatprep.subr.mxu0 0.0
    %3345 = vmatpush1.msra.mxu0 0.0
    %3346 = vmatprep.subr.mxu0 0.0
    %3347 = vmatpush1.msra.mxu0 0.0
    %3348 = vmatprep.subr.mxu0 0.0
    %3349 = vmatpush1.msra.mxu0 0.0
    %3350 = vmatprep.subr.mxu0 0.0
    %3351 = vmatpush1.msra.mxu0 0.0
    %3352 = vmatprep.subr.mxu0 0.0
    %3353 = vmatpush1.msra.mxu0 0.0
    %3354 = vmatprep.subr.mxu0 0.0
    %3355 = vmatpush1.msra.mxu0 0.0
    %3356 = vmatprep.subr.mxu0 0.0
    %3357 = vmatpush1.msra.mxu0 0.0
    %3358 = vmatprep.subr.mxu0 0.0
    %3359 = vmatpush1.msra.mxu0 0.0
    %3360 = vmatprep.subr.mxu0 0.0
    %3361 = vmatpush1.msra.mxu0 0.0
    %3362 = vmatprep.subr.mxu0 0.0
    %3363 = vmatpush1.msra.mxu0 0.0
    %3364 = vmatprep.subr.mxu0 0.0
    %3365 = vmatpush1.msra.mxu0 0.0
    %3366 = vmatprep.subr.mxu0 0.0
    %3367 = vmatpush1.msra.mxu0 0.0
    %3368 = vmatprep.mubr.f32.mxu0 0.0
    %3369 = vmatmul.mubr.f32.gmra.mrb[0].mxu0 %v1777
    %v3370 = vpop.f32.mrb[0].mxu0
    %v3371 = vadd.f32 %v3301, %v3370
    %v3372 = vpop.f32.mrb[0].mxu0
    %3373 = vdwg.mxu0
    %v3374 = vadd.f32 %v3371, %v125
    %3375 = vmatprep.subr.mxu0 0.0
    %3376 = vmatpush1.msra.mxu0 %v119
    %3377 = vmatprep.subr.mxu0 0.0
    %3378 = vmatpush1.msra.mxu0 0.0
    %3379 = vmatprep.subr.mxu0 0.0
    %3380 = vmatpush1.msra.mxu0 0.0
    %3381 = vmatprep.subr.mxu0 0.0
    %3382 = vmatpush1.msra.mxu0 0.0
    %3383 = vmatprep.subr.mxu0 0.0
    %3384 = vmatpush1.msra.mxu0 0.0
    %3385 = vmatprep.subr.mxu0 0.0
    %3386 = vmatpush1.msra.mxu0 0.0
    %3387 = vmatprep.subr.mxu0 0.0
    %3388 = vmatpush1.msra.mxu0 0.0
    %3389 = vmatprep.subr.mxu0 0.0
    %3390 = vmatpush1.msra.mxu0 0.0
    %3391 = vmatprep.subr.mxu0 0.0
    %3392 = vmatpush1.msra.mxu0 0.0
    %3393 = vmatprep.subr.mxu0 0.0
    %3394 = vmatpush1.msra.mxu0 0.0
    %3395 = vmatprep.subr.mxu0 0.0
    %3396 = vmatpush1.msra.mxu0 0.0
    %3397 = vmatprep.subr.mxu0 0.0
    %3398 = vmatpush1.msra.mxu0 0.0
    %3399 = vmatprep.subr.mxu0 0.0
    %3400 = vmatpush1.msra.mxu0 0.0
    %3401 = vmatprep.subr.mxu0 0.0
    %3402 = vmatpush1.msra.mxu0 0.0
    %3403 = vmatprep.subr.mxu0 0.0
    %3404 = vmatpush1.msra.mxu0 0.0
    %3405 = vmatprep.subr.mxu0 0.0
    %3406 = vmatpush1.msra.mxu0 0.0
    %3407 = vmatprep.subr.mxu0 0.0
    %3408 = vmatpush1.msra.mxu0 0.0
    %3409 = vmatprep.subr.mxu0 0.0
    %3410 = vmatpush1.msra.mxu0 0.0
    %3411 = vmatprep.subr.mxu0 0.0
    %3412 = vmatpush1.msra.mxu0 0.0
    %3413 = vmatprep.subr.mxu0 0.0
    %3414 = vmatpush1.msra.mxu0 0.0
    %3415 = vmatprep.subr.mxu0 0.0
    %3416 = vmatpush1.msra.mxu0 0.0
    %3417 = vmatprep.subr.mxu0 0.0
    %3418 = vmatpush1.msra.mxu0 0.0
    %3419 = vmatprep.subr.mxu0 0.0
    %3420 = vmatpush1.msra.mxu0 0.0
    %3421 = vmatprep.subr.mxu0 0.0
    %3422 = vmatpush1.msra.mxu0 0.0
    %3423 = vmatprep.subr.mxu0 0.0
    %3424 = vmatpush1.msra.mxu0 0.0
    %3425 = vmatprep.subr.mxu0 0.0
    %3426 = vmatpush1.msra.mxu0 0.0
    %3427 = vmatprep.subr.mxu0 0.0
    %3428 = vmatpush1.msra.mxu0 0.0
    %3429 = vmatprep.subr.mxu0 0.0
    %3430 = vmatpush1.msra.mxu0 0.0
    %3431 = vmatprep.subr.mxu0 0.0
    %3432 = vmatpush1.msra.mxu0 0.0
    %3433 = vmatprep.subr.mxu0 0.0
    %3434 = vmatpush1.msra.mxu0 0.0
    %3435 = vmatprep.subr.mxu0 0.0
    %3436 = vmatpush1.msra.mxu0 0.0
    %3437 = vmatprep.subr.mxu0 0.0
    %3438 = vmatpush1.msra.mxu0 0.0
    %3439 = vmatprep.mubr.f32.mxu0 0.0
    %3440 = vmatmul.mubr.f32.gmra.mrb[0].mxu0 %v2761
    %v3441 = vpop.f32.mrb[0].mxu0
    %v3442 = vadd.f32 0.0, %v3441
    %v3443 = vpop.f32.mrb[0].mxu0
    %3444 = vdwg.mxu0
    %3445 = vmatprep.subr.mxu0 0.0
    %3446 = vmatpush1.msra.mxu0 %v118
    %3447 = vmatprep.subr.mxu0 0.0
    %3448 = vmatpush1.msra.mxu0 0.0
    %3449 = vmatprep.subr.mxu0 0.0
    %3450 = vmatpush1.msra.mxu0 0.0
    %3451 = vmatprep.subr.mxu0 0.0
    %3452 = vmatpush1.msra.mxu0 0.0
    %3453 = vmatprep.subr.mxu0 0.0
    %3454 = vmatpush1.msra.mxu0 0.0
    %3455 = vmatprep.subr.mxu0 0.0
    %3456 = vmatpush1.msra.mxu0 0.0
    %3457 = vmatprep.subr.mxu0 0.0
    %3458 = vmatpush1.msra.mxu0 0.0
    %3459 = vmatprep.subr.mxu0 0.0
    %3460 = vmatpush1.msra.mxu0 0.0
    %3461 = vmatprep.subr.mxu0 0.0
    %3462 = vmatpush1.msra.mxu0 0.0
    %3463 = vmatprep.subr.mxu0 0.0
    %3464 = vmatpush1.msra.mxu0 0.0
    %3465 = vmatprep.subr.mxu0 0.0
    %3466 = vmatpush1.msra.mxu0 0.0
    %3467 = vmatprep.subr.mxu0 0.0
    %3468 = vmatpush1.msra.mxu0 0.0
    %3469 = vmatprep.subr.mxu0 0.0
    %3470 = vmatpush1.msra.mxu0 0.0
    %3471 = vmatprep.subr.mxu0 0.0
    %3472 = vmatpush1.msra.mxu0 0.0
    %3473 = vmatprep.subr.mxu0 0.0
    %3474 = vmatpush1.msra.mxu0 0.0
    %3475 = vmatprep.subr.mxu0 0.0
    %3476 = vmatpush1.msra.mxu0 0.0
    %3477 = vmatprep.subr.mxu0 0.0
    %3478 = vmatpush1.msra.mxu0 0.0
    %3479 = vmatprep.subr.mxu0 0.0
    %3480 = vmatpush1.msra.mxu0 0.0
    %3481 = vmatprep.subr.mxu0 0.0
    %3482 = vmatpush1.msra.mxu0 0.0
    %3483 = vmatprep.subr.mxu0 0.0
    %3484 = vmatpush1.msra.mxu0 0.0
    %3485 = vmatprep.subr.mxu0 0.0
    %3486 = vmatpush1.msra.mxu0 0.0
    %3487 = vmatprep.subr.mxu0 0.0
    %3488 = vmatpush1.msra.mxu0 0.0
    %3489 = vmatprep.subr.mxu0 0.0
    %3490 = vmatpush1.msra.mxu0 0.0
    %3491 = vmatprep.subr.mxu0 0.0
    %3492 = vmatpush1.msra.mxu0 0.0
    %3493 = vmatprep.subr.mxu0 0.0
    %3494 = vmatpush1.msra.mxu0 0.0
    %3495 = vmatprep.subr.mxu0 0.0
    %3496 = vmatpush1.msra.mxu0 0.0
    %3497 = vmatprep.subr.mxu0 0.0
    %3498 = vmatpush1.msra.mxu0 0.0
    %3499 = vmatprep.subr.mxu0 0.0
    %3500 = vmatpush1.msra.mxu0 0.0
    %3501 = vmatprep.subr.mxu0 0.0
    %3502 = vmatpush1.msra.mxu0 0.0
    %3503 = vmatprep.subr.mxu0 0.0
    %3504 = vmatpush1.msra.mxu0 0.0
    %3505 = vmatprep.subr.mxu0 0.0
    %3506 = vmatpush1.msra.mxu0 0.0
    %3507 = vmatprep.subr.mxu0 0.0
    %3508 = vmatpush1.msra.mxu0 0.0
    %3509 = vmatprep.mubr.f32.mxu0 0.0
    %3510 = vmatmul.mubr.f32.gmra.mrb[0].mxu0 %v1996
    %v3511 = vpop.f32.mrb[0].mxu0
    %v3512 = vadd.f32 %v3442, %v3511
    %v3513 = vpop.f32.mrb[0].mxu0
    %3514 = vdwg.mxu0
    %v3515 = vadd.f32 %v3512, %v125
    %3516 = vmatprep.subr.mxu0 0.0
    %3517 = vmatpush1.msra.mxu0 %v119
    %3518 = vmatprep.subr.mxu0 0.0
    %3519 = vmatpush1.msra.mxu0 0.0
    %3520 = vmatprep.subr.mxu0 0.0
    %3521 = vmatpush1.msra.mxu0 0.0
    %3522 = vmatprep.subr.mxu0 0.0
    %3523 = vmatpush1.msra.mxu0 0.0
    %3524 = vmatprep.subr.mxu0 0.0
    %3525 = vmatpush1.msra.mxu0 0.0
    %3526 = vmatprep.subr.mxu0 0.0
    %3527 = vmatpush1.msra.mxu0 0.0
    %3528 = vmatprep.subr.mxu0 0.0
    %3529 = vmatpush1.msra.mxu0 0.0
    %3530 = vmatprep.subr.mxu0 0.0
    %3531 = vmatpush1.msra.mxu0 0.0
    %3532 = vmatprep.subr.mxu0 0.0
    %3533 = vmatpush1.msra.mxu0 0.0
    %3534 = vmatprep.subr.mxu0 0.0
    %3535 = vmatpush1.msra.mxu0 0.0
    %3536 = vmatprep.subr.mxu0 0.0
    %3537 = vmatpush1.msra.mxu0 0.0
    %3538 = vmatprep.subr.mxu0 0.0
    %3539 = vmatpush1.msra.mxu0 0.0
    %3540 = vmatprep.subr.mxu0 0.0
    %3541 = vmatpush1.msra.mxu0 0.0
    %3542 = vmatprep.subr.mxu0 0.0
    %3543 = vmatpush1.msra.mxu0 0.0
    %3544 = vmatprep.subr.mxu0 0.0
    %3545 = vmatpush1.msra.mxu0 0.0
    %3546 = vmatprep.subr.mxu0 0.0
    %3547 = vmatpush1.msra.mxu0 0.0
    %3548 = vmatprep.subr.mxu0 0.0
    %3549 = vmatpush1.msra.mxu0 0.0
    %3550 = vmatprep.subr.mxu0 0.0
    %3551 = vmatpush1.msra.mxu0 0.0
    %3552 = vmatprep.subr.mxu0 0.0
    %3553 = vmatpush1.msra.mxu0 0.0
    %3554 = vmatprep.subr.mxu0 0.0
    %3555 = vmatpush1.msra.mxu0 0.0
    %3556 = vmatprep.subr.mxu0 0.0
    %3557 = vmatpush1.msra.mxu0 0.0
    %3558 = vmatprep.subr.mxu0 0.0
    %3559 = vmatpush1.msra.mxu0 0.0
    %3560 = vmatprep.subr.mxu0 0.0
    %3561 = vmatpush1.msra.mxu0 0.0
    %3562 = vmatprep.subr.mxu0 0.0
    %3563 = vmatpush1.msra.mxu0 0.0
    %3564 = vmatprep.subr.mxu0 0.0
    %3565 = vmatpush1.msra.mxu0 0.0
    %3566 = vmatprep.subr.mxu0 0.0
    %3567 = vmatpush1.msra.mxu0 0.0
    %3568 = vmatprep.subr.mxu0 0.0
    %3569 = vmatpush1.msra.mxu0 0.0
    %3570 = vmatprep.subr.mxu0 0.0
    %3571 = vmatpush1.msra.mxu0 0.0
    %3572 = vmatprep.subr.mxu0 0.0
    %3573 = vmatpush1.msra.mxu0 0.0
    %3574 = vmatprep.subr.mxu0 0.0
    %3575 = vmatpush1.msra.mxu0 0.0
    %3576 = vmatprep.subr.mxu0 0.0
    %3577 = vmatpush1.msra.mxu0 0.0
    %3578 = vmatprep.subr.mxu0 0.0
    %3579 = vmatpush1.msra.mxu0 0.0
    %3580 = vmatprep.mubr.f32.mxu0 0.0
    %3581 = vmatmul.mubr.f32.gmra.mrb[0].mxu0 %v2542
    %v3582 = vpop.f32.mrb[0].mxu0
    %v3583 = vadd.f32 0.0, %v3582
    %v3584 = vpop.f32.mrb[0].mxu0
    %3585 = vdwg.mxu0
    %3586 = vmatprep.subr.mxu0 0.0
    %3587 = vmatpush1.msra.mxu0 %v118
    %3588 = vmatprep.subr.mxu0 0.0
    %3589 = vmatpush1.msra.mxu0 0.0
    %3590 = vmatprep.subr.mxu0 0.0
    %3591 = vmatpush1.msra.mxu0 0.0
    %3592 = vmatprep.subr.mxu0 0.0
    %3593 = vmatpush1.msra.mxu0 0.0
    %3594 = vmatprep.subr.mxu0 0.0
    %3595 = vmatpush1.msra.mxu0 0.0
    %3596 = vmatprep.subr.mxu0 0.0
    %3597 = vmatpush1.msra.mxu0 0.0
    %3598 = vmatprep.subr.mxu0 0.0
    %3599 = vmatpush1.msra.mxu0 0.0
    %3600 = vmatprep.subr.mxu0 0.0
    %3601 = vmatpush1.msra.mxu0 0.0
    %3602 = vmatprep.subr.mxu0 0.0
    %3603 = vmatpush1.msra.mxu0 0.0
    %3604 = vmatprep.subr.mxu0 0.0
    %3605 = vmatpush1.msra.mxu0 0.0
    %3606 = vmatprep.subr.mxu0 0.0
    %3607 = vmatpush1.msra.mxu0 0.0
    %3608 = vmatprep.subr.mxu0 0.0
    %3609 = vmatpush1.msra.mxu0 0.0
    %3610 = vmatprep.subr.mxu0 0.0
    %3611 = vmatpush1.msra.mxu0 0.0
    %3612 = vmatprep.subr.mxu0 0.0
    %3613 = vmatpush1.msra.mxu0 0.0
    %3614 = vmatprep.subr.mxu0 0.0
    %3615 = vmatpush1.msra.mxu0 0.0
    %3616 = vmatprep.subr.mxu0 0.0
    %3617 = vmatpush1.msra.mxu0 0.0
    %3618 = vmatprep.subr.mxu0 0.0
    %3619 = vmatpush1.msra.mxu0 0.0
    %3620 = vmatprep.subr.mxu0 0.0
    %3621 = vmatpush1.msra.mxu0 0.0
    %3622 = vmatprep.subr.mxu0 0.0
    %3623 = vmatpush1.msra.mxu0 0.0
    %3624 = vmatprep.subr.mxu0 0.0
    %3625 = vmatpush1.msra.mxu0 0.0
    %3626 = vmatprep.subr.mxu0 0.0
    %3627 = vmatpush1.msra.mxu0 0.0
    %3628 = vmatprep.subr.mxu0 0.0
    %3629 = vmatpush1.msra.mxu0 0.0
    %3630 = vmatprep.subr.mxu0 0.0
    %3631 = vmatpush1.msra.mxu0 0.0
    %3632 = vmatprep.subr.mxu0 0.0
    %3633 = vmatpush1.msra.mxu0 0.0
    %3634 = vmatprep.subr.mxu0 0.0
    %3635 = vmatpush1.msra.mxu0 0.0
    %3636 = vmatprep.subr.mxu0 0.0
    %3637 = vmatpush1.msra.mxu0 0.0
    %3638 = vmatprep.subr.mxu0 0.0
    %3639 = vmatpush1.msra.mxu0 0.0
    %3640 = vmatprep.subr.mxu0 0.0
    %3641 = vmatpush1.msra.mxu0 0.0
    %3642 = vmatprep.subr.mxu0 0.0
    %3643 = vmatpush1.msra.mxu0 0.0
    %3644 = vmatprep.subr.mxu0 0.0
    %3645 = vmatpush1.msra.mxu0 0.0
    %3646 = vmatprep.subr.mxu0 0.0
    %3647 = vmatpush1.msra.mxu0 0.0
    %3648 = vmatprep.subr.mxu0 0.0
    %3649 = vmatpush1.msra.mxu0 0.0
    %3650 = vmatprep.mubr.f32.mxu0 0.0
    %3651 = vmatmul.mubr.f32.gmra.mrb[0].mxu0 %v2215
    %v3652 = vpop.f32.mrb[0].mxu0
    %v3653 = vadd.f32 %v3583, %v3652
    %v3654 = vpop.f32.mrb[0].mxu0
    %3655 = vdwg.mxu0
    %v3656 = vadd.f32 %v3653, %v125
    %3657 = vmatprep.subr.mxu0 0.0
    %3658 = vmatpush1.msra.mxu0 %v119
    %3659 = vmatprep.subr.mxu0 0.0
    %3660 = vmatpush1.msra.mxu0 0.0
    %3661 = vmatprep.subr.mxu0 0.0
    %3662 = vmatpush1.msra.mxu0 0.0
    %3663 = vmatprep.subr.mxu0 0.0
    %3664 = vmatpush1.msra.mxu0 0.0
    %3665 = vmatprep.subr.mxu0 0.0
    %3666 = vmatpush1.msra.mxu0 0.0
    %3667 = vmatprep.subr.mxu0 0.0
    %3668 = vmatpush1.msra.mxu0 0.0
    %3669 = vmatprep.subr.mxu0 0.0
    %3670 = vmatpush1.msra.mxu0 0.0
    %3671 = vmatprep.subr.mxu0 0.0
    %3672 = vmatpush1.msra.mxu0 0.0
    %3673 = vmatprep.subr.mxu0 0.0
    %3674 = vmatpush1.msra.mxu0 0.0
    %3675 = vmatprep.subr.mxu0 0.0
    %3676 = vmatpush1.msra.mxu0 0.0
    %3677 = vmatprep.subr.mxu0 0.0
    %3678 = vmatpush1.msra.mxu0 0.0
    %3679 = vmatprep.subr.mxu0 0.0
    %3680 = vmatpush1.msra.mxu0 0.0
    %3681 = vmatprep.subr.mxu0 0.0
    %3682 = vmatpush1.msra.mxu0 0.0
    %3683 = vmatprep.subr.mxu0 0.0
    %3684 = vmatpush1.msra.mxu0 0.0
    %3685 = vmatprep.subr.mxu0 0.0
    %3686 = vmatpush1.msra.mxu0 0.0
    %3687 = vmatprep.subr.mxu0 0.0
    %3688 = vmatpush1.msra.mxu0 0.0
    %3689 = vmatprep.subr.mxu0 0.0
    %3690 = vmatpush1.msra.mxu0 0.0
    %3691 = vmatprep.subr.mxu0 0.0
    %3692 = vmatpush1.msra.mxu0 0.0
    %3693 = vmatprep.subr.mxu0 0.0
    %3694 = vmatpush1.msra.mxu0 0.0
    %3695 = vmatprep.subr.mxu0 0.0
    %3696 = vmatpush1.msra.mxu0 0.0
    %3697 = vmatprep.subr.mxu0 0.0
    %3698 = vmatpush1.msra.mxu0 0.0
    %3699 = vmatprep.subr.mxu0 0.0
    %3700 = vmatpush1.msra.mxu0 0.0
    %3701 = vmatprep.subr.mxu0 0.0
    %3702 = vmatpush1.msra.mxu0 0.0
    %3703 = vmatprep.subr.mxu0 0.0
    %3704 = vmatpush1.msra.mxu0 0.0
    %3705 = vmatprep.subr.mxu0 0.0
    %3706 = vmatpush1.msra.mxu0 0.0
    %3707 = vmatprep.subr.mxu0 0.0
    %3708 = vmatpush1.msra.mxu0 0.0
    %3709 = vmatprep.subr.mxu0 0.0
    %3710 = vmatpush1.msra.mxu0 0.0
    %3711 = vmatprep.subr.mxu0 0.0
    %3712 = vmatpush1.msra.mxu0 0.0
    %3713 = vmatprep.subr.mxu0 0.0
    %3714 = vmatpush1.msra.mxu0 0.0
    %3715 = vmatprep.subr.mxu0 0.0
    %3716 = vmatpush1.msra.mxu0 0.0
    %3717 = vmatprep.subr.mxu0 0.0
    %3718 = vmatpush1.msra.mxu0 0.0
    %3719 = vmatprep.subr.mxu0 0.0
    %3720 = vmatpush1.msra.mxu0 0.0
    %3721 = vmatprep.mubr.f32.mxu0 0.0
    %3722 = vmatmul.mubr.f32.gmra.mrb[0].mxu0 %v2323
    %v3723 = vpop.f32.mrb[0].mxu0
    %v3724 = vadd.f32 0.0, %v3723
    %v3725 = vpop.f32.mrb[0].mxu0
    %3726 = vdwg.mxu0
    %3727 = vmatprep.subr.mxu0 0.0
    %3728 = vmatpush1.msra.mxu0 %v118
    %3729 = vmatprep.subr.mxu0 0.0
    %3730 = vmatpush1.msra.mxu0 0.0
    %3731 = vmatprep.subr.mxu0 0.0
    %3732 = vmatpush1.msra.mxu0 0.0
    %3733 = vmatprep.subr.mxu0 0.0
    %3734 = vmatpush1.msra.mxu0 0.0
    %3735 = vmatprep.subr.mxu0 0.0
    %3736 = vmatpush1.msra.mxu0 0.0
    %3737 = vmatprep.subr.mxu0 0.0
    %3738 = vmatpush1.msra.mxu0 0.0
    %3739 = vmatprep.subr.mxu0 0.0
    %3740 = vmatpush1.msra.mxu0 0.0
    %3741 = vmatprep.subr.mxu0 0.0
    %3742 = vmatpush1.msra.mxu0 0.0
    %3743 = vmatprep.subr.mxu0 0.0
    %3744 = vmatpush1.msra.mxu0 0.0
    %3745 = vmatprep.subr.mxu0 0.0
    %3746 = vmatpush1.msra.mxu0 0.0
    %3747 = vmatprep.subr.mxu0 0.0
    %3748 = vmatpush1.msra.mxu0 0.0
    %3749 = vmatprep.subr.mxu0 0.0
    %3750 = vmatpush1.msra.mxu0 0.0
    %3751 = vmatprep.subr.mxu0 0.0
    %3752 = vmatpush1.msra.mxu0 0.0
    %3753 = vmatprep.subr.mxu0 0.0
    %3754 = vmatpush1.msra.mxu0 0.0
    %3755 = vmatprep.subr.mxu0 0.0
    %3756 = vmatpush1.msra.mxu0 0.0
    %3757 = vmatprep.subr.mxu0 0.0
    %3758 = vmatpush1.msra.mxu0 0.0
    %3759 = vmatprep.subr.mxu0 0.0
    %3760 = vmatpush1.msra.mxu0 0.0
    %3761 = vmatprep.subr.mxu0 0.0
    %3762 = vmatpush1.msra.mxu0 0.0
    %3763 = vmatprep.subr.mxu0 0.0
    %3764 = vmatpush1.msra.mxu0 0.0
    %3765 = vmatprep.subr.mxu0 0.0
    %3766 = vmatpush1.msra.mxu0 0.0
    %3767 = vmatprep.subr.mxu0 0.0
    %3768 = vmatpush1.msra.mxu0 0.0
    %3769 = vmatprep.subr.mxu0 0.0
    %3770 = vmatpush1.msra.mxu0 0.0
    %3771 = vmatprep.subr.mxu0 0.0
    %3772 = vmatpush1.msra.mxu0 0.0
    %3773 = vmatprep.subr.mxu0 0.0
    %3774 = vmatpush1.msra.mxu0 0.0
    %3775 = vmatprep.subr.mxu0 0.0
    %3776 = vmatpush1.msra.mxu0 0.0
    %3777 = vmatprep.subr.mxu0 0.0
    %3778 = vmatpush1.msra.mxu0 0.0
    %3779 = vmatprep.subr.mxu0 0.0
    %3780 = vmatpush1.msra.mxu0 0.0
    %3781 = vmatprep.subr.mxu0 0.0
    %3782 = vmatpush1.msra.mxu0 0.0
    %3783 = vmatprep.subr.mxu0 0.0
    %3784 = vmatpush1.msra.mxu0 0.0
    %3785 = vmatprep.subr.mxu0 0.0
    %3786 = vmatpush1.msra.mxu0 0.0
    %3787 = vmatprep.subr.mxu0 0.0
    %3788 = vmatpush1.msra.mxu0 0.0
    %3789 = vmatprep.subr.mxu0 0.0
    %3790 = vmatpush1.msra.mxu0 0.0
    %3791 = vmatprep.mubr.f32.mxu0 0.0
    %3792 = vmatmul.mubr.f32.gmra.mrb[0].mxu0 %v2434
    %v3793 = vpop.f32.mrb[0].mxu0
    %v3794 = vadd.f32 %v3724, %v3793
    %v3795 = vpop.f32.mrb[0].mxu0
    %3796 = vdwg.mxu0
    %v3797 = vadd.f32 %v3794, %v125
    %3798 = vmatprep.subr.mxu0 0.0
    %3799 = vmatpush1.msra.mxu0 %v119
    %3800 = vmatprep.subr.mxu0 0.0
    %3801 = vmatpush1.msra.mxu0 0.0
    %3802 = vmatprep.subr.mxu0 0.0
    %3803 = vmatpush1.msra.mxu0 0.0
    %3804 = vmatprep.subr.mxu0 0.0
    %3805 = vmatpush1.msra.mxu0 0.0
    %3806 = vmatprep.subr.mxu0 0.0
    %3807 = vmatpush1.msra.mxu0 0.0
    %3808 = vmatprep.subr.mxu0 0.0
    %3809 = vmatpush1.msra.mxu0 0.0
    %3810 = vmatprep.subr.mxu0 0.0
    %3811 = vmatpush1.msra.mxu0 0.0
    %3812 = vmatprep.subr.mxu0 0.0
    %3813 = vmatpush1.msra.mxu0 0.0
    %3814 = vmatprep.subr.mxu0 0.0
    %3815 = vmatpush1.msra.mxu0 0.0
    %3816 = vmatprep.subr.mxu0 0.0
    %3817 = vmatpush1.msra.mxu0 0.0
    %3818 = vmatprep.subr.mxu0 0.0
    %3819 = vmatpush1.msra.mxu0 0.0
    %3820 = vmatprep.subr.mxu0 0.0
    %3821 = vmatpush1.msra.mxu0 0.0
    %3822 = vmatprep.subr.mxu0 0.0
    %3823 = vmatpush1.msra.mxu0 0.0
    %3824 = vmatprep.subr.mxu0 0.0
    %3825 = vmatpush1.msra.mxu0 0.0
    %3826 = vmatprep.subr.mxu0 0.0
    %3827 = vmatpush1.msra.mxu0 0.0
    %3828 = vmatprep.subr.mxu0 0.0
    %3829 = vmatpush1.msra.mxu0 0.0
    %3830 = vmatprep.subr.mxu0 0.0
    %3831 = vmatpush1.msra.mxu0 0.0
    %3832 = vmatprep.subr.mxu0 0.0
    %3833 = vmatpush1.msra.mxu0 0.0
    %3834 = vmatprep.subr.mxu0 0.0
    %3835 = vmatpush1.msra.mxu0 0.0
    %3836 = vmatprep.subr.mxu0 0.0
    %3837 = vmatpush1.msra.mxu0 0.0
    %3838 = vmatprep.subr.mxu0 0.0
    %3839 = vmatpush1.msra.mxu0 0.0
    %3840 = vmatprep.subr.mxu0 0.0
    %3841 = vmatpush1.msra.mxu0 0.0
    %3842 = vmatprep.subr.mxu0 0.0
    %3843 = vmatpush1.msra.mxu0 0.0
    %3844 = vmatprep.subr.mxu0 0.0
    %3845 = vmatpush1.msra.mxu0 0.0
    %3846 = vmatprep.subr.mxu0 0.0
    %3847 = vmatpush1.msra.mxu0 0.0
    %3848 = vmatprep.subr.mxu0 0.0
    %3849 = vmatpush1.msra.mxu0 0.0
    %3850 = vmatprep.subr.mxu0 0.0
    %3851 = vmatpush1.msra.mxu0 0.0
    %3852 = vmatprep.subr.mxu0 0.0
    %3853 = vmatpush1.msra.mxu0 0.0
    %3854 = vmatprep.subr.mxu0 0.0
    %3855 = vmatpush1.msra.mxu0 0.0
    %3856 = vmatprep.subr.mxu0 0.0
    %3857 = vmatpush1.msra.mxu0 0.0
    %3858 = vmatprep.subr.mxu0 0.0
    %3859 = vmatpush1.msra.mxu0 0.0
    %3860 = vmatprep.subr.mxu0 0.0
    %3861 = vmatpush1.msra.mxu0 0.0
    %3862 = vmatprep.mubr.f32.mxu0 0.0
    %3863 = vmatmul.mubr.f32.gmra.mrb[0].mxu0 %v2104
    %v3864 = vpop.f32.mrb[0].mxu0
    %v3865 = vadd.f32 0.0, %v3864
    %v3866 = vpop.f32.mrb[0].mxu0
    %3867 = vdwg.mxu0
    %3868 = vmatprep.subr.mxu0 0.0
    %3869 = vmatpush1.msra.mxu0 %v118
    %3870 = vmatprep.subr.mxu0 0.0
    %3871 = vmatpush1.msra.mxu0 0.0
    %3872 = vmatprep.subr.mxu0 0.0
    %3873 = vmatpush1.msra.mxu0 0.0
    %3874 = vmatprep.subr.mxu0 0.0
    %3875 = vmatpush1.msra.mxu0 0.0
    %3876 = vmatprep.subr.mxu0 0.0
    %3877 = vmatpush1.msra.mxu0 0.0
    %3878 = vmatprep.subr.mxu0 0.0
    %3879 = vmatpush1.msra.mxu0 0.0
    %3880 = vmatprep.subr.mxu0 0.0
    %3881 = vmatpush1.msra.mxu0 0.0
    %3882 = vmatprep.subr.mxu0 0.0
    %3883 = vmatpush1.msra.mxu0 0.0
    %3884 = vmatprep.subr.mxu0 0.0
    %3885 = vmatpush1.msra.mxu0 0.0
    %3886 = vmatprep.subr.mxu0 0.0
    %3887 = vmatpush1.msra.mxu0 0.0
    %3888 = vmatprep.subr.mxu0 0.0
    %3889 = vmatpush1.msra.mxu0 0.0
    %3890 = vmatprep.subr.mxu0 0.0
    %3891 = vmatpush1.msra.mxu0 0.0
    %3892 = vmatprep.subr.mxu0 0.0
    %3893 = vmatpush1.msra.mxu0 0.0
    %3894 = vmatprep.subr.mxu0 0.0
    %3895 = vmatpush1.msra.mxu0 0.0
    %3896 = vmatprep.subr.mxu0 0.0
    %3897 = vmatpush1.msra.mxu0 0.0
    %3898 = vmatprep.subr.mxu0 0.0
    %3899 = vmatpush1.msra.mxu0 0.0
    %3900 = vmatprep.subr.mxu0 0.0
    %3901 = vmatpush1.msra.mxu0 0.0
    %3902 = vmatprep.subr.mxu0 0.0
    %3903 = vmatpush1.msra.mxu0 0.0
    %3904 = vmatprep.subr.mxu0 0.0
    %3905 = vmatpush1.msra.mxu0 0.0
    %3906 = vmatprep.subr.mxu0 0.0
    %3907 = vmatpush1.msra.mxu0 0.0
    %3908 = vmatprep.subr.mxu0 0.0
    %3909 = vmatpush1.msra.mxu0 0.0
    %3910 = vmatprep.subr.mxu0 0.0
    %3911 = vmatpush1.msra.mxu0 0.0
    %3912 = vmatprep.subr.mxu0 0.0
    %3913 = vmatpush1.msra.mxu0 0.0
    %3914 = vmatprep.subr.mxu0 0.0
    %3915 = vmatpush1.msra.mxu0 0.0
    %3916 = vmatprep.subr.mxu0 0.0
    %3917 = vmatpush1.msra.mxu0 0.0
    %3918 = vmatprep.subr.mxu0 0.0
    %3919 = vmatpush1.msra.mxu0 0.0
    %3920 = vmatprep.subr.mxu0 0.0
    %3921 = vmatpush1.msra.mxu0 0.0
    %3922 = vmatprep.subr.mxu0 0.0
    %3923 = vmatpush1.msra.mxu0 0.0
    %3924 = vmatprep.subr.mxu0 0.0
    %3925 = vmatpush1.msra.mxu0 0.0
    %3926 = vmatprep.subr.mxu0 0.0
    %3927 = vmatpush1.msra.mxu0 0.0
    %3928 = vmatprep.subr.mxu0 0.0
    %3929 = vmatpush1.msra.mxu0 0.0
    %3930 = vmatprep.subr.mxu0 0.0
    %3931 = vmatpush1.msra.mxu0 0.0
    %3932 = vmatprep.mubr.f32.mxu0 0.0
    %3933 = vmatmul.mubr.f32.gmra.mrb[0].mxu0 %v2653
    %v3934 = vpop.f32.mrb[0].mxu0
    %v3935 = vadd.f32 %v3865, %v3934
    %v3936 = vpop.f32.mrb[0].mxu0
    %3937 = vdwg.mxu0
    %v3938 = vadd.f32 %v3935, %v125
    %3939 = vmatprep.subr.mxu0 0.0
    %3940 = vmatpush1.msra.mxu0 %v119
    %3941 = vmatprep.subr.mxu0 0.0
    %3942 = vmatpush1.msra.mxu0 0.0
    %3943 = vmatprep.subr.mxu0 0.0
    %3944 = vmatpush1.msra.mxu0 0.0
    %3945 = vmatprep.subr.mxu0 0.0
    %3946 = vmatpush1.msra.mxu0 0.0
    %3947 = vmatprep.subr.mxu0 0.0
    %3948 = vmatpush1.msra.mxu0 0.0
    %3949 = vmatprep.subr.mxu0 0.0
    %3950 = vmatpush1.msra.mxu0 0.0
    %3951 = vmatprep.subr.mxu0 0.0
    %3952 = vmatpush1.msra.mxu0 0.0
    %3953 = vmatprep.subr.mxu0 0.0
    %3954 = vmatpush1.msra.mxu0 0.0
    %3955 = vmatprep.subr.mxu0 0.0
    %3956 = vmatpush1.msra.mxu0 0.0
    %3957 = vmatprep.subr.mxu0 0.0
    %3958 = vmatpush1.msra.mxu0 0.0
    %3959 = vmatprep.subr.mxu0 0.0
    %3960 = vmatpush1.msra.mxu0 0.0
    %3961 = vmatprep.subr.mxu0 0.0
    %3962 = vmatpush1.msra.mxu0 0.0
    %3963 = vmatprep.subr.mxu0 0.0
    %3964 = vmatpush1.msra.mxu0 0.0
    %3965 = vmatprep.subr.mxu0 0.0
    %3966 = vmatpush1.msra.mxu0 0.0
    %3967 = vmatprep.subr.mxu0 0.0
    %3968 = vmatpush1.msra.mxu0 0.0
    %3969 = vmatprep.subr.mxu0 0.0
    %3970 = vmatpush1.msra.mxu0 0.0
    %3971 = vmatprep.subr.mxu0 0.0
    %3972 = vmatpush1.msra.mxu0 0.0
    %3973 = vmatprep.subr.mxu0 0.0
    %3974 = vmatpush1.msra.mxu0 0.0
    %3975 = vmatprep.subr.mxu0 0.0
    %3976 = vmatpush1.msra.mxu0 0.0
    %3977 = vmatprep.subr.mxu0 0.0
    %3978 = vmatpush1.msra.mxu0 0.0
    %3979 = vmatprep.subr.mxu0 0.0
    %3980 = vmatpush1.msra.mxu0 0.0
    %3981 = vmatprep.subr.mxu0 0.0
    %3982 = vmatpush1.msra.mxu0 0.0
    %3983 = vmatprep.subr.mxu0 0.0
    %3984 = vmatpush1.msra.mxu0 0.0
    %3985 = vmatprep.subr.mxu0 0.0
    %3986 = vmatpush1.msra.mxu0 0.0
    %3987 = vmatprep.subr.mxu0 0.0
    %3988 = vmatpush1.msra.mxu0 0.0
    %3989 = vmatprep.subr.mxu0 0.0
    %3990 = vmatpush1.msra.mxu0 0.0
    %3991 = vmatprep.subr.mxu0 0.0
    %3992 = vmatpush1.msra.mxu0 0.0
    %3993 = vmatprep.subr.mxu0 0.0
    %3994 = vmatpush1.msra.mxu0 0.0
    %3995 = vmatprep.subr.mxu0 0.0
    %3996 = vmatpush1.msra.mxu0 0.0
    %3997 = vmatprep.subr.mxu0 0.0
    %3998 = vmatpush1.msra.mxu0 0.0
    %3999 = vmatprep.subr.mxu0 0.0
    %4000 = vmatpush1.msra.mxu0 0.0
    %4001 = vmatprep.subr.mxu0 0.0
    %4002 = vmatpush1.msra.mxu0 0.0
    %4003 = vmatprep.mubr.f32.mxu0 0.0
    %4004 = vmatmul.mubr.f32.gmra.mrb[0].mxu0 %v1885
    %v4005 = vpop.f32.mrb[0].mxu0
    %v4006 = vadd.f32 0.0, %v4005
    %v4007 = vpop.f32.mrb[0].mxu0
    %4008 = vdwg.mxu0
    %4009 = vmatprep.subr.mxu0 0.0
    %4010 = vmatpush1.msra.mxu0 %v118
    %4011 = vmatprep.subr.mxu0 0.0
    %4012 = vmatpush1.msra.mxu0 0.0
    %4013 = vmatprep.subr.mxu0 0.0
    %4014 = vmatpush1.msra.mxu0 0.0
    %4015 = vmatprep.subr.mxu0 0.0
    %4016 = vmatpush1.msra.mxu0 0.0
    %4017 = vmatprep.subr.mxu0 0.0
    %4018 = vmatpush1.msra.mxu0 0.0
    %4019 = vmatprep.subr.mxu0 0.0
    %4020 = vmatpush1.msra.mxu0 0.0
    %4021 = vmatprep.subr.mxu0 0.0
    %4022 = vmatpush1.msra.mxu0 0.0
    %4023 = vmatprep.subr.mxu0 0.0
    %4024 = vmatpush1.msra.mxu0 0.0
    %4025 = vmatprep.subr.mxu0 0.0
    %4026 = vmatpush1.msra.mxu0 0.0
    %4027 = vmatprep.subr.mxu0 0.0
    %4028 = vmatpush1.msra.mxu0 0.0
    %4029 = vmatprep.subr.mxu0 0.0
    %4030 = vmatpush1.msra.mxu0 0.0
    %4031 = vmatprep.subr.mxu0 0.0
    %4032 = vmatpush1.msra.mxu0 0.0
    %4033 = vmatprep.subr.mxu0 0.0
    %4034 = vmatpush1.msra.mxu0 0.0
    %4035 = vmatprep.subr.mxu0 0.0
    %4036 = vmatpush1.msra.mxu0 0.0
    %4037 = vmatprep.subr.mxu0 0.0
    %4038 = vmatpush1.msra.mxu0 0.0
    %4039 = vmatprep.subr.mxu0 0.0
    %4040 = vmatpush1.msra.mxu0 0.0
    %4041 = vmatprep.subr.mxu0 0.0
    %4042 = vmatpush1.msra.mxu0 0.0
    %4043 = vmatprep.subr.mxu0 0.0
    %4044 = vmatpush1.msra.mxu0 0.0
    %4045 = vmatprep.subr.mxu0 0.0
    %4046 = vmatpush1.msra.mxu0 0.0
    %4047 = vmatprep.subr.mxu0 0.0
    %4048 = vmatpush1.msra.mxu0 0.0
    %4049 = vmatprep.subr.mxu0 0.0
    %4050 = vmatpush1.msra.mxu0 0.0
    %4051 = vmatprep.subr.mxu0 0.0
    %4052 = vmatpush1.msra.mxu0 0.0
    %4053 = vmatprep.subr.mxu0 0.0
    %4054 = vmatpush1.msra.mxu0 0.0
    %4055 = vmatprep.subr.mxu0 0.0
    %4056 = vmatpush1.msra.mxu0 0.0
    %4057 = vmatprep.subr.mxu0 0.0
    %4058 = vmatpush1.msra.mxu0 0.0
    %4059 = vmatprep.subr.mxu0 0.0
    %4060 = vmatpush1.msra.mxu0 0.0
    %4061 = vmatprep.subr.mxu0 0.0
    %4062 = vmatpush1.msra.mxu0 0.0
    %4063 = vmatprep.subr.mxu0 0.0
    %4064 = vmatpush1.msra.mxu0 0.0
    %4065 = vmatprep.subr.mxu0 0.0
    %4066 = vmatpush1.msra.mxu0 0.0
    %4067 = vmatprep.subr.mxu0 0.0
    %4068 = vmatpush1.msra.mxu0 0.0
    %4069 = vmatprep.subr.mxu0 0.0
    %4070 = vmatpush1.msra.mxu0 0.0
    %4071 = vmatprep.subr.mxu0 0.0
    %4072 = vmatpush1.msra.mxu0 0.0
    %4073 = vmatprep.mubr.f32.mxu0 0.0
    %4074 = vmatmul.mubr.f32.gmra.mrb[0].mxu0 %v2872
    %v4075 = vpop.f32.mrb[0].mxu0
    %v4076 = vadd.f32 %v4006, %v4075
    %v4077 = vpop.f32.mrb[0].mxu0
    %4078 = vdwg.mxu0
    %v4079 = vadd.f32 %v4076, %v125
    %4080 = vmatprep.subr.mxu0 0.0
    %4081 = vmatpush1.msra.mxu0 %v119
    %4082 = vmatprep.subr.mxu0 0.0
    %4083 = vmatpush1.msra.mxu0 0.0
    %4084 = vmatprep.subr.mxu0 0.0
    %4085 = vmatpush1.msra.mxu0 0.0
    %4086 = vmatprep.subr.mxu0 0.0
    %4087 = vmatpush1.msra.mxu0 0.0
    %4088 = vmatprep.subr.mxu0 0.0
    %4089 = vmatpush1.msra.mxu0 0.0
    %4090 = vmatprep.subr.mxu0 0.0
    %4091 = vmatpush1.msra.mxu0 0.0
    %4092 = vmatprep.subr.mxu0 0.0
    %4093 = vmatpush1.msra.mxu0 0.0
    %4094 = vmatprep.subr.mxu0 0.0
    %4095 = vmatpush1.msra.mxu0 0.0
    %4096 = vmatprep.subr.mxu0 0.0
    %4097 = vmatpush1.msra.mxu0 0.0
    %4098 = vmatprep.subr.mxu0 0.0
    %4099 = vmatpush1.msra.mxu0 0.0
    %4100 = vmatprep.subr.mxu0 0.0
    %4101 = vmatpush1.msra.mxu0 0.0
    %4102 = vmatprep.subr.mxu0 0.0
    %4103 = vmatpush1.msra.mxu0 0.0
    %4104 = vmatprep.subr.mxu0 0.0
    %4105 = vmatpush1.msra.mxu0 0.0
    %4106 = vmatprep.subr.mxu0 0.0
    %4107 = vmatpush1.msra.mxu0 0.0
    %4108 = vmatprep.subr.mxu0 0.0
    %4109 = vmatpush1.msra.mxu0 0.0
    %4110 = vmatprep.subr.mxu0 0.0
    %4111 = vmatpush1.msra.mxu0 0.0
    %4112 = vmatprep.subr.mxu0 0.0
    %4113 = vmatpush1.msra.mxu0 0.0
    %4114 = vmatprep.subr.mxu0 0.0
    %4115 = vmatpush1.msra.mxu0 0.0
    %4116 = vmatprep.subr.mxu0 0.0
    %4117 = vmatpush1.msra.mxu0 0.0
    %4118 = vmatprep.subr.mxu0 0.0
    %4119 = vmatpush1.msra.mxu0 0.0
    %4120 = vmatprep.subr.mxu0 0.0
    %4121 = vmatpush1.msra.mxu0 0.0
    %4122 = vmatprep.subr.mxu0 0.0
    %4123 = vmatpush1.msra.mxu0 0.0
    %4124 = vmatprep.subr.mxu0 0.0
    %4125 = vmatpush1.msra.mxu0 0.0
    %4126 = vmatprep.subr.mxu0 0.0
    %4127 = vmatpush1.msra.mxu0 0.0
    %4128 = vmatprep.subr.mxu0 0.0
    %4129 = vmatpush1.msra.mxu0 0.0
    %4130 = vmatprep.subr.mxu0 0.0
    %4131 = vmatpush1.msra.mxu0 0.0
    %4132 = vmatprep.subr.mxu0 0.0
    %4133 = vmatpush1.msra.mxu0 0.0
    %4134 = vmatprep.subr.mxu0 0.0
    %4135 = vmatpush1.msra.mxu0 0.0
    %4136 = vmatprep.subr.mxu0 0.0
    %4137 = vmatpush1.msra.mxu0 0.0
    %4138 = vmatprep.subr.mxu0 0.0
    %4139 = vmatpush1.msra.mxu0 0.0
    %4140 = vmatprep.subr.mxu0 0.0
    %4141 = vmatpush1.msra.mxu0 0.0
    %4142 = vmatprep.subr.mxu0 0.0
    %4143 = vmatpush1.msra.mxu0 0.0
    %4144 = vmatprep.mubr.f32.mxu0 0.0
    %4145 = vmatmul.mubr.f32.gmra.mrb[0].mxu0 %v1666
    %v4146 = vpop.f32.mrb[0].mxu0
    %v4147 = vadd.f32 0.0, %v4146
    %v4148 = vpop.f32.mrb[0].mxu0
    %4149 = vdwg.mxu0
    %4151 = vrot.lane.b32.xlu0 %v2976, 120
    %v4152 = vpop.permute.xlu0 %4151
    %v4153 = vsel %vm225, %v4152, 0
    %4155 = vmatprep.subr.mxu0 0.0
    %4156 = vmatpush1.msra.mxu0 %v118
    %4157 = vmatprep.subr.mxu0 0.0
    %4158 = vmatpush1.msra.mxu0 0.0
    %4159 = vmatprep.subr.mxu0 0.0
    %4160 = vmatpush1.msra.mxu0 0.0
    %4161 = vmatprep.subr.mxu0 0.0
    %4162 = vmatpush1.msra.mxu0 0.0
    %4163 = vmatprep.subr.mxu0 0.0
    %4164 = vmatpush1.msra.mxu0 0.0
    %4165 = vmatprep.subr.mxu0 0.0
    %4166 = vmatpush1.msra.mxu0 0.0
    %4167 = vmatprep.subr.mxu0 0.0
    %4168 = vmatpush1.msra.mxu0 0.0
    %4169 = vmatprep.subr.mxu0 0.0
    %4170 = vmatpush1.msra.mxu0 0.0
    %4171 = vmatprep.subr.mxu0 0.0
    %4172 = vmatpush1.msra.mxu0 0.0
    %4173 = vmatprep.subr.mxu0 0.0
    %4174 = vmatpush1.msra.mxu0 0.0
    %4175 = vmatprep.subr.mxu0 0.0
    %4176 = vmatpush1.msra.mxu0 0.0
    %4177 = vmatprep.subr.mxu0 0.0
    %4178 = vmatpush1.msra.mxu0 0.0
    %4179 = vmatprep.subr.mxu0 0.0
    %4180 = vmatpush1.msra.mxu0 0.0
    %4181 = vmatprep.subr.mxu0 0.0
    %4182 = vmatpush1.msra.mxu0 0.0
    %4183 = vmatprep.subr.mxu0 0.0
    %4184 = vmatpush1.msra.mxu0 0.0
    %4185 = vmatprep.subr.mxu0 0.0
    %4186 = vmatpush1.msra.mxu0 0.0
    %4187 = vmatprep.subr.mxu0 0.0
    %4188 = vmatpush1.msra.mxu0 0.0
    %4189 = vmatprep.subr.mxu0 0.0
    %4190 = vmatpush1.msra.mxu0 0.0
    %4191 = vmatprep.subr.mxu0 0.0
    %4192 = vmatpush1.msra.mxu0 0.0
    %4193 = vmatprep.subr.mxu0 0.0
    %4194 = vmatpush1.msra.mxu0 0.0
    %4195 = vmatprep.subr.mxu0 0.0
    %4196 = vmatpush1.msra.mxu0 0.0
    %4197 = vmatprep.subr.mxu0 0.0
    %4198 = vmatpush1.msra.mxu0 0.0
    %4199 = vmatprep.subr.mxu0 0.0
    %4200 = vmatpush1.msra.mxu0 0.0
    %4201 = vmatprep.subr.mxu0 0.0
    %4202 = vmatpush1.msra.mxu0 0.0
    %4203 = vmatprep.subr.mxu0 0.0
    %4204 = vmatpush1.msra.mxu0 0.0
    %4205 = vmatprep.subr.mxu0 0.0
    %4206 = vmatpush1.msra.mxu0 0.0
    %4207 = vmatprep.subr.mxu0 0.0
    %4208 = vmatpush1.msra.mxu0 0.0
    %4209 = vmatprep.subr.mxu0 0.0
    %4210 = vmatpush1.msra.mxu0 0.0
    %4211 = vmatprep.subr.mxu0 0.0
    %4212 = vmatpush1.msra.mxu0 0.0
    %4213 = vmatprep.subr.mxu0 0.0
    %4214 = vmatpush1.msra.mxu0 0.0
    %4215 = vmatprep.subr.mxu0 0.0
    %4216 = vmatpush1.msra.mxu0 0.0
    %4217 = vmatprep.subr.mxu0 0.0
    %4218 = vmatpush1.msra.mxu0 0.0
    %4219 = vmatprep.mubr.f32.mxu0 0.0
    %4220 = vmatmul.mubr.f32.gmra.mrb[0].mxu0 %v4153
    %v4221 = vpop.f32.mrb[0].mxu0
    %v4222 = vadd.f32 %v4147, %v4221
    %v4223 = vpop.f32.mrb[0].mxu0
    %4224 = vdwg.mxu0
    %v4225 = vadd.f32 %v4222, %v125
    %4226 = vmatprep.subr.mxu0 0.0
    %4227 = vmatpush1.msra.mxu0 %v127
    %4228 = vmatprep.subr.mxu0 0.0
    %4229 = vmatpush1.msra.mxu0 0.0
    %4230 = vmatprep.subr.mxu0 0.0
    %4231 = vmatpush1.msra.mxu0 0.0
    %4232 = vmatprep.subr.mxu0 0.0
    %4233 = vmatpush1.msra.mxu0 0.0
    %4234 = vmatprep.subr.mxu0 0.0
    %4235 = vmatpush1.msra.mxu0 0.0
    %4236 = vmatprep.subr.mxu0 0.0
    %4237 = vmatpush1.msra.mxu0 0.0
    %4238 = vmatprep.subr.mxu0 0.0
    %4239 = vmatpush1.msra.mxu0 0.0
    %4240 = vmatprep.subr.mxu0 0.0
    %4241 = vmatpush1.msra.mxu0 0.0
    %4242 = vmatprep.subr.mxu0 0.0
    %4243 = vmatpush1.msra.mxu0 0.0
    %4244 = vmatprep.subr.mxu0 0.0
    %4245 = vmatpush1.msra.mxu0 0.0
    %4246 = vmatprep.subr.mxu0 0.0
    %4247 = vmatpush1.msra.mxu0 0.0
    %4248 = vmatprep.subr.mxu0 0.0
    %4249 = vmatpush1.msra.mxu0 0.0
    %4250 = vmatprep.subr.mxu0 0.0
    %4251 = vmatpush1.msra.mxu0 0.0
    %4252 = vmatprep.subr.mxu0 0.0
    %4253 = vmatpush1.msra.mxu0 0.0
    %4254 = vmatprep.subr.mxu0 0.0
    %4255 = vmatpush1.msra.mxu0 0.0
    %4256 = vmatprep.subr.mxu0 0.0
    %4257 = vmatpush1.msra.mxu0 0.0
    %4258 = vmatprep.subr.mxu0 0.0
    %4259 = vmatpush1.msra.mxu0 0.0
    %4260 = vmatprep.subr.mxu0 0.0
    %4261 = vmatpush1.msra.mxu0 0.0
    %4262 = vmatprep.subr.mxu0 0.0
    %4263 = vmatpush1.msra.mxu0 0.0
    %4264 = vmatprep.subr.mxu0 0.0
    %4265 = vmatpush1.msra.mxu0 0.0
    %4266 = vmatprep.subr.mxu0 0.0
    %4267 = vmatpush1.msra.mxu0 0.0
    %4268 = vmatprep.subr.mxu0 0.0
    %4269 = vmatpush1.msra.mxu0 0.0
    %4270 = vmatprep.subr.mxu0 0.0
    %4271 = vmatpush1.msra.mxu0 0.0
    %4272 = vmatprep.subr.mxu0 0.0
    %4273 = vmatpush1.msra.mxu0 0.0
    %4274 = vmatprep.subr.mxu0 0.0
    %4275 = vmatpush1.msra.mxu0 0.0
    %4276 = vmatprep.subr.mxu0 0.0
    %4277 = vmatpush1.msra.mxu0 0.0
    %4278 = vmatprep.subr.mxu0 0.0
    %4279 = vmatpush1.msra.mxu0 0.0
    %4280 = vmatprep.subr.mxu0 0.0
    %4281 = vmatpush1.msra.mxu0 0.0
    %4282 = vmatprep.subr.mxu0 0.0
    %4283 = vmatpush1.msra.mxu0 0.0
    %4284 = vmatprep.subr.mxu0 0.0
    %4285 = vmatpush1.msra.mxu0 0.0
    %4286 = vmatprep.subr.mxu0 0.0
    %4287 = vmatpush1.msra.mxu0 0.0
    %4288 = vmatprep.subr.mxu0 0.0
    %4289 = vmatpush1.msra.mxu0 0.0
    %4290 = vmatprep.mubr.f32.mxu0 0.0
    %4291 = vmatmul.mubr.f32.gmra.mrb[0].mxu0 %v1343
    %v4292 = vpop.f32.mrb[0].mxu0
    %v4293 = vadd.f32 %v135, %v4292
    %v4294 = vpop.f32.mrb[0].mxu0
    %4295 = vdwg.mxu0
    %v4296 = vadd.f32 %v3233, %v4293
    %v4297 = vxor.u32 %v4296, 2147483648
    %v4298 = vmul.f32 %v4297, 1.442695
    %v4299 = vpow.pop %v4298
    %v4300 = vadd.f32 %v4299, 1.0
    %v4301 = vrcp.pop %v4300
    %v4302 = vmul.f32 1.0, %v4301
    %4304 = vrot.lane.b32.xlu0 %v4293, 112
    %v4305 = vpop.permute.xlu0 %4304
    %v4307 = vmul.f32 %v4302, %v4305
    %4309 = vrot.lane.b32.xlu0 %v4307, 16
    %v4310 = vpop.permute.xlu0 %4309
    %v4312 = vadd.f32 %v3233, %v4310
    %v4313 = vtanh.pop %v4312
    %v4314 = vsub.f32 1.0, %v4302
    %4316 = vrot.lane.b32.xlu0 %v4313, 120
    %v4317 = vpop.permute.xlu0 %4316
    %v4319 = vmul.f32 %v4314, %v4317
    %v4320 = vmul.f32 %v4302, 0.0
    %v4321 = vadd.f32 %v4319, %v4320
    %v4322 = vsel %vm1446, %v4321, 0.0
    %4323 = vmatprep.subr.mxu0 0.0
    %4324 = vmatpush1.msra.mxu0 %v129
    %4325 = vmatprep.subr.mxu0 0.0
    %4326 = vmatpush1.msra.mxu0 0.0
    %4327 = vmatprep.subr.mxu0 0.0
    %4328 = vmatpush1.msra.mxu0 0.0
    %4329 = vmatprep.subr.mxu0 0.0
    %4330 = vmatpush1.msra.mxu0 0.0
    %4331 = vmatprep.subr.mxu0 0.0
    %4332 = vmatpush1.msra.mxu0 0.0
    %4333 = vmatprep.subr.mxu0 0.0
    %4334 = vmatpush1.msra.mxu0 0.0
    %4335 = vmatprep.subr.mxu0 0.0
    %4336 = vmatpush1.msra.mxu0 0.0
    %4337 = vmatprep.subr.mxu0 0.0
    %4338 = vmatpush1.msra.mxu0 0.0
    %4339 = vmatprep.subr.mxu0 0.0
    %4340 = vmatpush1.msra.mxu0 0.0
    %4341 = vmatprep.subr.mxu0 0.0
    %4342 = vmatpush1.msra.mxu0 0.0
    %4343 = vmatprep.subr.mxu0 0.0
    %4344 = vmatpush1.msra.mxu0 0.0
    %4345 = vmatprep.subr.mxu0 0.0
    %4346 = vmatpush1.msra.mxu0 0.0
    %4347 = vmatprep.subr.mxu0 0.0
    %4348 = vmatpush1.msra.mxu0 0.0
    %4349 = vmatprep.subr.mxu0 0.0
    %4350 = vmatpush1.msra.mxu0 0.0
    %4351 = vmatprep.subr.mxu0 0.0
    %4352 = vmatpush1.msra.mxu0 0.0
    %4353 = vmatprep.subr.mxu0 0.0
    %4354 = vmatpush1.msra.mxu0 0.0
    %4355 = vmatprep.subr.mxu0 0.0
    %4356 = vmatpush1.msra.mxu0 0.0
    %4357 = vmatprep.subr.mxu0 0.0
    %4358 = vmatpush1.msra.mxu0 0.0
    %4359 = vmatprep.subr.mxu0 0.0
    %4360 = vmatpush1.msra.mxu0 0.0
    %4361 = vmatprep.subr.mxu0 0.0
    %4362 = vmatpush1.msra.mxu0 0.0
    %4363 = vmatprep.subr.mxu0 0.0
    %4364 = vmatpush1.msra.mxu0 0.0
    %4365 = vmatprep.subr.mxu0 0.0
    %4366 = vmatpush1.msra.mxu0 0.0
    %4367 = vmatprep.subr.mxu0 0.0
    %4368 = vmatpush1.msra.mxu0 0.0
    %4369 = vmatprep.subr.mxu0 0.0
    %4370 = vmatpush1.msra.mxu0 0.0
    %4371 = vmatprep.subr.mxu0 0.0
    %4372 = vmatpush1.msra.mxu0 0.0
    %4373 = vmatprep.subr.mxu0 0.0
    %4374 = vmatpush1.msra.mxu0 0.0
    %4375 = vmatprep.subr.mxu0 0.0
    %4376 = vmatpush1.msra.mxu0 0.0
    %4377 = vmatprep.subr.mxu0 0.0
    %4378 = vmatpush1.msra.mxu0 0.0
    %4379 = vmatprep.subr.mxu0 0.0
    %4380 = vmatpush1.msra.mxu0 0.0
    %4381 = vmatprep.subr.mxu0 0.0
    %4382 = vmatpush1.msra.mxu0 0.0
    %4383 = vmatprep.subr.mxu0 0.0
    %4384 = vmatpush1.msra.mxu0 0.0
    %4385 = vmatprep.subr.mxu0 0.0
    %4386 = vmatpush1.msra.mxu0 0.0
    %4387 = vmatprep.mubr.f32.mxu0 0.0
    %4388 = vmatmul.mubr.f32.gmra.mrb[0].mxu0 %v1343
    %v4389 = vpop.f32.mrb[0].mxu0
    %v4390 = vadd.f32 %v143, %v4389
    %v4391 = vpop.f32.mrb[0].mxu0
    %4392 = vdwg.mxu0
    %4394 = vrot.lane.b32.xlu0 %v4390, 24
    %v4395 = vpop.permute.xlu0 %4394
    %v4397 = vadd.f32 %v4225, %v4395
    %v4398 = vxor.u32 %v4397, 2147483648
    %v4399 = vmul.f32 %v4398, 1.442695
    %v4400 = vpow.pop %v4399
    %v4401 = vadd.f32 %v4400, 1.0
    %v4402 = vrcp.pop %v4401
    %v4403 = vmul.f32 1.0, %v4402
    %4404 = vrot.lane.b32.xlu0 %v4390, 8
    %v4405 = vpop.permute.xlu0 %4404
    %v4407 = vmul.f32 %v4403, %v4405
    %4409 = vrot.lane.b32.xlu0 %v4407, 16
    %v4410 = vpop.permute.xlu0 %4409
    %v4412 = vadd.f32 %v4225, %v4410
    %v4413 = vtanh.pop %v4412
    %v4414 = vsub.f32 1.0, %v4403
    %4416 = vrot.lane.b32.xlu0 %v4413, 120
    %v4417 = vpop.permute.xlu0 %4416
    %v4419 = vmul.f32 %v4414, %v4417
    %v4420 = vmul.f32 %v4403, 0.0
    %v4421 = vadd.f32 %v4419, %v4420
    %v4422 = vsel %vm1553, %v4421, 0.0
    %4424 = vrot.lane.b32.xlu0 %v4322, 120
    %v4425 = vpop.permute.xlu0 %4424
    %v4426 = vsel %vm225, %v4425, 0
    %4428 = vmatprep.subr.mxu0 0.0
    %4429 = vmatpush1.msra.mxu0 %v127
    %4430 = vmatprep.subr.mxu0 0.0
    %4431 = vmatpush1.msra.mxu0 0.0
    %4432 = vmatprep.subr.mxu0 0.0
    %4433 = vmatpush1.msra.mxu0 0.0
    %4434 = vmatprep.subr.mxu0 0.0
    %4435 = vmatpush1.msra.mxu0 0.0
    %4436 = vmatprep.subr.mxu0 0.0
    %4437 = vmatpush1.msra.mxu0 0.0
    %4438 = vmatprep.subr.mxu0 0.0
    %4439 = vmatpush1.msra.mxu0 0.0
    %4440 = vmatprep.subr.mxu0 0.0
    %4441 = vmatpush1.msra.mxu0 0.0
    %4442 = vmatprep.subr.mxu0 0.0
    %4443 = vmatpush1.msra.mxu0 0.0
    %4444 = vmatprep.subr.mxu0 0.0
    %4445 = vmatpush1.msra.mxu0 0.0
    %4446 = vmatprep.subr.mxu0 0.0
    %4447 = vmatpush1.msra.mxu0 0.0
    %4448 = vmatprep.subr.mxu0 0.0
    %4449 = vmatpush1.msra.mxu0 0.0
    %4450 = vmatprep.subr.mxu0 0.0
    %4451 = vmatpush1.msra.mxu0 0.0
    %4452 = vmatprep.subr.mxu0 0.0
    %4453 = vmatpush1.msra.mxu0 0.0
    %4454 = vmatprep.subr.mxu0 0.0
    %4455 = vmatpush1.msra.mxu0 0.0
    %4456 = vmatprep.subr.mxu0 0.0
    %4457 = vmatpush1.msra.mxu0 0.0
    %4458 = vmatprep.subr.mxu0 0.0
    %4459 = vmatpush1.msra.mxu0 0.0
    %4460 = vmatprep.subr.mxu0 0.0
    %4461 = vmatpush1.msra.mxu0 0.0
    %4462 = vmatprep.subr.mxu0 0.0
    %4463 = vmatpush1.msra.mxu0 0.0
    %4464 = vmatprep.subr.mxu0 0.0
    %4465 = vmatpush1.msra.mxu0 0.0
    %4466 = vmatprep.subr.mxu0 0.0
    %4467 = vmatpush1.msra.mxu0 0.0
    %4468 = vmatprep.subr.mxu0 0.0
    %4469 = vmatpush1.msra.mxu0 0.0
    %4470 = vmatprep.subr.mxu0 0.0
    %4471 = vmatpush1.msra.mxu0 0.0
    %4472 = vmatprep.subr.mxu0 0.0
    %4473 = vmatpush1.msra.mxu0 0.0
    %4474 = vmatprep.subr.mxu0 0.0
    %4475 = vmatpush1.msra.mxu0 0.0
    %4476 = vmatprep.subr.mxu0 0.0
    %4477 = vmatpush1.msra.mxu0 0.0
    %4478 = vmatprep.subr.mxu0 0.0
    %4479 = vmatpush1.msra.mxu0 0.0
    %4480 = vmatprep.subr.mxu0 0.0
    %4481 = vmatpush1.msra.mxu0 0.0
    %4482 = vmatprep.subr.mxu0 0.0
    %4483 = vmatpush1.msra.mxu0 0.0
    %4484 = vmatprep.subr.mxu0 0.0
    %4485 = vmatpush1.msra.mxu0 0.0
    %4486 = vmatprep.subr.mxu0 0.0
    %4487 = vmatpush1.msra.mxu0 0.0
    %4488 = vmatprep.subr.mxu0 0.0
    %4489 = vmatpush1.msra.mxu0 0.0
    %4490 = vmatprep.subr.mxu0 0.0
    %4491 = vmatpush1.msra.mxu0 0.0
    %4492 = vmatprep.mubr.f32.mxu0 0.0
    %4493 = vmatmul.mubr.f32.gmra.mrb[0].mxu0 %v4426
    %v4494 = vpop.f32.mrb[0].mxu0
    %v4495 = vadd.f32 %v135, %v4494
    %v4496 = vpop.f32.mrb[0].mxu0
    %4497 = vdwg.mxu0
    %v4498 = vadd.f32 %v3374, %v4495
    %v4499 = vxor.u32 %v4498, 2147483648
    %v4500 = vmul.f32 %v4499, 1.442695
    %v4501 = vpow.pop %v4500
    %v4502 = vadd.f32 %v4501, 1.0
    %v4503 = vrcp.pop %v4502
    %v4504 = vmul.f32 1.0, %v4503
    %4506 = vrot.lane.b32.xlu0 %v4495, 112
    %v4507 = vpop.permute.xlu0 %4506
    %v4509 = vmul.f32 %v4504, %v4507
    %4511 = vrot.lane.b32.xlu0 %v4509, 16
    %v4512 = vpop.permute.xlu0 %4511
    %v4514 = vadd.f32 %v3374, %v4512
    %v4515 = vtanh.pop %v4514
    %v4516 = vsub.f32 1.0, %v4504
    %4518 = vrot.lane.b32.xlu0 %v4515, 120
    %v4519 = vpop.permute.xlu0 %4518
    %v4521 = vmul.f32 %v4516, %v4519
    %v4522 = vmul.f32 %v4504, %v4322
    %v4523 = vadd.f32 %v4521, %v4522
    %v4524 = vsel %vm1661, %v4523, %v4322
    %4526 = vrot.lane.b32.xlu0 %v4422, 96
    %v4527 = vpop.permute.xlu0 %4526
    %v4528 = vsel %vm225, %v4527, 0
    %4530 = vmatprep.subr.mxu0 0.0
    %4531 = vmatpush1.msra.mxu0 %v129
    %4532 = vmatprep.subr.mxu0 0.0
    %4533 = vmatpush1.msra.mxu0 0.0
    %4534 = vmatprep.subr.mxu0 0.0
    %4535 = vmatpush1.msra.mxu0 0.0
    %4536 = vmatprep.subr.mxu0 0.0
    %4537 = vmatpush1.msra.mxu0 0.0
    %4538 = vmatprep.subr.mxu0 0.0
    %4539 = vmatpush1.msra.mxu0 0.0
    %4540 = vmatprep.subr.mxu0 0.0
    %4541 = vmatpush1.msra.mxu0 0.0
    %4542 = vmatprep.subr.mxu0 0.0
    %4543 = vmatpush1.msra.mxu0 0.0
    %4544 = vmatprep.subr.mxu0 0.0
    %4545 = vmatpush1.msra.mxu0 0.0
    %4546 = vmatprep.subr.mxu0 0.0
    %4547 = vmatpush1.msra.mxu0 0.0
    %4548 = vmatprep.subr.mxu0 0.0
    %4549 = vmatpush1.msra.mxu0 0.0
    %4550 = vmatprep.subr.mxu0 0.0
    %4551 = vmatpush1.msra.mxu0 0.0
    %4552 = vmatprep.subr.mxu0 0.0
    %4553 = vmatpush1.msra.mxu0 0.0
    %4554 = vmatprep.subr.mxu0 0.0
    %4555 = vmatpush1.msra.mxu0 0.0
    %4556 = vmatprep.subr.mxu0 0.0
    %4557 = vmatpush1.msra.mxu0 0.0
    %4558 = vmatprep.subr.mxu0 0.0
    %4559 = vmatpush1.msra.mxu0 0.0
    %4560 = vmatprep.subr.mxu0 0.0
    %4561 = vmatpush1.msra.mxu0 0.0
    %4562 = vmatprep.subr.mxu0 0.0
    %4563 = vmatpush1.msra.mxu0 0.0
    %4564 = vmatprep.subr.mxu0 0.0
    %4565 = vmatpush1.msra.mxu0 0.0
    %4566 = vmatprep.subr.mxu0 0.0
    %4567 = vmatpush1.msra.mxu0 0.0
    %4568 = vmatprep.subr.mxu0 0.0
    %4569 = vmatpush1.msra.mxu0 0.0
    %4570 = vmatprep.subr.mxu0 0.0
    %4571 = vmatpush1.msra.mxu0 0.0
    %4572 = vmatprep.subr.mxu0 0.0
    %4573 = vmatpush1.msra.mxu0 0.0
    %4574 = vmatprep.subr.mxu0 0.0
    %4575 = vmatpush1.msra.mxu0 0.0
    %4576 = vmatprep.subr.mxu0 0.0
    %4577 = vmatpush1.msra.mxu0 0.0
    %4578 = vmatprep.subr.mxu0 0.0
    %4579 = vmatpush1.msra.mxu0 0.0
    %4580 = vmatprep.subr.mxu0 0.0
    %4581 = vmatpush1.msra.mxu0 0.0
    %4582 = vmatprep.subr.mxu0 0.0
    %4583 = vmatpush1.msra.mxu0 0.0
    %4584 = vmatprep.subr.mxu0 0.0
    %4585 = vmatpush1.msra.mxu0 0.0
    %4586 = vmatprep.subr.mxu0 0.0
    %4587 = vmatpush1.msra.mxu0 0.0
    %4588 = vmatprep.subr.mxu0 0.0
    %4589 = vmatpush1.msra.mxu0 0.0
    %4590 = vmatprep.subr.mxu0 0.0
    %4591 = vmatpush1.msra.mxu0 0.0
    %4592 = vmatprep.subr.mxu0 0.0
    %4593 = vmatpush1.msra.mxu0 0.0
    %4594 = vmatprep.mubr.f32.mxu0 0.0
    %4595 = vmatmul.mubr.f32.gmra.mrb[0].mxu0 %v4528
    %v4596 = vpop.f32.mrb[0].mxu0
    %v4597 = vadd.f32 %v143, %v4596
    %v4598 = vpop.f32.mrb[0].mxu0
    %4599 = vdwg.mxu0
    %4601 = vrot.lane.b32.xlu0 %v4597, 24
    %v4602 = vpop.permute.xlu0 %4601
    %v4604 = vadd.f32 %v4079, %v4602
    %v4605 = vxor.u32 %v4604, 2147483648
    %v4606 = vmul.f32 %v4605, 1.442695
    %v4607 = vpow.pop %v4606
    %v4608 = vadd.f32 %v4607, 1.0
    %v4609 = vrcp.pop %v4608
    %v4610 = vmul.f32 1.0, %v4609
    %4611 = vrot.lane.b32.xlu0 %v4597, 8
    %v4612 = vpop.permute.xlu0 %4611
    %v4614 = vmul.f32 %v4610, %v4612
    %4616 = vrot.lane.b32.xlu0 %v4614, 16
    %v4617 = vpop.permute.xlu0 %4616
    %v4619 = vadd.f32 %v4079, %v4617
    %v4620 = vtanh.pop %v4619
    %v4621 = vsub.f32 1.0, %v4610
    %4623 = vrot.lane.b32.xlu0 %v4620, 120
    %v4624 = vpop.permute.xlu0 %4623
    %v4626 = vmul.f32 %v4621, %v4624
    %v4627 = vmul.f32 %v4610, %v4422
    %v4628 = vadd.f32 %v4626, %v4627
    %v4629 = vsel %vm1772, %v4628, %v4422
    %4631 = vrot.lane.b32.xlu0 %v4524, 120
    %v4632 = vpop.permute.xlu0 %4631
    %v4633 = vsel %vm225, %v4632, 0
    %4635 = vmatprep.subr.mxu0 0.0
    %4636 = vmatpush1.msra.mxu0 %v127
    %4637 = vmatprep.subr.mxu0 0.0
    %4638 = vmatpush1.msra.mxu0 0.0
    %4639 = vmatprep.subr.mxu0 0.0
    %4640 = vmatpush1.msra.mxu0 0.0
    %4641 = vmatprep.subr.mxu0 0.0
    %4642 = vmatpush1.msra.mxu0 0.0
    %4643 = vmatprep.subr.mxu0 0.0
    %4644 = vmatpush1.msra.mxu0 0.0
    %4645 = vmatprep.subr.mxu0 0.0
    %4646 = vmatpush1.msra.mxu0 0.0
    %4647 = vmatprep.subr.mxu0 0.0
    %4648 = vmatpush1.msra.mxu0 0.0
    %4649 = vmatprep.subr.mxu0 0.0
    %4650 = vmatpush1.msra.mxu0 0.0
    %4651 = vmatprep.subr.mxu0 0.0
    %4652 = vmatpush1.msra.mxu0 0.0
    %4653 = vmatprep.subr.mxu0 0.0
    %4654 = vmatpush1.msra.mxu0 0.0
    %4655 = vmatprep.subr.mxu0 0.0
    %4656 = vmatpush1.msra.mxu0 0.0
    %4657 = vmatprep.subr.mxu0 0.0
    %4658 = vmatpush1.msra.mxu0 0.0
    %4659 = vmatprep.subr.mxu0 0.0
    %4660 = vmatpush1.msra.mxu0 0.0
    %4661 = vmatprep.subr.mxu0 0.0
    %4662 = vmatpush1.msra.mxu0 0.0
    %4663 = vmatprep.subr.mxu0 0.0
    %4664 = vmatpush1.msra.mxu0 0.0
    %4665 = vmatprep.subr.mxu0 0.0
    %4666 = vmatpush1.msra.mxu0 0.0
    %4667 = vmatprep.subr.mxu0 0.0
    %4668 = vmatpush1.msra.mxu0 0.0
    %4669 = vmatprep.subr.mxu0 0.0
    %4670 = vmatpush1.msra.mxu0 0.0
    %4671 = vmatprep.subr.mxu0 0.0
    %4672 = vmatpush1.msra.mxu0 0.0
    %4673 = vmatprep.subr.mxu0 0.0
    %4674 = vmatpush1.msra.mxu0 0.0
    %4675 = vmatprep.subr.mxu0 0.0
    %4676 = vmatpush1.msra.mxu0 0.0
    %4677 = vmatprep.subr.mxu0 0.0
    %4678 = vmatpush1.msra.mxu0 0.0
    %4679 = vmatprep.subr.mxu0 0.0
    %4680 = vmatpush1.msra.mxu0 0.0
    %4681 = vmatprep.subr.mxu0 0.0
    %4682 = vmatpush1.msra.mxu0 0.0
    %4683 = vmatprep.subr.mxu0 0.0
    %4684 = vmatpush1.msra.mxu0 0.0
    %4685 = vmatprep.subr.mxu0 0.0
    %4686 = vmatpush1.msra.mxu0 0.0
    %4687 = vmatprep.subr.mxu0 0.0
    %4688 = vmatpush1.msra.mxu0 0.0
    %4689 = vmatprep.subr.mxu0 0.0
    %4690 = vmatpush1.msra.mxu0 0.0
    %4691 = vmatprep.subr.mxu0 0.0
    %4692 = vmatpush1.msra.mxu0 0.0
    %4693 = vmatprep.subr.mxu0 0.0
    %4694 = vmatpush1.msra.mxu0 0.0
    %4695 = vmatprep.subr.mxu0 0.0
    %4696 = vmatpush1.msra.mxu0 0.0
    %4697 = vmatprep.subr.mxu0 0.0
    %4698 = vmatpush1.msra.mxu0 0.0
    %4699 = vmatprep.mubr.f32.mxu0 0.0
    %4700 = vmatmul.mubr.f32.gmra.mrb[0].mxu0 %v4633
    %v4701 = vpop.f32.mrb[0].mxu0
    %v4702 = vadd.f32 %v135, %v4701
    %v4703 = vpop.f32.mrb[0].mxu0
    %4704 = vdwg.mxu0
    %v4705 = vadd.f32 %v3515, %v4702
    %v4706 = vxor.u32 %v4705, 2147483648
    %v4707 = vmul.f32 %v4706, 1.442695
    %v4708 = vpow.pop %v4707
    %v4709 = vadd.f32 %v4708, 1.0
    %v4710 = vrcp.pop %v4709
    %v4711 = vmul.f32 1.0, %v4710
    %4713 = vrot.lane.b32.xlu0 %v4702, 112
    %v4714 = vpop.permute.xlu0 %4713
    %v4716 = vmul.f32 %v4711, %v4714
    %4718 = vrot.lane.b32.xlu0 %v4716, 16
    %v4719 = vpop.permute.xlu0 %4718
    %v4721 = vadd.f32 %v3515, %v4719
    %v4722 = vtanh.pop %v4721
    %v4723 = vsub.f32 1.0, %v4711
    %4725 = vrot.lane.b32.xlu0 %v4722, 120
    %v4726 = vpop.permute.xlu0 %4725
    %v4728 = vmul.f32 %v4723, %v4726
    %v4729 = vmul.f32 %v4711, %v4524
    %v4730 = vadd.f32 %v4728, %v4729
    %v4731 = vsel %vm1880, %v4730, %v4524
    %4733 = vrot.lane.b32.xlu0 %v4629, 96
    %v4734 = vpop.permute.xlu0 %4733
    %v4735 = vsel %vm225, %v4734, 0
    %4737 = vmatprep.subr.mxu0 0.0
    %4738 = vmatpush1.msra.mxu0 %v129
    %4739 = vmatprep.subr.mxu0 0.0
    %4740 = vmatpush1.msra.mxu0 0.0
    %4741 = vmatprep.subr.mxu0 0.0
    %4742 = vmatpush1.msra.mxu0 0.0
    %4743 = vmatprep.subr.mxu0 0.0
    %4744 = vmatpush1.msra.mxu0 0.0
    %4745 = vmatprep.subr.mxu0 0.0
    %4746 = vmatpush1.msra.mxu0 0.0
    %4747 = vmatprep.subr.mxu0 0.0
    %4748 = vmatpush1.msra.mxu0 0.0
    %4749 = vmatprep.subr.mxu0 0.0
    %4750 = vmatpush1.msra.mxu0 0.0
    %4751 = vmatprep.subr.mxu0 0.0
    %4752 = vmatpush1.msra.mxu0 0.0
    %4753 = vmatprep.subr.mxu0 0.0
    %4754 = vmatpush1.msra.mxu0 0.0
    %4755 = vmatprep.subr.mxu0 0.0
    %4756 = vmatpush1.msra.mxu0 0.0
    %4757 = vmatprep.subr.mxu0 0.0
    %4758 = vmatpush1.msra.mxu0 0.0
    %4759 = vmatprep.subr.mxu0 0.0
    %4760 = vmatpush1.msra.mxu0 0.0
    %4761 = vmatprep.subr.mxu0 0.0
    %4762 = vmatpush1.msra.mxu0 0.0
    %4763 = vmatprep.subr.mxu0 0.0
    %4764 = vmatpush1.msra.mxu0 0.0
    %4765 = vmatprep.subr.mxu0 0.0
    %4766 = vmatpush1.msra.mxu0 0.0
    %4767 = vmatprep.subr.mxu0 0.0
    %4768 = vmatpush1.msra.mxu0 0.0
    %4769 = vmatprep.subr.mxu0 0.0
    %4770 = vmatpush1.msra.mxu0 0.0
    %4771 = vmatprep.subr.mxu0 0.0
    %4772 = vmatpush1.msra.mxu0 0.0
    %4773 = vmatprep.subr.mxu0 0.0
    %4774 = vmatpush1.msra.mxu0 0.0
    %4775 = vmatprep.subr.mxu0 0.0
    %4776 = vmatpush1.msra.mxu0 0.0
    %4777 = vmatprep.subr.mxu0 0.0
    %4778 = vmatpush1.msra.mxu0 0.0
    %4779 = vmatprep.subr.mxu0 0.0
    %4780 = vmatpush1.msra.mxu0 0.0
    %4781 = vmatprep.subr.mxu0 0.0
    %4782 = vmatpush1.msra.mxu0 0.0
    %4783 = vmatprep.subr.mxu0 0.0
    %4784 = vmatpush1.msra.mxu0 0.0
    %4785 = vmatprep.subr.mxu0 0.0
    %4786 = vmatpush1.msra.mxu0 0.0
    %4787 = vmatprep.subr.mxu0 0.0
    %4788 = vmatpush1.msra.mxu0 0.0
    %4789 = vmatprep.subr.mxu0 0.0
    %4790 = vmatpush1.msra.mxu0 0.0
    %4791 = vmatprep.subr.mxu0 0.0
    %4792 = vmatpush1.msra.mxu0 0.0
    %4793 = vmatprep.subr.mxu0 0.0
    %4794 = vmatpush1.msra.mxu0 0.0
    %4795 = vmatprep.subr.mxu0 0.0
    %4796 = vmatpush1.msra.mxu0 0.0
    %4797 = vmatprep.subr.mxu0 0.0
    %4798 = vmatpush1.msra.mxu0 0.0
    %4799 = vmatprep.subr.mxu0 0.0
    %4800 = vmatpush1.msra.mxu0 0.0
    %4801 = vmatprep.mubr.f32.mxu0 0.0
    %4802 = vmatmul.mubr.f32.gmra.mrb[0].mxu0 %v4735
    %v4803 = vpop.f32.mrb[0].mxu0
    %v4804 = vadd.f32 %v143, %v4803
    %v4805 = vpop.f32.mrb[0].mxu0
    %4806 = vdwg.mxu0
    %4808 = vrot.lane.b32.xlu0 %v4804, 24
    %v4809 = vpop.permute.xlu0 %4808
    %v4811 = vadd.f32 %v3938, %v4809
    %v4812 = vxor.u32 %v4811, 2147483648
    %v4813 = vmul.f32 %v4812, 1.442695
    %v4814 = vpow.pop %v4813
    %v4815 = vadd.f32 %v4814, 1.0
    %v4816 = vrcp.pop %v4815
    %v4817 = vmul.f32 1.0, %v4816
    %4818 = vrot.lane.b32.xlu0 %v4804, 8
    %v4819 = vpop.permute.xlu0 %4818
    %v4821 = vmul.f32 %v4817, %v4819
    %4823 = vrot.lane.b32.xlu0 %v4821, 16
    %v4824 = vpop.permute.xlu0 %4823
    %v4826 = vadd.f32 %v3938, %v4824
    %v4827 = vtanh.pop %v4826
    %v4828 = vsub.f32 1.0, %v4817
    %4830 = vrot.lane.b32.xlu0 %v4827, 120
    %v4831 = vpop.permute.xlu0 %4830
    %v4833 = vmul.f32 %v4828, %v4831
    %v4834 = vmul.f32 %v4817, %v4629
    %v4835 = vadd.f32 %v4833, %v4834
    %v4836 = vsel %vm1991, %v4835, %v4629
    %4838 = vrot.lane.b32.xlu0 %v4731, 120
    %v4839 = vpop.permute.xlu0 %4838
    %v4840 = vsel %vm225, %v4839, 0
    %4842 = vmatprep.subr.mxu0 0.0
    %4843 = vmatpush1.msra.mxu0 %v127
    %4844 = vmatprep.subr.mxu0 0.0
    %4845 = vmatpush1.msra.mxu0 0.0
    %4846 = vmatprep.subr.mxu0 0.0
    %4847 = vmatpush1.msra.mxu0 0.0
    %4848 = vmatprep.subr.mxu0 0.0
    %4849 = vmatpush1.msra.mxu0 0.0
    %4850 = vmatprep.subr.mxu0 0.0
    %4851 = vmatpush1.msra.mxu0 0.0
    %4852 = vmatprep.subr.mxu0 0.0
    %4853 = vmatpush1.msra.mxu0 0.0
    %4854 = vmatprep.subr.mxu0 0.0
    %4855 = vmatpush1.msra.mxu0 0.0
    %4856 = vmatprep.subr.mxu0 0.0
    %4857 = vmatpush1.msra.mxu0 0.0
    %4858 = vmatprep.subr.mxu0 0.0
    %4859 = vmatpush1.msra.mxu0 0.0
    %4860 = vmatprep.subr.mxu0 0.0
    %4861 = vmatpush1.msra.mxu0 0.0
    %4862 = vmatprep.subr.mxu0 0.0
    %4863 = vmatpush1.msra.mxu0 0.0
    %4864 = vmatprep.subr.mxu0 0.0
    %4865 = vmatpush1.msra.mxu0 0.0
    %4866 = vmatprep.subr.mxu0 0.0
    %4867 = vmatpush1.msra.mxu0 0.0
    %4868 = vmatprep.subr.mxu0 0.0
    %4869 = vmatpush1.msra.mxu0 0.0
    %4870 = vmatprep.subr.mxu0 0.0
    %4871 = vmatpush1.msra.mxu0 0.0
    %4872 = vmatprep.subr.mxu0 0.0
    %4873 = vmatpush1.msra.mxu0 0.0
    %4874 = vmatprep.subr.mxu0 0.0
    %4875 = vmatpush1.msra.mxu0 0.0
    %4876 = vmatprep.subr.mxu0 0.0
    %4877 = vmatpush1.msra.mxu0 0.0
    %4878 = vmatprep.subr.mxu0 0.0
    %4879 = vmatpush1.msra.mxu0 0.0
    %4880 = vmatprep.subr.mxu0 0.0
    %4881 = vmatpush1.msra.mxu0 0.0
    %4882 = vmatprep.subr.mxu0 0.0
    %4883 = vmatpush1.msra.mxu0 0.0
    %4884 = vmatprep.subr.mxu0 0.0
    %4885 = vmatpush1.msra.mxu0 0.0
    %4886 = vmatprep.subr.mxu0 0.0
    %4887 = vmatpush1.msra.mxu0 0.0
    %4888 = vmatprep.subr.mxu0 0.0
    %4889 = vmatpush1.msra.mxu0 0.0
    %4890 = vmatprep.subr.mxu0 0.0
    %4891 = vmatpush1.msra.mxu0 0.0
    %4892 = vmatprep.subr.mxu0 0.0
    %4893 = vmatpush1.msra.mxu0 0.0
    %4894 = vmatprep.subr.mxu0 0.0
    %4895 = vmatpush1.msra.mxu0 0.0
    %4896 = vmatprep.subr.mxu0 0.0
    %4897 = vmatpush1.msra.mxu0 0.0
    %4898 = vmatprep.subr.mxu0 0.0
    %4899 = vmatpush1.msra.mxu0 0.0
    %4900 = vmatprep.subr.mxu0 0.0
    %4901 = vmatpush1.msra.mxu0 0.0
    %4902 = vmatprep.subr.mxu0 0.0
    %4903 = vmatpush1.msra.mxu0 0.0
    %4904 = vmatprep.subr.mxu0 0.0
    %4905 = vmatpush1.msra.mxu0 0.0
    %4906 = vmatprep.mubr.f32.mxu0 0.0
    %4907 = vmatmul.mubr.f32.gmra.mrb[0].mxu0 %v4840
    %v4908 = vpop.f32.mrb[0].mxu0
    %v4909 = vadd.f32 %v135, %v4908
    %v4910 = vpop.f32.mrb[0].mxu0
    %4911 = vdwg.mxu0
    %v4912 = vadd.f32 %v3656, %v4909
    %v4913 = vxor.u32 %v4912, 2147483648
    %v4914 = vmul.f32 %v4913, 1.442695
    %v4915 = vpow.pop %v4914
    %v4916 = vadd.f32 %v4915, 1.0
    %v4917 = vrcp.pop %v4916
    %v4918 = vmul.f32 1.0, %v4917
    %4920 = vrot.lane.b32.xlu0 %v4909, 112
    %v4921 = vpop.permute.xlu0 %4920
    %v4923 = vmul.f32 %v4918, %v4921
    %4925 = vrot.lane.b32.xlu0 %v4923, 16
    %v4926 = vpop.permute.xlu0 %4925
    %v4928 = vadd.f32 %v3656, %v4926
    %v4929 = vtanh.pop %v4928
    %v4930 = vsub.f32 1.0, %v4918
    %4932 = vrot.lane.b32.xlu0 %v4929, 120
    %v4933 = vpop.permute.xlu0 %4932
    %v4935 = vmul.f32 %v4930, %v4933
    %v4936 = vmul.f32 %v4918, %v4731
    %v4937 = vadd.f32 %v4935, %v4936
    %v4938 = vsel %vm2099, %v4937, %v4731
    %4940 = vrot.lane.b32.xlu0 %v4836, 96
    %v4941 = vpop.permute.xlu0 %4940
    %v4942 = vsel %vm225, %v4941, 0
    %4944 = vmatprep.subr.mxu0 0.0
    %4945 = vmatpush1.msra.mxu0 %v129
    %4946 = vmatprep.subr.mxu0 0.0
    %4947 = vmatpush1.msra.mxu0 0.0
    %4948 = vmatprep.subr.mxu0 0.0
    %4949 = vmatpush1.msra.mxu0 0.0
    %4950 = vmatprep.subr.mxu0 0.0
    %4951 = vmatpush1.msra.mxu0 0.0
    %4952 = vmatprep.subr.mxu0 0.0
    %4953 = vmatpush1.msra.mxu0 0.0
    %4954 = vmatprep.subr.mxu0 0.0
    %4955 = vmatpush1.msra.mxu0 0.0
    %4956 = vmatprep.subr.mxu0 0.0
    %4957 = vmatpush1.msra.mxu0 0.0
    %4958 = vmatprep.subr.mxu0 0.0
    %4959 = vmatpush1.msra.mxu0 0.0
    %4960 = vmatprep.subr.mxu0 0.0
    %4961 = vmatpush1.msra.mxu0 0.0
    %4962 = vmatprep.subr.mxu0 0.0
    %4963 = vmatpush1.msra.mxu0 0.0
    %4964 = vmatprep.subr.mxu0 0.0
    %4965 = vmatpush1.msra.mxu0 0.0
    %4966 = vmatprep.subr.mxu0 0.0
    %4967 = vmatpush1.msra.mxu0 0.0
    %4968 = vmatprep.subr.mxu0 0.0
    %4969 = vmatpush1.msra.mxu0 0.0
    %4970 = vmatprep.subr.mxu0 0.0
    %4971 = vmatpush1.msra.mxu0 0.0
    %4972 = vmatprep.subr.mxu0 0.0
    %4973 = vmatpush1.msra.mxu0 0.0
    %4974 = vmatprep.subr.mxu0 0.0
    %4975 = vmatpush1.msra.mxu0 0.0
    %4976 = vmatprep.subr.mxu0 0.0
    %4977 = vmatpush1.msra.mxu0 0.0
    %4978 = vmatprep.subr.mxu0 0.0
    %4979 = vmatpush1.msra.mxu0 0.0
    %4980 = vmatprep.subr.mxu0 0.0
    %4981 = vmatpush1.msra.mxu0 0.0
    %4982 = vmatprep.subr.mxu0 0.0
    %4983 = vmatpush1.msra.mxu0 0.0
    %4984 = vmatprep.subr.mxu0 0.0
    %4985 = vmatpush1.msra.mxu0 0.0
    %4986 = vmatprep.subr.mxu0 0.0
    %4987 = vmatpush1.msra.mxu0 0.0
    %4988 = vmatprep.subr.mxu0 0.0
    %4989 = vmatpush1.msra.mxu0 0.0
    %4990 = vmatprep.subr.mxu0 0.0
    %4991 = vmatpush1.msra.mxu0 0.0
    %4992 = vmatprep.subr.mxu0 0.0
    %4993 = vmatpush1.msra.mxu0 0.0
    %4994 = vmatprep.subr.mxu0 0.0
    %4995 = vmatpush1.msra.mxu0 0.0
    %4996 = vmatprep.subr.mxu0 0.0
    %4997 = vmatpush1.msra.mxu0 0.0
    %4998 = vmatprep.subr.mxu0 0.0
    %4999 = vmatpush1.msra.mxu0 0.0
    %5000 = vmatprep.subr.mxu0 0.0
    %5001 = vmatpush1.msra.mxu0 0.0
    %5002 = vmatprep.subr.mxu0 0.0
    %5003 = vmatpush1.msra.mxu0 0.0
    %5004 = vmatprep.subr.mxu0 0.0
    %5005 = vmatpush1.msra.mxu0 0.0
    %5006 = vmatprep.subr.mxu0 0.0
    %5007 = vmatpush1.msra.mxu0 0.0
    %5008 = vmatprep.mubr.f32.mxu0 0.0
    %5009 = vmatmul.mubr.f32.gmra.mrb[0].mxu0 %v4942
    %v5010 = vpop.f32.mrb[0].mxu0
    %v5011 = vadd.f32 %v143, %v5010
    %v5012 = vpop.f32.mrb[0].mxu0
    %5013 = vdwg.mxu0
    %5015 = vrot.lane.b32.xlu0 %v5011, 24
    %v5016 = vpop.permute.xlu0 %5015
    %v5018 = vadd.f32 %v3797, %v5016
    %v5019 = vxor.u32 %v5018, 2147483648
    %v5020 = vmul.f32 %v5019, 1.442695
    %v5021 = vpow.pop %v5020
    %v5022 = vadd.f32 %v5021, 1.0
    %v5023 = vrcp.pop %v5022
    %v5024 = vmul.f32 1.0, %v5023
    %5025 = vrot.lane.b32.xlu0 %v5011, 8
    %v5026 = vpop.permute.xlu0 %5025
    %v5028 = vmul.f32 %v5024, %v5026
    %5030 = vrot.lane.b32.xlu0 %v5028, 16
    %v5031 = vpop.permute.xlu0 %5030
    %v5033 = vadd.f32 %v3797, %v5031
    %v5034 = vtanh.pop %v5033
    %v5035 = vsub.f32 1.0, %v5024
    %5037 = vrot.lane.b32.xlu0 %v5034, 120
    %v5038 = vpop.permute.xlu0 %5037
    %v5040 = vmul.f32 %v5035, %v5038
    %v5041 = vmul.f32 %v5024, %v4836
    %v5042 = vadd.f32 %v5040, %v5041
    %v5043 = vsel %vm2210, %v5042, %v4836
    %5045 = vrot.lane.b32.xlu0 %v4938, 120
    %v5046 = vpop.permute.xlu0 %5045
    %v5047 = vsel %vm225, %v5046, 0
    %5049 = vmatprep.subr.mxu0 0.0
    %5050 = vmatpush1.msra.mxu0 %v127
    %5051 = vmatprep.subr.mxu0 0.0
    %5052 = vmatpush1.msra.mxu0 0.0
    %5053 = vmatprep.subr.mxu0 0.0
    %5054 = vmatpush1.msra.mxu0 0.0
    %5055 = vmatprep.subr.mxu0 0.0
    %5056 = vmatpush1.msra.mxu0 0.0
    %5057 = vmatprep.subr.mxu0 0.0
    %5058 = vmatpush1.msra.mxu0 0.0
    %5059 = vmatprep.subr.mxu0 0.0
    %5060 = vmatpush1.msra.mxu0 0.0
    %5061 = vmatprep.subr.mxu0 0.0
    %5062 = vmatpush1.msra.mxu0 0.0
    %5063 = vmatprep.subr.mxu0 0.0
    %5064 = vmatpush1.msra.mxu0 0.0
    %5065 = vmatprep.subr.mxu0 0.0
    %5066 = vmatpush1.msra.mxu0 0.0
    %5067 = vmatprep.subr.mxu0 0.0
    %5068 = vmatpush1.msra.mxu0 0.0
    %5069 = vmatprep.subr.mxu0 0.0
    %5070 = vmatpush1.msra.mxu0 0.0
    %5071 = vmatprep.subr.mxu0 0.0
    %5072 = vmatpush1.msra.mxu0 0.0
    %5073 = vmatprep.subr.mxu0 0.0
    %5074 = vmatpush1.msra.mxu0 0.0
    %5075 = vmatprep.subr.mxu0 0.0
    %5076 = vmatpush1.msra.mxu0 0.0
    %5077 = vmatprep.subr.mxu0 0.0
    %5078 = vmatpush1.msra.mxu0 0.0
    %5079 = vmatprep.subr.mxu0 0.0
    %5080 = vmatpush1.msra.mxu0 0.0
    %5081 = vmatprep.subr.mxu0 0.0
    %5082 = vmatpush1.msra.mxu0 0.0
    %5083 = vmatprep.subr.mxu0 0.0
    %5084 = vmatpush1.msra.mxu0 0.0
    %5085 = vmatprep.subr.mxu0 0.0
    %5086 = vmatpush1.msra.mxu0 0.0
    %5087 = vmatprep.subr.mxu0 0.0
    %5088 = vmatpush1.msra.mxu0 0.0
    %5089 = vmatprep.subr.mxu0 0.0
    %5090 = vmatpush1.msra.mxu0 0.0
    %5091 = vmatprep.subr.mxu0 0.0
    %5092 = vmatpush1.msra.mxu0 0.0
    %5093 = vmatprep.subr.mxu0 0.0
    %5094 = vmatpush1.msra.mxu0 0.0
    %5095 = vmatprep.subr.mxu0 0.0
    %5096 = vmatpush1.msra.mxu0 0.0
    %5097 = vmatprep.subr.mxu0 0.0
    %5098 = vmatpush1.msra.mxu0 0.0
    %5099 = vmatprep.subr.mxu0 0.0
    %5100 = vmatpush1.msra.mxu0 0.0
    %5101 = vmatprep.subr.mxu0 0.0
    %5102 = vmatpush1.msra.mxu0 0.0
    %5103 = vmatprep.subr.mxu0 0.0
    %5104 = vmatpush1.msra.mxu0 0.0
    %5105 = vmatprep.subr.mxu0 0.0
    %5106 = vmatpush1.msra.mxu0 0.0
    %5107 = vmatprep.subr.mxu0 0.0
    %5108 = vmatpush1.msra.mxu0 0.0
    %5109 = vmatprep.subr.mxu0 0.0
    %5110 = vmatpush1.msra.mxu0 0.0
    %5111 = vmatprep.subr.mxu0 0.0
    %5112 = vmatpush1.msra.mxu0 0.0
    %5113 = vmatprep.mubr.f32.mxu0 0.0
    %5114 = vmatmul.mubr.f32.gmra.mrb[0].mxu0 %v5047
    %v5115 = vpop.f32.mrb[0].mxu0
    %v5116 = vadd.f32 %v135, %v5115
    %v5117 = vpop.f32.mrb[0].mxu0
    %5118 = vdwg.mxu0
    %v5119 = vadd.f32 %v3797, %v5116
    %v5120 = vxor.u32 %v5119, 2147483648
    %v5121 = vmul.f32 %v5120, 1.442695
    %v5122 = vpow.pop %v5121
    %v5123 = vadd.f32 %v5122, 1.0
    %v5124 = vrcp.pop %v5123
    %v5125 = vmul.f32 1.0, %v5124
    %5127 = vrot.lane.b32.xlu0 %v5116, 112
    %v5128 = vpop.permute.xlu0 %5127
    %v5130 = vmul.f32 %v5125, %v5128
    %5132 = vrot.lane.b32.xlu0 %v5130, 16
    %v5133 = vpop.permute.xlu0 %5132
    %v5135 = vadd.f32 %v3797, %v5133
    %v5136 = vtanh.pop %v5135
    %v5137 = vsub.f32 1.0, %v5125
    %5139 = vrot.lane.b32.xlu0 %v5136, 120
    %v5140 = vpop.permute.xlu0 %5139
    %v5142 = vmul.f32 %v5137, %v5140
    %v5143 = vmul.f32 %v5125, %v4938
    %v5144 = vadd.f32 %v5142, %v5143
    %v5145 = vsel %vm2318, %v5144, %v4938
    %5147 = vrot.lane.b32.xlu0 %v5043, 96
    %v5148 = vpop.permute.xlu0 %5147
    %v5149 = vsel %vm225, %v5148, 0
    %5151 = vmatprep.subr.mxu0 0.0
    %5152 = vmatpush1.msra.mxu0 %v129
    %5153 = vmatprep.subr.mxu0 0.0
    %5154 = vmatpush1.msra.mxu0 0.0
    %5155 = vmatprep.subr.mxu0 0.0
    %5156 = vmatpush1.msra.mxu0 0.0
    %5157 = vmatprep.subr.mxu0 0.0
    %5158 = vmatpush1.msra.mxu0 0.0
    %5159 = vmatprep.subr.mxu0 0.0
    %5160 = vmatpush1.msra.mxu0 0.0
    %5161 = vmatprep.subr.mxu0 0.0
    %5162 = vmatpush1.msra.mxu0 0.0
    %5163 = vmatprep.subr.mxu0 0.0
    %5164 = vmatpush1.msra.mxu0 0.0
    %5165 = vmatprep.subr.mxu0 0.0
    %5166 = vmatpush1.msra.mxu0 0.0
    %5167 = vmatprep.subr.mxu0 0.0
    %5168 = vmatpush1.msra.mxu0 0.0
    %5169 = vmatprep.subr.mxu0 0.0
    %5170 = vmatpush1.msra.mxu0 0.0
    %5171 = vmatprep.subr.mxu0 0.0
    %5172 = vmatpush1.msra.mxu0 0.0
    %5173 = vmatprep.subr.mxu0 0.0
    %5174 = vmatpush1.msra.mxu0 0.0
    %5175 = vmatprep.subr.mxu0 0.0
    %5176 = vmatpush1.msra.mxu0 0.0
    %5177 = vmatprep.subr.mxu0 0.0
    %5178 = vmatpush1.msra.mxu0 0.0
    %5179 = vmatprep.subr.mxu0 0.0
    %5180 = vmatpush1.msra.mxu0 0.0
    %5181 = vmatprep.subr.mxu0 0.0
    %5182 = vmatpush1.msra.mxu0 0.0
    %5183 = vmatprep.subr.mxu0 0.0
    %5184 = vmatpush1.msra.mxu0 0.0
    %5185 = vmatprep.subr.mxu0 0.0
    %5186 = vmatpush1.msra.mxu0 0.0
    %5187 = vmatprep.subr.mxu0 0.0
    %5188 = vmatpush1.msra.mxu0 0.0
    %5189 = vmatprep.subr.mxu0 0.0
    %5190 = vmatpush1.msra.mxu0 0.0
    %5191 = vmatprep.subr.mxu0 0.0
    %5192 = vmatpush1.msra.mxu0 0.0
    %5193 = vmatprep.subr.mxu0 0.0
    %5194 = vmatpush1.msra.mxu0 0.0
    %5195 = vmatprep.subr.mxu0 0.0
    %5196 = vmatpush1.msra.mxu0 0.0
    %5197 = vmatprep.subr.mxu0 0.0
    %5198 = vmatpush1.msra.mxu0 0.0
    %5199 = vmatprep.subr.mxu0 0.0
    %5200 = vmatpush1.msra.mxu0 0.0
    %5201 = vmatprep.subr.mxu0 0.0
    %5202 = vmatpush1.msra.mxu0 0.0
    %5203 = vmatprep.subr.mxu0 0.0
    %5204 = vmatpush1.msra.mxu0 0.0
    %5205 = vmatprep.subr.mxu0 0.0
    %5206 = vmatpush1.msra.mxu0 0.0
    %5207 = vmatprep.subr.mxu0 0.0
    %5208 = vmatpush1.msra.mxu0 0.0
    %5209 = vmatprep.subr.mxu0 0.0
    %5210 = vmatpush1.msra.mxu0 0.0
    %5211 = vmatprep.subr.mxu0 0.0
    %5212 = vmatpush1.msra.mxu0 0.0
    %5213 = vmatprep.subr.mxu0 0.0
    %5214 = vmatpush1.msra.mxu0 0.0
    %5215 = vmatprep.mubr.f32.mxu0 0.0
    %5216 = vmatmul.mubr.f32.gmra.mrb[0].mxu0 %v5149
    %v5217 = vpop.f32.mrb[0].mxu0
    %v5218 = vadd.f32 %v143, %v5217
    %v5219 = vpop.f32.mrb[0].mxu0
    %5220 = vdwg.mxu0
    %5222 = vrot.lane.b32.xlu0 %v5218, 24
    %v5223 = vpop.permute.xlu0 %5222
    %v5225 = vadd.f32 %v3656, %v5223
    %v5226 = vxor.u32 %v5225, 2147483648
    %v5227 = vmul.f32 %v5226, 1.442695
    %v5228 = vpow.pop %v5227
    %v5229 = vadd.f32 %v5228, 1.0
    %v5230 = vrcp.pop %v5229
    %v5231 = vmul.f32 1.0, %v5230
    %5232 = vrot.lane.b32.xlu0 %v5218, 8
    %v5233 = vpop.permute.xlu0 %5232
    %v5235 = vmul.f32 %v5231, %v5233
    %5237 = vrot.lane.b32.xlu0 %v5235, 16
    %v5238 = vpop.permute.xlu0 %5237
    %v5240 = vadd.f32 %v3656, %v5238
    %v5241 = vtanh.pop %v5240
    %v5242 = vsub.f32 1.0, %v5231
    %5244 = vrot.lane.b32.xlu0 %v5241, 120
    %v5245 = vpop.permute.xlu0 %5244
    %v5247 = vmul.f32 %v5242, %v5245
    %v5248 = vmul.f32 %v5231, %v5043
    %v5249 = vadd.f32 %v5247, %v5248
    %v5250 = vsel %vm2429, %v5249, %v5043
    %5252 = vrot.lane.b32.xlu0 %v5145, 120
    %v5253 = vpop.permute.xlu0 %5252
    %v5254 = vsel %vm225, %v5253, 0
    %5256 = vmatprep.subr.mxu0 0.0
    %5257 = vmatpush1.msra.mxu0 %v127
    %5258 = vmatprep.subr.mxu0 0.0
    %5259 = vmatpush1.msra.mxu0 0.0
    %5260 = vmatprep.subr.mxu0 0.0
    %5261 = vmatpush1.msra.mxu0 0.0
    %5262 = vmatprep.subr.mxu0 0.0
    %5263 = vmatpush1.msra.mxu0 0.0
    %5264 = vmatprep.subr.mxu0 0.0
    %5265 = vmatpush1.msra.mxu0 0.0
    %5266 = vmatprep.subr.mxu0 0.0
    %5267 = vmatpush1.msra.mxu0 0.0
    %5268 = vmatprep.subr.mxu0 0.0
    %5269 = vmatpush1.msra.mxu0 0.0
    %5270 = vmatprep.subr.mxu0 0.0
    %5271 = vmatpush1.msra.mxu0 0.0
    %5272 = vmatprep.subr.mxu0 0.0
    %5273 = vmatpush1.msra.mxu0 0.0
    %5274 = vmatprep.subr.mxu0 0.0
    %5275 = vmatpush1.msra.mxu0 0.0
    %5276 = vmatprep.subr.mxu0 0.0
    %5277 = vmatpush1.msra.mxu0 0.0
    %5278 = vmatprep.subr.mxu0 0.0
    %5279 = vmatpush1.msra.mxu0 0.0
    %5280 = vmatprep.subr.mxu0 0.0
    %5281 = vmatpush1.msra.mxu0 0.0
    %5282 = vmatprep.subr.mxu0 0.0
    %5283 = vmatpush1.msra.mxu0 0.0
    %5284 = vmatprep.subr.mxu0 0.0
    %5285 = vmatpush1.msra.mxu0 0.0
    %5286 = vmatprep.subr.mxu0 0.0
    %5287 = vmatpush1.msra.mxu0 0.0
    %5288 = vmatprep.subr.mxu0 0.0
    %5289 = vmatpush1.msra.mxu0 0.0
    %5290 = vmatprep.subr.mxu0 0.0
    %5291 = vmatpush1.msra.mxu0 0.0
    %5292 = vmatprep.subr.mxu0 0.0
    %5293 = vmatpush1.msra.mxu0 0.0
    %5294 = vmatprep.subr.mxu0 0.0
    %5295 = vmatpush1.msra.mxu0 0.0
    %5296 = vmatprep.subr.mxu0 0.0
    %5297 = vmatpush1.msra.mxu0 0.0
    %5298 = vmatprep.subr.mxu0 0.0
    %5299 = vmatpush1.msra.mxu0 0.0
    %5300 = vmatprep.subr.mxu0 0.0
    %5301 = vmatpush1.msra.mxu0 0.0
    %5302 = vmatprep.subr.mxu0 0.0
    %5303 = vmatpush1.msra.mxu0 0.0
    %5304 = vmatprep.subr.mxu0 0.0
    %5305 = vmatpush1.msra.mxu0 0.0
    %5306 = vmatprep.subr.mxu0 0.0
    %5307 = vmatpush1.msra.mxu0 0.0
    %5308 = vmatprep.subr.mxu0 0.0
    %5309 = vmatpush1.msra.mxu0 0.0
    %5310 = vmatprep.subr.mxu0 0.0
    %5311 = vmatpush1.msra.mxu0 0.0
    %5312 = vmatprep.subr.mxu0 0.0
    %5313 = vmatpush1.msra.mxu0 0.0
    %5314 = vmatprep.subr.mxu0 0.0
    %5315 = vmatpush1.msra.mxu0 0.0
    %5316 = vmatprep.subr.mxu0 0.0
    %5317 = vmatpush1.msra.mxu0 0.0
    %5318 = vmatprep.subr.mxu0 0.0
    %5319 = vmatpush1.msra.mxu0 0.0
    %5320 = vmatprep.mubr.f32.mxu0 0.0
    %5321 = vmatmul.mubr.f32.gmra.mrb[0].mxu0 %v5254
    %v5322 = vpop.f32.mrb[0].mxu0
    %v5323 = vadd.f32 %v135, %v5322
    %v5324 = vpop.f32.mrb[0].mxu0
    %5325 = vdwg.mxu0
    %v5326 = vadd.f32 %v3938, %v5323
    %v5327 = vxor.u32 %v5326, 2147483648
    %v5328 = vmul.f32 %v5327, 1.442695
    %v5329 = vpow.pop %v5328
    %v5330 = vadd.f32 %v5329, 1.0
    %v5331 = vrcp.pop %v5330
    %v5332 = vmul.f32 1.0, %v5331
    %5334 = vrot.lane.b32.xlu0 %v5323, 112
    %v5335 = vpop.permute.xlu0 %5334
    %v5337 = vmul.f32 %v5332, %v5335
    %5339 = vrot.lane.b32.xlu0 %v5337, 16
    %v5340 = vpop.permute.xlu0 %5339
    %v5342 = vadd.f32 %v3938, %v5340
    %v5343 = vtanh.pop %v5342
    %v5344 = vsub.f32 1.0, %v5332
    %5346 = vrot.lane.b32.xlu0 %v5343, 120
    %v5347 = vpop.permute.xlu0 %5346
    %v5349 = vmul.f32 %v5344, %v5347
    %v5350 = vmul.f32 %v5332, %v5145
    %v5351 = vadd.f32 %v5349, %v5350
    %v5352 = vsel %vm2537, %v5351, %v5145
    %5354 = vrot.lane.b32.xlu0 %v5250, 96
    %v5355 = vpop.permute.xlu0 %5354
    %v5356 = vsel %vm225, %v5355, 0
    %5358 = vmatprep.subr.mxu0 0.0
    %5359 = vmatpush1.msra.mxu0 %v129
    %5360 = vmatprep.subr.mxu0 0.0
    %5361 = vmatpush1.msra.mxu0 0.0
    %5362 = vmatprep.subr.mxu0 0.0
    %5363 = vmatpush1.msra.mxu0 0.0
    %5364 = vmatprep.subr.mxu0 0.0
    %5365 = vmatpush1.msra.mxu0 0.0
    %5366 = vmatprep.subr.mxu0 0.0
    %5367 = vmatpush1.msra.mxu0 0.0
    %5368 = vmatprep.subr.mxu0 0.0
    %5369 = vmatpush1.msra.mxu0 0.0
    %5370 = vmatprep.subr.mxu0 0.0
    %5371 = vmatpush1.msra.mxu0 0.0
    %5372 = vmatprep.subr.mxu0 0.0
    %5373 = vmatpush1.msra.mxu0 0.0
    %5374 = vmatprep.subr.mxu0 0.0
    %5375 = vmatpush1.msra.mxu0 0.0
    %5376 = vmatprep.subr.mxu0 0.0
    %5377 = vmatpush1.msra.mxu0 0.0
    %5378 = vmatprep.subr.mxu0 0.0
    %5379 = vmatpush1.msra.mxu0 0.0
    %5380 = vmatprep.subr.mxu0 0.0
    %5381 = vmatpush1.msra.mxu0 0.0
    %5382 = vmatprep.subr.mxu0 0.0
    %5383 = vmatpush1.msra.mxu0 0.0
    %5384 = vmatprep.subr.mxu0 0.0
    %5385 = vmatpush1.msra.mxu0 0.0
    %5386 = vmatprep.subr.mxu0 0.0
    %5387 = vmatpush1.msra.mxu0 0.0
    %5388 = vmatprep.subr.mxu0 0.0
    %5389 = vmatpush1.msra.mxu0 0.0
    %5390 = vmatprep.subr.mxu0 0.0
    %5391 = vmatpush1.msra.mxu0 0.0
    %5392 = vmatprep.subr.mxu0 0.0
    %5393 = vmatpush1.msra.mxu0 0.0
    %5394 = vmatprep.subr.mxu0 0.0
    %5395 = vmatpush1.msra.mxu0 0.0
    %5396 = vmatprep.subr.mxu0 0.0
    %5397 = vmatpush1.msra.mxu0 0.0
    %5398 = vmatprep.subr.mxu0 0.0
    %5399 = vmatpush1.msra.mxu0 0.0
    %5400 = vmatprep.subr.mxu0 0.0
    %5401 = vmatpush1.msra.mxu0 0.0
    %5402 = vmatprep.subr.mxu0 0.0
    %5403 = vmatpush1.msra.mxu0 0.0
    %5404 = vmatprep.subr.mxu0 0.0
    %5405 = vmatpush1.msra.mxu0 0.0
    %5406 = vmatprep.subr.mxu0 0.0
    %5407 = vmatpush1.msra.mxu0 0.0
    %5408 = vmatprep.subr.mxu0 0.0
    %5409 = vmatpush1.msra.mxu0 0.0
    %5410 = vmatprep.subr.mxu0 0.0
    %5411 = vmatpush1.msra.mxu0 0.0
    %5412 = vmatprep.subr.mxu0 0.0
    %5413 = vmatpush1.msra.mxu0 0.0
    %5414 = vmatprep.subr.mxu0 0.0
    %5415 = vmatpush1.msra.mxu0 0.0
    %5416 = vmatprep.subr.mxu0 0.0
    %5417 = vmatpush1.msra.mxu0 0.0
    %5418 = vmatprep.subr.mxu0 0.0
    %5419 = vmatpush1.msra.mxu0 0.0
    %5420 = vmatprep.subr.mxu0 0.0
    %5421 = vmatpush1.msra.mxu0 0.0
    %5422 = vmatprep.mubr.f32.mxu0 0.0
    %5423 = vmatmul.mubr.f32.gmra.mrb[0].mxu0 %v5356
    %v5424 = vpop.f32.mrb[0].mxu0
    %v5425 = vadd.f32 %v143, %v5424
    %v5426 = vpop.f32.mrb[0].mxu0
    %5427 = vdwg.mxu0
    %5429 = vrot.lane.b32.xlu0 %v5425, 24
    %v5430 = vpop.permute.xlu0 %5429
    %v5432 = vadd.f32 %v3515, %v5430
    %v5433 = vxor.u32 %v5432, 2147483648
    %v5434 = vmul.f32 %v5433, 1.442695
    %v5435 = vpow.pop %v5434
    %v5436 = vadd.f32 %v5435, 1.0
    %v5437 = vrcp.pop %v5436
    %v5438 = vmul.f32 1.0, %v5437
    %5439 = vrot.lane.b32.xlu0 %v5425, 8
    %v5440 = vpop.permute.xlu0 %5439
    %v5442 = vmul.f32 %v5438, %v5440
    %5444 = vrot.lane.b32.xlu0 %v5442, 16
    %v5445 = vpop.permute.xlu0 %5444
    %v5447 = vadd.f32 %v3515, %v5445
    %v5448 = vtanh.pop %v5447
    %v5449 = vsub.f32 1.0, %v5438
    %5451 = vrot.lane.b32.xlu0 %v5448, 120
    %v5452 = vpop.permute.xlu0 %5451
    %v5454 = vmul.f32 %v5449, %v5452
    %v5455 = vmul.f32 %v5438, %v5250
    %v5456 = vadd.f32 %v5454, %v5455
    %v5457 = vsel %vm2648, %v5456, %v5250
    %5459 = vrot.lane.b32.xlu0 %v5352, 120
    %v5460 = vpop.permute.xlu0 %5459
    %v5461 = vsel %vm225, %v5460, 0
    %5463 = vmatprep.subr.mxu0 0.0
    %5464 = vmatpush1.msra.mxu0 %v127
    %5465 = vmatprep.subr.mxu0 0.0
    %5466 = vmatpush1.msra.mxu0 0.0
    %5467 = vmatprep.subr.mxu0 0.0
    %5468 = vmatpush1.msra.mxu0 0.0
    %5469 = vmatprep.subr.mxu0 0.0
    %5470 = vmatpush1.msra.mxu0 0.0
    %5471 = vmatprep.subr.mxu0 0.0
    %5472 = vmatpush1.msra.mxu0 0.0
    %5473 = vmatprep.subr.mxu0 0.0
    %5474 = vmatpush1.msra.mxu0 0.0
    %5475 = vmatprep.subr.mxu0 0.0
    %5476 = vmatpush1.msra.mxu0 0.0
    %5477 = vmatprep.subr.mxu0 0.0
    %5478 = vmatpush1.msra.mxu0 0.0
    %5479 = vmatprep.subr.mxu0 0.0
    %5480 = vmatpush1.msra.mxu0 0.0
    %5481 = vmatprep.subr.mxu0 0.0
    %5482 = vmatpush1.msra.mxu0 0.0
    %5483 = vmatprep.subr.mxu0 0.0
    %5484 = vmatpush1.msra.mxu0 0.0
    %5485 = vmatprep.subr.mxu0 0.0
    %5486 = vmatpush1.msra.mxu0 0.0
    %5487 = vmatprep.subr.mxu0 0.0
    %5488 = vmatpush1.msra.mxu0 0.0
    %5489 = vmatprep.subr.mxu0 0.0
    %5490 = vmatpush1.msra.mxu0 0.0
    %5491 = vmatprep.subr.mxu0 0.0
    %5492 = vmatpush1.msra.mxu0 0.0
    %5493 = vmatprep.subr.mxu0 0.0
    %5494 = vmatpush1.msra.mxu0 0.0
    %5495 = vmatprep.subr.mxu0 0.0
    %5496 = vmatpush1.msra.mxu0 0.0
    %5497 = vmatprep.subr.mxu0 0.0
    %5498 = vmatpush1.msra.mxu0 0.0
    %5499 = vmatprep.subr.mxu0 0.0
    %5500 = vmatpush1.msra.mxu0 0.0
    %5501 = vmatprep.subr.mxu0 0.0
    %5502 = vmatpush1.msra.mxu0 0.0
    %5503 = vmatprep.subr.mxu0 0.0
    %5504 = vmatpush1.msra.mxu0 0.0
    %5505 = vmatprep.subr.mxu0 0.0
    %5506 = vmatpush1.msra.mxu0 0.0
    %5507 = vmatprep.subr.mxu0 0.0
    %5508 = vmatpush1.msra.mxu0 0.0
    %5509 = vmatprep.subr.mxu0 0.0
    %5510 = vmatpush1.msra.mxu0 0.0
    %5511 = vmatprep.subr.mxu0 0.0
    %5512 = vmatpush1.msra.mxu0 0.0
    %5513 = vmatprep.subr.mxu0 0.0
    %5514 = vmatpush1.msra.mxu0 0.0
    %5515 = vmatprep.subr.mxu0 0.0
    %5516 = vmatpush1.msra.mxu0 0.0
    %5517 = vmatprep.subr.mxu0 0.0
    %5518 = vmatpush1.msra.mxu0 0.0
    %5519 = vmatprep.subr.mxu0 0.0
    %5520 = vmatpush1.msra.mxu0 0.0
    %5521 = vmatprep.subr.mxu0 0.0
    %5522 = vmatpush1.msra.mxu0 0.0
    %5523 = vmatprep.subr.mxu0 0.0
    %5524 = vmatpush1.msra.mxu0 0.0
    %5525 = vmatprep.subr.mxu0 0.0
    %5526 = vmatpush1.msra.mxu0 0.0
    %5527 = vmatprep.mubr.f32.mxu0 0.0
    %5528 = vmatmul.mubr.f32.gmra.mrb[0].mxu0 %v5461
    %v5529 = vpop.f32.mrb[0].mxu0
    %v5530 = vadd.f32 %v135, %v5529
    %v5531 = vpop.f32.mrb[0].mxu0
    %5532 = vdwg.mxu0
    %v5533 = vadd.f32 %v4079, %v5530
    %v5534 = vxor.u32 %v5533, 2147483648
    %v5535 = vmul.f32 %v5534, 1.442695
    %v5536 = vpow.pop %v5535
    %v5537 = vadd.f32 %v5536, 1.0
    %v5538 = vrcp.pop %v5537
    %v5539 = vmul.f32 1.0, %v5538
    %5541 = vrot.lane.b32.xlu0 %v5530, 112
    %v5542 = vpop.permute.xlu0 %5541
    %v5544 = vmul.f32 %v5539, %v5542
    %5546 = vrot.lane.b32.xlu0 %v5544, 16
    %v5547 = vpop.permute.xlu0 %5546
    %v5549 = vadd.f32 %v4079, %v5547
    %v5550 = vtanh.pop %v5549
    %v5551 = vsub.f32 1.0, %v5539
    %5553 = vrot.lane.b32.xlu0 %v5550, 120
    %v5554 = vpop.permute.xlu0 %5553
    %v5556 = vmul.f32 %v5551, %v5554
    %v5557 = vmul.f32 %v5539, %v5352
    %v5558 = vadd.f32 %v5556, %v5557
    %v5559 = vsel %vm2756, %v5558, %v5352
    %5561 = vrot.lane.b32.xlu0 %v5457, 96
    %v5562 = vpop.permute.xlu0 %5561
    %v5563 = vsel %vm225, %v5562, 0
    %5565 = vmatprep.subr.mxu0 0.0
    %5566 = vmatpush1.msra.mxu0 %v129
    %5567 = vmatprep.subr.mxu0 0.0
    %5568 = vmatpush1.msra.mxu0 0.0
    %5569 = vmatprep.subr.mxu0 0.0
    %5570 = vmatpush1.msra.mxu0 0.0
    %5571 = vmatprep.subr.mxu0 0.0
    %5572 = vmatpush1.msra.mxu0 0.0
    %5573 = vmatprep.subr.mxu0 0.0
    %5574 = vmatpush1.msra.mxu0 0.0
    %5575 = vmatprep.subr.mxu0 0.0
    %5576 = vmatpush1.msra.mxu0 0.0
    %5577 = vmatprep.subr.mxu0 0.0
    %5578 = vmatpush1.msra.mxu0 0.0
    %5579 = vmatprep.subr.mxu0 0.0
    %5580 = vmatpush1.msra.mxu0 0.0
    %5581 = vmatprep.subr.mxu0 0.0
    %5582 = vmatpush1.msra.mxu0 0.0
    %5583 = vmatprep.subr.mxu0 0.0
    %5584 = vmatpush1.msra.mxu0 0.0
    %5585 = vmatprep.subr.mxu0 0.0
    %5586 = vmatpush1.msra.mxu0 0.0
    %5587 = vmatprep.subr.mxu0 0.0
    %5588 = vmatpush1.msra.mxu0 0.0
    %5589 = vmatprep.subr.mxu0 0.0
    %5590 = vmatpush1.msra.mxu0 0.0
    %5591 = vmatprep.subr.mxu0 0.0
    %5592 = vmatpush1.msra.mxu0 0.0
    %5593 = vmatprep.subr.mxu0 0.0
    %5594 = vmatpush1.msra.mxu0 0.0
    %5595 = vmatprep.subr.mxu0 0.0
    %5596 = vmatpush1.msra.mxu0 0.0
    %5597 = vmatprep.subr.mxu0 0.0
    %5598 = vmatpush1.msra.mxu0 0.0
    %5599 = vmatprep.subr.mxu0 0.0
    %5600 = vmatpush1.msra.mxu0 0.0
    %5601 = vmatprep.subr.mxu0 0.0
    %5602 = vmatpush1.msra.mxu0 0.0
    %5603 = vmatprep.subr.mxu0 0.0
    %5604 = vmatpush1.msra.mxu0 0.0
    %5605 = vmatprep.subr.mxu0 0.0
    %5606 = vmatpush1.msra.mxu0 0.0
    %5607 = vmatprep.subr.mxu0 0.0
    %5608 = vmatpush1.msra.mxu0 0.0
    %5609 = vmatprep.subr.mxu0 0.0
    %5610 = vmatpush1.msra.mxu0 0.0
    %5611 = vmatprep.subr.mxu0 0.0
    %5612 = vmatpush1.msra.mxu0 0.0
    %5613 = vmatprep.subr.mxu0 0.0
    %5614 = vmatpush1.msra.mxu0 0.0
    %5615 = vmatprep.subr.mxu0 0.0
    %5616 = vmatpush1.msra.mxu0 0.0
    %5617 = vmatprep.subr.mxu0 0.0
    %5618 = vmatpush1.msra.mxu0 0.0
    %5619 = vmatprep.subr.mxu0 0.0
    %5620 = vmatpush1.msra.mxu0 0.0
    %5621 = vmatprep.subr.mxu0 0.0
    %5622 = vmatpush1.msra.mxu0 0.0
    %5623 = vmatprep.subr.mxu0 0.0
    %5624 = vmatpush1.msra.mxu0 0.0
    %5625 = vmatprep.subr.mxu0 0.0
    %5626 = vmatpush1.msra.mxu0 0.0
    %5627 = vmatprep.subr.mxu0 0.0
    %5628 = vmatpush1.msra.mxu0 0.0
    %5629 = vmatprep.mubr.f32.mxu0 0.0
    %5630 = vmatmul.mubr.f32.gmra.mrb[0].mxu0 %v5563
    %v5631 = vpop.f32.mrb[0].mxu0
    %v5632 = vadd.f32 %v143, %v5631
    %v5633 = vpop.f32.mrb[0].mxu0
    %5634 = vdwg.mxu0
    %5636 = vrot.lane.b32.xlu0 %v5632, 24
    %v5637 = vpop.permute.xlu0 %5636
    %v5639 = vadd.f32 %v3374, %v5637
    %v5640 = vxor.u32 %v5639, 2147483648
    %v5641 = vmul.f32 %v5640, 1.442695
    %v5642 = vpow.pop %v5641
    %v5643 = vadd.f32 %v5642, 1.0
    %v5644 = vrcp.pop %v5643
    %v5645 = vmul.f32 1.0, %v5644
    %5646 = vrot.lane.b32.xlu0 %v5632, 8
    %v5647 = vpop.permute.xlu0 %5646
    %v5649 = vmul.f32 %v5645, %v5647
    %5651 = vrot.lane.b32.xlu0 %v5649, 16
    %v5652 = vpop.permute.xlu0 %5651
    %v5654 = vadd.f32 %v3374, %v5652
    %v5655 = vtanh.pop %v5654
    %v5656 = vsub.f32 1.0, %v5645
    %5658 = vrot.lane.b32.xlu0 %v5655, 120
    %v5659 = vpop.permute.xlu0 %5658
    %v5661 = vmul.f32 %v5656, %v5659
    %v5662 = vmul.f32 %v5645, %v5457
    %v5663 = vadd.f32 %v5661, %v5662
    %v5664 = vsel %vm2867, %v5663, %v5457
    %5666 = vrot.lane.b32.xlu0 %v5559, 120
    %v5667 = vpop.permute.xlu0 %5666
    %v5668 = vsel %vm225, %v5667, 0
    %5670 = vmatprep.subr.mxu0 0.0
    %5671 = vmatpush1.msra.mxu0 %v127
    %5672 = vmatprep.subr.mxu0 0.0
    %5673 = vmatpush1.msra.mxu0 0.0
    %5674 = vmatprep.subr.mxu0 0.0
    %5675 = vmatpush1.msra.mxu0 0.0
    %5676 = vmatprep.subr.mxu0 0.0
    %5677 = vmatpush1.msra.mxu0 0.0
    %5678 = vmatprep.subr.mxu0 0.0
    %5679 = vmatpush1.msra.mxu0 0.0
    %5680 = vmatprep.subr.mxu0 0.0
    %5681 = vmatpush1.msra.mxu0 0.0
    %5682 = vmatprep.subr.mxu0 0.0
    %5683 = vmatpush1.msra.mxu0 0.0
    %5684 = vmatprep.subr.mxu0 0.0
    %5685 = vmatpush1.msra.mxu0 0.0
    %5686 = vmatprep.subr.mxu0 0.0
    %5687 = vmatpush1.msra.mxu0 0.0
    %5688 = vmatprep.subr.mxu0 0.0
    %5689 = vmatpush1.msra.mxu0 0.0
    %5690 = vmatprep.subr.mxu0 0.0
    %5691 = vmatpush1.msra.mxu0 0.0
    %5692 = vmatprep.subr.mxu0 0.0
    %5693 = vmatpush1.msra.mxu0 0.0
    %5694 = vmatprep.subr.mxu0 0.0
    %5695 = vmatpush1.msra.mxu0 0.0
    %5696 = vmatprep.subr.mxu0 0.0
    %5697 = vmatpush1.msra.mxu0 0.0
    %5698 = vmatprep.subr.mxu0 0.0
    %5699 = vmatpush1.msra.mxu0 0.0
    %5700 = vmatprep.subr.mxu0 0.0
    %5701 = vmatpush1.msra.mxu0 0.0
    %5702 = vmatprep.subr.mxu0 0.0
    %5703 = vmatpush1.msra.mxu0 0.0
    %5704 = vmatprep.subr.mxu0 0.0
    %5705 = vmatpush1.msra.mxu0 0.0
    %5706 = vmatprep.subr.mxu0 0.0
    %5707 = vmatpush1.msra.mxu0 0.0
    %5708 = vmatprep.subr.mxu0 0.0
    %5709 = vmatpush1.msra.mxu0 0.0
    %5710 = vmatprep.subr.mxu0 0.0
    %5711 = vmatpush1.msra.mxu0 0.0
    %5712 = vmatprep.subr.mxu0 0.0
    %5713 = vmatpush1.msra.mxu0 0.0
    %5714 = vmatprep.subr.mxu0 0.0
    %5715 = vmatpush1.msra.mxu0 0.0
    %5716 = vmatprep.subr.mxu0 0.0
    %5717 = vmatpush1.msra.mxu0 0.0
    %5718 = vmatprep.subr.mxu0 0.0
    %5719 = vmatpush1.msra.mxu0 0.0
    %5720 = vmatprep.subr.mxu0 0.0
    %5721 = vmatpush1.msra.mxu0 0.0
    %5722 = vmatprep.subr.mxu0 0.0
    %5723 = vmatpush1.msra.mxu0 0.0
    %5724 = vmatprep.subr.mxu0 0.0
    %5725 = vmatpush1.msra.mxu0 0.0
    %5726 = vmatprep.subr.mxu0 0.0
    %5727 = vmatpush1.msra.mxu0 0.0
    %5728 = vmatprep.subr.mxu0 0.0
    %5729 = vmatpush1.msra.mxu0 0.0
    %5730 = vmatprep.subr.mxu0 0.0
    %5731 = vmatpush1.msra.mxu0 0.0
    %5732 = vmatprep.subr.mxu0 0.0
    %5733 = vmatpush1.msra.mxu0 0.0
    %5734 = vmatprep.mubr.f32.mxu0 0.0
    %5735 = vmatmul.mubr.f32.gmra.mrb[0].mxu0 %v5668
    %v5736 = vpop.f32.mrb[0].mxu0
    %v5737 = vadd.f32 %v135, %v5736
    %v5738 = vpop.f32.mrb[0].mxu0
    %5739 = vdwg.mxu0
    %v5740 = vadd.f32 %v4225, %v5737
    %v5741 = vxor.u32 %v5740, 2147483648
    %v5742 = vmul.f32 %v5741, 1.442695
    %v5743 = vpow.pop %v5742
    %v5744 = vadd.f32 %v5743, 1.0
    %v5745 = vrcp.pop %v5744
    %v5746 = vmul.f32 1.0, %v5745
    %5748 = vrot.lane.b32.xlu0 %v5737, 112
    %v5749 = vpop.permute.xlu0 %5748
    %v5751 = vmul.f32 %v5746, %v5749
    %5753 = vrot.lane.b32.xlu0 %v5751, 16
    %v5754 = vpop.permute.xlu0 %5753
    %v5756 = vadd.f32 %v4225, %v5754
    %v5757 = vtanh.pop %v5756
    %v5758 = vsub.f32 1.0, %v5746
    %5760 = vrot.lane.b32.xlu0 %v5757, 120
    %v5761 = vpop.permute.xlu0 %5760
    %v5763 = vmul.f32 %v5758, %v5761
    %v5764 = vmul.f32 %v5746, %v5559
    %v5765 = vadd.f32 %v5763, %v5764
    %v5766 = vsel %vm2975, %v5765, %v5559
    %5768 = vrot.lane.b32.xlu0 %v5664, 96
    %v5769 = vpop.permute.xlu0 %5768
    %v5770 = vsel %vm225, %v5769, 0
    %5772 = vmatprep.subr.mxu0 0.0
    %5773 = vmatpush1.msra.mxu0 %v129
    %5774 = vmatprep.subr.mxu0 0.0
    %5775 = vmatpush1.msra.mxu0 0.0
    %5776 = vmatprep.subr.mxu0 0.0
    %5777 = vmatpush1.msra.mxu0 0.0
    %5778 = vmatprep.subr.mxu0 0.0
    %5779 = vmatpush1.msra.mxu0 0.0
    %5780 = vmatprep.subr.mxu0 0.0
    %5781 = vmatpush1.msra.mxu0 0.0
    %5782 = vmatprep.subr.mxu0 0.0
    %5783 = vmatpush1.msra.mxu0 0.0
    %5784 = vmatprep.subr.mxu0 0.0
    %5785 = vmatpush1.msra.mxu0 0.0
    %5786 = vmatprep.subr.mxu0 0.0
    %5787 = vmatpush1.msra.mxu0 0.0
    %5788 = vmatprep.subr.mxu0 0.0
    %5789 = vmatpush1.msra.mxu0 0.0
    %5790 = vmatprep.subr.mxu0 0.0
    %5791 = vmatpush1.msra.mxu0 0.0
    %5792 = vmatprep.subr.mxu0 0.0
    %5793 = vmatpush1.msra.mxu0 0.0
    %5794 = vmatprep.subr.mxu0 0.0
    %5795 = vmatpush1.msra.mxu0 0.0
    %5796 = vmatprep.subr.mxu0 0.0
    %5797 = vmatpush1.msra.mxu0 0.0
    %5798 = vmatprep.subr.mxu0 0.0
    %5799 = vmatpush1.msra.mxu0 0.0
    %5800 = vmatprep.subr.mxu0 0.0
    %5801 = vmatpush1.msra.mxu0 0.0
    %5802 = vmatprep.subr.mxu0 0.0
    %5803 = vmatpush1.msra.mxu0 0.0
    %5804 = vmatprep.subr.mxu0 0.0
    %5805 = vmatpush1.msra.mxu0 0.0
    %5806 = vmatprep.subr.mxu0 0.0
    %5807 = vmatpush1.msra.mxu0 0.0
    %5808 = vmatprep.subr.mxu0 0.0
    %5809 = vmatpush1.msra.mxu0 0.0
    %5810 = vmatprep.subr.mxu0 0.0
    %5811 = vmatpush1.msra.mxu0 0.0
    %5812 = vmatprep.subr.mxu0 0.0
    %5813 = vmatpush1.msra.mxu0 0.0
    %5814 = vmatprep.subr.mxu0 0.0
    %5815 = vmatpush1.msra.mxu0 0.0
    %5816 = vmatprep.subr.mxu0 0.0
    %5817 = vmatpush1.msra.mxu0 0.0
    %5818 = vmatprep.subr.mxu0 0.0
    %5819 = vmatpush1.msra.mxu0 0.0
    %5820 = vmatprep.subr.mxu0 0.0
    %5821 = vmatpush1.msra.mxu0 0.0
    %5822 = vmatprep.subr.mxu0 0.0
    %5823 = vmatpush1.msra.mxu0 0.0
    %5824 = vmatprep.subr.mxu0 0.0
    %5825 = vmatpush1.msra.mxu0 0.0
    %5826 = vmatprep.subr.mxu0 0.0
    %5827 = vmatpush1.msra.mxu0 0.0
    %5828 = vmatprep.subr.mxu0 0.0
    %5829 = vmatpush1.msra.mxu0 0.0
    %5830 = vmatprep.subr.mxu0 0.0
    %5831 = vmatpush1.msra.mxu0 0.0
    %5832 = vmatprep.subr.mxu0 0.0
    %5833 = vmatpush1.msra.mxu0 0.0
    %5834 = vmatprep.subr.mxu0 0.0
    %5835 = vmatpush1.msra.mxu0 0.0
    %5836 = vmatprep.mubr.f32.mxu0 0.0
    %5837 = vmatmul.mubr.f32.gmra.mrb[0].mxu0 %v5770
    %v5838 = vpop.f32.mrb[0].mxu0
    %v5839 = vadd.f32 %v143, %v5838
    %v5840 = vpop.f32.mrb[0].mxu0
    %5841 = vdwg.mxu0
    %5843 = vrot.lane.b32.xlu0 %v5839, 24
    %v5844 = vpop.permute.xlu0 %5843
    %v5846 = vadd.f32 %v3233, %v5844
    %v5847 = vxor.u32 %v5846, 2147483648
    %v5848 = vmul.f32 %v5847, 1.442695
    %v5849 = vpow.pop %v5848
    %v5850 = vadd.f32 %v5849, 1.0
    %v5851 = vrcp.pop %v5850
    %v5852 = vmul.f32 1.0, %v5851
    %5853 = vrot.lane.b32.xlu0 %v5839, 8
    %v5854 = vpop.permute.xlu0 %5853
    %v5856 = vmul.f32 %v5852, %v5854
    %5858 = vrot.lane.b32.xlu0 %v5856, 16
    %v5859 = vpop.permute.xlu0 %5858
    %v5861 = vadd.f32 %v3233, %v5859
    %v5862 = vtanh.pop %v5861
    %v5863 = vsub.f32 1.0, %v5852
    %5865 = vrot.lane.b32.xlu0 %v5862, 120
    %v5866 = vpop.permute.xlu0 %5865
    %v5868 = vmul.f32 %v5863, %v5866
    %v5869 = vmul.f32 %v5852, %v5664
    %v5870 = vadd.f32 %v5868, %v5869
    %v5871 = vsel %vm3086, %v5870, %v5664
    %v5872 = vld [vmem:[%s15] sm:$0xff]
    %v5873 = vld [vmem:[%s15 + $0x8] sm:$0xff]
    %v5874 = vld [vmem:[%s15 + $0x10] sm:$0xff]
    %v5875 = vld [vmem:[%s15 + $0x18] sm:$0xff]
    %v5876 = vld [vmem:[%s15 + $0x20] sm:$0xff]
    %v5877 = vld [vmem:[%s15 + $0x28] sm:$0xff]
    %v5878 = vld [vmem:[%s15 + $0x30] sm:$0xff]
    %v5879 = vld [vmem:[%s15 + $0x38] sm:$0xff]
    %5881 = vrot.lane.b32.xlu0 %v5766, 120
    %v5882 = vpop.permute.xlu0 %5881
    %v5883 = vsel %vm225, %v5882, 0
    %5885 = vmatprep.subr.mxu0 %v5877
    %5886 = vmatpush1.msra.mxu0 %v5876
    %5887 = vmatprep.subr.mxu0 0.0
    %5888 = vmatpush1.msra.mxu0 0.0
    %5889 = vmatprep.subr.mxu0 0.0
    %5890 = vmatpush1.msra.mxu0 0.0
    %5891 = vmatprep.subr.mxu0 0.0
    %5892 = vmatpush1.msra.mxu0 0.0
    %5893 = vmatprep.subr.mxu0 0.0
    %5894 = vmatpush1.msra.mxu0 0.0
    %5895 = vmatprep.subr.mxu0 0.0
    %5896 = vmatpush1.msra.mxu0 0.0
    %5897 = vmatprep.subr.mxu0 0.0
    %5898 = vmatpush1.msra.mxu0 0.0
    %5899 = vmatprep.subr.mxu0 0.0
    %5900 = vmatpush1.msra.mxu0 0.0
    %5901 = vmatprep.subr.mxu0 0.0
    %5902 = vmatpush1.msra.mxu0 0.0
    %5903 = vmatprep.subr.mxu0 0.0
    %5904 = vmatpush1.msra.mxu0 0.0
    %5905 = vmatprep.subr.mxu0 0.0
    %5906 = vmatpush1.msra.mxu0 0.0
    %5907 = vmatprep.subr.mxu0 0.0
    %5908 = vmatpush1.msra.mxu0 0.0
    %5909 = vmatprep.subr.mxu0 0.0
    %5910 = vmatpush1.msra.mxu0 0.0
    %5911 = vmatprep.subr.mxu0 0.0
    %5912 = vmatpush1.msra.mxu0 0.0
    %5913 = vmatprep.subr.mxu0 0.0
    %5914 = vmatpush1.msra.mxu0 0.0
    %5915 = vmatprep.subr.mxu0 0.0
    %5916 = vmatpush1.msra.mxu0 0.0
    %5917 = vmatprep.subr.mxu0 0.0
    %5918 = vmatpush1.msra.mxu0 0.0
    %5919 = vmatprep.subr.mxu0 0.0
    %5920 = vmatpush1.msra.mxu0 0.0
    %5921 = vmatprep.subr.mxu0 0.0
    %5922 = vmatpush1.msra.mxu0 0.0
    %5923 = vmatprep.subr.mxu0 0.0
    %5924 = vmatpush1.msra.mxu0 0.0
    %5925 = vmatprep.subr.mxu0 0.0
    %5926 = vmatpush1.msra.mxu0 0.0
    %5927 = vmatprep.subr.mxu0 0.0
    %5928 = vmatpush1.msra.mxu0 0.0
    %5929 = vmatprep.subr.mxu0 0.0
    %5930 = vmatpush1.msra.mxu0 0.0
    %5931 = vmatprep.subr.mxu0 0.0
    %5932 = vmatpush1.msra.mxu0 0.0
    %5933 = vmatprep.subr.mxu0 0.0
    %5934 = vmatpush1.msra.mxu0 0.0
    %5935 = vmatprep.subr.mxu0 0.0
    %5936 = vmatpush1.msra.mxu0 0.0
    %5937 = vmatprep.subr.mxu0 0.0
    %5938 = vmatpush1.msra.mxu0 0.0
    %5939 = vmatprep.subr.mxu0 0.0
    %5940 = vmatpush1.msra.mxu0 0.0
    %5941 = vmatprep.subr.mxu0 0.0
    %5942 = vmatpush1.msra.mxu0 0.0
    %5943 = vmatprep.subr.mxu0 0.0
    %5944 = vmatpush1.msra.mxu0 0.0
    %5945 = vmatprep.subr.mxu0 0.0
    %5946 = vmatpush1.msra.mxu0 0.0
    %5947 = vmatprep.subr.mxu0 0.0
    %5948 = vmatpush1.msra.mxu0 0.0
    %5949 = vmatprep.mubr.f32.mxu0 0.0
    %5950 = vmatmul.mubr.f32.gmra.mrb[0].mxu0 %v5883
    %v5951 = vpop.f32.mrb[0].mxu0
    %v5952 = vadd.f32 0.0, %v5951
    %v5953 = vpop.f32.mrb[0].mxu0
    %v5954 = vadd.f32 0.0, %v5953
    %5955 = vdwg.mxu0
    %5956 = vmatprep.subr.mxu0 %v5879
    %5957 = vmatpush1.msra.mxu0 %v5878
    %5958 = vmatprep.subr.mxu0 0.0
    %5959 = vmatpush1.msra.mxu0 0.0
    %5960 = vmatprep.subr.mxu0 0.0
    %5961 = vmatpush1.msra.mxu0 0.0
    %5962 = vmatprep.subr.mxu0 0.0
    %5963 = vmatpush1.msra.mxu0 0.0
    %5964 = vmatprep.subr.mxu0 0.0
    %5965 = vmatpush1.msra.mxu0 0.0
    %5966 = vmatprep.subr.mxu0 0.0
    %5967 = vmatpush1.msra.mxu0 0.0
    %5968 = vmatprep.subr.mxu0 0.0
    %5969 = vmatpush1.msra.mxu0 0.0
    %5970 = vmatprep.subr.mxu0 0.0
    %5971 = vmatpush1.msra.mxu0 0.0
    %5972 = vmatprep.subr.mxu0 0.0
    %5973 = vmatpush1.msra.mxu0 0.0
    %5974 = vmatprep.subr.mxu0 0.0
    %5975 = vmatpush1.msra.mxu0 0.0
    %5976 = vmatprep.subr.mxu0 0.0
    %5977 = vmatpush1.msra.mxu0 0.0
    %5978 = vmatprep.subr.mxu0 0.0
    %5979 = vmatpush1.msra.mxu0 0.0
    %5980 = vmatprep.subr.mxu0 0.0
    %5981 = vmatpush1.msra.mxu0 0.0
    %5982 = vmatprep.subr.mxu0 0.0
    %5983 = vmatpush1.msra.mxu0 0.0
    %5984 = vmatprep.subr.mxu0 0.0
    %5985 = vmatpush1.msra.mxu0 0.0
    %5986 = vmatprep.subr.mxu0 0.0
    %5987 = vmatpush1.msra.mxu0 0.0
    %5988 = vmatprep.subr.mxu0 0.0
    %5989 = vmatpush1.msra.mxu0 0.0
    %5990 = vmatprep.subr.mxu0 0.0
    %5991 = vmatpush1.msra.mxu0 0.0
    %5992 = vmatprep.subr.mxu0 0.0
    %5993 = vmatpush1.msra.mxu0 0.0
    %5994 = vmatprep.subr.mxu0 0.0
    %5995 = vmatpush1.msra.mxu0 0.0
    %5996 = vmatprep.subr.mxu0 0.0
    %5997 = vmatpush1.msra.mxu0 0.0
    %5998 = vmatprep.subr.mxu0 0.0
    %5999 = vmatpush1.msra.mxu0 0.0
    %6000 = vmatprep.subr.mxu0 0.0
    %6001 = vmatpush1.msra.mxu0 0.0
    %6002 = vmatprep.subr.mxu0 0.0
    %6003 = vmatpush1.msra.mxu0 0.0
    %6004 = vmatprep.subr.mxu0 0.0
    %6005 = vmatpush1.msra.mxu0 0.0
    %6006 = vmatprep.subr.mxu0 0.0
    %6007 = vmatpush1.msra.mxu0 0.0
    %6008 = vmatprep.subr.mxu0 0.0
    %6009 = vmatpush1.msra.mxu0 0.0
    %6010 = vmatprep.subr.mxu0 0.0
    %6011 = vmatpush1.msra.mxu0 0.0
    %6012 = vmatprep.subr.mxu0 0.0
    %6013 = vmatpush1.msra.mxu0 0.0
    %6014 = vmatprep.subr.mxu0 0.0
    %6015 = vmatpush1.msra.mxu0 0.0
    %6016 = vmatprep.subr.mxu0 0.0
    %6017 = vmatpush1.msra.mxu0 0.0
    %6018 = vmatprep.subr.mxu0 0.0
    %6019 = vmatpush1.msra.mxu0 0.0
    %6020 = vmatprep.mubr.f32.mxu0 0.0
    %6021 = vmatmul.mubr.f32.gmra.mrb[0].mxu0 %v5883
    %v6022 = vpop.f32.mrb[0].mxu0
    %v6023 = vadd.f32 0.0, %v6022
    %v6024 = vpop.f32.mrb[0].mxu0
    %v6025 = vadd.f32 0.0, %v6024
    %6026 = vdwg.mxu0
    %6028 = vrot.lane.b32.xlu0 %v5871, 96
    %v6029 = vpop.permute.xlu0 %6028
    %v6030 = vsel %vm225, %v6029, 0
    %6032 = vmatprep.subr.mxu0 %v5873
    %6033 = vmatpush1.msra.mxu0 %v5872
    %6034 = vmatprep.subr.mxu0 0.0
    %6035 = vmatpush1.msra.mxu0 0.0
    %6036 = vmatprep.subr.mxu0 0.0
    %6037 = vmatpush1.msra.mxu0 0.0
    %6038 = vmatprep.subr.mxu0 0.0
    %6039 = vmatpush1.msra.mxu0 0.0
    %6040 = vmatprep.subr.mxu0 0.0
    %6041 = vmatpush1.msra.mxu0 0.0
    %6042 = vmatprep.subr.mxu0 0.0
    %6043 = vmatpush1.msra.mxu0 0.0
    %6044 = vmatprep.subr.mxu0 0.0
    %6045 = vmatpush1.msra.mxu0 0.0
    %6046 = vmatprep.subr.mxu0 0.0
    %6047 = vmatpush1.msra.mxu0 0.0
    %6048 = vmatprep.subr.mxu0 0.0
    %6049 = vmatpush1.msra.mxu0 0.0
    %6050 = vmatprep.subr.mxu0 0.0
    %6051 = vmatpush1.msra.mxu0 0.0
    %6052 = vmatprep.subr.mxu0 0.0
    %6053 = vmatpush1.msra.mxu0 0.0
    %6054 = vmatprep.subr.mxu0 0.0
    %6055 = vmatpush1.msra.mxu0 0.0
    %6056 = vmatprep.subr.mxu0 0.0
    %6057 = vmatpush1.msra.mxu0 0.0
    %6058 = vmatprep.subr.mxu0 0.0
    %6059 = vmatpush1.msra.mxu0 0.0
    %6060 = vmatprep.subr.mxu0 0.0
    %6061 = vmatpush1.msra.mxu0 0.0
    %6062 = vmatprep.subr.mxu0 0.0
    %6063 = vmatpush1.msra.mxu0 0.0
    %6064 = vmatprep.subr.mxu0 0.0
    %6065 = vmatpush1.msra.mxu0 0.0
    %6066 = vmatprep.subr.mxu0 0.0
    %6067 = vmatpush1.msra.mxu0 0.0
    %6068 = vmatprep.subr.mxu0 0.0
    %6069 = vmatpush1.msra.mxu0 0.0
    %6070 = vmatprep.subr.mxu0 0.0
    %6071 = vmatpush1.msra.mxu0 0.0
    %6072 = vmatprep.subr.mxu0 0.0
    %6073 = vmatpush1.msra.mxu0 0.0
    %6074 = vmatprep.subr.mxu0 0.0
    %6075 = vmatpush1.msra.mxu0 0.0
    %6076 = vmatprep.subr.mxu0 0.0
    %6077 = vmatpush1.msra.mxu0 0.0
    %6078 = vmatprep.subr.mxu0 0.0
    %6079 = vmatpush1.msra.mxu0 0.0
    %6080 = vmatprep.subr.mxu0 0.0
    %6081 = vmatpush1.msra.mxu0 0.0
    %6082 = vmatprep.subr.mxu0 0.0
    %6083 = vmatpush1.msra.mxu0 0.0
    %6084 = vmatprep.subr.mxu0 0.0
    %6085 = vmatpush1.msra.mxu0 0.0
    %6086 = vmatprep.subr.mxu0 0.0
    %6087 = vmatpush1.msra.mxu0 0.0
    %6088 = vmatprep.subr.mxu0 0.0
    %6089 = vmatpush1.msra.mxu0 0.0
    %6090 = vmatprep.subr.mxu0 0.0
    %6091 = vmatpush1.msra.mxu0 0.0
    %6092 = vmatprep.subr.mxu0 0.0
    %6093 = vmatpush1.msra.mxu0 0.0
    %6094 = vmatprep.subr.mxu0 0.0
    %6095 = vmatpush1.msra.mxu0 0.0
    %6096 = vmatprep.mubr.f32.mxu0 0.0
    %6097 = vmatmul.mubr.f32.gmra.mrb[0].mxu0 %v6030
    %v6098 = vpop.f32.mrb[0].mxu0
    %v6099 = vadd.f32 %v5952, %v6098
    %v6100 = vpop.f32.mrb[0].mxu0
    %v6101 = vadd.f32 %v5954, %v6100
    %6102 = vdwg.mxu0
    %6103 = vmatprep.subr.mxu0 %v5875
    %6104 = vmatpush1.msra.mxu0 %v5874
    %6105 = vmatprep.subr.mxu0 0.0
    %6106 = vmatpush1.msra.mxu0 0.0
    %6107 = vmatprep.subr.mxu0 0.0
    %6108 = vmatpush1.msra.mxu0 0.0
    %6109 = vmatprep.subr.mxu0 0.0
    %6110 = vmatpush1.msra.mxu0 0.0
    %6111 = vmatprep.subr.mxu0 0.0
    %6112 = vmatpush1.msra.mxu0 0.0
    %6113 = vmatprep.subr.mxu0 0.0
    %6114 = vmatpush1.msra.mxu0 0.0
    %6115 = vmatprep.subr.mxu0 0.0
    %6116 = vmatpush1.msra.mxu0 0.0
    %6117 = vmatprep.subr.mxu0 0.0
    %6118 = vmatpush1.msra.mxu0 0.0
    %6119 = vmatprep.subr.mxu0 0.0
    %6120 = vmatpush1.msra.mxu0 0.0
    %6121 = vmatprep.subr.mxu0 0.0
    %6122 = vmatpush1.msra.mxu0 0.0
    %6123 = vmatprep.subr.mxu0 0.0
    %6124 = vmatpush1.msra.mxu0 0.0
    %6125 = vmatprep.subr.mxu0 0.0
    %6126 = vmatpush1.msra.mxu0 0.0
    %6127 = vmatprep.subr.mxu0 0.0
    %6128 = vmatpush1.msra.mxu0 0.0
    %6129 = vmatprep.subr.mxu0 0.0
    %6130 = vmatpush1.msra.mxu0 0.0
    %6131 = vmatprep.subr.mxu0 0.0
    %6132 = vmatpush1.msra.mxu0 0.0
    %6133 = vmatprep.subr.mxu0 0.0
    %6134 = vmatpush1.msra.mxu0 0.0
    %6135 = vmatprep.subr.mxu0 0.0
    %6136 = vmatpush1.msra.mxu0 0.0
    %6137 = vmatprep.subr.mxu0 0.0
    %6138 = vmatpush1.msra.mxu0 0.0
    %6139 = vmatprep.subr.mxu0 0.0
    %6140 = vmatpush1.msra.mxu0 0.0
    %6141 = vmatprep.subr.mxu0 0.0
    %6142 = vmatpush1.msra.mxu0 0.0
    %6143 = vmatprep.subr.mxu0 0.0
    %6144 = vmatpush1.msra.mxu0 0.0
    %6145 = vmatprep.subr.mxu0 0.0
    %6146 = vmatpush1.msra.mxu0 0.0
    %6147 = vmatprep.subr.mxu0 0.0
    %6148 = vmatpush1.msra.mxu0 0.0
    %6149 = vmatprep.subr.mxu0 0.0
    %6150 = vmatpush1.msra.mxu0 0.0
    %6151 = vmatprep.subr.mxu0 0.0
    %6152 = vmatpush1.msra.mxu0 0.0
    %6153 = vmatprep.subr.mxu0 0.0
    %6154 = vmatpush1.msra.mxu0 0.0
    %6155 = vmatprep.subr.mxu0 0.0
    %6156 = vmatpush1.msra.mxu0 0.0
    %6157 = vmatprep.subr.mxu0 0.0
    %6158 = vmatpush1.msra.mxu0 0.0
    %6159 = vmatprep.subr.mxu0 0.0
    %6160 = vmatpush1.msra.mxu0 0.0
    %6161 = vmatprep.subr.mxu0 0.0
    %6162 = vmatpush1.msra.mxu0 0.0
    %6163 = vmatprep.subr.mxu0 0.0
    %6164 = vmatpush1.msra.mxu0 0.0
    %6165 = vmatprep.subr.mxu0 0.0
    %6166 = vmatpush1.msra.mxu0 0.0
    %6167 = vmatprep.mubr.f32.mxu0 0.0
    %6168 = vmatmul.mubr.f32.gmra.mrb[0].mxu0 %v6030
    %v6169 = vpop.f32.mrb[0].mxu0
    %v6170 = vadd.f32 %v6023, %v6169
    %v6171 = vpop.f32.mrb[0].mxu0
    %v6172 = vadd.f32 %v6025, %v6171
    %6173 = vdwg.mxu0
    %v6174 = vld [vmem:[%s15 + $0x40] sm:$0xff]
    %v6175 = vld [vmem:[%s15 + $0x48] sm:$0xff]
    %v6176 = vld [vmem:[%s15 + $0x50] sm:$0xff]
    %v6177 = vld [vmem:[%s15 + $0x58] sm:$0xff]
    %6178 = vmatprep.subr.mxu0 %v6175
    %6179 = vmatpush1.msra.mxu0 %v6174
    %6180 = vmatprep.subr.mxu0 0.0
    %6181 = vmatpush1.msra.mxu0 0.0
    %6182 = vmatprep.subr.mxu0 0.0
    %6183 = vmatpush1.msra.mxu0 0.0
    %6184 = vmatprep.subr.mxu0 0.0
    %6185 = vmatpush1.msra.mxu0 0.0
    %6186 = vmatprep.subr.mxu0 0.0
    %6187 = vmatpush1.msra.mxu0 0.0
    %6188 = vmatprep.subr.mxu0 0.0
    %6189 = vmatpush1.msra.mxu0 0.0
    %6190 = vmatprep.subr.mxu0 0.0
    %6191 = vmatpush1.msra.mxu0 0.0
    %6192 = vmatprep.subr.mxu0 0.0
    %6193 = vmatpush1.msra.mxu0 0.0
    %6194 = vmatprep.subr.mxu0 0.0
    %6195 = vmatpush1.msra.mxu0 0.0
    %6196 = vmatprep.subr.mxu0 0.0
    %6197 = vmatpush1.msra.mxu0 0.0
    %6198 = vmatprep.subr.mxu0 0.0
    %6199 = vmatpush1.msra.mxu0 0.0
    %6200 = vmatprep.subr.mxu0 0.0
    %6201 = vmatpush1.msra.mxu0 0.0
    %6202 = vmatprep.subr.mxu0 0.0
    %6203 = vmatpush1.msra.mxu0 0.0
    %6204 = vmatprep.subr.mxu0 0.0
    %6205 = vmatpush1.msra.mxu0 0.0
    %6206 = vmatprep.subr.mxu0 0.0
    %6207 = vmatpush1.msra.mxu0 0.0
    %6208 = vmatprep.subr.mxu0 0.0
    %6209 = vmatpush1.msra.mxu0 0.0
    %6210 = vmatprep.subr.mxu0 0.0
    %6211 = vmatpush1.msra.mxu0 0.0
    %6212 = vmatprep.subr.mxu0 0.0
    %6213 = vmatpush1.msra.mxu0 0.0
    %6214 = vmatprep.subr.mxu0 0.0
    %6215 = vmatpush1.msra.mxu0 0.0
    %6216 = vmatprep.subr.mxu0 0.0
    %6217 = vmatpush1.msra.mxu0 0.0
    %6218 = vmatprep.subr.mxu0 0.0
    %6219 = vmatpush1.msra.mxu0 0.0
    %6220 = vmatprep.subr.mxu0 0.0
    %6221 = vmatpush1.msra.mxu0 0.0
    %6222 = vmatprep.subr.mxu0 0.0
    %6223 = vmatpush1.msra.mxu0 0.0
    %6224 = vmatprep.subr.mxu0 0.0
    %6225 = vmatpush1.msra.mxu0 0.0
    %6226 = vmatprep.subr.mxu0 0.0
    %6227 = vmatpush1.msra.mxu0 0.0
    %6228 = vmatprep.subr.mxu0 0.0
    %6229 = vmatpush1.msra.mxu0 0.0
    %6230 = vmatprep.subr.mxu0 0.0
    %6231 = vmatpush1.msra.mxu0 0.0
    %6232 = vmatprep.subr.mxu0 0.0
    %6233 = vmatpush1.msra.mxu0 0.0
    %6234 = vmatprep.subr.mxu0 0.0
    %6235 = vmatpush1.msra.mxu0 0.0
    %6236 = vmatprep.subr.mxu0 0.0
    %6237 = vmatpush1.msra.mxu0 0.0
    %6238 = vmatprep.subr.mxu0 0.0
    %6239 = vmatpush1.msra.mxu0 0.0
    %6240 = vmatprep.subr.mxu0 0.0
    %6241 = vmatpush1.msra.mxu0 0.0
    %6242 = vmatprep.mubr.f32.mxu0 0.0
    %6243 = vmatmul.mubr.f32.gmra.mrb[0].mxu0 %v3091
    %v6244 = vpop.f32.mrb[0].mxu0
    %v6245 = vadd.f32 0.0, %v6244
    %v6246 = vpop.f32.mrb[0].mxu0
    %v6247 = vadd.f32 0.0, %v6246
    %6248 = vdwg.mxu0
    %6249 = vmatprep.subr.mxu0 %v6177
    %6250 = vmatpush1.msra.mxu0 %v6176
    %6251 = vmatprep.subr.mxu0 0.0
    %6252 = vmatpush1.msra.mxu0 0.0
    %6253 = vmatprep.subr.mxu0 0.0
    %6254 = vmatpush1.msra.mxu0 0.0
    %6255 = vmatprep.subr.mxu0 0.0
    %6256 = vmatpush1.msra.mxu0 0.0
    %6257 = vmatprep.subr.mxu0 0.0
    %6258 = vmatpush1.msra.mxu0 0.0
    %6259 = vmatprep.subr.mxu0 0.0
    %6260 = vmatpush1.msra.mxu0 0.0
    %6261 = vmatprep.subr.mxu0 0.0
    %6262 = vmatpush1.msra.mxu0 0.0
    %6263 = vmatprep.subr.mxu0 0.0
    %6264 = vmatpush1.msra.mxu0 0.0
    %6265 = vmatprep.subr.mxu0 0.0
    %6266 = vmatpush1.msra.mxu0 0.0
    %6267 = vmatprep.subr.mxu0 0.0
    %6268 = vmatpush1.msra.mxu0 0.0
    %6269 = vmatprep.subr.mxu0 0.0
    %6270 = vmatpush1.msra.mxu0 0.0
    %6271 = vmatprep.subr.mxu0 0.0
    %6272 = vmatpush1.msra.mxu0 0.0
    %6273 = vmatprep.subr.mxu0 0.0
    %6274 = vmatpush1.msra.mxu0 0.0
    %6275 = vmatprep.subr.mxu0 0.0
    %6276 = vmatpush1.msra.mxu0 0.0
    %6277 = vmatprep.subr.mxu0 0.0
    %6278 = vmatpush1.msra.mxu0 0.0
    %6279 = vmatprep.subr.mxu0 0.0
    %6280 = vmatpush1.msra.mxu0 0.0
    %6281 = vmatprep.subr.mxu0 0.0
    %6282 = vmatpush1.msra.mxu0 0.0
    %6283 = vmatprep.subr.mxu0 0.0
    %6284 = vmatpush1.msra.mxu0 0.0
    %6285 = vmatprep.subr.mxu0 0.0
    %6286 = vmatpush1.msra.mxu0 0.0
    %6287 = vmatprep.subr.mxu0 0.0
    %6288 = vmatpush1.msra.mxu0 0.0
    %6289 = vmatprep.subr.mxu0 0.0
    %6290 = vmatpush1.msra.mxu0 0.0
    %6291 = vmatprep.subr.mxu0 0.0
    %6292 = vmatpush1.msra.mxu0 0.0
    %6293 = vmatprep.subr.mxu0 0.0
    %6294 = vmatpush1.msra.mxu0 0.0
    %6295 = vmatprep.subr.mxu0 0.0
    %6296 = vmatpush1.msra.mxu0 0.0
    %6297 = vmatprep.subr.mxu0 0.0
    %6298 = vmatpush1.msra.mxu0 0.0
    %6299 = vmatprep.subr.mxu0 0.0
    %6300 = vmatpush1.msra.mxu0 0.0
    %6301 = vmatprep.subr.mxu0 0.0
    %6302 = vmatpush1.msra.mxu0 0.0
    %6303 = vmatprep.subr.mxu0 0.0
    %6304 = vmatpush1.msra.mxu0 0.0
    %6305 = vmatprep.subr.mxu0 0.0
    %6306 = vmatpush1.msra.mxu0 0.0
    %6307 = vmatprep.subr.mxu0 0.0
    %6308 = vmatpush1.msra.mxu0 0.0
    %6309 = vmatprep.subr.mxu0 0.0
    %6310 = vmatpush1.msra.mxu0 0.0
    %6311 = vmatprep.subr.mxu0 0.0
    %6312 = vmatpush1.msra.mxu0 0.0
    %6313 = vmatprep.mubr.f32.mxu0 0.0
    %6314 = vmatmul.mubr.f32.gmra.mrb[0].mxu0 %v3091
    %v6315 = vpop.f32.mrb[0].mxu0
    %v6316 = vadd.f32 0.0, %v6315
    %v6317 = vpop.f32.mrb[0].mxu0
    %v6318 = vadd.f32 0.0, %v6317
    %6319 = vdwg.mxu0
    %v6320 = vadd.f32 %v6099, %v6245
    %v6321 = vadd.f32 %v6101, %v6247
    %v6322 = vadd.f32 %v6170, %v6316
    %v6323 = vadd.f32 %v6172, %v6318
    %v6324 = vld [vmem:[%s15 + $0x60] sm:$0xff]
    %v6325 = vld [vmem:[%s15 + $0x68] sm:$0xff]
    %v6326 = vld [vmem:[%s15 + $0x70] sm:$0xff]
    %v6327 = vld [vmem:[%s15 + $0x78] sm:$0xff]
    %6328 = vmatprep.subr.mxu0 %v6325
    %6329 = vmatpush1.msra.mxu0 %v6324
    %6330 = vmatprep.subr.mxu0 0.0
    %6331 = vmatpush1.msra.mxu0 0.0
    %6332 = vmatprep.subr.mxu0 0.0
    %6333 = vmatpush1.msra.mxu0 0.0
    %6334 = vmatprep.subr.mxu0 0.0
    %6335 = vmatpush1.msra.mxu0 0.0
    %6336 = vmatprep.subr.mxu0 0.0
    %6337 = vmatpush1.msra.mxu0 0.0
    %6338 = vmatprep.subr.mxu0 0.0
    %6339 = vmatpush1.msra.mxu0 0.0
    %6340 = vmatprep.subr.mxu0 0.0
    %6341 = vmatpush1.msra.mxu0 0.0
    %6342 = vmatprep.subr.mxu0 0.0
    %6343 = vmatpush1.msra.mxu0 0.0
    %6344 = vmatprep.subr.mxu0 0.0
    %6345 = vmatpush1.msra.mxu0 0.0
    %6346 = vmatprep.subr.mxu0 0.0
    %6347 = vmatpush1.msra.mxu0 0.0
    %6348 = vmatprep.subr.mxu0 0.0
    %6349 = vmatpush1.msra.mxu0 0.0
    %6350 = vmatprep.subr.mxu0 0.0
    %6351 = vmatpush1.msra.mxu0 0.0
    %6352 = vmatprep.subr.mxu0 0.0
    %6353 = vmatpush1.msra.mxu0 0.0
    %6354 = vmatprep.subr.mxu0 0.0
    %6355 = vmatpush1.msra.mxu0 0.0
    %6356 = vmatprep.subr.mxu0 0.0
    %6357 = vmatpush1.msra.mxu0 0.0
    %6358 = vmatprep.subr.mxu0 0.0
    %6359 = vmatpush1.msra.mxu0 0.0
    %6360 = vmatprep.subr.mxu0 0.0
    %6361 = vmatpush1.msra.mxu0 0.0
    %6362 = vmatprep.subr.mxu0 0.0
    %6363 = vmatpush1.msra.mxu0 0.0
    %6364 = vmatprep.subr.mxu0 0.0
    %6365 = vmatpush1.msra.mxu0 0.0
    %6366 = vmatprep.subr.mxu0 0.0
    %6367 = vmatpush1.msra.mxu0 0.0
    %6368 = vmatprep.subr.mxu0 0.0
    %6369 = vmatpush1.msra.mxu0 0.0
    %6370 = vmatprep.subr.mxu0 0.0
    %6371 = vmatpush1.msra.mxu0 0.0
    %6372 = vmatprep.subr.mxu0 0.0
    %6373 = vmatpush1.msra.mxu0 0.0
    %6374 = vmatprep.subr.mxu0 0.0
    %6375 = vmatpush1.msra.mxu0 0.0
    %6376 = vmatprep.subr.mxu0 0.0
    %6377 = vmatpush1.msra.mxu0 0.0
    %6378 = vmatprep.subr.mxu0 0.0
    %6379 = vmatpush1.msra.mxu0 0.0
    %6380 = vmatprep.subr.mxu0 0.0
    %6381 = vmatpush1.msra.mxu0 0.0
    %6382 = vmatprep.subr.mxu0 0.0
    %6383 = vmatpush1.msra.mxu0 0.0
    %6384 = vmatprep.subr.mxu0 0.0
    %6385 = vmatpush1.msra.mxu0 0.0
    %6386 = vmatprep.subr.mxu0 0.0
    %6387 = vmatpush1.msra.mxu0 0.0
    %6388 = vmatprep.subr.mxu0 0.0
    %6389 = vmatpush1.msra.mxu0 0.0
    %6390 = vmatprep.subr.mxu0 0.0
    %6391 = vmatpush1.msra.mxu0 0.0
    %6392 = vmatprep.mubr.f32.mxu0 0.0
    %6393 = vmatmul.mubr.f32.gmra.mrb[0].mxu0 %v4153
    %v6394 = vpop.f32.mrb[0].mxu0
    %v6395 = vadd.f32 0.0, %v6394
    %v6396 = vpop.f32.mrb[0].mxu0
    %v6397 = vadd.f32 0.0, %v6396
    %6398 = vdwg.mxu0
    %6399 = vmatprep.subr.mxu0 %v6327
    %6400 = vmatpush1.msra.mxu0 %v6326
    %6401 = vmatprep.subr.mxu0 0.0
    %6402 = vmatpush1.msra.mxu0 0.0
    %6403 = vmatprep.subr.mxu0 0.0
    %6404 = vmatpush1.msra.mxu0 0.0
    %6405 = vmatprep.subr.mxu0 0.0
    %6406 = vmatpush1.msra.mxu0 0.0
    %6407 = vmatprep.subr.mxu0 0.0
    %6408 = vmatpush1.msra.mxu0 0.0
    %6409 = vmatprep.subr.mxu0 0.0
    %6410 = vmatpush1.msra.mxu0 0.0
    %6411 = vmatprep.subr.mxu0 0.0
    %6412 = vmatpush1.msra.mxu0 0.0
    %6413 = vmatprep.subr.mxu0 0.0
    %6414 = vmatpush1.msra.mxu0 0.0
    %6415 = vmatprep.subr.mxu0 0.0
    %6416 = vmatpush1.msra.mxu0 0.0
    %6417 = vmatprep.subr.mxu0 0.0
    %6418 = vmatpush1.msra.mxu0 0.0
    %6419 = vmatprep.subr.mxu0 0.0
    %6420 = vmatpush1.msra.mxu0 0.0
    %6421 = vmatprep.subr.mxu0 0.0
    %6422 = vmatpush1.msra.mxu0 0.0
    %6423 = vmatprep.subr.mxu0 0.0
    %6424 = vmatpush1.msra.mxu0 0.0
    %6425 = vmatprep.subr.mxu0 0.0
    %6426 = vmatpush1.msra.mxu0 0.0
    %6427 = vmatprep.subr.mxu0 0.0
    %6428 = vmatpush1.msra.mxu0 0.0
    %6429 = vmatprep.subr.mxu0 0.0
    %6430 = vmatpush1.msra.mxu0 0.0
    %6431 = vmatprep.subr.mxu0 0.0
    %6432 = vmatpush1.msra.mxu0 0.0
    %6433 = vmatprep.subr.mxu0 0.0
    %6434 = vmatpush1.msra.mxu0 0.0
    %6435 = vmatprep.subr.mxu0 0.0
    %6436 = vmatpush1.msra.mxu0 0.0
    %6437 = vmatprep.subr.mxu0 0.0
    %6438 = vmatpush1.msra.mxu0 0.0
    %6439 = vmatprep.subr.mxu0 0.0
    %6440 = vmatpush1.msra.mxu0 0.0
    %6441 = vmatprep.subr.mxu0 0.0
    %6442 = vmatpush1.msra.mxu0 0.0
    %6443 = vmatprep.subr.mxu0 0.0
    %6444 = vmatpush1.msra.mxu0 0.0
    %6445 = vmatprep.subr.mxu0 0.0
    %6446 = vmatpush1.msra.mxu0 0.0
    %6447 = vmatprep.subr.mxu0 0.0
    %6448 = vmatpush1.msra.mxu0 0.0
    %6449 = vmatprep.subr.mxu0 0.0
    %6450 = vmatpush1.msra.mxu0 0.0
    %6451 = vmatprep.subr.mxu0 0.0
    %6452 = vmatpush1.msra.mxu0 0.0
    %6453 = vmatprep.subr.mxu0 0.0
    %6454 = vmatpush1.msra.mxu0 0.0
    %6455 = vmatprep.subr.mxu0 0.0
    %6456 = vmatpush1.msra.mxu0 0.0
    %6457 = vmatprep.subr.mxu0 0.0
    %6458 = vmatpush1.msra.mxu0 0.0
    %6459 = vmatprep.subr.mxu0 0.0
    %6460 = vmatpush1.msra.mxu0 0.0
    %6461 = vmatprep.subr.mxu0 0.0
    %6462 = vmatpush1.msra.mxu0 0.0
    %6463 = vmatprep.mubr.f32.mxu0 0.0
    %6464 = vmatmul.mubr.f32.gmra.mrb[0].mxu0 %v4153
    %v6465 = vpop.f32.mrb[0].mxu0
    %v6466 = vadd.f32 0.0, %v6465
    %v6467 = vpop.f32.mrb[0].mxu0
    %v6468 = vadd.f32 0.0, %v6467
    %6469 = vdwg.mxu0
    %v6470 = vadd.f32 %v6320, %v6395
    %v6471 = vadd.f32 %v6321, %v6397
    %v6472 = vadd.f32 %v6322, %v6466
    %v6473 = vadd.f32 %v6323, %v6468
    %v6474 = vld [vmem:[%s2] sm:$0xff]
    %v6475 = vld [vmem:[%s2 + $0x8] sm:$0x3]
    %v6476 = vld [vmem:[%s15 + $0x80] sm:$0xff]
    %v6477 = vld [vmem:[%s15 + $0x88] sm:$0xff]
    %v6478 = vld [vmem:[%s15 + $0x90] sm:$0xff]
    %v6479 = vld [vmem:[%s15 + $0x98] sm:$0xff]
    %v6480 = vld [vmem:[%s15 + $0xa0] sm:$0xff]
    %v6481 = vld [vmem:[%s15 + $0xa8] sm:$0xff]
    %v6482 = vld [vmem:[%s15 + $0xb0] sm:$0xff]
    %v6483 = vld [vmem:[%s15 + $0xb8] sm:$0xff]
    %v6484 = vld [vmem:[%s15 + $0xc0] sm:$0xff]
    %v6485 = vld [vmem:[%s15 + $0xc8] sm:$0xff]
    %v6486 = vld [vmem:[%s15 + $0xd0] sm:$0xff]
    %v6487 = vld [vmem:[%s15 + $0xd8] sm:$0xff]
    %v6488 = vld [vmem:[%s15 + $0xe0] sm:$0xff]
    %v6489 = vld [vmem:[%s15 + $0xe8] sm:$0xff]
    %v6490 = vld [vmem:[%s15 + $0xf0] sm:$0xff]
    %v6491 = vld [vmem:[%s15 + $0xf8] sm:$0xff]
    %v6492 = vld [vmem:[%s15 + $0x100] sm:$0xff]
    %v6493 = vld [vmem:[%s15 + $0x108] sm:$0xff]
    %v6494 = vld [vmem:[%s15 + $0x110] sm:$0xff]
    %v6495 = vld [vmem:[%s15 + $0x118] sm:$0xff]
    %v6496 = vld [vmem:[%s15 + $0x120] sm:$0xff]
    %v6497 = vld [vmem:[%s15 + $0x128] sm:$0xff]
    %v6498 = vld [vmem:[%s15 + $0x130] sm:$0xff]
    %v6499 = vld [vmem:[%s15 + $0x138] sm:$0xff]
    %v6500 = vld [vmem:[%s15 + $0x140] sm:$0xff]
    %v6501 = vld [vmem:[%s15 + $0x148] sm:$0xff]
    %v6502 = vld [vmem:[%s15 + $0x150] sm:$0xff]
    %v6503 = vld [vmem:[%s15 + $0x158] sm:$0xff]
    %v6504 = vld [vmem:[%s15 + $0x160] sm:$0xff]
    %v6505 = vld [vmem:[%s15 + $0x168] sm:$0xff]
    %v6506 = vld [vmem:[%s15 + $0x170] sm:$0xff]
    %v6507 = vld [vmem:[%s15 + $0x178] sm:$0xff]
    %v6508 = vld [vmem:[%s15 + $0x180] sm:$0xff]
    %v6509 = vld [vmem:[%s15 + $0x188] sm:$0xff]
    %v6510 = vld [vmem:[%s15 + $0x190] sm:$0xff]
    %v6511 = vld [vmem:[%s15 + $0x198] sm:$0xff]
    %v6512 = vld [vmem:[%s15 + $0x1a0] sm:$0xff]
    %v6513 = vld [vmem:[%s15 + $0x1a8] sm:$0xff]
    %v6514 = vld [vmem:[%s15 + $0x1b0] sm:$0xff]
    %v6515 = vld [vmem:[%s15 + $0x1b8] sm:$0xff]
    %v6516 = vld [vmem:[%s15 + $0x1c0] sm:$0xff]
    %v6517 = vld [vmem:[%s15 + $0x1c8] sm:$0xff]
    %v6518 = vld [vmem:[%s15 + $0x1d0] sm:$0xff]
    %v6519 = vld [vmem:[%s15 + $0x1d8] sm:$0xff]
    %v6520 = vld [vmem:[%s15 + $0x1e0] sm:$0xff]
    %v6521 = vld [vmem:[%s15 + $0x1e8] sm:$0xff]
    %v6522 = vld [vmem:[%s15 + $0x1f0] sm:$0xff]
    %v6523 = vld [vmem:[%s15 + $0x1f8] sm:$0xff]
    %v6524 = vld [vmem:[%s15 + $0x200] sm:$0xff]
    %v6525 = vld [vmem:[%s15 + $0x208] sm:$0xff]
    %v6526 = vld [vmem:[%s15 + $0x210] sm:$0xff]
    %v6527 = vld [vmem:[%s15 + $0x218] sm:$0xff]
    %v6528 = vld [vmem:[%s15 + $0x220] sm:$0xff]
    %v6529 = vld [vmem:[%s15 + $0x228] sm:$0xff]
    %v6530 = vld [vmem:[%s15 + $0x230] sm:$0xff]
    %v6531 = vld [vmem:[%s15 + $0x238] sm:$0xff]
    %v6532 = vld [vmem:[%s15 + $0x240] sm:$0xff]
    %v6533 = vld [vmem:[%s15 + $0x248] sm:$0xff]
    %v6534 = vld [vmem:[%s15 + $0x250] sm:$0xff]
    %v6535 = vld [vmem:[%s15 + $0x258] sm:$0xff]
    %v6536 = vld [vmem:[%s15 + $0x260] sm:$0xff]
    %v6537 = vld [vmem:[%s15 + $0x268] sm:$0xff]
    %v6538 = vld [vmem:[%s15 + $0x270] sm:$0xff]
    %v6539 = vld [vmem:[%s15 + $0x278] sm:$0xff]
    %v6540 = vld [vmem:[%s15 + $0x280] sm:$0xff]
    %v6541 = vld [vmem:[%s15 + $0x288] sm:$0xff]
    %v6542 = vld [vmem:[%s15 + $0x290] sm:$0xff]
    %v6543 = vld [vmem:[%s15 + $0x298] sm:$0xff]
    %v6544 = vld [vmem:[%s15 + $0x2a0] sm:$0xff]
    %v6545 = vld [vmem:[%s15 + $0x2a8] sm:$0xff]
    %v6546 = vld [vmem:[%s15 + $0x2b0] sm:$0xff]
    %v6547 = vld [vmem:[%s15 + $0x2b8] sm:$0xff]
    %v6548 = vld [vmem:[%s15 + $0x2c0] sm:$0xff]
    %v6549 = vld [vmem:[%s15 + $0x2c8] sm:$0xff]
    %v6550 = vld [vmem:[%s15 + $0x2d0] sm:$0xff]
    %v6551 = vld [vmem:[%s15 + $0x2d8] sm:$0xff]
    %v6552 = vld [vmem:[%s15 + $0x2e0] sm:$0xff]
    %v6553 = vld [vmem:[%s15 + $0x2e8] sm:$0xff]
    %v6554 = vld [vmem:[%s15 + $0x2f0] sm:$0xff]
    %v6555 = vld [vmem:[%s15 + $0x2f8] sm:$0xff]
    %v6556 = vld [vmem:[%s15 + $0x300] sm:$0xff]
    %v6557 = vld [vmem:[%s15 + $0x308] sm:$0xff]
    %v6558 = vld [vmem:[%s15 + $0x310] sm:$0xff]
    %v6559 = vld [vmem:[%s15 + $0x318] sm:$0xff]
    %v6560 = vld [vmem:[%s15 + $0x320] sm:$0xff]
    %v6561 = vld [vmem:[%s15 + $0x328] sm:$0xff]
    %v6562 = vld [vmem:[%s15 + $0x330] sm:$0xff]
    %v6563 = vld [vmem:[%s15 + $0x338] sm:$0xff]
    %v6564 = vld [vmem:[%s15 + $0x340] sm:$0xff]
    %v6565 = vld [vmem:[%s15 + $0x348] sm:$0xff]
    %v6566 = vld [vmem:[%s15 + $0x350] sm:$0xff]
    %v6567 = vld [vmem:[%s15 + $0x358] sm:$0xff]
    %v6568 = vld [vmem:[%s15 + $0x360] sm:$0xff]
    %v6569 = vld [vmem:[%s15 + $0x368] sm:$0xff]
    %v6570 = vld [vmem:[%s15 + $0x370] sm:$0xff]
    %v6571 = vld [vmem:[%s15 + $0x378] sm:$0xff]
    %v6572 = vld [vmem:[%s15 + $0x380] sm:$0xff]
    %v6573 = vld [vmem:[%s15 + $0x388] sm:$0xff]
    %v6574 = vld [vmem:[%s15 + $0x390] sm:$0xff]
    %v6575 = vld [vmem:[%s15 + $0x398] sm:$0xff]
    %v6576 = vld [vmem:[%s15 + $0x3a0] sm:$0xff]
    %v6577 = vld [vmem:[%s15 + $0x3a8] sm:$0xff]
    %v6578 = vld [vmem:[%s15 + $0x3b0] sm:$0xff]
    %v6579 = vld [vmem:[%s15 + $0x3b8] sm:$0xff]
    %v6580 = vld [vmem:[%s15 + $0x3c0] sm:$0xff]
    %v6581 = vld [vmem:[%s15 + $0x3c8] sm:$0xff]
    %v6582 = vld [vmem:[%s15 + $0x3d0] sm:$0xff]
    %v6583 = vld [vmem:[%s15 + $0x3d8] sm:$0xff]
    %v6584 = vld [vmem:[%s15 + $0x3e0] sm:$0xff]
    %v6585 = vld [vmem:[%s15 + $0x3e8] sm:$0xff]
    %v6586 = vld [vmem:[%s15 + $0x3f0] sm:$0xff]
    %v6587 = vld [vmem:[%s15 + $0x3f8] sm:$0xff]
    %v6588 = vld [vmem:[%s15 + $0x400] sm:$0xff]
    %v6589 = vld [vmem:[%s15 + $0x408] sm:$0xff]
    %v6590 = vld [vmem:[%s15 + $0x410] sm:$0xff]
    %v6591 = vld [vmem:[%s15 + $0x418] sm:$0xff]
    %v6592 = vld [vmem:[%s15 + $0x420] sm:$0xff]
    %v6593 = vld [vmem:[%s15 + $0x428] sm:$0xff]
    %v6594 = vld [vmem:[%s15 + $0x430] sm:$0xff]
    %v6595 = vld [vmem:[%s15 + $0x438] sm:$0xff]
    %v6596 = vld [vmem:[%s15 + $0x440] sm:$0xff]
    %v6597 = vld [vmem:[%s15 + $0x448] sm:$0xff]
    %v6598 = vld [vmem:[%s15 + $0x450] sm:$0xff]
    %v6599 = vld [vmem:[%s15 + $0x458] sm:$0xff]
    %v6600 = vld [vmem:[%s15 + $0x460] sm:$0xff]
    %v6601 = vld [vmem:[%s15 + $0x468] sm:$0xff]
    %v6602 = vld [vmem:[%s15 + $0x470] sm:$0xff]
    %v6603 = vld [vmem:[%s15 + $0x478] sm:$0xff]
    %v6604 = vld [vmem:[%s15 + $0x480] sm:$0xff]
    %v6605 = vld [vmem:[%s15 + $0x488] sm:$0xff]
    %v6606 = vld [vmem:[%s15 + $0x490] sm:$0xff]
    %v6607 = vld [vmem:[%s15 + $0x498] sm:$0xff]
    %v6608 = vld [vmem:[%s15 + $0x4a0] sm:$0xff]
    %v6609 = vld [vmem:[%s15 + $0x4a8] sm:$0xff]
    %v6610 = vld [vmem:[%s15 + $0x4b0] sm:$0xff]
    %v6611 = vld [vmem:[%s15 + $0x4b8] sm:$0xff]
    %v6612 = vld [vmem:[%s15 + $0x4c0] sm:$0xff]
    %v6613 = vld [vmem:[%s15 + $0x4c8] sm:$0xff]
    %v6614 = vld [vmem:[%s15 + $0x4d0] sm:$0xff]
    %v6615 = vld [vmem:[%s15 + $0x4d8] sm:$0xff]
    %v6616 = vld [vmem:[%s15 + $0x4e0] sm:$0xff]
    %v6617 = vld [vmem:[%s15 + $0x4e8] sm:$0xff]
    %v6618 = vld [vmem:[%s15 + $0x4f0] sm:$0xff]
    %v6619 = vld [vmem:[%s15 + $0x4f8] sm:$0xff]
    %v6620 = vld [vmem:[%s15 + $0x500] sm:$0xff]
    %v6621 = vld [vmem:[%s15 + $0x508] sm:$0xff]
    %v6622 = vld [vmem:[%s15 + $0x510] sm:$0xff]
    %v6623 = vld [vmem:[%s15 + $0x518] sm:$0xff]
    %v6624 = vld [vmem:[%s15 + $0x520] sm:$0xff]
    %v6625 = vld [vmem:[%s15 + $0x528] sm:$0xff]
    %v6626 = vld [vmem:[%s15 + $0x530] sm:$0xff]
    %v6627 = vld [vmem:[%s15 + $0x538] sm:$0xff]
    %v6628 = vld [vmem:[%s15 + $0x540] sm:$0xff]
    %v6629 = vld [vmem:[%s15 + $0x548] sm:$0xff]
    %v6630 = vld [vmem:[%s15 + $0x550] sm:$0xff]
    %v6631 = vld [vmem:[%s15 + $0x558] sm:$0xff]
    %v6632 = vld [vmem:[%s15 + $0x560] sm:$0xff]
    %v6633 = vld [vmem:[%s15 + $0x568] sm:$0xff]
    %v6634 = vld [vmem:[%s15 + $0x570] sm:$0xff]
    %v6635 = vld [vmem:[%s15 + $0x578] sm:$0xff]
    %v6636 = vld [vmem:[%s15 + $0x580] sm:$0xff]
    %v6637 = vld [vmem:[%s15 + $0x588] sm:$0xff]
    %v6638 = vld [vmem:[%s15 + $0x590] sm:$0xff]
    %v6639 = vld [vmem:[%s15 + $0x598] sm:$0xff]
    %v6640 = vld [vmem:[%s15 + $0x5a0] sm:$0xff]
    %v6641 = vld [vmem:[%s15 + $0x5a8] sm:$0xff]
    %v6642 = vld [vmem:[%s15 + $0x5b0] sm:$0xff]
    %v6643 = vld [vmem:[%s15 + $0x5b8] sm:$0xff]
    %v6644 = vld [vmem:[%s15 + $0x5c0] sm:$0xff]
    %v6645 = vld [vmem:[%s15 + $0x5c8] sm:$0xff]
    %v6646 = vld [vmem:[%s15 + $0x5d0] sm:$0xff]
    %v6647 = vld [vmem:[%s15 + $0x5d8] sm:$0xff]
    %v6648 = vld [vmem:[%s15 + $0x5e0] sm:$0xff]
    %v6649 = vld [vmem:[%s15 + $0x5e8] sm:$0xff]
    %v6650 = vld [vmem:[%s15 + $0x5f0] sm:$0xff]
    %v6651 = vld [vmem:[%s15 + $0x5f8] sm:$0xff]
    %v6652 = vld [vmem:[%s15 + $0x600] sm:$0xff]
    %v6653 = vld [vmem:[%s15 + $0x608] sm:$0xff]
    %v6654 = vld [vmem:[%s15 + $0x610] sm:$0xff]
    %v6655 = vld [vmem:[%s15 + $0x618] sm:$0xff]
    %v6656 = vld [vmem:[%s15 + $0x620] sm:$0xff]
    %v6657 = vld [vmem:[%s15 + $0x628] sm:$0xff]
    %v6658 = vld [vmem:[%s15 + $0x630] sm:$0xff]
    %v6659 = vld [vmem:[%s15 + $0x638] sm:$0xff]
    %v6660 = vld [vmem:[%s15 + $0x640] sm:$0xff]
    %v6661 = vld [vmem:[%s15 + $0x648] sm:$0xff]
    %v6662 = vld [vmem:[%s15 + $0x650] sm:$0xff]
    %v6663 = vld [vmem:[%s15 + $0x658] sm:$0xff]
    %v6664 = vld [vmem:[%s15 + $0x660] sm:$0xff]
    %v6665 = vld [vmem:[%s15 + $0x668] sm:$0xff]
    %v6666 = vld [vmem:[%s15 + $0x670] sm:$0xff]
    %v6667 = vld [vmem:[%s15 + $0x678] sm:$0xff]
    %v6668 = vld [vmem:[%s15 + $0x680] sm:$0xff]
    %v6669 = vld [vmem:[%s15 + $0x688] sm:$0xff]
    %v6670 = vld [vmem:[%s15 + $0x690] sm:$0xff]
    %v6671 = vld [vmem:[%s15 + $0x698] sm:$0xff]
    %v6672 = vld [vmem:[%s15 + $0x6a0] sm:$0xff]
    %v6673 = vld [vmem:[%s15 + $0x6a8] sm:$0xff]
    %v6674 = vld [vmem:[%s15 + $0x6b0] sm:$0xff]
    %v6675 = vld [vmem:[%s15 + $0x6b8] sm:$0xff]
    %v6676 = vld [vmem:[%s15 + $0x6c0] sm:$0xff]
    %v6677 = vld [vmem:[%s15 + $0x6c8] sm:$0xff]
    %v6678 = vld [vmem:[%s15 + $0x6d0] sm:$0xff]
    %v6679 = vld [vmem:[%s15 + $0x6d8] sm:$0xff]
    %v6680 = vld [vmem:[%s15 + $0x6e0] sm:$0xff]
    %v6681 = vld [vmem:[%s15 + $0x6e8] sm:$0xff]
    %v6682 = vld [vmem:[%s15 + $0x6f0] sm:$0xff]
    %v6683 = vld [vmem:[%s15 + $0x6f8] sm:$0xff]
    %v6684 = vld [vmem:[%s15 + $0x700] sm:$0xff]
    %v6685 = vld [vmem:[%s15 + $0x708] sm:$0xff]
    %v6686 = vld [vmem:[%s15 + $0x710] sm:$0xff]
    %v6687 = vld [vmem:[%s15 + $0x718] sm:$0xff]
    %v6688 = vld [vmem:[%s15 + $0x720] sm:$0xff]
    %v6689 = vld [vmem:[%s15 + $0x728] sm:$0xff]
    %v6690 = vld [vmem:[%s15 + $0x730] sm:$0xff]
    %v6691 = vld [vmem:[%s15 + $0x738] sm:$0xff]
    %v6692 = vld [vmem:[%s15 + $0x740] sm:$0xff]
    %v6693 = vld [vmem:[%s15 + $0x748] sm:$0xff]
    %v6694 = vld [vmem:[%s15 + $0x750] sm:$0xff]
    %v6695 = vld [vmem:[%s15 + $0x758] sm:$0xff]
    %v6696 = vld [vmem:[%s15 + $0x760] sm:$0xff]
    %v6697 = vld [vmem:[%s15 + $0x768] sm:$0xff]
    %v6698 = vld [vmem:[%s15 + $0x770] sm:$0xff]
    %v6699 = vld [vmem:[%s15 + $0x778] sm:$0xff]
    %v6700 = vld [vmem:[%s15 + $0x780] sm:$0xff]
    %v6701 = vld [vmem:[%s15 + $0x788] sm:$0xff]
    %v6702 = vld [vmem:[%s15 + $0x790] sm:$0xff]
    %v6703 = vld [vmem:[%s15 + $0x798] sm:$0xff]
    %v6704 = vld [vmem:[%s15 + $0x7a0] sm:$0xff]
    %v6705 = vld [vmem:[%s15 + $0x7a8] sm:$0xff]
    %v6706 = vld [vmem:[%s15 + $0x7b0] sm:$0xff]
    %v6707 = vld [vmem:[%s15 + $0x7b8] sm:$0xff]
    %v6708 = vld [vmem:[%s15 + $0x7c0] sm:$0xff]
    %v6709 = vld [vmem:[%s15 + $0x7c8] sm:$0xff]
    %v6710 = vld [vmem:[%s15 + $0x7d0] sm:$0xff]
    %v6711 = vld [vmem:[%s15 + $0x7d8] sm:$0xff]
    %v6712 = vld [vmem:[%s15 + $0x7e0] sm:$0xff]
    %v6713 = vld [vmem:[%s15 + $0x7e8] sm:$0xff]
    %v6714 = vld [vmem:[%s15 + $0x7f0] sm:$0xff]
    %v6715 = vld [vmem:[%s15 + $0x7f8] sm:$0xff]
    %v6716 = vld [vmem:[%s15 + $0x800] sm:$0xff]
    %v6717 = vld [vmem:[%s15 + $0x808] sm:$0xff]
    %v6718 = vld [vmem:[%s15 + $0x810] sm:$0xff]
    %v6719 = vld [vmem:[%s15 + $0x818] sm:$0xff]
    %v6720 = vld [vmem:[%s15 + $0x820] sm:$0xff]
    %v6721 = vld [vmem:[%s15 + $0x828] sm:$0xff]
    %v6722 = vld [vmem:[%s15 + $0x830] sm:$0xff]
    %v6723 = vld [vmem:[%s15 + $0x838] sm:$0xff]
    %v6724 = vld [vmem:[%s15 + $0x840] sm:$0xff]
    %v6725 = vld [vmem:[%s15 + $0x848] sm:$0xff]
    %v6726 = vld [vmem:[%s15 + $0x850] sm:$0xff]
    %v6727 = vld [vmem:[%s15 + $0x858] sm:$0xff]
    %v6728 = vld [vmem:[%s15 + $0x860] sm:$0xff]
    %v6729 = vld [vmem:[%s15 + $0x868] sm:$0xff]
    %v6730 = vld [vmem:[%s15 + $0x870] sm:$0xff]
    %v6731 = vld [vmem:[%s15 + $0x878] sm:$0xff]
    %v6732 = vld [vmem:[%s15 + $0x880] sm:$0xff]
    %v6733 = vld [vmem:[%s15 + $0x888] sm:$0xff]
    %v6734 = vld [vmem:[%s15 + $0x890] sm:$0xff]
    %v6735 = vld [vmem:[%s15 + $0x898] sm:$0xff]
    %v6736 = vld [vmem:[%s15 + $0x8a0] sm:$0xff]
    %v6737 = vld [vmem:[%s15 + $0x8a8] sm:$0xff]
    %v6738 = vld [vmem:[%s15 + $0x8b0] sm:$0xff]
    %v6739 = vld [vmem:[%s15 + $0x8b8] sm:$0xff]
    %v6740 = vld [vmem:[%s15 + $0x8c0] sm:$0xff]
    %v6741 = vld [vmem:[%s15 + $0x8c8] sm:$0xff]
    %v6742 = vld [vmem:[%s15 + $0x8d0] sm:$0xff]
    %v6743 = vld [vmem:[%s15 + $0x8d8] sm:$0xff]
    %v6744 = vld [vmem:[%s15 + $0x8e0] sm:$0xff]
    %v6745 = vld [vmem:[%s15 + $0x8e8] sm:$0xff]
    %v6746 = vld [vmem:[%s15 + $0x8f0] sm:$0xff]
    %v6747 = vld [vmem:[%s15 + $0x8f8] sm:$0xff]
    %v6748 = vld [vmem:[%s15 + $0x900] sm:$0xff]
    %v6749 = vld [vmem:[%s15 + $0x908] sm:$0xff]
    %v6750 = vld [vmem:[%s15 + $0x910] sm:$0xff]
    %v6751 = vld [vmem:[%s15 + $0x918] sm:$0xff]
    %v6752 = vld [vmem:[%s15 + $0x920] sm:$0xff]
    %v6753 = vld [vmem:[%s15 + $0x928] sm:$0xff]
    %v6754 = vld [vmem:[%s15 + $0x930] sm:$0xff]
    %v6755 = vld [vmem:[%s15 + $0x938] sm:$0xff]
    %v6756 = vld [vmem:[%s15 + $0x940] sm:$0xff]
    %v6757 = vld [vmem:[%s15 + $0x948] sm:$0xff]
    %v6758 = vld [vmem:[%s15 + $0x950] sm:$0xff]
    %v6759 = vld [vmem:[%s15 + $0x958] sm:$0xff]
    %v6760 = vld [vmem:[%s15 + $0x960] sm:$0xff]
    %v6761 = vld [vmem:[%s15 + $0x968] sm:$0xff]
    %v6762 = vld [vmem:[%s15 + $0x970] sm:$0xff]
    %v6763 = vld [vmem:[%s15 + $0x978] sm:$0xff]
    %v6764 = vld [vmem:[%s15 + $0x980] sm:$0x3]
    %v6765 = vld [vmem:[%s15 + $0x988] sm:$0x3]
    %v6766 = vld [vmem:[%s15 + $0x990] sm:$0x3]
    %v6767 = vld [vmem:[%s15 + $0x998] sm:$0x3]
    %v6770 = vcombine.high %v6474, %v6474
    %v6772 = vunpack.c.l.s4 1983009808
    %v6773 = vunpack.c.0.s8 %v6772
    %v6774 = vlaneseq
    %v6775 = vshrl.u32 %v6774, 7
    %v6776 = vsub.s32 %v6773, %v6775
    %v6777 = vrot.slane %v6474, %v6776
    %v6779 = vunpack.c.l.s4 1983009808
    %v6780 = vunpack.c.0.s8 %v6779
    %v6781 = vlaneseq
    %v6782 = vshrl.u32 %v6781, 7
    %v6783 = vsub.s32 %v6780, %v6782
    %v6784 = vrot.slane %v6770, %v6783
    %v6785 = vcombine.high %v6777, %v6777
    %v6786 = vcombine.high %v6784, %v6784
    %v6788 = vunpack.c.l.s4 1983009808
    %v6789 = vunpack.c.0.s8 %v6788
    %v6790 = vlaneseq
    %v6791 = vshrl.u32 %v6790, 7
    %v6792 = vsub.s32 %v6789, %v6791
    %v6793 = vrot.slane %v6475, %v6792
    %vm6798 = vcmask 539648
    %v6799 = vsel %vm6798, %v6793, 0
    %vm6801 = vcmask 1041408
    %v6803 = vsel %vm6801, %v6764, 0
    %v6806 = vsel %vm6801, %v6765, 0
    %v6809 = vsel %vm6801, %v6766, 0
    %v6812 = vsel %vm6801, %v6767, 0
    %6814 = vmatprep.subr.mxu0 %v6477
    %6815 = vmatpush1.msra.mxu0 %v6476
    %6816 = vmatprep.subr.mxu0 %v6481
    %6817 = vmatpush1.msra.mxu0 %v6480
    %6818 = vmatprep.subr.mxu0 %v6485
    %6819 = vmatpush1.msra.mxu0 %v6484
    %6820 = vmatprep.subr.mxu0 %v6489
    %6821 = vmatpush1.msra.mxu0 %v6488
    %6822 = vmatprep.subr.mxu0 %v6493
    %6823 = vmatpush1.msra.mxu0 %v6492
    %6824 = vmatprep.subr.mxu0 %v6497
    %6825 = vmatpush1.msra.mxu0 %v6496
    %6826 = vmatprep.subr.mxu0 %v6501
    %6827 = vmatpush1.msra.mxu0 %v6500
    %6828 = vmatprep.subr.mxu0 %v6505
    %6829 = vmatpush1.msra.mxu0 %v6504
    %6830 = vmatprep.subr.mxu0 %v6509
    %6831 = vmatpush1.msra.mxu0 %v6508
    %6832 = vmatprep.subr.mxu0 %v6513
    %6833 = vmatpush1.msra.mxu0 %v6512
    %6834 = vmatprep.subr.mxu0 %v6517
    %6835 = vmatpush1.msra.mxu0 %v6516
    %6836 = vmatprep.subr.mxu0 %v6521
    %6837 = vmatpush1.msra.mxu0 %v6520
    %6838 = vmatprep.subr.mxu0 %v6525
    %6839 = vmatpush1.msra.mxu0 %v6524
    %6840 = vmatprep.subr.mxu0 %v6529
    %6841 = vmatpush1.msra.mxu0 %v6528
    %6842 = vmatprep.subr.mxu0 %v6533
    %6843 = vmatpush1.msra.mxu0 %v6532
    %6844 = vmatprep.subr.mxu0 %v6537
    %6845 = vmatpush1.msra.mxu0 %v6536
    %6846 = vmatprep.subr.mxu0 %v6541
    %6847 = vmatpush1.msra.mxu0 %v6540
    %6848 = vmatprep.subr.mxu0 %v6545
    %6849 = vmatpush1.msra.mxu0 %v6544
    %6850 = vmatprep.subr.mxu0 %v6549
    %6851 = vmatpush1.msra.mxu0 %v6548
    %6852 = vmatprep.subr.mxu0 %v6553
    %6853 = vmatpush1.msra.mxu0 %v6552
    %6854 = vmatprep.subr.mxu0 %v6557
    %6855 = vmatpush1.msra.mxu0 %v6556
    %6856 = vmatprep.subr.mxu0 %v6561
    %6857 = vmatpush1.msra.mxu0 %v6560
    %6858 = vmatprep.subr.mxu0 %v6565
    %6859 = vmatpush1.msra.mxu0 %v6564
    %6860 = vmatprep.subr.mxu0 %v6569
    %6861 = vmatpush1.msra.mxu0 %v6568
    %6862 = vmatprep.subr.mxu0 %v6573
    %6863 = vmatpush1.msra.mxu0 %v6572
    %6864 = vmatprep.subr.mxu0 %v6577
    %6865 = vmatpush1.msra.mxu0 %v6576
    %6866 = vmatprep.subr.mxu0 %v6581
    %6867 = vmatpush1.msra.mxu0 %v6580
    %6868 = vmatprep.subr.mxu0 %v6585
    %6869 = vmatpush1.msra.mxu0 %v6584
    %6870 = vmatprep.subr.mxu0 %v6589
    %6871 = vmatpush1.msra.mxu0 %v6588
    %6872 = vmatprep.subr.mxu0 %v6593
    %6873 = vmatpush1.msra.mxu0 %v6592
    %6874 = vmatprep.subr.mxu0 %v6597
    %6875 = vmatpush1.msra.mxu0 %v6596
    %6876 = vmatprep.subr.mxu0 %v6601
    %6877 = vmatpush1.msra.mxu0 %v6600
    %6878 = vmatprep.mubr.f32.mxu0 %v6785
    %6879 = vmatmul.mubr.f32.gmra.mrb[0].mxu0 %v6777
    %v6880 = vpop.f32.mrb[0].mxu0
    %v6881 = vadd.f32 0.0, %v6880
    %v6882 = vpop.f32.mrb[0].mxu0
    %v6883 = vadd.f32 0.0, %v6882
    %6884 = vdwg.mxu0
    %6885 = vmatprep.subr.mxu0 %v6605
    %6886 = vmatpush1.msra.mxu0 %v6604
    %6887 = vmatprep.subr.mxu0 %v6609
    %6888 = vmatpush1.msra.mxu0 %v6608
    %6889 = vmatprep.subr.mxu0 %v6613
    %6890 = vmatpush1.msra.mxu0 %v6612
    %6891 = vmatprep.subr.mxu0 %v6617
    %6892 = vmatpush1.msra.mxu0 %v6616
    %6893 = vmatprep.subr.mxu0 %v6621
    %6894 = vmatpush1.msra.mxu0 %v6620
    %6895 = vmatprep.subr.mxu0 %v6625
    %6896 = vmatpush1.msra.mxu0 %v6624
    %6897 = vmatprep.subr.mxu0 %v6629
    %6898 = vmatpush1.msra.mxu0 %v6628
    %6899 = vmatprep.subr.mxu0 %v6633
    %6900 = vmatpush1.msra.mxu0 %v6632
    %6901 = vmatprep.subr.mxu0 %v6637
    %6902 = vmatpush1.msra.mxu0 %v6636
    %6903 = vmatprep.subr.mxu0 %v6641
    %6904 = vmatpush1.msra.mxu0 %v6640
    %6905 = vmatprep.subr.mxu0 %v6645
    %6906 = vmatpush1.msra.mxu0 %v6644
    %6907 = vmatprep.subr.mxu0 %v6649
    %6908 = vmatpush1.msra.mxu0 %v6648
    %6909 = vmatprep.subr.mxu0 %v6653
    %6910 = vmatpush1.msra.mxu0 %v6652
    %6911 = vmatprep.subr.mxu0 %v6657
    %6912 = vmatpush1.msra.mxu0 %v6656
    %6913 = vmatprep.subr.mxu0 %v6661
    %6914 = vmatpush1.msra.mxu0 %v6660
    %6915 = vmatprep.subr.mxu0 %v6665
    %6916 = vmatpush1.msra.mxu0 %v6664
    %6917 = vmatprep.subr.mxu0 %v6669
    %6918 = vmatpush1.msra.mxu0 %v6668
    %6919 = vmatprep.subr.mxu0 %v6673
    %6920 = vmatpush1.msra.mxu0 %v6672
    %6921 = vmatprep.subr.mxu0 %v6677
    %6922 = vmatpush1.msra.mxu0 %v6676
    %6923 = vmatprep.subr.mxu0 %v6681
    %6924 = vmatpush1.msra.mxu0 %v6680
    %6925 = vmatprep.subr.mxu0 %v6685
    %6926 = vmatpush1.msra.mxu0 %v6684
    %6927 = vmatprep.subr.mxu0 %v6689
    %6928 = vmatpush1.msra.mxu0 %v6688
    %6929 = vmatprep.subr.mxu0 %v6693
    %6930 = vmatpush1.msra.mxu0 %v6692
    %6931 = vmatprep.subr.mxu0 %v6697
    %6932 = vmatpush1.msra.mxu0 %v6696
    %6933 = vmatprep.subr.mxu0 %v6701
    %6934 = vmatpush1.msra.mxu0 %v6700
    %6935 = vmatprep.subr.mxu0 %v6705
    %6936 = vmatpush1.msra.mxu0 %v6704
    %6937 = vmatprep.subr.mxu0 %v6709
    %6938 = vmatpush1.msra.mxu0 %v6708
    %6939 = vmatprep.subr.mxu0 %v6713
    %6940 = vmatpush1.msra.mxu0 %v6712
    %6941 = vmatprep.subr.mxu0 %v6717
    %6942 = vmatpush1.msra.mxu0 %v6716
    %6943 = vmatprep.subr.mxu0 %v6721
    %6944 = vmatpush1.msra.mxu0 %v6720
    %6945 = vmatprep.subr.mxu0 %v6725
    %6946 = vmatpush1.msra.mxu0 %v6724
    %6947 = vmatprep.subr.mxu0 %v6729
    %6948 = vmatpush1.msra.mxu0 %v6728
    %6949 = vmatprep.mubr.f32.mxu0 %v6786
    %6950 = vmatmul.mubr.f32.gmra.mrb[0].mxu0 %v6784
    %v6951 = vpop.f32.mrb[0].mxu0
    %v6952 = vadd.f32 %v6881, %v6951
    %v6953 = vpop.f32.mrb[0].mxu0
    %v6954 = vadd.f32 %v6883, %v6953
    %6955 = vdwg.mxu0
    %6956 = vmatprep.subr.mxu0 %v6733
    %6957 = vmatpush1.msra.mxu0 %v6732
    %6958 = vmatprep.subr.mxu0 %v6737
    %6959 = vmatpush1.msra.mxu0 %v6736
    %6960 = vmatprep.subr.mxu0 %v6741
    %6961 = vmatpush1.msra.mxu0 %v6740
    %6962 = vmatprep.subr.mxu0 %v6745
    %6963 = vmatpush1.msra.mxu0 %v6744
    %6964 = vmatprep.subr.mxu0 %v6749
    %6965 = vmatpush1.msra.mxu0 %v6748
    %6966 = vmatprep.subr.mxu0 %v6753
    %6967 = vmatpush1.msra.mxu0 %v6752
    %6968 = vmatprep.subr.mxu0 %v6757
    %6969 = vmatpush1.msra.mxu0 %v6756
    %6970 = vmatprep.subr.mxu0 %v6761
    %6971 = vmatpush1.msra.mxu0 %v6760
    %6972 = vmatprep.subr.mxu0 %v6806
    %6973 = vmatpush1.msra.mxu0 %v6803
    %6974 = vmatprep.subr.mxu0 0.0
    %6975 = vmatpush1.msra.mxu0 0.0
    %6976 = vmatprep.subr.mxu0 0.0
    %6977 = vmatpush1.msra.mxu0 0.0
    %6978 = vmatprep.subr.mxu0 0.0
    %6979 = vmatpush1.msra.mxu0 0.0
    %6980 = vmatprep.subr.mxu0 0.0
    %6981 = vmatpush1.msra.mxu0 0.0
    %6982 = vmatprep.subr.mxu0 0.0
    %6983 = vmatpush1.msra.mxu0 0.0
    %6984 = vmatprep.subr.mxu0 0.0
    %6985 = vmatpush1.msra.mxu0 0.0
    %6986 = vmatprep.subr.mxu0 0.0
    %6987 = vmatpush1.msra.mxu0 0.0
    %6988 = vmatprep.subr.mxu0 0.0
    %6989 = vmatpush1.msra.mxu0 0.0
    %6990 = vmatprep.subr.mxu0 0.0
    %6991 = vmatpush1.msra.mxu0 0.0
    %6992 = vmatprep.subr.mxu0 0.0
    %6993 = vmatpush1.msra.mxu0 0.0
    %6994 = vmatprep.subr.mxu0 0.0
    %6995 = vmatpush1.msra.mxu0 0.0
    %6996 = vmatprep.subr.mxu0 0.0
    %6997 = vmatpush1.msra.mxu0 0.0
    %6998 = vmatprep.subr.mxu0 0.0
    %6999 = vmatpush1.msra.mxu0 0.0
    %7000 = vmatprep.subr.mxu0 0.0
    %7001 = vmatpush1.msra.mxu0 0.0
    %7002 = vmatprep.subr.mxu0 0.0
    %7003 = vmatpush1.msra.mxu0 0.0
    %7004 = vmatprep.subr.mxu0 0.0
    %7005 = vmatpush1.msra.mxu0 0.0
    %7006 = vmatprep.subr.mxu0 0.0
    %7007 = vmatpush1.msra.mxu0 0.0
    %7008 = vmatprep.subr.mxu0 0.0
    %7009 = vmatpush1.msra.mxu0 0.0
    %7010 = vmatprep.subr.mxu0 0.0
    %7011 = vmatpush1.msra.mxu0 0.0
    %7012 = vmatprep.subr.mxu0 0.0
    %7013 = vmatpush1.msra.mxu0 0.0
    %7014 = vmatprep.subr.mxu0 0.0
    %7015 = vmatpush1.msra.mxu0 0.0
    %7016 = vmatprep.subr.mxu0 0.0
    %7017 = vmatpush1.msra.mxu0 0.0
    %7018 = vmatprep.subr.mxu0 0.0
    %7019 = vmatpush1.msra.mxu0 0.0
    %7020 = vmatprep.mubr.f32.mxu0 0.0
    %7021 = vmatmul.mubr.f32.gmra.mrb[0].mxu0 %v6799
    %v7022 = vpop.f32.mrb[0].mxu0
    %v7023 = vadd.f32 %v6952, %v7022
    %v7024 = vpop.f32.mrb[0].mxu0
    %v7025 = vadd.f32 %v6954, %v7024
    %7026 = vdwg.mxu0
    %7027 = vmatprep.subr.mxu0 %v6479
    %7028 = vmatpush1.msra.mxu0 %v6478
    %7029 = vmatprep.subr.mxu0 %v6483
    %7030 = vmatpush1.msra.mxu0 %v6482
    %7031 = vmatprep.subr.mxu0 %v6487
    %7032 = vmatpush1.msra.mxu0 %v6486
    %7033 = vmatprep.subr.mxu0 %v6491
    %7034 = vmatpush1.msra.mxu0 %v6490
    %7035 = vmatprep.subr.mxu0 %v6495
    %7036 = vmatpush1.msra.mxu0 %v6494
    %7037 = vmatprep.subr.mxu0 %v6499
    %7038 = vmatpush1.msra.mxu0 %v6498
    %7039 = vmatprep.subr.mxu0 %v6503
    %7040 = vmatpush1.msra.mxu0 %v6502
    %7041 = vmatprep.subr.mxu0 %v6507
    %7042 = vmatpush1.msra.mxu0 %v6506
    %7043 = vmatprep.subr.mxu0 %v6511
    %7044 = vmatpush1.msra.mxu0 %v6510
    %7045 = vmatprep.subr.mxu0 %v6515
    %7046 = vmatpush1.msra.mxu0 %v6514
    %7047 = vmatprep.subr.mxu0 %v6519
    %7048 = vmatpush1.msra.mxu0 %v6518
    %7049 = vmatprep.subr.mxu0 %v6523
    %7050 = vmatpush1.msra.mxu0 %v6522
    %7051 = vmatprep.subr.mxu0 %v6527
    %7052 = vmatpush1.msra.mxu0 %v6526
    %7053 = vmatprep.subr.mxu0 %v6531
    %7054 = vmatpush1.msra.mxu0 %v6530
    %7055 = vmatprep.subr.mxu0 %v6535
    %7056 = vmatpush1.msra.mxu0 %v6534
    %7057 = vmatprep.subr.mxu0 %v6539
    %7058 = vmatpush1.msra.mxu0 %v6538
    %7059 = vmatprep.subr.mxu0 %v6543
    %7060 = vmatpush1.msra.mxu0 %v6542
    %7061 = vmatprep.subr.mxu0 %v6547
    %7062 = vmatpush1.msra.mxu0 %v6546
    %7063 = vmatprep.subr.mxu0 %v6551
    %7064 = vmatpush1.msra.mxu0 %v6550
    %7065 = vmatprep.subr.mxu0 %v6555
    %7066 = vmatpush1.msra.mxu0 %v6554
    %7067 = vmatprep.subr.mxu0 %v6559
    %7068 = vmatpush1.msra.mxu0 %v6558
    %7069 = vmatprep.subr.mxu0 %v6563
    %7070 = vmatpush1.msra.mxu0 %v6562
    %7071 = vmatprep.subr.mxu0 %v6567
    %7072 = vmatpush1.msra.mxu0 %v6566
    %7073 = vmatprep.subr.mxu0 %v6571
    %7074 = vmatpush1.msra.mxu0 %v6570
    %7075 = vmatprep.subr.mxu0 %v6575
    %7076 = vmatpush1.msra.mxu0 %v6574
    %7077 = vmatprep.subr.mxu0 %v6579
    %7078 = vmatpush1.msra.mxu0 %v6578
    %7079 = vmatprep.subr.mxu0 %v6583
    %7080 = vmatpush1.msra.mxu0 %v6582
    %7081 = vmatprep.subr.mxu0 %v6587
    %7082 = vmatpush1.msra.mxu0 %v6586
    %7083 = vmatprep.subr.mxu0 %v6591
    %7084 = vmatpush1.msra.mxu0 %v6590
    %7085 = vmatprep.subr.mxu0 %v6595
    %7086 = vmatpush1.msra.mxu0 %v6594
    %7087 = vmatprep.subr.mxu0 %v6599
    %7088 = vmatpush1.msra.mxu0 %v6598
    %7089 = vmatprep.subr.mxu0 %v6603
    %7090 = vmatpush1.msra.mxu0 %v6602
    %7091 = vmatprep.mubr.f32.mxu0 %v6785
    %7092 = vmatmul.mubr.f32.gmra.mrb[0].mxu0 %v6777
    %v7093 = vpop.f32.mrb[0].mxu0
    %v7094 = vadd.f32 0.0, %v7093
    %v7095 = vpop.f32.mrb[0].mxu0
    %v7096 = vadd.f32 0.0, %v7095
    %7097 = vdwg.mxu0
    %7098 = vmatprep.subr.mxu0 %v6607
    %7099 = vmatpush1.msra.mxu0 %v6606
    %7100 = vmatprep.subr.mxu0 %v6611
    %7101 = vmatpush1.msra.mxu0 %v6610
    %7102 = vmatprep.subr.mxu0 %v6615
    %7103 = vmatpush1.msra.mxu0 %v6614
    %7104 = vmatprep.subr.mxu0 %v6619
    %7105 = vmatpush1.msra.mxu0 %v6618
    %7106 = vmatprep.subr.mxu0 %v6623
    %7107 = vmatpush1.msra.mxu0 %v6622
    %7108 = vmatprep.subr.mxu0 %v6627
    %7109 = vmatpush1.msra.mxu0 %v6626
    %7110 = vmatprep.subr.mxu0 %v6631
    %7111 = vmatpush1.msra.mxu0 %v6630
    %7112 = vmatprep.subr.mxu0 %v6635
    %7113 = vmatpush1.msra.mxu0 %v6634
    %7114 = vmatprep.subr.mxu0 %v6639
    %7115 = vmatpush1.msra.mxu0 %v6638
    %7116 = vmatprep.subr.mxu0 %v6643
    %7117 = vmatpush1.msra.mxu0 %v6642
    %7118 = vmatprep.subr.mxu0 %v6647
    %7119 = vmatpush1.msra.mxu0 %v6646
    %7120 = vmatprep.subr.mxu0 %v6651
    %7121 = vmatpush1.msra.mxu0 %v6650
    %7122 = vmatprep.subr.mxu0 %v6655
    %7123 = vmatpush1.msra.mxu0 %v6654
    %7124 = vmatprep.subr.mxu0 %v6659
    %7125 = vmatpush1.msra.mxu0 %v6658
    %7126 = vmatprep.subr.mxu0 %v6663
    %7127 = vmatpush1.msra.mxu0 %v6662
    %7128 = vmatprep.subr.mxu0 %v6667
    %7129 = vmatpush1.msra.mxu0 %v6666
    %7130 = vmatprep.subr.mxu0 %v6671
    %7131 = vmatpush1.msra.mxu0 %v6670
    %7132 = vmatprep.subr.mxu0 %v6675
    %7133 = vmatpush1.msra.mxu0 %v6674
    %7134 = vmatprep.subr.mxu0 %v6679
    %7135 = vmatpush1.msra.mxu0 %v6678
    %7136 = vmatprep.subr.mxu0 %v6683
    %7137 = vmatpush1.msra.mxu0 %v6682
    %7138 = vmatprep.subr.mxu0 %v6687
    %7139 = vmatpush1.msra.mxu0 %v6686
    %7140 = vmatprep.subr.mxu0 %v6691
    %7141 = vmatpush1.msra.mxu0 %v6690
    %7142 = vmatprep.subr.mxu0 %v6695
    %7143 = vmatpush1.msra.mxu0 %v6694
    %7144 = vmatprep.subr.mxu0 %v6699
    %7145 = vmatpush1.msra.mxu0 %v6698
    %7146 = vmatprep.subr.mxu0 %v6703
    %7147 = vmatpush1.msra.mxu0 %v6702
    %7148 = vmatprep.subr.mxu0 %v6707
    %7149 = vmatpush1.msra.mxu0 %v6706
    %7150 = vmatprep.subr.mxu0 %v6711
    %7151 = vmatpush1.msra.mxu0 %v6710
    %7152 = vmatprep.subr.mxu0 %v6715
    %7153 = vmatpush1.msra.mxu0 %v6714
    %7154 = vmatprep.subr.mxu0 %v6719
    %7155 = vmatpush1.msra.mxu0 %v6718
    %7156 = vmatprep.subr.mxu0 %v6723
    %7157 = vmatpush1.msra.mxu0 %v6722
    %7158 = vmatprep.subr.mxu0 %v6727
    %7159 = vmatpush1.msra.mxu0 %v6726
    %7160 = vmatprep.subr.mxu0 %v6731
    %7161 = vmatpush1.msra.mxu0 %v6730
    %7162 = vmatprep.mubr.f32.mxu0 %v6786
    %7163 = vmatmul.mubr.f32.gmra.mrb[0].mxu0 %v6784
    %v7164 = vpop.f32.mrb[0].mxu0
    %v7165 = vadd.f32 %v7094, %v7164
    %v7166 = vpop.f32.mrb[0].mxu0
    %v7167 = vadd.f32 %v7096, %v7166
    %7168 = vdwg.mxu0
    %7169 = vmatprep.subr.mxu0 %v6735
    %7170 = vmatpush1.msra.mxu0 %v6734
    %7171 = vmatprep.subr.mxu0 %v6739
    %7172 = vmatpush1.msra.mxu0 %v6738
    %7173 = vmatprep.subr.mxu0 %v6743
    %7174 = vmatpush1.msra.mxu0 %v6742
    %7175 = vmatprep.subr.mxu0 %v6747
    %7176 = vmatpush1.msra.mxu0 %v6746
    %7177 = vmatprep.subr.mxu0 %v6751
    %7178 = vmatpush1.msra.mxu0 %v6750
    %7179 = vmatprep.subr.mxu0 %v6755
    %7180 = vmatpush1.msra.mxu0 %v6754
    %7181 = vmatprep.subr.mxu0 %v6759
    %7182 = vmatpush1.msra.mxu0 %v6758
    %7183 = vmatprep.subr.mxu0 %v6763
    %7184 = vmatpush1.msra.mxu0 %v6762
    %7185 = vmatprep.subr.mxu0 %v6812
    %7186 = vmatpush1.msra.mxu0 %v6809
    %7187 = vmatprep.subr.mxu0 0.0
    %7188 = vmatpush1.msra.mxu0 0.0
    %7189 = vmatprep.subr.mxu0 0.0
    %7190 = vmatpush1.msra.mxu0 0.0
    %7191 = vmatprep.subr.mxu0 0.0
    %7192 = vmatpush1.msra.mxu0 0.0
    %7193 = vmatprep.subr.mxu0 0.0
    %7194 = vmatpush1.msra.mxu0 0.0
    %7195 = vmatprep.subr.mxu0 0.0
    %7196 = vmatpush1.msra.mxu0 0.0
    %7197 = vmatprep.subr.mxu0 0.0
    %7198 = vmatpush1.msra.mxu0 0.0
    %7199 = vmatprep.subr.mxu0 0.0
    %7200 = vmatpush1.msra.mxu0 0.0
    %7201 = vmatprep.subr.mxu0 0.0
    %7202 = vmatpush1.msra.mxu0 0.0
    %7203 = vmatprep.subr.mxu0 0.0
    %7204 = vmatpush1.msra.mxu0 0.0
    %7205 = vmatprep.subr.mxu0 0.0
    %7206 = vmatpush1.msra.mxu0 0.0
    %7207 = vmatprep.subr.mxu0 0.0
    %7208 = vmatpush1.msra.mxu0 0.0
    %7209 = vmatprep.subr.mxu0 0.0
    %7210 = vmatpush1.msra.mxu0 0.0
    %7211 = vmatprep.subr.mxu0 0.0
    %7212 = vmatpush1.msra.mxu0 0.0
    %7213 = vmatprep.subr.mxu0 0.0
    %7214 = vmatpush1.msra.mxu0 0.0
    %7215 = vmatprep.subr.mxu0 0.0
    %7216 = vmatpush1.msra.mxu0 0.0
    %7217 = vmatprep.subr.mxu0 0.0
    %7218 = vmatpush1.msra.mxu0 0.0
    %7219 = vmatprep.subr.mxu0 0.0
    %7220 = vmatpush1.msra.mxu0 0.0
    %7221 = vmatprep.subr.mxu0 0.0
    %7222 = vmatpush1.msra.mxu0 0.0
    %7223 = vmatprep.subr.mxu0 0.0
    %7224 = vmatpush1.msra.mxu0 0.0
    %7225 = vmatprep.subr.mxu0 0.0
    %7226 = vmatpush1.msra.mxu0 0.0
    %7227 = vmatprep.subr.mxu0 0.0
    %7228 = vmatpush1.msra.mxu0 0.0
    %7229 = vmatprep.subr.mxu0 0.0
    %7230 = vmatpush1.msra.mxu0 0.0
    %7231 = vmatprep.subr.mxu0 0.0
    %7232 = vmatpush1.msra.mxu0 0.0
    %7233 = vmatprep.mubr.f32.mxu0 0.0
    %7234 = vmatmul.mubr.f32.gmra.mrb[0].mxu0 %v6799
    %v7235 = vpop.f32.mrb[0].mxu0
    %v7236 = vadd.f32 %v7165, %v7235
    %v7237 = vpop.f32.mrb[0].mxu0
    %v7238 = vadd.f32 %v7167, %v7237
    %7239 = vdwg.mxu0
    %v7240 = vadd.f32 %v6470, %v7023
    %v7241 = vadd.f32 %v6471, %v7025
    %v7242 = vadd.f32 %v6472, %v7236
    %v7243 = vadd.f32 %v6473, %v7238
    %v7244 = vld [vmem:[%s16] sm:$0xf]
    %v7246 = vlaneseq
    %v7247 = vshrl.u32 %v7246, 7
    %v7248 = vsub.s32 0, %v7247
    %v7249 = vrot.slane %v7244, %v7248
    %v7250 = vlaneseq
    %v7251 = vshrl.u32 %v7250, 7
    %v7252 = vsub.s32 1, %v7251
    %v7253 = vrot.slane %v7244, %v7252
    %v7254 = vlaneseq
    %v7255 = vshrl.u32 %v7254, 7
    %v7256 = vsub.s32 2, %v7255
    %v7257 = vrot.slane %v7244, %v7256
    %v7258 = vlaneseq
    %v7259 = vshrl.u32 %v7258, 7
    %v7260 = vsub.s32 3, %v7259
    %v7261 = vrot.slane %v7244, %v7260
    %v7266 = vadd.f32 %v7240, %v7249
    %v7267 = vadd.f32 %v7241, %v7253
    %v7268 = vadd.f32 %v7242, %v7257
    %v7269 = vadd.f32 %v7243, %v7261
    %v7270 = vmax.f32 %v7266, 0.0
    %v7271 = vmax.f32 %v7267, 0.0
    %v7272 = vmax.f32 %v7268, 0.0
    %v7273 = vmax.f32 %v7269, 0.0
    %v7274 = vld [vmem:[%s17] sm:$0xff]
    %v7275 = vld [vmem:[%s17 + $0x8] sm:$0xff]
    %v7276 = vld [vmem:[%s17 + $0x10] sm:$0xff]
    %v7277 = vld [vmem:[%s17 + $0x18] sm:$0xff]
    %v7278 = vld [vmem:[%s17 + $0x20] sm:$0xff]
    %v7279 = vld [vmem:[%s17 + $0x28] sm:$0xff]
    %v7280 = vld [vmem:[%s17 + $0x30] sm:$0xff]
    %v7281 = vld [vmem:[%s17 + $0x38] sm:$0xff]
    %v7282 = vld [vmem:[%s17 + $0x40] sm:$0xff]
    %v7283 = vld [vmem:[%s17 + $0x48] sm:$0xff]
    %v7284 = vld [vmem:[%s17 + $0x50] sm:$0xff]
    %v7285 = vld [vmem:[%s17 + $0x58] sm:$0xff]
    %v7286 = vld [vmem:[%s17 + $0x60] sm:$0xff]
    %v7287 = vld [vmem:[%s17 + $0x68] sm:$0xff]
    %v7288 = vld [vmem:[%s17 + $0x70] sm:$0xff]
    %v7289 = vld [vmem:[%s17 + $0x78] sm:$0xff]
    %v7290 = vld [vmem:[%s17 + $0x80] sm:$0xff]
    %v7291 = vld [vmem:[%s17 + $0x88] sm:$0xff]
    %v7292 = vld [vmem:[%s17 + $0x90] sm:$0xff]
    %v7293 = vld [vmem:[%s17 + $0x98] sm:$0xff]
    %v7294 = vld [vmem:[%s17 + $0xa0] sm:$0xff]
    %v7295 = vld [vmem:[%s17 + $0xa8] sm:$0xff]
    %v7296 = vld [vmem:[%s17 + $0xb0] sm:$0xff]
    %v7297 = vld [vmem:[%s17 + $0xb8] sm:$0xff]
    %v7298 = vld [vmem:[%s17 + $0xc0] sm:$0xff]
    %v7299 = vld [vmem:[%s17 + $0xc8] sm:$0xff]
    %v7300 = vld [vmem:[%s17 + $0xd0] sm:$0xff]
    %v7301 = vld [vmem:[%s17 + $0xd8] sm:$0xff]
    %v7302 = vld [vmem:[%s17 + $0xe0] sm:$0xff]
    %v7303 = vld [vmem:[%s17 + $0xe8] sm:$0xff]
    %v7304 = vld [vmem:[%s17 + $0xf0] sm:$0xff]
    %v7305 = vld [vmem:[%s17 + $0xf8] sm:$0xff]
    %v7306 = vld [vmem:[%s17 + $0x100] sm:$0xff]
    %v7307 = vld [vmem:[%s17 + $0x108] sm:$0xff]
    %v7308 = vld [vmem:[%s17 + $0x110] sm:$0xff]
    %v7309 = vld [vmem:[%s17 + $0x118] sm:$0xff]
    %v7310 = vld [vmem:[%s17 + $0x120] sm:$0xff]
    %v7311 = vld [vmem:[%s17 + $0x128] sm:$0xff]
    %v7312 = vld [vmem:[%s17 + $0x130] sm:$0xff]
    %v7313 = vld [vmem:[%s17 + $0x138] sm:$0xff]
    %v7314 = vld [vmem:[%s17 + $0x140] sm:$0xff]
    %v7315 = vld [vmem:[%s17 + $0x148] sm:$0xff]
    %v7316 = vld [vmem:[%s17 + $0x150] sm:$0xff]
    %v7317 = vld [vmem:[%s17 + $0x158] sm:$0xff]
    %v7318 = vld [vmem:[%s17 + $0x160] sm:$0xff]
    %v7319 = vld [vmem:[%s17 + $0x168] sm:$0xff]
    %v7320 = vld [vmem:[%s17 + $0x170] sm:$0xff]
    %v7321 = vld [vmem:[%s17 + $0x178] sm:$0xff]
    %v7322 = vld [vmem:[%s17 + $0x180] sm:$0xff]
    %v7323 = vld [vmem:[%s17 + $0x188] sm:$0xff]
    %v7324 = vld [vmem:[%s17 + $0x190] sm:$0xff]
    %v7325 = vld [vmem:[%s17 + $0x198] sm:$0xff]
    %v7326 = vld [vmem:[%s17 + $0x1a0] sm:$0xff]
    %v7327 = vld [vmem:[%s17 + $0x1a8] sm:$0xff]
    %v7328 = vld [vmem:[%s17 + $0x1b0] sm:$0xff]
    %v7329 = vld [vmem:[%s17 + $0x1b8] sm:$0xff]
    %v7330 = vld [vmem:[%s17 + $0x1c0] sm:$0xff]
    %v7331 = vld [vmem:[%s17 + $0x1c8] sm:$0xff]
    %v7332 = vld [vmem:[%s17 + $0x1d0] sm:$0xff]
    %v7333 = vld [vmem:[%s17 + $0x1d8] sm:$0xff]
    %v7334 = vld [vmem:[%s17 + $0x1e0] sm:$0xff]
    %v7335 = vld [vmem:[%s17 + $0x1e8] sm:$0xff]
    %v7336 = vld [vmem:[%s17 + $0x1f0] sm:$0xff]
    %v7337 = vld [vmem:[%s17 + $0x1f8] sm:$0xff]
    %v7338 = vld [vmem:[%s17 + $0x200] sm:$0xff]
    %v7339 = vld [vmem:[%s17 + $0x208] sm:$0xff]
    %v7340 = vld [vmem:[%s17 + $0x210] sm:$0xff]
    %v7341 = vld [vmem:[%s17 + $0x218] sm:$0xff]
    %v7342 = vld [vmem:[%s17 + $0x220] sm:$0xff]
    %v7343 = vld [vmem:[%s17 + $0x228] sm:$0xff]
    %v7344 = vld [vmem:[%s17 + $0x230] sm:$0xff]
    %v7345 = vld [vmem:[%s17 + $0x238] sm:$0xff]
    %v7346 = vld [vmem:[%s17 + $0x240] sm:$0xff]
    %v7347 = vld [vmem:[%s17 + $0x248] sm:$0xff]
    %v7348 = vld [vmem:[%s17 + $0x250] sm:$0xff]
    %v7349 = vld [vmem:[%s17 + $0x258] sm:$0xff]
    %v7350 = vld [vmem:[%s17 + $0x260] sm:$0xff]
    %v7351 = vld [vmem:[%s17 + $0x268] sm:$0xff]
    %v7352 = vld [vmem:[%s17 + $0x270] sm:$0xff]
    %v7353 = vld [vmem:[%s17 + $0x278] sm:$0xff]
    %v7354 = vld [vmem:[%s17 + $0x280] sm:$0xff]
    %v7355 = vld [vmem:[%s17 + $0x288] sm:$0xff]
    %v7356 = vld [vmem:[%s17 + $0x290] sm:$0xff]
    %v7357 = vld [vmem:[%s17 + $0x298] sm:$0xff]
    %v7358 = vld [vmem:[%s17 + $0x2a0] sm:$0xff]
    %v7359 = vld [vmem:[%s17 + $0x2a8] sm:$0xff]
    %v7360 = vld [vmem:[%s17 + $0x2b0] sm:$0xff]
    %v7361 = vld [vmem:[%s17 + $0x2b8] sm:$0xff]
    %v7362 = vld [vmem:[%s17 + $0x2c0] sm:$0xff]
    %v7363 = vld [vmem:[%s17 + $0x2c8] sm:$0xff]
    %v7364 = vld [vmem:[%s17 + $0x2d0] sm:$0xff]
    %v7365 = vld [vmem:[%s17 + $0x2d8] sm:$0xff]
    %v7366 = vld [vmem:[%s17 + $0x2e0] sm:$0xff]
    %v7367 = vld [vmem:[%s17 + $0x2e8] sm:$0xff]
    %v7368 = vld [vmem:[%s17 + $0x2f0] sm:$0xff]
    %v7369 = vld [vmem:[%s17 + $0x2f8] sm:$0xff]
    %v7370 = vld [vmem:[%s17 + $0x300] sm:$0xff]
    %v7371 = vld [vmem:[%s17 + $0x308] sm:$0xff]
    %v7372 = vld [vmem:[%s17 + $0x310] sm:$0xff]
    %v7373 = vld [vmem:[%s17 + $0x318] sm:$0xff]
    %v7374 = vld [vmem:[%s17 + $0x320] sm:$0xff]
    %v7375 = vld [vmem:[%s17 + $0x328] sm:$0xff]
    %v7376 = vld [vmem:[%s17 + $0x330] sm:$0xff]
    %v7377 = vld [vmem:[%s17 + $0x338] sm:$0xff]
    %v7378 = vld [vmem:[%s17 + $0x340] sm:$0xff]
    %v7379 = vld [vmem:[%s17 + $0x348] sm:$0xff]
    %v7380 = vld [vmem:[%s17 + $0x350] sm:$0xff]
    %v7381 = vld [vmem:[%s17 + $0x358] sm:$0xff]
    %v7382 = vld [vmem:[%s17 + $0x360] sm:$0xff]
    %v7383 = vld [vmem:[%s17 + $0x368] sm:$0xff]
    %v7384 = vld [vmem:[%s17 + $0x370] sm:$0xff]
    %v7385 = vld [vmem:[%s17 + $0x378] sm:$0xff]
    %v7386 = vld [vmem:[%s17 + $0x380] sm:$0xff]
    %v7387 = vld [vmem:[%s17 + $0x388] sm:$0xff]
    %v7388 = vld [vmem:[%s17 + $0x390] sm:$0xff]
    %v7389 = vld [vmem:[%s17 + $0x398] sm:$0xff]
    %v7390 = vld [vmem:[%s17 + $0x3a0] sm:$0xff]
    %v7391 = vld [vmem:[%s17 + $0x3a8] sm:$0xff]
    %v7392 = vld [vmem:[%s17 + $0x3b0] sm:$0xff]
    %v7393 = vld [vmem:[%s17 + $0x3b8] sm:$0xff]
    %v7394 = vld [vmem:[%s17 + $0x3c0] sm:$0xff]
    %v7395 = vld [vmem:[%s17 + $0x3c8] sm:$0xff]
    %v7396 = vld [vmem:[%s17 + $0x3d0] sm:$0xff]
    %v7397 = vld [vmem:[%s17 + $0x3d8] sm:$0xff]
    %v7398 = vld [vmem:[%s17 + $0x3e0] sm:$0xff]
    %v7399 = vld [vmem:[%s17 + $0x3e8] sm:$0xff]
    %v7400 = vld [vmem:[%s17 + $0x3f0] sm:$0xff]
    %v7401 = vld [vmem:[%s17 + $0x3f8] sm:$0xff]
    %v7402 = vld [vmem:[%s17 + $0x400] sm:$0xff]
    %v7403 = vld [vmem:[%s17 + $0x408] sm:$0xff]
    %v7404 = vld [vmem:[%s17 + $0x410] sm:$0xff]
    %v7405 = vld [vmem:[%s17 + $0x418] sm:$0xff]
    %v7406 = vld [vmem:[%s17 + $0x420] sm:$0xff]
    %v7407 = vld [vmem:[%s17 + $0x428] sm:$0xff]
    %v7408 = vld [vmem:[%s17 + $0x430] sm:$0xff]
    %v7409 = vld [vmem:[%s17 + $0x438] sm:$0xff]
    %v7410 = vld [vmem:[%s17 + $0x440] sm:$0xff]
    %v7411 = vld [vmem:[%s17 + $0x448] sm:$0xff]
    %v7412 = vld [vmem:[%s17 + $0x450] sm:$0xff]
    %v7413 = vld [vmem:[%s17 + $0x458] sm:$0xff]
    %v7414 = vld [vmem:[%s17 + $0x460] sm:$0xff]
    %v7415 = vld [vmem:[%s17 + $0x468] sm:$0xff]
    %v7416 = vld [vmem:[%s17 + $0x470] sm:$0xff]
    %v7417 = vld [vmem:[%s17 + $0x478] sm:$0xff]
    %v7418 = vld [vmem:[%s17 + $0x480] sm:$0xff]
    %v7419 = vld [vmem:[%s17 + $0x488] sm:$0xff]
    %v7420 = vld [vmem:[%s17 + $0x490] sm:$0xff]
    %v7421 = vld [vmem:[%s17 + $0x498] sm:$0xff]
    %v7422 = vld [vmem:[%s17 + $0x4a0] sm:$0xff]
    %v7423 = vld [vmem:[%s17 + $0x4a8] sm:$0xff]
    %v7424 = vld [vmem:[%s17 + $0x4b0] sm:$0xff]
    %v7425 = vld [vmem:[%s17 + $0x4b8] sm:$0xff]
    %v7426 = vld [vmem:[%s17 + $0x4c0] sm:$0xff]
    %v7427 = vld [vmem:[%s17 + $0x4c8] sm:$0xff]
    %v7428 = vld [vmem:[%s17 + $0x4d0] sm:$0xff]
    %v7429 = vld [vmem:[%s17 + $0x4d8] sm:$0xff]
    %v7430 = vld [vmem:[%s17 + $0x4e0] sm:$0xff]
    %v7431 = vld [vmem:[%s17 + $0x4e8] sm:$0xff]
    %v7432 = vld [vmem:[%s17 + $0x4f0] sm:$0xff]
    %v7433 = vld [vmem:[%s17 + $0x4f8] sm:$0xff]
    %v7434 = vld [vmem:[%s17 + $0x500] sm:$0xff]
    %v7435 = vld [vmem:[%s17 + $0x508] sm:$0xff]
    %v7436 = vld [vmem:[%s17 + $0x510] sm:$0xff]
    %v7437 = vld [vmem:[%s17 + $0x518] sm:$0xff]
    %v7438 = vld [vmem:[%s17 + $0x520] sm:$0xff]
    %v7439 = vld [vmem:[%s17 + $0x528] sm:$0xff]
    %v7440 = vld [vmem:[%s17 + $0x530] sm:$0xff]
    %v7441 = vld [vmem:[%s17 + $0x538] sm:$0xff]
    %v7442 = vld [vmem:[%s17 + $0x540] sm:$0xff]
    %v7443 = vld [vmem:[%s17 + $0x548] sm:$0xff]
    %v7444 = vld [vmem:[%s17 + $0x550] sm:$0xff]
    %v7445 = vld [vmem:[%s17 + $0x558] sm:$0x3]
    %v7446 = vld [vmem:[%s17 + $0x560] sm:$0x3]
    %v7447 = vld [vmem:[%s17 + $0x568] sm:$0x3]
    %v7448 = vld [vmem:[%s18] sm:$0x7]
    %v7450 = vlaneseq
    %v7451 = vshrl.u32 %v7450, 7
    %v7452 = vsub.s32 0, %v7451
    %v7453 = vrot.slane %v7448, %v7452
    %v7454 = vlaneseq
    %v7455 = vshrl.u32 %v7454, 7
    %v7456 = vsub.s32 1, %v7455
    %v7457 = vrot.slane %v7448, %v7456
    %v7458 = vlaneseq
    %v7459 = vshrl.u32 %v7458, 7
    %v7460 = vsub.s32 2, %v7459
    %v7461 = vrot.slane %v7448, %v7460
    %vm7465 = vcmask 605184
    %v7467 = vsel %vm7465, %v7273, 0
    %v7470 = vsel %vm6801, %v7445, 0
    %v7473 = vsel %vm6801, %v7446, 0
    %v7476 = vsel %vm6801, %v7447, 0
    %7478 = vmatprep.subr.mxu0 %v7275
    %7479 = vmatpush1.msra.mxu0 %v7274
    %7480 = vmatprep.subr.mxu0 %v7278
    %7481 = vmatpush1.msra.mxu0 %v7277
    %7482 = vmatprep.subr.mxu0 %v7281
    %7483 = vmatpush1.msra.mxu0 %v7280
    %7484 = vmatprep.subr.mxu0 %v7284
    %7485 = vmatpush1.msra.mxu0 %v7283
    %7486 = vmatprep.subr.mxu0 %v7287
    %7487 = vmatpush1.msra.mxu0 %v7286
    %7488 = vmatprep.subr.mxu0 %v7290
    %7489 = vmatpush1.msra.mxu0 %v7289
    %7490 = vmatprep.subr.mxu0 %v7293
    %7491 = vmatpush1.msra.mxu0 %v7292
    %7492 = vmatprep.subr.mxu0 %v7296
    %7493 = vmatpush1.msra.mxu0 %v7295
    %7494 = vmatprep.subr.mxu0 %v7299
    %7495 = vmatpush1.msra.mxu0 %v7298
    %7496 = vmatprep.subr.mxu0 %v7302
    %7497 = vmatpush1.msra.mxu0 %v7301
    %7498 = vmatprep.subr.mxu0 %v7305
    %7499 = vmatpush1.msra.mxu0 %v7304
    %7500 = vmatprep.subr.mxu0 %v7308
    %7501 = vmatpush1.msra.mxu0 %v7307
    %7502 = vmatprep.subr.mxu0 %v7311
    %7503 = vmatpush1.msra.mxu0 %v7310
    %7504 = vmatprep.subr.mxu0 %v7314
    %7505 = vmatpush1.msra.mxu0 %v7313
    %7506 = vmatprep.subr.mxu0 %v7317
    %7507 = vmatpush1.msra.mxu0 %v7316
    %7508 = vmatprep.subr.mxu0 %v7320
    %7509 = vmatpush1.msra.mxu0 %v7319
    %7510 = vmatprep.subr.mxu0 %v7323
    %7511 = vmatpush1.msra.mxu0 %v7322
    %7512 = vmatprep.subr.mxu0 %v7326
    %7513 = vmatpush1.msra.mxu0 %v7325
    %7514 = vmatprep.subr.mxu0 %v7329
    %7515 = vmatpush1.msra.mxu0 %v7328
    %7516 = vmatprep.subr.mxu0 %v7332
    %7517 = vmatpush1.msra.mxu0 %v7331
    %7518 = vmatprep.subr.mxu0 %v7335
    %7519 = vmatpush1.msra.mxu0 %v7334
    %7520 = vmatprep.subr.mxu0 %v7338
    %7521 = vmatpush1.msra.mxu0 %v7337
    %7522 = vmatprep.subr.mxu0 %v7341
    %7523 = vmatpush1.msra.mxu0 %v7340
    %7524 = vmatprep.subr.mxu0 %v7344
    %7525 = vmatpush1.msra.mxu0 %v7343
    %7526 = vmatprep.subr.mxu0 %v7347
    %7527 = vmatpush1.msra.mxu0 %v7346
    %7528 = vmatprep.subr.mxu0 %v7350
    %7529 = vmatpush1.msra.mxu0 %v7349
    %7530 = vmatprep.subr.mxu0 %v7353
    %7531 = vmatpush1.msra.mxu0 %v7352
    %7532 = vmatprep.subr.mxu0 %v7356
    %7533 = vmatpush1.msra.mxu0 %v7355
    %7534 = vmatprep.subr.mxu0 %v7359
    %7535 = vmatpush1.msra.mxu0 %v7358
    %7536 = vmatprep.subr.mxu0 %v7362
    %7537 = vmatpush1.msra.mxu0 %v7361
    %7538 = vmatprep.subr.mxu0 %v7365
    %7539 = vmatpush1.msra.mxu0 %v7364
    %7540 = vmatprep.subr.mxu0 %v7368
    %7541 = vmatpush1.msra.mxu0 %v7367
    %7542 = vmatprep.mubr.f32.mxu0 %v7271
    %7543 = vmatmul.mubr.f32.gmra.mrb[0].mxu0 %v7270
    %v7544 = vpop.f32.mrb[0].mxu0
    %v7545 = vadd.f32 %v7453, %v7544
    %v7546 = vpop.f32.mrb[0].mxu0
    %v7547 = vadd.f32 %v7457, %v7546
    %7548 = vdwg.mxu0
    %7549 = vmatprep.subr.mxu0 %v7371
    %7550 = vmatpush1.msra.mxu0 %v7370
    %7551 = vmatprep.subr.mxu0 %v7374
    %7552 = vmatpush1.msra.mxu0 %v7373
    %7553 = vmatprep.subr.mxu0 %v7377
    %7554 = vmatpush1.msra.mxu0 %v7376
    %7555 = vmatprep.subr.mxu0 %v7380
    %7556 = vmatpush1.msra.mxu0 %v7379
    %7557 = vmatprep.subr.mxu0 %v7383
    %7558 = vmatpush1.msra.mxu0 %v7382
    %7559 = vmatprep.subr.mxu0 %v7386
    %7560 = vmatpush1.msra.mxu0 %v7385
    %7561 = vmatprep.subr.mxu0 %v7389
    %7562 = vmatpush1.msra.mxu0 %v7388
    %7563 = vmatprep.subr.mxu0 %v7392
    %7564 = vmatpush1.msra.mxu0 %v7391
    %7565 = vmatprep.subr.mxu0 %v7395
    %7566 = vmatpush1.msra.mxu0 %v7394
    %7567 = vmatprep.subr.mxu0 %v7398
    %7568 = vmatpush1.msra.mxu0 %v7397
    %7569 = vmatprep.subr.mxu0 %v7401
    %7570 = vmatpush1.msra.mxu0 %v7400
    %7571 = vmatprep.subr.mxu0 %v7404
    %7572 = vmatpush1.msra.mxu0 %v7403
    %7573 = vmatprep.subr.mxu0 %v7407
    %7574 = vmatpush1.msra.mxu0 %v7406
    %7575 = vmatprep.subr.mxu0 %v7410
    %7576 = vmatpush1.msra.mxu0 %v7409
    %7577 = vmatprep.subr.mxu0 %v7413
    %7578 = vmatpush1.msra.mxu0 %v7412
    %7579 = vmatprep.subr.mxu0 %v7416
    %7580 = vmatpush1.msra.mxu0 %v7415
    %7581 = vmatprep.subr.mxu0 %v7419
    %7582 = vmatpush1.msra.mxu0 %v7418
    %7583 = vmatprep.subr.mxu0 %v7422
    %7584 = vmatpush1.msra.mxu0 %v7421
    %7585 = vmatprep.subr.mxu0 %v7425
    %7586 = vmatpush1.msra.mxu0 %v7424
    %7587 = vmatprep.subr.mxu0 %v7428
    %7588 = vmatpush1.msra.mxu0 %v7427
    %7589 = vmatprep.subr.mxu0 %v7431
    %7590 = vmatpush1.msra.mxu0 %v7430
    %7591 = vmatprep.subr.mxu0 %v7434
    %7592 = vmatpush1.msra.mxu0 %v7433
    %7593 = vmatprep.subr.mxu0 %v7437
    %7594 = vmatpush1.msra.mxu0 %v7436
    %7595 = vmatprep.subr.mxu0 %v7440
    %7596 = vmatpush1.msra.mxu0 %v7439
    %7597 = vmatprep.subr.mxu0 %v7443
    %7598 = vmatpush1.msra.mxu0 %v7442
    %7599 = vmatprep.subr.mxu0 %v7473
    %7600 = vmatpush1.msra.mxu0 %v7470
    %7601 = vmatprep.subr.mxu0 0.0
    %7602 = vmatpush1.msra.mxu0 0.0
    %7603 = vmatprep.subr.mxu0 0.0
    %7604 = vmatpush1.msra.mxu0 0.0
    %7605 = vmatprep.subr.mxu0 0.0
    %7606 = vmatpush1.msra.mxu0 0.0
    %7607 = vmatprep.subr.mxu0 0.0
    %7608 = vmatpush1.msra.mxu0 0.0
    %7609 = vmatprep.subr.mxu0 0.0
    %7610 = vmatpush1.msra.mxu0 0.0
    %7611 = vmatprep.subr.mxu0 0.0
    %7612 = vmatpush1.msra.mxu0 0.0
    %7613 = vmatprep.mubr.f32.mxu0 %v7467
    %7614 = vmatmul.mubr.f32.gmra.mrb[0].mxu0 %v7272
    %v7615 = vpop.f32.mrb[0].mxu0
    %v7616 = vadd.f32 %v7545, %v7615
    %v7617 = vpop.f32.mrb[0].mxu0
    %v7618 = vadd.f32 %v7547, %v7617
    %7619 = vdwg.mxu0
    %7620 = vmatprep.subr.mxu0 0.0
    %7621 = vmatpush1.msra.mxu0 %v7276
    %7622 = vmatprep.subr.mxu0 0.0
    %7623 = vmatpush1.msra.mxu0 %v7279
    %7624 = vmatprep.subr.mxu0 0.0
    %7625 = vmatpush1.msra.mxu0 %v7282
    %7626 = vmatprep.subr.mxu0 0.0
    %7627 = vmatpush1.msra.mxu0 %v7285
    %7628 = vmatprep.subr.mxu0 0.0
    %7629 = vmatpush1.msra.mxu0 %v7288
    %7630 = vmatprep.subr.mxu0 0.0
    %7631 = vmatpush1.msra.mxu0 %v7291
    %7632 = vmatprep.subr.mxu0 0.0
    %7633 = vmatpush1.msra.mxu0 %v7294
    %7634 = vmatprep.subr.mxu0 0.0
    %7635 = vmatpush1.msra.mxu0 %v7297
    %7636 = vmatprep.subr.mxu0 0.0
    %7637 = vmatpush1.msra.mxu0 %v7300
    %7638 = vmatprep.subr.mxu0 0.0
    %7639 = vmatpush1.msra.mxu0 %v7303
    %7640 = vmatprep.subr.mxu0 0.0
    %7641 = vmatpush1.msra.mxu0 %v7306
    %7642 = vmatprep.subr.mxu0 0.0
    %7643 = vmatpush1.msra.mxu0 %v7309
    %7644 = vmatprep.subr.mxu0 0.0
    %7645 = vmatpush1.msra.mxu0 %v7312
    %7646 = vmatprep.subr.mxu0 0.0
    %7647 = vmatpush1.msra.mxu0 %v7315
    %7648 = vmatprep.subr.mxu0 0.0
    %7649 = vmatpush1.msra.mxu0 %v7318
    %7650 = vmatprep.subr.mxu0 0.0
    %7651 = vmatpush1.msra.mxu0 %v7321
    %7652 = vmatprep.subr.mxu0 0.0
    %7653 = vmatpush1.msra.mxu0 %v7324
    %7654 = vmatprep.subr.mxu0 0.0
    %7655 = vmatpush1.msra.mxu0 %v7327
    %7656 = vmatprep.subr.mxu0 0.0
    %7657 = vmatpush1.msra.mxu0 %v7330
    %7658 = vmatprep.subr.mxu0 0.0
    %7659 = vmatpush1.msra.mxu0 %v7333
    %7660 = vmatprep.subr.mxu0 0.0
    %7661 = vmatpush1.msra.mxu0 %v7336
    %7662 = vmatprep.subr.mxu0 0.0
    %7663 = vmatpush1.msra.mxu0 %v7339
    %7664 = vmatprep.subr.mxu0 0.0
    %7665 = vmatpush1.msra.mxu0 %v7342
    %7666 = vmatprep.subr.mxu0 0.0
    %7667 = vmatpush1.msra.mxu0 %v7345
    %7668 = vmatprep.subr.mxu0 0.0
    %7669 = vmatpush1.msra.mxu0 %v7348
    %7670 = vmatprep.subr.mxu0 0.0
    %7671 = vmatpush1.msra.mxu0 %v7351
    %7672 = vmatprep.subr.mxu0 0.0
    %7673 = vmatpush1.msra.mxu0 %v7354
    %7674 = vmatprep.subr.mxu0 0.0
    %7675 = vmatpush1.msra.mxu0 %v7357
    %7676 = vmatprep.subr.mxu0 0.0
    %7677 = vmatpush1.msra.mxu0 %v7360
    %7678 = vmatprep.subr.mxu0 0.0
    %7679 = vmatpush1.msra.mxu0 %v7363
    %7680 = vmatprep.subr.mxu0 0.0
    %7681 = vmatpush1.msra.mxu0 %v7366
    %7682 = vmatprep.subr.mxu0 0.0
    %7683 = vmatpush1.msra.mxu0 %v7369
    %7684 = vmatprep.mubr.f32.mxu0 %v7271
    %7685 = vmatmul.mubr.f32.gmra.mrb[0].mxu0 %v7270
    %v7686 = vpop.f32.mrb[0].mxu0
    %v7687 = vadd.f32 %v7461, %v7686
    %v7688 = vpop.f32.mrb[0].mxu0
    %7689 = vdwg.mxu0
    %7690 = vmatprep.subr.mxu0 0.0
    %7691 = vmatpush1.msra.mxu0 %v7372
    %7692 = vmatprep.subr.mxu0 0.0
    %7693 = vmatpush1.msra.mxu0 %v7375
    %7694 = vmatprep.subr.mxu0 0.0
    %7695 = vmatpush1.msra.mxu0 %v7378
    %7696 = vmatprep.subr.mxu0 0.0
    %7697 = vmatpush1.msra.mxu0 %v7381
    %7698 = vmatprep.subr.mxu0 0.0
    %7699 = vmatpush1.msra.mxu0 %v7384
    %7700 = vmatprep.subr.mxu0 0.0
    %7701 = vmatpush1.msra.mxu0 %v7387
    %7702 = vmatprep.subr.mxu0 0.0
    %7703 = vmatpush1.msra.mxu0 %v7390
    %7704 = vmatprep.subr.mxu0 0.0
    %7705 = vmatpush1.msra.mxu0 %v7393
    %7706 = vmatprep.subr.mxu0 0.0
    %7707 = vmatpush1.msra.mxu0 %v7396
    %7708 = vmatprep.subr.mxu0 0.0
    %7709 = vmatpush1.msra.mxu0 %v7399
    %7710 = vmatprep.subr.mxu0 0.0
    %7711 = vmatpush1.msra.mxu0 %v7402
    %7712 = vmatprep.subr.mxu0 0.0
    %7713 = vmatpush1.msra.mxu0 %v7405
    %7714 = vmatprep.subr.mxu0 0.0
    %7715 = vmatpush1.msra.mxu0 %v7408
    %7716 = vmatprep.subr.mxu0 0.0
    %7717 = vmatpush1.msra.mxu0 %v7411
    %7718 = vmatprep.subr.mxu0 0.0
    %7719 = vmatpush1.msra.mxu0 %v7414
    %7720 = vmatprep.subr.mxu0 0.0
    %7721 = vmatpush1.msra.mxu0 %v7417
    %7722 = vmatprep.subr.mxu0 0.0
    %7723 = vmatpush1.msra.mxu0 %v7420
    %7724 = vmatprep.subr.mxu0 0.0
    %7725 = vmatpush1.msra.mxu0 %v7423
    %7726 = vmatprep.subr.mxu0 0.0
    %7727 = vmatpush1.msra.mxu0 %v7426
    %7728 = vmatprep.subr.mxu0 0.0
    %7729 = vmatpush1.msra.mxu0 %v7429
    %7730 = vmatprep.subr.mxu0 0.0
    %7731 = vmatpush1.msra.mxu0 %v7432
    %7732 = vmatprep.subr.mxu0 0.0
    %7733 = vmatpush1.msra.mxu0 %v7435
    %7734 = vmatprep.subr.mxu0 0.0
    %7735 = vmatpush1.msra.mxu0 %v7438
    %7736 = vmatprep.subr.mxu0 0.0
    %7737 = vmatpush1.msra.mxu0 %v7441
    %7738 = vmatprep.subr.mxu0 0.0
    %7739 = vmatpush1.msra.mxu0 %v7444
    %7740 = vmatprep.subr.mxu0 0.0
    %7741 = vmatpush1.msra.mxu0 %v7476
    %7742 = vmatprep.subr.mxu0 0.0
    %7743 = vmatpush1.msra.mxu0 0.0
    %7744 = vmatprep.subr.mxu0 0.0
    %7745 = vmatpush1.msra.mxu0 0.0
    %7746 = vmatprep.subr.mxu0 0.0
    %7747 = vmatpush1.msra.mxu0 0.0
    %7748 = vmatprep.subr.mxu0 0.0
    %7749 = vmatpush1.msra.mxu0 0.0
    %7750 = vmatprep.subr.mxu0 0.0
    %7751 = vmatpush1.msra.mxu0 0.0
    %7752 = vmatprep.subr.mxu0 0.0
    %7753 = vmatpush1.msra.mxu0 0.0
    %7754 = vmatprep.mubr.f32.mxu0 %v7467
    %7755 = vmatmul.mubr.f32.gmra.mrb[0].mxu0 %v7272
    %v7756 = vpop.f32.mrb[0].mxu0
    %v7757 = vadd.f32 %v7687, %v7756
    %v7758 = vpop.f32.mrb[0].mxu0
    %7759 = vdwg.mxu0
    %v7760 = vmax.f32 %v7616, 0.0
    %v7761 = vmax.f32 %v7618, 0.0
    %v7762 = vmax.f32 %v7757, 0.0
    %v7763 = vld [vmem:[%s19] sm:$0xff]
    %v7764 = vld [vmem:[%s19 + $0x8] sm:$0xff]
    %v7765 = vld [vmem:[%s19 + $0x10] sm:$0xff]
    %v7766 = vld [vmem:[%s19 + $0x18] sm:$0xff]
    %v7767 = vld [vmem:[%s19 + $0x20] sm:$0xff]
    %v7768 = vld [vmem:[%s19 + $0x28] sm:$0xff]
    %v7769 = vld [vmem:[%s19 + $0x30] sm:$0xff]
    %v7770 = vld [vmem:[%s19 + $0x38] sm:$0xff]
    %v7771 = vld [vmem:[%s19 + $0x40] sm:$0xff]
    %v7772 = vld [vmem:[%s19 + $0x48] sm:$0xff]
    %v7773 = vld [vmem:[%s19 + $0x50] sm:$0xff]
    %v7774 = vld [vmem:[%s19 + $0x58] sm:$0xff]
    %v7775 = vld [vmem:[%s19 + $0x60] sm:$0xff]
    %v7776 = vld [vmem:[%s19 + $0x68] sm:$0xff]
    %v7777 = vld [vmem:[%s19 + $0x70] sm:$0xff]
    %v7778 = vld [vmem:[%s19 + $0x78] sm:$0xff]
    %v7779 = vld [vmem:[%s19 + $0x80] sm:$0xff]
    %v7780 = vld [vmem:[%s19 + $0x88] sm:$0xff]
    %v7781 = vld [vmem:[%s19 + $0x90] sm:$0xff]
    %v7782 = vld [vmem:[%s19 + $0x98] sm:$0xff]
    %v7783 = vld [vmem:[%s19 + $0xa0] sm:$0xff]
    %v7784 = vld [vmem:[%s19 + $0xa8] sm:$0xff]
    %v7785 = vld [vmem:[%s19 + $0xb0] sm:$0xff]
    %v7786 = vld [vmem:[%s19 + $0xb8] sm:$0xff]
    %v7787 = vld [vmem:[%s19 + $0xc0] sm:$0xff]
    %v7788 = vld [vmem:[%s19 + $0xc8] sm:$0xff]
    %v7789 = vld [vmem:[%s19 + $0xd0] sm:$0xff]
    %v7790 = vld [vmem:[%s19 + $0xd8] sm:$0xff]
    %v7791 = vld [vmem:[%s19 + $0xe0] sm:$0xff]
    %v7792 = vld [vmem:[%s19 + $0xe8] sm:$0xff]
    %v7793 = vld [vmem:[%s19 + $0xf0] sm:$0xff]
    %v7794 = vld [vmem:[%s19 + $0xf8] sm:$0xff]
    %v7795 = vld [vmem:[%s19 + $0x100] sm:$0xff]
    %v7796 = vld [vmem:[%s19 + $0x108] sm:$0xff]
    %v7797 = vld [vmem:[%s19 + $0x110] sm:$0xff]
    %v7798 = vld [vmem:[%s19 + $0x118] sm:$0xff]
    %v7799 = vld [vmem:[%s19 + $0x120] sm:$0xff]
    %v7800 = vld [vmem:[%s19 + $0x128] sm:$0xff]
    %v7801 = vld [vmem:[%s19 + $0x130] sm:$0x7]
    %v7802 = vld [vmem:[%s20] sm:$0x1]
    %v7804 = vlaneseq
    %v7805 = vshrl.u32 %v7804, 7
    %v7806 = vsub.s32 0, %v7805
    %v7807 = vrot.slane %v7802, %v7806
    %vm7809 = vcmask 416768
    %v7811 = vsel %vm7809, %v7762, 0
    %vm7813 = vcmask 1042432
    %v7815 = vsel %vm7813, %v7801, 0
    %7817 = vmatprep.subr.mxu0 0.0
    %7818 = vmatpush1.msra.mxu0 %v7763
    %7819 = vmatprep.subr.mxu0 0.0
    %7820 = vmatpush1.msra.mxu0 %v7764
    %7821 = vmatprep.subr.mxu0 0.0
    %7822 = vmatpush1.msra.mxu0 %v7765
    %7823 = vmatprep.subr.mxu0 0.0
    %7824 = vmatpush1.msra.mxu0 %v7766
    %7825 = vmatprep.subr.mxu0 0.0
    %7826 = vmatpush1.msra.mxu0 %v7767
    %7827 = vmatprep.subr.mxu0 0.0
    %7828 = vmatpush1.msra.mxu0 %v7768
    %7829 = vmatprep.subr.mxu0 0.0
    %7830 = vmatpush1.msra.mxu0 %v7769
    %7831 = vmatprep.subr.mxu0 0.0
    %7832 = vmatpush1.msra.mxu0 %v7770
    %7833 = vmatprep.subr.mxu0 0.0
    %7834 = vmatpush1.msra.mxu0 %v7771
    %7835 = vmatprep.subr.mxu0 0.0
    %7836 = vmatpush1.msra.mxu0 %v7772
    %7837 = vmatprep.subr.mxu0 0.0
    %7838 = vmatpush1.msra.mxu0 %v7773
    %7839 = vmatprep.subr.mxu0 0.0
    %7840 = vmatpush1.msra.mxu0 %v7774
    %7841 = vmatprep.subr.mxu0 0.0
    %7842 = vmatpush1.msra.mxu0 %v7775
    %7843 = vmatprep.subr.mxu0 0.0
    %7844 = vmatpush1.msra.mxu0 %v7776
    %7845 = vmatprep.subr.mxu0 0.0
    %7846 = vmatpush1.msra.mxu0 %v7777
    %7847 = vmatprep.subr.mxu0 0.0
    %7848 = vmatpush1.msra.mxu0 %v7778
    %7849 = vmatprep.subr.mxu0 0.0
    %7850 = vmatpush1.msra.mxu0 %v7779
    %7851 = vmatprep.subr.mxu0 0.0
    %7852 = vmatpush1.msra.mxu0 %v7780
    %7853 = vmatprep.subr.mxu0 0.0
    %7854 = vmatpush1.msra.mxu0 %v7781
    %7855 = vmatprep.subr.mxu0 0.0
    %7856 = vmatpush1.msra.mxu0 %v7782
    %7857 = vmatprep.subr.mxu0 0.0
    %7858 = vmatpush1.msra.mxu0 %v7783
    %7859 = vmatprep.subr.mxu0 0.0
    %7860 = vmatpush1.msra.mxu0 %v7784
    %7861 = vmatprep.subr.mxu0 0.0
    %7862 = vmatpush1.msra.mxu0 %v7785
    %7863 = vmatprep.subr.mxu0 0.0
    %7864 = vmatpush1.msra.mxu0 %v7786
    %7865 = vmatprep.subr.mxu0 0.0
    %7866 = vmatpush1.msra.mxu0 %v7787
    %7867 = vmatprep.subr.mxu0 0.0
    %7868 = vmatpush1.msra.mxu0 %v7788
    %7869 = vmatprep.subr.mxu0 0.0
    %7870 = vmatpush1.msra.mxu0 %v7789
    %7871 = vmatprep.subr.mxu0 0.0
    %7872 = vmatpush1.msra.mxu0 %v7790
    %7873 = vmatprep.subr.mxu0 0.0
    %7874 = vmatpush1.msra.mxu0 %v7791
    %7875 = vmatprep.subr.mxu0 0.0
    %7876 = vmatpush1.msra.mxu0 %v7792
    %7877 = vmatprep.subr.mxu0 0.0
    %7878 = vmatpush1.msra.mxu0 %v7793
    %7879 = vmatprep.subr.mxu0 0.0
    %7880 = vmatpush1.msra.mxu0 %v7794
    %7881 = vmatprep.mubr.f32.mxu0 %v7761
    %7882 = vmatmul.mubr.f32.gmra.mrb[0].mxu0 %v7760
    %v7883 = vpop.f32.mrb[0].mxu0
    %v7884 = vadd.f32 %v7807, %v7883
    %v7885 = vpop.f32.mrb[0].mxu0
    %7886 = vdwg.mxu0
    %7887 = vmatprep.subr.mxu0 0.0
    %7888 = vmatpush1.msra.mxu0 %v7795
    %7889 = vmatprep.subr.mxu0 0.0
    %7890 = vmatpush1.msra.mxu0 %v7796
    %7891 = vmatprep.subr.mxu0 0.0
    %7892 = vmatpush1.msra.mxu0 %v7797
    %7893 = vmatprep.subr.mxu0 0.0
    %7894 = vmatpush1.msra.mxu0 %v7798
    %7895 = vmatprep.subr.mxu0 0.0
    %7896 = vmatpush1.msra.mxu0 %v7799
    %7897 = vmatprep.subr.mxu0 0.0
    %7898 = vmatpush1.msra.mxu0 %v7800
    %7899 = vmatprep.subr.mxu0 0.0
    %7900 = vmatpush1.msra.mxu0 %v7815
    %7901 = vmatprep.subr.mxu0 0.0
    %7902 = vmatpush1.msra.mxu0 0.0
    %7903 = vmatprep.subr.mxu0 0.0
    %7904 = vmatpush1.msra.mxu0 0.0
    %7905 = vmatprep.subr.mxu0 0.0
    %7906 = vmatpush1.msra.mxu0 0.0
    %7907 = vmatprep.subr.mxu0 0.0
    %7908 = vmatpush1.msra.mxu0 0.0
    %7909 = vmatprep.subr.mxu0 0.0
    %7910 = vmatpush1.msra.mxu0 0.0
    %7911 = vmatprep.subr.mxu0 0.0
    %7912 = vmatpush1.msra.mxu0 0.0
    %7913 = vmatprep.subr.mxu0 0.0
    %7914 = vmatpush1.msra.mxu0 0.0
    %7915 = vmatprep.subr.mxu0 0.0
    %7916 = vmatpush1.msra.mxu0 0.0
    %7917 = vmatprep.subr.mxu0 0.0
    %7918 = vmatpush1.msra.mxu0 0.0
    %7919 = vmatprep.subr.mxu0 0.0
    %7920 = vmatpush1.msra.mxu0 0.0
    %7921 = vmatprep.subr.mxu0 0.0
    %7922 = vmatpush1.msra.mxu0 0.0
    %7923 = vmatprep.subr.mxu0 0.0
    %7924 = vmatpush1.msra.mxu0 0.0
    %7925 = vmatprep.subr.mxu0 0.0
    %7926 = vmatpush1.msra.mxu0 0.0
    %7927 = vmatprep.subr.mxu0 0.0
    %7928 = vmatpush1.msra.mxu0 0.0
    %7929 = vmatprep.subr.mxu0 0.0
    %7930 = vmatpush1.msra.mxu0 0.0
    %7931 = vmatprep.subr.mxu0 0.0
    %7932 = vmatpush1.msra.mxu0 0.0
    %7933 = vmatprep.subr.mxu0 0.0
    %7934 = vmatpush1.msra.mxu0 0.0
    %7935 = vmatprep.subr.mxu0 0.0
    %7936 = vmatpush1.msra.mxu0 0.0
    %7937 = vmatprep.subr.mxu0 0.0
    %7938 = vmatpush1.msra.mxu0 0.0
    %7939 = vmatprep.subr.mxu0 0.0
    %7940 = vmatpush1.msra.mxu0 0.0
    %7941 = vmatprep.subr.mxu0 0.0
    %7942 = vmatpush1.msra.mxu0 0.0
    %7943 = vmatprep.subr.mxu0 0.0
    %7944 = vmatpush1.msra.mxu0 0.0
    %7945 = vmatprep.subr.mxu0 0.0
    %7946 = vmatpush1.msra.mxu0 0.0
    %7947 = vmatprep.subr.mxu0 0.0
    %7948 = vmatpush1.msra.mxu0 0.0
    %7949 = vmatprep.subr.mxu0 0.0
    %7950 = vmatpush1.msra.mxu0 0.0
    %7951 = vmatprep.mubr.f32.mxu0 0.0
    %7952 = vmatmul.mubr.f32.gmra.mrb[0].mxu0 %v7811
    %v7953 = vpop.f32.mrb[0].mxu0
    %v7954 = vadd.f32 %v7884, %v7953
    %v7955 = vpop.f32.mrb[0].mxu0
    %7956 = vdwg.mxu0
    %v7957 = vsub.f32 %v7954, 5.0
    %v7958 = vmax.f32 %v7957, 0.0
    %v7959 = vand.u32 2147483647, %v7957
    %v7960 = vsub.f32 0.0, %v7959
    %v7961 = vmul.f32 %v7960, 1.442695
    %v7962 = vpow.pop %v7961
    %v7963 = vadd.f32 %v7962, 1.0
    %v7964 = vlog2.pop %v7963
    %v7965 = vmul.f32 %v7964, 0.6931472
    %v7966 = vadd.f32 %v7958, %v7965
    %v7967 = vld [vmem:[%s3] sm:$0x3]
    %7969 = vrot.lane.b32.xlu0 %v7967, 4
    %v7970 = vpop.permute.xlu0 %7969
    %v7972 = vmul.f32 %v7966, %v7970
    %7974 = vrot.lane.b32.xlu0 %v7972, 124
    %v7975 = vpop.permute.xlu0 %7974
    %v7977 = vadd.f32 %v7954, %v7975
    %v7978 = vld [vmem:[%s21] sm:$0xf]
    %v7979 = vld [vmem:[%s22] sm:$0x1]
    %v7981 = vlaneseq
    %v7982 = vshrl.u32 %v7981, 7
    %v7983 = vsub.s32 0, %v7982
    %v7984 = vrot.slane %v7979, %v7983
    %vm7986 = vcmask 31744
    %v7988 = vsel %vm7986, %v7977, 0
    %v7991 = vsel %vm150, %v7978, 0
    %7993 = vmatprep.subr.mxu0 0.0
    %7994 = vmatpush1.msra.mxu0 %v7991
    %7995 = vmatprep.subr.mxu0 0.0
    %7996 = vmatpush1.msra.mxu0 0.0
    %7997 = vmatprep.subr.mxu0 0.0
    %7998 = vmatpush1.msra.mxu0 0.0
    %7999 = vmatprep.subr.mxu0 0.0
    %8000 = vmatpush1.msra.mxu0 0.0
    %8001 = vmatprep.subr.mxu0 0.0
    %8002 = vmatpush1.msra.mxu0 0.0
    %8003 = vmatprep.subr.mxu0 0.0
    %8004 = vmatpush1.msra.mxu0 0.0
    %8005 = vmatprep.subr.mxu0 0.0
    %8006 = vmatpush1.msra.mxu0 0.0
    %8007 = vmatprep.subr.mxu0 0.0
    %8008 = vmatpush1.msra.mxu0 0.0
    %8009 = vmatprep.subr.mxu0 0.0
    %8010 = vmatpush1.msra.mxu0 0.0
    %8011 = vmatprep.subr.mxu0 0.0
    %8012 = vmatpush1.msra.mxu0 0.0
    %8013 = vmatprep.subr.mxu0 0.0
    %8014 = vmatpush1.msra.mxu0 0.0
    %8015 = vmatprep.subr.mxu0 0.0
    %8016 = vmatpush1.msra.mxu0 0.0
    %8017 = vmatprep.subr.mxu0 0.0
    %8018 = vmatpush1.msra.mxu0 0.0
    %8019 = vmatprep.subr.mxu0 0.0
    %8020 = vmatpush1.msra.mxu0 0.0
    %8021 = vmatprep.subr.mxu0 0.0
    %8022 = vmatpush1.msra.mxu0 0.0
    %8023 = vmatprep.subr.mxu0 0.0
    %8024 = vmatpush1.msra.mxu0 0.0
    %8025 = vmatprep.subr.mxu0 0.0
    %8026 = vmatpush1.msra.mxu0 0.0
    %8027 = vmatprep.subr.mxu0 0.0
    %8028 = vmatpush1.msra.mxu0 0.0
    %8029 = vmatprep.subr.mxu0 0.0
    %8030 = vmatpush1.msra.mxu0 0.0
    %8031 = vmatprep.subr.mxu0 0.0
    %8032 = vmatpush1.msra.mxu0 0.0
    %8033 = vmatprep.subr.mxu0 0.0
    %8034 = vmatpush1.msra.mxu0 0.0
    %8035 = vmatprep.subr.mxu0 0.0
    %8036 = vmatpush1.msra.mxu0 0.0
    %8037 = vmatprep.subr.mxu0 0.0
    %8038 = vmatpush1.msra.mxu0 0.0
    %8039 = vmatprep.subr.mxu0 0.0
    %8040 = vmatpush1.msra.mxu0 0.0
    %8041 = vmatprep.subr.mxu0 0.0
    %8042 = vmatpush1.msra.mxu0 0.0
    %8043 = vmatprep.subr.mxu0 0.0
    %8044 = vmatpush1.msra.mxu0 0.0
    %8045 = vmatprep.subr.mxu0 0.0
    %8046 = vmatpush1.msra.mxu0 0.0
    %8047 = vmatprep.subr.mxu0 0.0
    %8048 = vmatpush1.msra.mxu0 0.0
    %8049 = vmatprep.subr.mxu0 0.0
    %8050 = vmatpush1.msra.mxu0 0.0
    %8051 = vmatprep.subr.mxu0 0.0
    %8052 = vmatpush1.msra.mxu0 0.0
    %8053 = vmatprep.subr.mxu0 0.0
    %8054 = vmatpush1.msra.mxu0 0.0
    %8055 = vmatprep.subr.mxu0 0.0
    %8056 = vmatpush1.msra.mxu0 0.0
    %8057 = vmatprep.mubr.f32.mxu0 0.0
    %8058 = vmatmul.mubr.f32.gmra.mrb[0].mxu0 %v7988
    %v8059 = vpop.f32.mrb[0].mxu0
    %v8060 = vadd.f32 %v7984, %v8059
    %v8061 = vpop.f32.mrb[0].mxu0
    %8062 = vdwg.mxu0
    %v8063 = vxor.u32 %v8060, 2147483648
    %v8064 = vmul.f32 %v8063, 1.442695
    %v8065 = vpow.pop %v8064
    %v8066 = vadd.f32 %v8065, 1.0
    %v8067 = vrcp.pop %v8066
    %v8068 = vmul.f32 1.0, %v8067
    %vm8069 = vcmask 9216
    %8070 = vst.msk [vmem:[#allocation2] sm:$0x3] %vm8069, %v8068
    %vm8071 = vcmask 25600
    %8072 = vst.msk [vmem:[#allocation4] sm:$0x3] %vm8071, %v7954
    %8074 = vrot.lane.b32.xlu0 %v7966, 124
    %v8075 = vpop.permute.xlu0 %8074
    %8077 = vst.msk [vmem:[#allocation6] sm:$0x3] %vm8071, %v8075
    %8078 = vst.msk [vmem:[#allocation7] sm:$0x3] %vm8071, %v7977
    // Predicated region
    $region94: #{dvib_forward.1} parent=1 // pred_check
      _
    $region95: #{dvib_forward.1} parent=1 // pred_check_branch
      %8080 = sbr.rel (0) target = $region97
    $region96: #{dvib_forward.1} parent=1 // pred_region
      %s8082 = ssub.s32 32, 32
      %8083 = vsyncadd [#allocation3], %s8082
      %s8085 = sshll.u32 [#allocation2], 4
      %s8086 = int_to_ptr.vmem [resolvable:$true] %s8085
      %8088 = dma.vmem_to_hbm [thread:$0]  %s8086, 32, %s23, [#allocation3]
    $region97: #{dvib_forward.1} parent=1 // pred_fallthru
      _
    // Predicated region
    $region98: #{dvib_forward.1} parent=1 // pred_check
      _
    $region99: #{dvib_forward.1} parent=1 // pred_check_branch
      %8090 = sbr.rel (0) target = $region101
    $region100: #{dvib_forward.1} parent=1 // pred_region
      %s8092 = ssub.s32 32, 32
      %8093 = vsyncadd [#allocation5], %s8092
      %s8095 = sshll.u32 [#allocation4], 4
      %s8096 = int_to_ptr.vmem [resolvable:$true] %s8095
      %8098 = dma.vmem_to_hbm [thread:$0]  %s8096, 32, %s24, [#allocation5]
    $region101: #{dvib_forward.1} parent=1 // pred_fallthru
      _
    // Predicated region
    $region102: #{dvib_forward.1} parent=1 // pred_check
      _
    $region103: #{dvib_forward.1} parent=1 // pred_check_branch
      %8100 = sbr.rel (0) target = $region105
    $region104: #{dvib_forward.1} parent=1 // pred_region
      %s8102 = ssub.s32 32, 32
      %8103 = vsyncadd [#allocation5], %s8102
      %s8105 = sshll.u32 [#allocation6], 4
      %s8106 = int_to_ptr.vmem [resolvable:$true] %s8105
      %8108 = dma.vmem_to_hbm [thread:$0]  %s8106, 32, %s25, [#allocation5]
    $region105: #{dvib_forward.1} parent=1 // pred_fallthru
      _
    // Predicated region
    $region106: #{dvib_forward.1} parent=1 // pred_check
      _
    $region107: #{dvib_forward.1} parent=1 // pred_check_branch
      %8110 = sbr.rel (0) target = $region109
    $region108: #{dvib_forward.1} parent=1 // pred_region
      %s8112 = ssub.s32 32, 32
      %8113 = vsyncadd [#allocation8], %s8112
      %s8115 = sshll.u32 [#allocation7], 4
      %s8116 = int_to_ptr.vmem [resolvable:$true] %s8115
      %8118 = dma.vmem_to_hbm [thread:$0]  %s8116, 32, %s26, [#allocation8]
    $region109: #{dvib_forward.1} parent=1 // pred_fallthru
      _
    // Predicated region
    $region110: #{dvib_forward.1} parent=1 // pred_check
      _
    $region111: #{dvib_forward.1} parent=1 // pred_check_branch
      %8120 = sbr.rel (0) target = $region113
    $region112: #{dvib_forward.1} parent=1 // pred_region
      %8121 = dma.done [#allocation3], 32
    $region113: #{dvib_forward.1} parent=1 // pred_fallthru
      _
    // Predicated region
    $region114: #{dvib_forward.1} parent=1 // pred_check
      _
    $region115: #{dvib_forward.1} parent=1 // pred_check_branch
      %8123 = sbr.rel (0) target = $region117
    $region116: #{dvib_forward.1} parent=1 // pred_region
      %8124 = dma.done [#allocation5], 32
    $region117: #{dvib_forward.1} parent=1 // pred_fallthru
      _
    // Predicated region
    $region118: #{dvib_forward.1} parent=1 // pred_check
      _
    $region119: #{dvib_forward.1} parent=1 // pred_check_branch
      %8126 = sbr.rel (0) target = $region121
    $region120: #{dvib_forward.1} parent=1 // pred_region
      %8127 = dma.done [#allocation5], 32
    $region121: #{dvib_forward.1} parent=1 // pred_fallthru
      _
    // Predicated region
    $region122: #{dvib_forward.1} parent=1 // pred_check
      _
    $region123: #{dvib_forward.1} parent=1 // pred_check_branch
      %8129 = sbr.rel (0) target = $region125
    $region124: #{dvib_forward.1} parent=1 // pred_region
      %8130 = dma.done [#allocation8], 32
    $region125: #{dvib_forward.1} parent=1 // pred_fallthru
      _
    %8131 = vsyncpa [#allocation3], 1
    %8132 = vsyncpa [#allocation5], 1
    %8133 = vsyncpa [#allocation8], 1

</llo_original>
